<compile_context>
chip_gen: v7x
topology: tpu7x:2x2x1
jax: 0.10.0
libtpu: 0.0.40
codegen_flags: <defaults>
</compile_context>

<pallas_src>
import functools

import jax
import jax.numpy as jnp
from jax.experimental import pallas as pl
from jax.experimental.pallas import tpu as pltpu

_LANE = 128  # TPU lane width: in-VMEM channel padding target


def _round_up(x, m):
    return (x + m - 1) // m * m


def _double_conv_kernel(x_ref, w1_ref, s1_ref, b1_ref, w2_ref, s2_ref, b2_ref,
                        out_ref, xpad_ref, mid_ref, acc_ref, *,
                        H, W, Cin, Cout, Cp):
    """Fused (conv3x3 -> BN -> ReLU) x 2 for one batch element (NHWC, lane=C).

    x_ref     : (1, H+2, W+2, Cin)  spatially zero-padded input (narrow lanes)
    w{1,2}_ref: (9, Cp, Cp)         per-tap weights, channel-zero-padded
    s/b refs  : (1, Cp)             folded BatchNorm scale / bias (f32)
    out_ref   : (1, H, W, Cout)     valid output (no lane padding in HBM)
    xpad_ref  : VMEM (H+2, W+2, Cp) lane-padded stage-1 input
    mid_ref   : VMEM (H+2, W+2, Cp) zero-padded stage-1 activation
    acc_ref   : VMEM (H*W, Cp) f32  shared matmul accumulator
    """
    f32 = jnp.float32
    R = H * W

    # Lane-pad the input inside VMEM.  Both buffers are zero-filled every grid
    # step so the kernel stays correct when the batch axis is sharded across
    # TensorCores (megacore); the fill is negligible next to the 18 matmuls.
    xpad_ref[...] = jnp.zeros_like(xpad_ref)
    mid_ref[...] = jnp.zeros_like(mid_ref)
    xpad_ref[:, :, 0:Cin] = x_ref[0]

    # ---- stage 1: 3x3 conv as 9 accumulate-matmuls (K = Cp) over valid HxW --
    for dy in range(3):
        for dx in range(3):
            t = dy * 3 + dx
            tap = xpad_ref[dy:dy + H, dx:dx + W, :].reshape(R, Cp)
            upd = jnp.dot(tap, w1_ref[t], preferred_element_type=f32)
            if t == 0:
                acc_ref[...] = upd
            else:
                acc_ref[...] += upd
    y = jnp.maximum(acc_ref[...] * s1_ref[...] + b1_ref[...], 0.0)
    # Interior-only write keeps mid's zero halo and zero pad lanes intact, so
    # mid is exactly the zero-padded stage-2 input (no HBM round trip).
    mid_ref[1:H + 1, 1:W + 1, :] = y.reshape(H, W, Cp).astype(mid_ref.dtype)

    # ---- stage 2: same structure over the stage-1 activation ---------------
    for dy in range(3):
        for dx in range(3):
            t = dy * 3 + dx
            tap = mid_ref[dy:dy + H, dx:dx + W, :].reshape(R, Cp)
            upd = jnp.dot(tap, w2_ref[t], preferred_element_type=f32)
            if t == 0:
                acc_ref[...] = upd
            else:
                acc_ref[...] += upd
    z = jnp.maximum(acc_ref[...] * s2_ref[...] + b2_ref[...], 0.0)
    out_ref[0] = z.reshape(H, W, Cp)[:, :, 0:Cout].astype(out_ref.dtype)


def _fold_bn(gamma, beta, mean, var, eps):
    scale = gamma / jnp.sqrt(var + eps)
    return scale, beta - mean * scale


def _pack_weight(w_oihw, cp, dtype):
    """OIHW (Cout, Cin, 3, 3) -> per-tap, channel-zero-padded (9, cp, cp)."""
    cout, cin, kh, kw = w_oihw.shape
    w = jnp.transpose(w_oihw, (2, 3, 1, 0)).reshape(kh * kw, cin, cout)
    w_pad = jnp.zeros((kh * kw, cp, cp), jnp.float32)
    w_pad = w_pad.at[:, :cin, :cout].set(w.astype(jnp.float32))
    return w_pad.astype(dtype)


def _pad_row(v, cp):
    row = jnp.zeros((1, cp), jnp.float32)
    return row.at[0, :v.shape[0]].set(v.astype(jnp.float32))


def double_conv(x_nchw, params, eps=1e-5, compute_dtype=jnp.bfloat16):
    """params: two tuples (w_oihw, gamma, beta, running_mean, running_var).

    Eval-mode (folded) BatchNorm, stride=1, pad=1, no conv bias -- matches the
    PyTorch DoubleConv forward under module.eval().  `compute_dtype` sets the
    matmul operand precision (bf16 default); accumulation is always f32.
    """
    (w1, g1, be1, m1, v1), (w2, g2, be2, m2, v2) = params
    N, Cin, H, W = x_nchw.shape
    Cmid, Cout = w1.shape[0], w2.shape[0]
    Cp = _round_up(max(Cin, Cmid, Cout, 1), _LANE)

    s1, b1 = _fold_bn(g1, be1, m1, v1, eps)
    s2, b2 = _fold_bn(g2, be2, m2, v2, eps)
    w1p = _pack_weight(w1, Cp, compute_dtype)
    w2p = _pack_weight(w2, Cp, compute_dtype)
    s1p, b1p = _pad_row(s1, Cp), _pad_row(b1, Cp)
    s2p, b2p = _pad_row(s2, Cp), _pad_row(b2, Cp)

    # NCHW -> NHWC + spatial halo of 1.  Channels stay narrow (Cin) in HBM;
    # lane padding to Cp happens inside the kernel's VMEM.
    x_nhwc = jnp.transpose(x_nchw, (0, 2, 3, 1)).astype(compute_dtype)
    xp = jnp.pad(x_nhwc, ((0, 0), (1, 1), (1, 1), (0, 0)))

    cbytes = jnp.dtype(compute_dtype).itemsize
    scratch_bytes = (2 * (H + 2) * (W + 2) * Cp * cbytes   # xpad + mid
                     + H * W * Cp * 4)                     # f32 accumulator
    block_bytes = (2 * 9 * Cp * Cp * cbytes                # both weight stacks
                   + (H + 2) * (W + 2) * Cin * cbytes      # input block
                   + H * W * Cout * 4                      # output block
                   + 4 * Cp * 4)                           # scales / biases
    vmem_limit = int(min(max(2 * (scratch_bytes + block_bytes) + (8 << 20),
                             32 << 20), 64 << 20))

    kernel = functools.partial(_double_conv_kernel,
                               H=H, W=W, Cin=Cin, Cout=Cout, Cp=Cp)
    out = pl.pallas_call(
        kernel,
        out_shape=jax.ShapeDtypeStruct((N, H, W, Cout), jnp.float32),
        grid_spec=pltpu.PrefetchScalarGridSpec(
            num_scalar_prefetch=0,
            grid=(N,),
            in_specs=[
                pl.BlockSpec((1, H + 2, W + 2, Cin), lambda n: (n, 0, 0, 0)),
                pl.BlockSpec((9, Cp, Cp), lambda n: (0, 0, 0)),
                pl.BlockSpec((1, Cp), lambda n: (0, 0)),
                pl.BlockSpec((1, Cp), lambda n: (0, 0)),
                pl.BlockSpec((9, Cp, Cp), lambda n: (0, 0, 0)),
                pl.BlockSpec((1, Cp), lambda n: (0, 0)),
                pl.BlockSpec((1, Cp), lambda n: (0, 0)),
            ],
            out_specs=pl.BlockSpec((1, H, W, Cout), lambda n: (n, 0, 0, 0)),
            scratch_shapes=[
                pltpu.VMEM((H + 2, W + 2, Cp), compute_dtype),
                pltpu.VMEM((H + 2, W + 2, Cp), compute_dtype),
                pltpu.VMEM((H * W, Cp), jnp.float32),
            ],
        ),
        compiler_params=pltpu.CompilerParams(
            dimension_semantics=("parallel",),
            vmem_limit_bytes=vmem_limit),
    )(xp, w1p, s1p, b1p, w2p, s2p, b2p)

    return jnp.transpose(out, (0, 3, 1, 2))   # NHWC -> NCHW


def _reference(x_nchw, params, eps=1e-5):
    """Pure-JAX reference (lax conv, NCHW) for correctness checking."""
    x = x_nchw
    for (w, g, b, m, v) in params:
        y = jax.lax.conv_general_dilated(
            x, w, window_strides=(1, 1), padding=((1, 1), (1, 1)),
            dimension_numbers=("NCHW", "OIHW", "NCHW"))
        scale = (g / jnp.sqrt(v + eps)).reshape(1, -1, 1, 1)
        bias = (b - m * g / jnp.sqrt(v + eps)).reshape(1, -1, 1, 1)
        x = jnp.maximum(y * scale + bias, 0.0)
    return x


if __name__ == "__main__":
    key = jax.random.PRNGKey(0)
    N, Cin, Cout, H, W = 2, 4, 8, 16, 16
    Cmid = Cout  # mid_channels defaults to out_channels

    k = jax.random.split(key, 11)
    x = jax.random.normal(k[0], (N, Cin, H, W), jnp.float32)

    # Deterministic synthetic parameters (PyTorch shapes: conv OIHW, BN per-channel).
    w1 = jax.random.normal(k[1], (Cmid, Cin, 3, 3), jnp.float32) * 0.2
    g1 = 1.0 + 0.1 * jax.random.normal(k[2], (Cmid,), jnp.float32)
    b1 = 0.1 * jax.random.normal(k[3], (Cmid,), jnp.float32)
    m1 = 0.1 * jax.random.normal(k[4], (Cmid,), jnp.float32)
    v1 = jax.random.uniform(k[5], (Cmid,), jnp.float32, 0.5, 1.5)

    w2 = jax.random.normal(k[6], (Cout, Cmid, 3, 3), jnp.float32) * 0.2
    g2 = 1.0 + 0.1 * jax.random.normal(k[7], (Cout,), jnp.float32)
    b2 = 0.1 * jax.random.normal(k[8], (Cout,), jnp.float32)
    m2 = 0.1 * jax.random.normal(k[9], (Cout,), jnp.float32)
    v2 = jax.random.uniform(k[10], (Cout,), jnp.float32, 0.5, 1.5)

    params = [(w1, g1, b1, m1, v1), (w2, g2, b2, m2, v2)]

    ref = jax.block_until_ready(_reference(x, params))

    # f32 operands: tight check against the f32 reference.
    out_f32 = jax.block_until_ready(
        double_conv(x, params, compute_dtype=jnp.float32))
    assert out_f32.shape == (N, Cout, H, W), out_f32.shape
    assert jnp.allclose(out_f32, ref, atol=1e-4, rtol=1e-4), \
        float(jnp.max(jnp.abs(out_f32 - ref)))

    # bf16 matmul operands (default / production mode): relaxed tolerance
    # (typical error ~1e-2 with f32 accumulation).
    out_bf16 = jax.block_until_ready(double_conv(x, params))
    assert out_bf16.shape == (N, Cout, H, W), out_bf16.shape
    assert jnp.allclose(out_bf16, ref, atol=1e-1, rtol=1e-1), \
        float(jnp.max(jnp.abs(out_bf16 - ref)))

    print("KERNEL_OK")
</pallas_src>

<mosaic_0001>
module attributes {stable_mosaic.version = 11 : i64} {
  func.func @_double_conv_kernel(%arg0: i32, %arg1: memref<1x18x18x4xf32, #tpu.memory_space<vmem>>, %arg2: memref<9x128x128xf32, #tpu.memory_space<vmem>>, %arg3: memref<1x128xf32, #tpu.memory_space<vmem>>, %arg4: memref<1x128xf32, #tpu.memory_space<vmem>>, %arg5: memref<9x128x128xf32, #tpu.memory_space<vmem>>, %arg6: memref<1x128xf32, #tpu.memory_space<vmem>>, %arg7: memref<1x128xf32, #tpu.memory_space<vmem>>, %arg8: memref<1x16x16x8xf32, #tpu.memory_space<vmem>>, %arg9: memref<18x18x128xf32, #tpu.memory_space<vmem>>, %arg10: memref<18x18x128xf32, #tpu.memory_space<vmem>>, %arg11: memref<256x128xf32, #tpu.memory_space<vmem>>) attributes {dimension_semantics = [#tpu.dimension_semantics<parallel>], iteration_bounds = array<i64: 2>, scalar_prefetch = 0 : i64, scratch_operands = 3 : i64, tpu.core_type = #tpu.core_type<tc>, window_params = [{transform_indices = @transform_0, window_bounds = array<i64: 1, 18, 18, 4>}, {pipeline_mode = #tpu.pipeline_mode<synchronous>, transform_indices = @transform_1, window_bounds = array<i64: 9, 128, 128>}, {pipeline_mode = #tpu.pipeline_mode<synchronous>, transform_indices = @transform_2, window_bounds = array<i64: 1, 128>}, {pipeline_mode = #tpu.pipeline_mode<synchronous>, transform_indices = @transform_3, window_bounds = array<i64: 1, 128>}, {pipeline_mode = #tpu.pipeline_mode<synchronous>, transform_indices = @transform_4, window_bounds = array<i64: 9, 128, 128>}, {pipeline_mode = #tpu.pipeline_mode<synchronous>, transform_indices = @transform_5, window_bounds = array<i64: 1, 128>}, {pipeline_mode = #tpu.pipeline_mode<synchronous>, transform_indices = @transform_6, window_bounds = array<i64: 1, 128>}, {transform_indices = @transform_7, window_bounds = array<i64: 1, 16, 16, 8>}]} {
    %cst = arith.constant 0.000000e+00 : f32
    %0 = vector.broadcast %cst : f32 to vector<18x18x128xf32>
    %c0 = arith.constant 0 : index
    %c0_0 = arith.constant 0 : index
    %c0_1 = arith.constant 0 : index
    %1 = vector.load %arg9[%c0, %c0_0, %c0_1] : memref<18x18x128xf32, #tpu.memory_space<vmem>>, vector<18x18x128xf32>
    tpu.vector_store %arg9[%c0, %c0_0, %c0_1], %0 {strides = array<i32>} : memref<18x18x128xf32, #tpu.memory_space<vmem>>, vector<18x18x128xf32>,
    %cst_2 = arith.constant 0.000000e+00 : f32
    %2 = vector.broadcast %cst_2 : f32 to vector<18x18x128xf32>
    %c0_3 = arith.constant 0 : index
    %c0_4 = arith.constant 0 : index
    %c0_5 = arith.constant 0 : index
    %3 = vector.load %arg10[%c0_3, %c0_4, %c0_5] : memref<18x18x128xf32, #tpu.memory_space<vmem>>, vector<18x18x128xf32>
    tpu.vector_store %arg10[%c0_3, %c0_4, %c0_5], %2 {strides = array<i32>} : memref<18x18x128xf32, #tpu.memory_space<vmem>>, vector<18x18x128xf32>,
    %c0_6 = arith.constant 0 : index
    %c0_7 = arith.constant 0 : index
    %c0_8 = arith.constant 0 : index
    %c0_9 = arith.constant 0 : index
    %4 = vector.load %arg1[%c0_6, %c0_7, %c0_8, %c0_9] : memref<1x18x18x4xf32, #tpu.memory_space<vmem>>, vector<1x18x18x4xf32>
    %5 = vector.shape_cast %4 : vector<1x18x18x4xf32> to vector<18x18x4xf32>
    %c0_10 = arith.constant 0 : index
    %c0_11 = arith.constant 0 : index
    %c0_12 = arith.constant 0 : index
    %6 = vector.load %arg9[%c0_10, %c0_11, %c0_12] : memref<18x18x128xf32, #tpu.memory_space<vmem>>, vector<18x18x4xf32>
    tpu.vector_store %arg9[%c0_10, %c0_11, %c0_12], %5 {strides = array<i32>} : memref<18x18x128xf32, #tpu.memory_space<vmem>>, vector<18x18x4xf32>,
    %c0_13 = arith.constant 0 : index
    %c0_14 = arith.constant 0 : index
    %c0_15 = arith.constant 0 : index
    %7 = vector.load %arg9[%c0_13, %c0_14, %c0_15] : memref<18x18x128xf32, #tpu.memory_space<vmem>>, vector<16x16x128xf32>
    %8 = vector.shape_cast %7 : vector<16x16x128xf32> to vector<256x128xf32>
    %c0_16 = arith.constant 0 : index
    %c0_17 = arith.constant 0 : index
    %c0_18 = arith.constant 0 : index
    %9 = vector.load %arg2[%c0_16, %c0_17, %c0_18] : memref<9x128x128xf32, #tpu.memory_space<vmem>>, vector<1x128x128xf32>
    %10 = vector.shape_cast %9 : vector<1x128x128xf32> to vector<128x128xf32>
    %cst_19 = arith.constant dense<0.000000e+00> : vector<256x128xf32>
    %11 = tpu.matmul %8, %10, %cst_19 {dimension_numbers = #tpu.dot_dimension_numbers<[1], [0], [0], [1], [0, 0, 1, 1], [], []>} : vector<256x128xf32>, vector<128x128xf32>, vector<256x128xf32> -> vector<256x128xf32>
    %c0_20 = arith.constant 0 : index
    %c0_21 = arith.constant 0 : index
    %12 = vector.load %arg11[%c0_20, %c0_21] : memref<256x128xf32, #tpu.memory_space<vmem>>, vector<256x128xf32>
    tpu.vector_store %arg11[%c0_20, %c0_21], %11 {strides = array<i32>} : memref<256x128xf32, #tpu.memory_space<vmem>>, vector<256x128xf32>,
    %c0_22 = arith.constant 0 : index
    %c1 = arith.constant 1 : index
    %c0_23 = arith.constant 0 : index
    %13 = vector.load %arg9[%c0_22, %c1, %c0_23] : memref<18x18x128xf32, #tpu.memory_space<vmem>>, vector<16x16x128xf32>
    %14 = vector.shape_cast %13 : vector<16x16x128xf32> to vector<256x128xf32>
    %c1_24 = arith.constant 1 : index
    %c0_25 = arith.constant 0 : index
    %c0_26 = arith.constant 0 : index
    %15 = vector.load %arg2[%c1_24, %c0_25, %c0_26] : memref<9x128x128xf32, #tpu.memory_space<vmem>>, vector<1x128x128xf32>
    %16 = vector.shape_cast %15 : vector<1x128x128xf32> to vector<128x128xf32>
    %cst_27 = arith.constant dense<0.000000e+00> : vector<256x128xf32>
    %17 = tpu.matmul %14, %16, %cst_27 {dimension_numbers = #tpu.dot_dimension_numbers<[1], [0], [0], [1], [0, 0, 1, 1], [], []>} : vector<256x128xf32>, vector<128x128xf32>, vector<256x128xf32> -> vector<256x128xf32>
    %c0_28 = arith.constant 0 : index
    %c0_29 = arith.constant 0 : index
    %18 = vector.load %arg11[%c0_28, %c0_29] : memref<256x128xf32, #tpu.memory_space<vmem>>, vector<256x128xf32>
    %19 = arith.addf %18, %17 : vector<256x128xf32>
    %c0_30 = arith.constant 0 : index
    %c0_31 = arith.constant 0 : index
    %20 = vector.load %arg11[%c0_30, %c0_31] : memref<256x128xf32, #tpu.memory_space<vmem>>, vector<256x128xf32>
    tpu.vector_store %arg11[%c0_30, %c0_31], %19 {strides = array<i32>} : memref<256x128xf32, #tpu.memory_space<vmem>>, vector<256x128xf32>,
    %c0_32 = arith.constant 0 : index
    %c2 = arith.constant 2 : index
    %c0_33 = arith.constant 0 : index
    %21 = vector.load %arg9[%c0_32, %c2, %c0_33] : memref<18x18x128xf32, #tpu.memory_space<vmem>>, vector<16x16x128xf32>
    %22 = vector.shape_cast %21 : vector<16x16x128xf32> to vector<256x128xf32>
    %c2_34 = arith.constant 2 : index
    %c0_35 = arith.constant 0 : index
    %c0_36 = arith.constant 0 : index
    %23 = vector.load %arg2[%c2_34, %c0_35, %c0_36] : memref<9x128x128xf32, #tpu.memory_space<vmem>>, vector<1x128x128xf32>
    %24 = vector.shape_cast %23 : vector<1x128x128xf32> to vector<128x128xf32>
    %cst_37 = arith.constant dense<0.000000e+00> : vector<256x128xf32>
    %25 = tpu.matmul %22, %24, %cst_37 {dimension_numbers = #tpu.dot_dimension_numbers<[1], [0], [0], [1], [0, 0, 1, 1], [], []>} : vector<256x128xf32>, vector<128x128xf32>, vector<256x128xf32> -> vector<256x128xf32>
    %c0_38 = arith.constant 0 : index
    %c0_39 = arith.constant 0 : index
    %26 = vector.load %arg11[%c0_38, %c0_39] : memref<256x128xf32, #tpu.memory_space<vmem>>, vector<256x128xf32>
    %27 = arith.addf %26, %25 : vector<256x128xf32>
    %c0_40 = arith.constant 0 : index
    %c0_41 = arith.constant 0 : index
    %28 = vector.load %arg11[%c0_40, %c0_41] : memref<256x128xf32, #tpu.memory_space<vmem>>, vector<256x128xf32>
    tpu.vector_store %arg11[%c0_40, %c0_41], %27 {strides = array<i32>} : memref<256x128xf32, #tpu.memory_space<vmem>>, vector<256x128xf32>,
    %c1_42 = arith.constant 1 : index
    %c0_43 = arith.constant 0 : index
    %c0_44 = arith.constant 0 : index
    %29 = vector.load %arg9[%c1_42, %c0_43, %c0_44] : memref<18x18x128xf32, #tpu.memory_space<vmem>>, vector<16x16x128xf32>
    %30 = vector.shape_cast %29 : vector<16x16x128xf32> to vector<256x128xf32>
    %c3 = arith.constant 3 : index
    %c0_45 = arith.constant 0 : index
    %c0_46 = arith.constant 0 : index
    %31 = vector.load %arg2[%c3, %c0_45, %c0_46] : memref<9x128x128xf32, #tpu.memory_space<vmem>>, vector<1x128x128xf32>
    %32 = vector.shape_cast %31 : vector<1x128x128xf32> to vector<128x128xf32>
    %cst_47 = arith.constant dense<0.000000e+00> : vector<256x128xf32>
    %33 = tpu.matmul %30, %32, %cst_47 {dimension_numbers = #tpu.dot_dimension_numbers<[1], [0], [0], [1], [0, 0, 1, 1], [], []>} : vector<256x128xf32>, vector<128x128xf32>, vector<256x128xf32> -> vector<256x128xf32>
    %c0_48 = arith.constant 0 : index
    %c0_49 = arith.constant 0 : index
    %34 = vector.load %arg11[%c0_48, %c0_49] : memref<256x128xf32, #tpu.memory_space<vmem>>, vector<256x128xf32>
    %35 = arith.addf %34, %33 : vector<256x128xf32>
    %c0_50 = arith.constant 0 : index
    %c0_51 = arith.constant 0 : index
    %36 = vector.load %arg11[%c0_50, %c0_51] : memref<256x128xf32, #tpu.memory_space<vmem>>, vector<256x128xf32>
    tpu.vector_store %arg11[%c0_50, %c0_51], %35 {strides = array<i32>} : memref<256x128xf32, #tpu.memory_space<vmem>>, vector<256x128xf32>,
    %c1_52 = arith.constant 1 : index
    %c1_53 = arith.constant 1 : index
    %c0_54 = arith.constant 0 : index
    %37 = vector.load %arg9[%c1_52, %c1_53, %c0_54] : memref<18x18x128xf32, #tpu.memory_space<vmem>>, vector<16x16x128xf32>
    %38 = vector.shape_cast %37 : vector<16x16x128xf32> to vector<256x128xf32>
    %c4 = arith.constant 4 : index
    %c0_55 = arith.constant 0 : index
    %c0_56 = arith.constant 0 : index
    %39 = vector.load %arg2[%c4, %c0_55, %c0_56] : memref<9x128x128xf32, #tpu.memory_space<vmem>>, vector<1x128x128xf32>
    %40 = vector.shape_cast %39 : vector<1x128x128xf32> to vector<128x128xf32>
    %cst_57 = arith.constant dense<0.000000e+00> : vector<256x128xf32>
    %41 = tpu.matmul %38, %40, %cst_57 {dimension_numbers = #tpu.dot_dimension_numbers<[1], [0], [0], [1], [0, 0, 1, 1], [], []>} : vector<256x128xf32>, vector<128x128xf32>, vector<256x128xf32> -> vector<256x128xf32>
    %c0_58 = arith.constant 0 : index
    %c0_59 = arith.constant 0 : index
    %42 = vector.load %arg11[%c0_58, %c0_59] : memref<256x128xf32, #tpu.memory_space<vmem>>, vector<256x128xf32>
    %43 = arith.addf %42, %41 : vector<256x128xf32>
    %c0_60 = arith.constant 0 : index
    %c0_61 = arith.constant 0 : index
    %44 = vector.load %arg11[%c0_60, %c0_61] : memref<256x128xf32, #tpu.memory_space<vmem>>, vector<256x128xf32>
    tpu.vector_store %arg11[%c0_60, %c0_61], %43 {strides = array<i32>} : memref<256x128xf32, #tpu.memory_space<vmem>>, vector<256x128xf32>,
    %c1_62 = arith.constant 1 : index
    %c2_63 = arith.constant 2 : index
    %c0_64 = arith.constant 0 : index
    %45 = vector.load %arg9[%c1_62, %c2_63, %c0_64] : memref<18x18x128xf32, #tpu.memory_space<vmem>>, vector<16x16x128xf32>
    %46 = vector.shape_cast %45 : vector<16x16x128xf32> to vector<256x128xf32>
    %c5 = arith.constant 5 : index
    %c0_65 = arith.constant 0 : index
    %c0_66 = arith.constant 0 : index
    %47 = vector.load %arg2[%c5, %c0_65, %c0_66] : memref<9x128x128xf32, #tpu.memory_space<vmem>>, vector<1x128x128xf32>
    %48 = vector.shape_cast %47 : vector<1x128x128xf32> to vector<128x128xf32>
    %cst_67 = arith.constant dense<0.000000e+00> : vector<256x128xf32>
    %49 = tpu.matmul %46, %48, %cst_67 {dimension_numbers = #tpu.dot_dimension_numbers<[1], [0], [0], [1], [0, 0, 1, 1], [], []>} : vector<256x128xf32>, vector<128x128xf32>, vector<256x128xf32> -> vector<256x128xf32>
    %c0_68 = arith.constant 0 : index
    %c0_69 = arith.constant 0 : index
    %50 = vector.load %arg11[%c0_68, %c0_69] : memref<256x128xf32, #tpu.memory_space<vmem>>, vector<256x128xf32>
    %51 = arith.addf %50, %49 : vector<256x128xf32>
    %c0_70 = arith.constant 0 : index
    %c0_71 = arith.constant 0 : index
    %52 = vector.load %arg11[%c0_70, %c0_71] : memref<256x128xf32, #tpu.memory_space<vmem>>, vector<256x128xf32>
    tpu.vector_store %arg11[%c0_70, %c0_71], %51 {strides = array<i32>} : memref<256x128xf32, #tpu.memory_space<vmem>>, vector<256x128xf32>,
    %c2_72 = arith.constant 2 : index
    %c0_73 = arith.constant 0 : index
    %c0_74 = arith.constant 0 : index
    %53 = vector.load %arg9[%c2_72, %c0_73, %c0_74] : memref<18x18x128xf32, #tpu.memory_space<vmem>>, vector<16x16x128xf32>
    %54 = vector.shape_cast %53 : vector<16x16x128xf32> to vector<256x128xf32>
    %c6 = arith.constant 6 : index
    %c0_75 = arith.constant 0 : index
    %c0_76 = arith.constant 0 : index
    %55 = vector.load %arg2[%c6, %c0_75, %c0_76] : memref<9x128x128xf32, #tpu.memory_space<vmem>>, vector<1x128x128xf32>
    %56 = vector.shape_cast %55 : vector<1x128x128xf32> to vector<128x128xf32>
    %cst_77 = arith.constant dense<0.000000e+00> : vector<256x128xf32>
    %57 = tpu.matmul %54, %56, %cst_77 {dimension_numbers = #tpu.dot_dimension_numbers<[1], [0], [0], [1], [0, 0, 1, 1], [], []>} : vector<256x128xf32>, vector<128x128xf32>, vector<256x128xf32> -> vector<256x128xf32>
    %c0_78 = arith.constant 0 : index
    %c0_79 = arith.constant 0 : index
    %58 = vector.load %arg11[%c0_78, %c0_79] : memref<256x128xf32, #tpu.memory_space<vmem>>, vector<256x128xf32>
    %59 = arith.addf %58, %57 : vector<256x128xf32>
    %c0_80 = arith.constant 0 : index
    %c0_81 = arith.constant 0 : index
    %60 = vector.load %arg11[%c0_80, %c0_81] : memref<256x128xf32, #tpu.memory_space<vmem>>, vector<256x128xf32>
    tpu.vector_store %arg11[%c0_80, %c0_81], %59 {strides = array<i32>} : memref<256x128xf32, #tpu.memory_space<vmem>>, vector<256x128xf32>,
    %c2_82 = arith.constant 2 : index
    %c1_83 = arith.constant 1 : index
    %c0_84 = arith.constant 0 : index
    %61 = vector.load %arg9[%c2_82, %c1_83, %c0_84] : memref<18x18x128xf32, #tpu.memory_space<vmem>>, vector<16x16x128xf32>
    %62 = vector.shape_cast %61 : vector<16x16x128xf32> to vector<256x128xf32>
    %c7 = arith.constant 7 : index
    %c0_85 = arith.constant 0 : index
    %c0_86 = arith.constant 0 : index
    %63 = vector.load %arg2[%c7, %c0_85, %c0_86] : memref<9x128x128xf32, #tpu.memory_space<vmem>>, vector<1x128x128xf32>
    %64 = vector.shape_cast %63 : vector<1x128x128xf32> to vector<128x128xf32>
    %cst_87 = arith.constant dense<0.000000e+00> : vector<256x128xf32>
    %65 = tpu.matmul %62, %64, %cst_87 {dimension_numbers = #tpu.dot_dimension_numbers<[1], [0], [0], [1], [0, 0, 1, 1], [], []>} : vector<256x128xf32>, vector<128x128xf32>, vector<256x128xf32> -> vector<256x128xf32>
    %c0_88 = arith.constant 0 : index
    %c0_89 = arith.constant 0 : index
    %66 = vector.load %arg11[%c0_88, %c0_89] : memref<256x128xf32, #tpu.memory_space<vmem>>, vector<256x128xf32>
    %67 = arith.addf %66, %65 : vector<256x128xf32>
    %c0_90 = arith.constant 0 : index
    %c0_91 = arith.constant 0 : index
    %68 = vector.load %arg11[%c0_90, %c0_91] : memref<256x128xf32, #tpu.memory_space<vmem>>, vector<256x128xf32>
    tpu.vector_store %arg11[%c0_90, %c0_91], %67 {strides = array<i32>} : memref<256x128xf32, #tpu.memory_space<vmem>>, vector<256x128xf32>,
    %c2_92 = arith.constant 2 : index
    %c2_93 = arith.constant 2 : index
    %c0_94 = arith.constant 0 : index
    %69 = vector.load %arg9[%c2_92, %c2_93, %c0_94] : memref<18x18x128xf32, #tpu.memory_space<vmem>>, vector<16x16x128xf32>
    %70 = vector.shape_cast %69 : vector<16x16x128xf32> to vector<256x128xf32>
    %c8 = arith.constant 8 : index
    %c0_95 = arith.constant 0 : index
    %c0_96 = arith.constant 0 : index
    %71 = vector.load %arg2[%c8, %c0_95, %c0_96] : memref<9x128x128xf32, #tpu.memory_space<vmem>>, vector<1x128x128xf32>
    %72 = vector.shape_cast %71 : vector<1x128x128xf32> to vector<128x128xf32>
    %cst_97 = arith.constant dense<0.000000e+00> : vector<256x128xf32>
    %73 = tpu.matmul %70, %72, %cst_97 {dimension_numbers = #tpu.dot_dimension_numbers<[1], [0], [0], [1], [0, 0, 1, 1], [], []>} : vector<256x128xf32>, vector<128x128xf32>, vector<256x128xf32> -> vector<256x128xf32>
    %c0_98 = arith.constant 0 : index
    %c0_99 = arith.constant 0 : index
    %74 = vector.load %arg11[%c0_98, %c0_99] : memref<256x128xf32, #tpu.memory_space<vmem>>, vector<256x128xf32>
    %75 = arith.addf %74, %73 : vector<256x128xf32>
    %c0_100 = arith.constant 0 : index
    %c0_101 = arith.constant 0 : index
    %76 = vector.load %arg11[%c0_100, %c0_101] : memref<256x128xf32, #tpu.memory_space<vmem>>, vector<256x128xf32>
    tpu.vector_store %arg11[%c0_100, %c0_101], %75 {strides = array<i32>} : memref<256x128xf32, #tpu.memory_space<vmem>>, vector<256x128xf32>,
    %c0_102 = arith.constant 0 : index
    %c0_103 = arith.constant 0 : index
    %77 = vector.load %arg11[%c0_102, %c0_103] : memref<256x128xf32, #tpu.memory_space<vmem>>, vector<256x128xf32>
    %c0_104 = arith.constant 0 : index
    %c0_105 = arith.constant 0 : index
    %78 = vector.load %arg3[%c0_104, %c0_105] : memref<1x128xf32, #tpu.memory_space<vmem>>, vector<1x128xf32>
    %79 = vector.broadcast %78 : vector<1x128xf32> to vector<256x128xf32>
    %80 = arith.mulf %77, %79 : vector<256x128xf32>
    %c0_106 = arith.constant 0 : index
    %c0_107 = arith.constant 0 : index
    %81 = vector.load %arg4[%c0_106, %c0_107] : memref<1x128xf32, #tpu.memory_space<vmem>>, vector<1x128xf32>
    %82 = vector.broadcast %81 : vector<1x128xf32> to vector<256x128xf32>
    %83 = arith.addf %80, %82 : vector<256x128xf32>
    %cst_108 = arith.constant 0.000000e+00 : f32
    %84 = vector.broadcast %cst_108 : f32 to vector<256x128xf32>
    %85 = arith.maximumf %83, %84 : vector<256x128xf32>
    %86 = vector.shape_cast %85 : vector<256x128xf32> to vector<16x16x128xf32>
    %c1_109 = arith.constant 1 : index
    %c1_110 = arith.constant 1 : index
    %c0_111 = arith.constant 0 : index
    %87 = vector.load %arg10[%c1_109, %c1_110, %c0_111] : memref<18x18x128xf32, #tpu.memory_space<vmem>>, vector<16x16x128xf32>
    tpu.vector_store %arg10[%c1_109, %c1_110, %c0_111], %86 {strides = array<i32>} : memref<18x18x128xf32, #tpu.memory_space<vmem>>, vector<16x16x128xf32>,
    %c0_112 = arith.constant 0 : index
    %c0_113 = arith.constant 0 : index
    %c0_114 = arith.constant 0 : index
    %88 = vector.load %arg10[%c0_112, %c0_113, %c0_114] : memref<18x18x128xf32, #tpu.memory_space<vmem>>, vector<16x16x128xf32>
    %89 = vector.shape_cast %88 : vector<16x16x128xf32> to vector<256x128xf32>
    %c0_115 = arith.constant 0 : index
    %c0_116 = arith.constant 0 : index
    %c0_117 = arith.constant 0 : index
    %90 = vector.load %arg5[%c0_115, %c0_116, %c0_117] : memref<9x128x128xf32, #tpu.memory_space<vmem>>, vector<1x128x128xf32>
    %91 = vector.shape_cast %90 : vector<1x128x128xf32> to vector<128x128xf32>
    %cst_118 = arith.constant dense<0.000000e+00> : vector<256x128xf32>
    %92 = tpu.matmul %89, %91, %cst_118 {dimension_numbers = #tpu.dot_dimension_numbers<[1], [0], [0], [1], [0, 0, 1, 1], [], []>} : vector<256x128xf32>, vector<128x128xf32>, vector<256x128xf32> -> vector<256x128xf32>
    %c0_119 = arith.constant 0 : index
    %c0_120 = arith.constant 0 : index
    %93 = vector.load %arg11[%c0_119, %c0_120] : memref<256x128xf32, #tpu.memory_space<vmem>>, vector<256x128xf32>
    tpu.vector_store %arg11[%c0_119, %c0_120], %92 {strides = array<i32>} : memref<256x128xf32, #tpu.memory_space<vmem>>, vector<256x128xf32>,
    %c0_121 = arith.constant 0 : index
    %c1_122 = arith.constant 1 : index
    %c0_123 = arith.constant 0 : index
    %94 = vector.load %arg10[%c0_121, %c1_122, %c0_123] : memref<18x18x128xf32, #tpu.memory_space<vmem>>, vector<16x16x128xf32>
    %95 = vector.shape_cast %94 : vector<16x16x128xf32> to vector<256x128xf32>
    %c1_124 = arith.constant 1 : index
    %c0_125 = arith.constant 0 : index
    %c0_126 = arith.constant 0 : index
    %96 = vector.load %arg5[%c1_124, %c0_125, %c0_126] : memref<9x128x128xf32, #tpu.memory_space<vmem>>, vector<1x128x128xf32>
    %97 = vector.shape_cast %96 : vector<1x128x128xf32> to vector<128x128xf32>
    %cst_127 = arith.constant dense<0.000000e+00> : vector<256x128xf32>
    %98 = tpu.matmul %95, %97, %cst_127 {dimension_numbers = #tpu.dot_dimension_numbers<[1], [0], [0], [1], [0, 0, 1, 1], [], []>} : vector<256x128xf32>, vector<128x128xf32>, vector<256x128xf32> -> vector<256x128xf32>
    %c0_128 = arith.constant 0 : index
    %c0_129 = arith.constant 0 : index
    %99 = vector.load %arg11[%c0_128, %c0_129] : memref<256x128xf32, #tpu.memory_space<vmem>>, vector<256x128xf32>
    %100 = arith.addf %99, %98 : vector<256x128xf32>
    %c0_130 = arith.constant 0 : index
    %c0_131 = arith.constant 0 : index
    %101 = vector.load %arg11[%c0_130, %c0_131] : memref<256x128xf32, #tpu.memory_space<vmem>>, vector<256x128xf32>
    tpu.vector_store %arg11[%c0_130, %c0_131], %100 {strides = array<i32>} : memref<256x128xf32, #tpu.memory_space<vmem>>, vector<256x128xf32>,
    %c0_132 = arith.constant 0 : index
    %c2_133 = arith.constant 2 : index
    %c0_134 = arith.constant 0 : index
    %102 = vector.load %arg10[%c0_132, %c2_133, %c0_134] : memref<18x18x128xf32, #tpu.memory_space<vmem>>, vector<16x16x128xf32>
    %103 = vector.shape_cast %102 : vector<16x16x128xf32> to vector<256x128xf32>
    %c2_135 = arith.constant 2 : index
    %c0_136 = arith.constant 0 : index
    %c0_137 = arith.constant 0 : index
    %104 = vector.load %arg5[%c2_135, %c0_136, %c0_137] : memref<9x128x128xf32, #tpu.memory_space<vmem>>, vector<1x128x128xf32>
    %105 = vector.shape_cast %104 : vector<1x128x128xf32> to vector<128x128xf32>
    %cst_138 = arith.constant dense<0.000000e+00> : vector<256x128xf32>
    %106 = tpu.matmul %103, %105, %cst_138 {dimension_numbers = #tpu.dot_dimension_numbers<[1], [0], [0], [1], [0, 0, 1, 1], [], []>} : vector<256x128xf32>, vector<128x128xf32>, vector<256x128xf32> -> vector<256x128xf32>
    %c0_139 = arith.constant 0 : index
    %c0_140 = arith.constant 0 : index
    %107 = vector.load %arg11[%c0_139, %c0_140] : memref<256x128xf32, #tpu.memory_space<vmem>>, vector<256x128xf32>
    %108 = arith.addf %107, %106 : vector<256x128xf32>
    %c0_141 = arith.constant 0 : index
    %c0_142 = arith.constant 0 : index
    %109 = vector.load %arg11[%c0_141, %c0_142] : memref<256x128xf32, #tpu.memory_space<vmem>>, vector<256x128xf32>
    tpu.vector_store %arg11[%c0_141, %c0_142], %108 {strides = array<i32>} : memref<256x128xf32, #tpu.memory_space<vmem>>, vector<256x128xf32>,
    %c1_143 = arith.constant 1 : index
    %c0_144 = arith.constant 0 : index
    %c0_145 = arith.constant 0 : index
    %110 = vector.load %arg10[%c1_143, %c0_144, %c0_145] : memref<18x18x128xf32, #tpu.memory_space<vmem>>, vector<16x16x128xf32>
    %111 = vector.shape_cast %110 : vector<16x16x128xf32> to vector<256x128xf32>
    %c3_146 = arith.constant 3 : index
    %c0_147 = arith.constant 0 : index
    %c0_148 = arith.constant 0 : index
    %112 = vector.load %arg5[%c3_146, %c0_147, %c0_148] : memref<9x128x128xf32, #tpu.memory_space<vmem>>, vector<1x128x128xf32>
    %113 = vector.shape_cast %112 : vector<1x128x128xf32> to vector<128x128xf32>
    %cst_149 = arith.constant dense<0.000000e+00> : vector<256x128xf32>
    %114 = tpu.matmul %111, %113, %cst_149 {dimension_numbers = #tpu.dot_dimension_numbers<[1], [0], [0], [1], [0, 0, 1, 1], [], []>} : vector<256x128xf32>, vector<128x128xf32>, vector<256x128xf32> -> vector<256x128xf32>
    %c0_150 = arith.constant 0 : index
    %c0_151 = arith.constant 0 : index
    %115 = vector.load %arg11[%c0_150, %c0_151] : memref<256x128xf32, #tpu.memory_space<vmem>>, vector<256x128xf32>
    %116 = arith.addf %115, %114 : vector<256x128xf32>
    %c0_152 = arith.constant 0 : index
    %c0_153 = arith.constant 0 : index
    %117 = vector.load %arg11[%c0_152, %c0_153] : memref<256x128xf32, #tpu.memory_space<vmem>>, vector<256x128xf32>
    tpu.vector_store %arg11[%c0_152, %c0_153], %116 {strides = array<i32>} : memref<256x128xf32, #tpu.memory_space<vmem>>, vector<256x128xf32>,
    %c1_154 = arith.constant 1 : index
    %c1_155 = arith.constant 1 : index
    %c0_156 = arith.constant 0 : index
    %118 = vector.load %arg10[%c1_154, %c1_155, %c0_156] : memref<18x18x128xf32, #tpu.memory_space<vmem>>, vector<16x16x128xf32>
    %119 = vector.shape_cast %118 : vector<16x16x128xf32> to vector<256x128xf32>
    %c4_157 = arith.constant 4 : index
    %c0_158 = arith.constant 0 : index
    %c0_159 = arith.constant 0 : index
    %120 = vector.load %arg5[%c4_157, %c0_158, %c0_159] : memref<9x128x128xf32, #tpu.memory_space<vmem>>, vector<1x128x128xf32>
    %121 = vector.shape_cast %120 : vector<1x128x128xf32> to vector<128x128xf32>
    %cst_160 = arith.constant dense<0.000000e+00> : vector<256x128xf32>
    %122 = tpu.matmul %119, %121, %cst_160 {dimension_numbers = #tpu.dot_dimension_numbers<[1], [0], [0], [1], [0, 0, 1, 1], [], []>} : vector<256x128xf32>, vector<128x128xf32>, vector<256x128xf32> -> vector<256x128xf32>
    %c0_161 = arith.constant 0 : index
    %c0_162 = arith.constant 0 : index
    %123 = vector.load %arg11[%c0_161, %c0_162] : memref<256x128xf32, #tpu.memory_space<vmem>>, vector<256x128xf32>
    %124 = arith.addf %123, %122 : vector<256x128xf32>
    %c0_163 = arith.constant 0 : index
    %c0_164 = arith.constant 0 : index
    %125 = vector.load %arg11[%c0_163, %c0_164] : memref<256x128xf32, #tpu.memory_space<vmem>>, vector<256x128xf32>
    tpu.vector_store %arg11[%c0_163, %c0_164], %124 {strides = array<i32>} : memref<256x128xf32, #tpu.memory_space<vmem>>, vector<256x128xf32>,
    %c1_165 = arith.constant 1 : index
    %c2_166 = arith.constant 2 : index
    %c0_167 = arith.constant 0 : index
    %126 = vector.load %arg10[%c1_165, %c2_166, %c0_167] : memref<18x18x128xf32, #tpu.memory_space<vmem>>, vector<16x16x128xf32>
    %127 = vector.shape_cast %126 : vector<16x16x128xf32> to vector<256x128xf32>
    %c5_168 = arith.constant 5 : index
    %c0_169 = arith.constant 0 : index
    %c0_170 = arith.constant 0 : index
    %128 = vector.load %arg5[%c5_168, %c0_169, %c0_170] : memref<9x128x128xf32, #tpu.memory_space<vmem>>, vector<1x128x128xf32>
    %129 = vector.shape_cast %128 : vector<1x128x128xf32> to vector<128x128xf32>
    %cst_171 = arith.constant dense<0.000000e+00> : vector<256x128xf32>
    %130 = tpu.matmul %127, %129, %cst_171 {dimension_numbers = #tpu.dot_dimension_numbers<[1], [0], [0], [1], [0, 0, 1, 1], [], []>} : vector<256x128xf32>, vector<128x128xf32>, vector<256x128xf32> -> vector<256x128xf32>
    %c0_172 = arith.constant 0 : index
    %c0_173 = arith.constant 0 : index
    %131 = vector.load %arg11[%c0_172, %c0_173] : memref<256x128xf32, #tpu.memory_space<vmem>>, vector<256x128xf32>
    %132 = arith.addf %131, %130 : vector<256x128xf32>
    %c0_174 = arith.constant 0 : index
    %c0_175 = arith.constant 0 : index
    %133 = vector.load %arg11[%c0_174, %c0_175] : memref<256x128xf32, #tpu.memory_space<vmem>>, vector<256x128xf32>
    tpu.vector_store %arg11[%c0_174, %c0_175], %132 {strides = array<i32>} : memref<256x128xf32, #tpu.memory_space<vmem>>, vector<256x128xf32>,
    %c2_176 = arith.constant 2 : index
    %c0_177 = arith.constant 0 : index
    %c0_178 = arith.constant 0 : index
    %134 = vector.load %arg10[%c2_176, %c0_177, %c0_178] : memref<18x18x128xf32, #tpu.memory_space<vmem>>, vector<16x16x128xf32>
    %135 = vector.shape_cast %134 : vector<16x16x128xf32> to vector<256x128xf32>
    %c6_179 = arith.constant 6 : index
    %c0_180 = arith.constant 0 : index
    %c0_181 = arith.constant 0 : index
    %136 = vector.load %arg5[%c6_179, %c0_180, %c0_181] : memref<9x128x128xf32, #tpu.memory_space<vmem>>, vector<1x128x128xf32>
    %137 = vector.shape_cast %136 : vector<1x128x128xf32> to vector<128x128xf32>
    %cst_182 = arith.constant dense<0.000000e+00> : vector<256x128xf32>
    %138 = tpu.matmul %135, %137, %cst_182 {dimension_numbers = #tpu.dot_dimension_numbers<[1], [0], [0], [1], [0, 0, 1, 1], [], []>} : vector<256x128xf32>, vector<128x128xf32>, vector<256x128xf32> -> vector<256x128xf32>
    %c0_183 = arith.constant 0 : index
    %c0_184 = arith.constant 0 : index
    %139 = vector.load %arg11[%c0_183, %c0_184] : memref<256x128xf32, #tpu.memory_space<vmem>>, vector<256x128xf32>
    %140 = arith.addf %139, %138 : vector<256x128xf32>
    %c0_185 = arith.constant 0 : index
    %c0_186 = arith.constant 0 : index
    %141 = vector.load %arg11[%c0_185, %c0_186] : memref<256x128xf32, #tpu.memory_space<vmem>>, vector<256x128xf32>
    tpu.vector_store %arg11[%c0_185, %c0_186], %140 {strides = array<i32>} : memref<256x128xf32, #tpu.memory_space<vmem>>, vector<256x128xf32>,
    %c2_187 = arith.constant 2 : index
    %c1_188 = arith.constant 1 : index
    %c0_189 = arith.constant 0 : index
    %142 = vector.load %arg10[%c2_187, %c1_188, %c0_189] : memref<18x18x128xf32, #tpu.memory_space<vmem>>, vector<16x16x128xf32>
    %143 = vector.shape_cast %142 : vector<16x16x128xf32> to vector<256x128xf32>
    %c7_190 = arith.constant 7 : index
    %c0_191 = arith.constant 0 : index
    %c0_192 = arith.constant 0 : index
    %144 = vector.load %arg5[%c7_190, %c0_191, %c0_192] : memref<9x128x128xf32, #tpu.memory_space<vmem>>, vector<1x128x128xf32>
    %145 = vector.shape_cast %144 : vector<1x128x128xf32> to vector<128x128xf32>
    %cst_193 = arith.constant dense<0.000000e+00> : vector<256x128xf32>
    %146 = tpu.matmul %143, %145, %cst_193 {dimension_numbers = #tpu.dot_dimension_numbers<[1], [0], [0], [1], [0, 0, 1, 1], [], []>} : vector<256x128xf32>, vector<128x128xf32>, vector<256x128xf32> -> vector<256x128xf32>
    %c0_194 = arith.constant 0 : index
    %c0_195 = arith.constant 0 : index
    %147 = vector.load %arg11[%c0_194, %c0_195] : memref<256x128xf32, #tpu.memory_space<vmem>>, vector<256x128xf32>
    %148 = arith.addf %147, %146 : vector<256x128xf32>
    %c0_196 = arith.constant 0 : index
    %c0_197 = arith.constant 0 : index
    %149 = vector.load %arg11[%c0_196, %c0_197] : memref<256x128xf32, #tpu.memory_space<vmem>>, vector<256x128xf32>
    tpu.vector_store %arg11[%c0_196, %c0_197], %148 {strides = array<i32>} : memref<256x128xf32, #tpu.memory_space<vmem>>, vector<256x128xf32>,
    %c2_198 = arith.constant 2 : index
    %c2_199 = arith.constant 2 : index
    %c0_200 = arith.constant 0 : index
    %150 = vector.load %arg10[%c2_198, %c2_199, %c0_200] : memref<18x18x128xf32, #tpu.memory_space<vmem>>, vector<16x16x128xf32>
    %151 = vector.shape_cast %150 : vector<16x16x128xf32> to vector<256x128xf32>
    %c8_201 = arith.constant 8 : index
    %c0_202 = arith.constant 0 : index
    %c0_203 = arith.constant 0 : index
    %152 = vector.load %arg5[%c8_201, %c0_202, %c0_203] : memref<9x128x128xf32, #tpu.memory_space<vmem>>, vector<1x128x128xf32>
    %153 = vector.shape_cast %152 : vector<1x128x128xf32> to vector<128x128xf32>
    %cst_204 = arith.constant dense<0.000000e+00> : vector<256x128xf32>
    %154 = tpu.matmul %151, %153, %cst_204 {dimension_numbers = #tpu.dot_dimension_numbers<[1], [0], [0], [1], [0, 0, 1, 1], [], []>} : vector<256x128xf32>, vector<128x128xf32>, vector<256x128xf32> -> vector<256x128xf32>
    %c0_205 = arith.constant 0 : index
    %c0_206 = arith.constant 0 : index
    %155 = vector.load %arg11[%c0_205, %c0_206] : memref<256x128xf32, #tpu.memory_space<vmem>>, vector<256x128xf32>
    %156 = arith.addf %155, %154 : vector<256x128xf32>
    %c0_207 = arith.constant 0 : index
    %c0_208 = arith.constant 0 : index
    %157 = vector.load %arg11[%c0_207, %c0_208] : memref<256x128xf32, #tpu.memory_space<vmem>>, vector<256x128xf32>
    tpu.vector_store %arg11[%c0_207, %c0_208], %156 {strides = array<i32>} : memref<256x128xf32, #tpu.memory_space<vmem>>, vector<256x128xf32>,
    %c0_209 = arith.constant 0 : index
    %c0_210 = arith.constant 0 : index
    %158 = vector.load %arg11[%c0_209, %c0_210] : memref<256x128xf32, #tpu.memory_space<vmem>>, vector<256x128xf32>
    %c0_211 = arith.constant 0 : index
    %c0_212 = arith.constant 0 : index
    %159 = vector.load %arg6[%c0_211, %c0_212] : memref<1x128xf32, #tpu.memory_space<vmem>>, vector<1x128xf32>
    %160 = vector.broadcast %159 : vector<1x128xf32> to vector<256x128xf32>
    %161 = arith.mulf %158, %160 : vector<256x128xf32>
    %c0_213 = arith.constant 0 : index
    %c0_214 = arith.constant 0 : index
    %162 = vector.load %arg7[%c0_213, %c0_214] : memref<1x128xf32, #tpu.memory_space<vmem>>, vector<1x128xf32>
    %163 = vector.broadcast %162 : vector<1x128xf32> to vector<256x128xf32>
    %164 = arith.addf %161, %163 : vector<256x128xf32>
    %cst_215 = arith.constant 0.000000e+00 : f32
    %165 = vector.broadcast %cst_215 : f32 to vector<256x128xf32>
    %166 = arith.maximumf %164, %165 : vector<256x128xf32>
    %167 = vector.shape_cast %166 : vector<256x128xf32> to vector<16x16x128xf32>
    %168 = vector.extract_strided_slice %167 {offsets = [0, 0, 0], sizes = [16, 16, 8], strides = [1, 1, 1]} : vector<16x16x128xf32> to vector<16x16x8xf32>
    %c0_216 = arith.constant 0 : index
    %c0_217 = arith.constant 0 : index
    %c0_218 = arith.constant 0 : index
    %c0_219 = arith.constant 0 : index
    %169 = vector.load %arg8[%c0_216, %c0_217, %c0_218, %c0_219] : memref<1x16x16x8xf32, #tpu.memory_space<vmem>>, vector<1x16x16x8xf32>
    %170 = vector.shape_cast %169 : vector<1x16x16x8xf32> to vector<16x16x8xf32>
    %171 = vector.shape_cast %168 : vector<16x16x8xf32> to vector<1x16x16x8xf32>
    tpu.vector_store %arg8[%c0_216, %c0_217, %c0_218, %c0_219], %171 {strides = array<i32>} : memref<1x16x16x8xf32, #tpu.memory_space<vmem>>, vector<1x16x16x8xf32>,
    return
  }
  func.func @transform_0(%arg0: i32) -> (i32, i32, i32, i32) {
    %c0_i32 = arith.constant 0 : i32
    %c0_i32_0 = arith.constant 0 : i32
    %c0_i32_1 = arith.constant 0 : i32
    %c0_i32_2 = arith.constant 0 : i32
    return %arg0, %c0_i32, %c0_i32_0, %c0_i32_1 : i32, i32, i32, i32
  }
  func.func @transform_1(%arg0: i32) -> (i32, i32, i32) {
    %c0_i32 = arith.constant 0 : i32
    %c0_i32_0 = arith.constant 0 : i32
    %c0_i32_1 = arith.constant 0 : i32
    %c0_i32_2 = arith.constant 0 : i32
    return %c0_i32, %c0_i32_0, %c0_i32_1 : i32, i32, i32
  }
  func.func @transform_2(%arg0: i32) -> (i32, i32) {
    %c0_i32 = arith.constant 0 : i32
    %c0_i32_0 = arith.constant 0 : i32
    %c0_i32_1 = arith.constant 0 : i32
    return %c0_i32, %c0_i32_0 : i32, i32
  }
  func.func @transform_3(%arg0: i32) -> (i32, i32) {
    %c0_i32 = arith.constant 0 : i32
    %c0_i32_0 = arith.constant 0 : i32
    %c0_i32_1 = arith.constant 0 : i32
    return %c0_i32, %c0_i32_0 : i32, i32
  }
  func.func @transform_4(%arg0: i32) -> (i32, i32, i32) {
    %c0_i32 = arith.constant 0 : i32
    %c0_i32_0 = arith.constant 0 : i32
    %c0_i32_1 = arith.constant 0 : i32
    %c0_i32_2 = arith.constant 0 : i32
    return %c0_i32, %c0_i32_0, %c0_i32_1 : i32, i32, i32
  }
  func.func @transform_5(%arg0: i32) -> (i32, i32) {
    %c0_i32 = arith.constant 0 : i32
    %c0_i32_0 = arith.constant 0 : i32
    %c0_i32_1 = arith.constant 0 : i32
    return %c0_i32, %c0_i32_0 : i32, i32
  }
  func.func @transform_6(%arg0: i32) -> (i32, i32) {
    %c0_i32 = arith.constant 0 : i32
    %c0_i32_0 = arith.constant 0 : i32
    %c0_i32_1 = arith.constant 0 : i32
    return %c0_i32, %c0_i32_0 : i32, i32
  }
  func.func @transform_7(%arg0: i32) -> (i32, i32, i32, i32) {
    %c0_i32 = arith.constant 0 : i32
    %c0_i32_0 = arith.constant 0 : i32
    %c0_i32_1 = arith.constant 0 : i32
    %c0_i32_2 = arith.constant 0 : i32
    return %arg0, %c0_i32, %c0_i32_0, %c0_i32_1 : i32, i32, i32, i32
  }
}

</mosaic_0001>

<llo_original>
// kernel: tpu_custom_call.1
$region0: #{tpu_custom_call.1}
  #allocation0 [shape = 'u32[]', space=smem, size = 0x4, offset = 0x4, fixed_abs, tag = 'smem constant byte address 0x4 - core index']
  #allocation1 [shape = 'u32[144,128]{1,0:T(1,128)}', space=vmem, size = 0x12000, scoped, tag = 'internal scratch']
  #allocation2 [shape = 'f32[18,18,128]{2,1,0:T(8,128)}', space=vmem, size = 0x36000, scoped, tag = 'scratch operand']
  #allocation3 [shape = 'f32[18,18,128]{2,1,0:T(8,128)}', space=vmem, size = 0x36000, scoped, tag = 'scratch operand']
  #allocation4 [shape = 'f32[256,128]{1,0:T(8,128)}', space=vmem, size = 0x20000, scoped, tag = 'scratch operand']
  %s0 = inlined_call_operand.vmem [shape: f32[2,18,18,4], index: 0, kind: input, shape index: {}]
  %s1 = inlined_call_operand.hbm [shape: f32[9,128,128], index: 1, kind: input, shape index: {}]
  %s2 = inlined_call_operand.vmem [shape: f32[1,128], index: 2, kind: input, shape index: {}]
  %s3 = inlined_call_operand.vmem [shape: f32[1,128], index: 3, kind: input, shape index: {}]
  %s4 = inlined_call_operand.hbm [shape: f32[9,128,128], index: 4, kind: input, shape index: {}]
  %s5 = inlined_call_operand.vmem [shape: f32[1,128], index: 5, kind: input, shape index: {}]
  %s6 = inlined_call_operand.vmem [shape: f32[1,128], index: 6, kind: input, shape index: {}]
  %s7 = inlined_call_operand.vmem [shape: f32[2,16,16,8], index: 7, kind: output, shape index: {}]
  %s8 = sld [smem:[#allocation0]]
  $region69: #{tpu_custom_call.1} parent=0
    _
  %s10 = ssub.s32 1, %s8
  %s11 = scalar_select 0, %s10, %s8
  $region1: #{tpu_custom_call.1} parent=0
    #allocation5 [shape = 'u8[589824]{0}', space=vmem, size = 0x90000, scoped, tag = 'input window, operand 1, single buffered']
    #allocation6 [shape = 's32[2]{0}', space=sflag, size = 0x8, scoped, tag = 'scoped memory for tpu_custom_call.1']
    #allocation7 [shape = 'u8[589824]{0}', space=vmem, size = 0x90000, scoped, tag = 'input window, operand 4, single buffered']
    #allocation8 [shape = 's32[1]{0}', space=sflag, size = 0x4, scoped, tag = 'scoped memory for tpu_custom_call.1']
    %12 = vsyncpa [#allocation6], 0
    %13 = vsyncpa [#allocation8], 0
    loop: start=0, step=1, limit=4
    $region2: #{tpu_custom_call.1} parent=1 // loop_pre_header
      _
    $region3: #{tpu_custom_call.1} parent=1 // loop_header
      %s15 = sphi 0, %s19
      %p16 = scmp.ge.s32.totalorder %s15, 4
      %s25 = sphi 0, %s27
      %s28 = sphi 0, %s25
      %s29 = sphi 0, %s28
      %s45 = sphi 0, %s29
      %s49 = sphi 0, %s49
      %s51 = sphi 0, %s49
      %s52 = sphi 0, %s51
      %s66 = sphi 0, %s52
      %s70 = sphi 0, %s70
      %s72 = sphi 0, %s70
      %s73 = sphi 0, %s72
      %s87 = sphi 0, %s73
      %s91 = sphi 0, %s91
      %s93 = sphi 0, %s91
      %s94 = sphi 0, %s93
      %s108 = sphi 0, %s94
      %s112 = sphi 0, %s112
      %s114 = sphi 0, %s112
      %s115 = sphi 0, %s114
      %s129 = sphi 0, %s115
      %s133 = sphi 0, %s133
      %s135 = sphi 0, %s133
      %s136 = sphi 0, %s135
      %s150 = sphi 0, %s136
      %s154 = sphi 0, %s154
      %s156 = sphi 0, %s154
      %s157 = sphi 0, %s156
      %s171 = sphi 0, %s157
      %s177 = sphi 0, %s179
      %s180 = sphi 0, %s177
      %s181 = sphi 0, %s180
      %s197 = sphi 0, %s181
    $region4: #{tpu_custom_call.1} parent=1 // loop_header_branch
      %18 = sbr.rel (%p16) target = $region8
    $region5: #{tpu_custom_call.1} parent=1 // loop_body
      %s20 = ssub.s32 %s15, 1
      %s21 = ssub.s32 %s15, 2
      %s22 = sadd.s32 %s15, 1
      %s23 = ssub.s32 %s15, %s22
      %p24 = scmp.eq.s32.totalorder %s23, 0
      %s26 = sadd.s32 %s25, 1
      %s27 = scalar_select %p24, %s25, %s26
      %p30 = pneg %p24
      %p31 = scmp.eq.s32.totalorder %s15, 1
      %p32 = por %p30, %p31
      %p33 = scmp.ne.s32.totalorder %s25, %s28
      %p34 = scmp.eq.s32.totalorder %s15, 0
      %p35 = por %p33, %p34
      %p36 = scmp.ne.s32.totalorder %s25, %s28
      %p37 = scmp.eq.s32.totalorder %s20, 1
      %p38 = por %p36, %p37
      %p39 = scmp.ne.s32.totalorder %s28, %s29
      %p40 = scmp.eq.s32.totalorder %s20, 0
      %p41 = por %p39, %p40
      %p42 = scmp.ne.s32.totalorder %s28, %s29
      %p43 = scmp.eq.s32.totalorder %s21, 1
      %p44 = por %p42, %p43
      %p46 = scmp.ne.s32.totalorder %s29, %s45
      %p47 = scmp.eq.s32.totalorder %s21, 0
      %p48 = por %p46, %p47
      %s50 = sadd.s32 %s49, 1
      %p53 = scmp.eq.s32.totalorder %s15, 1
      %p54 = scmp.ne.s32.totalorder %s49, %s51
      %p55 = scmp.eq.s32.totalorder %s15, 0
      %p56 = por %p54, %p55
      %p57 = scmp.ne.s32.totalorder %s49, %s51
      %p58 = scmp.eq.s32.totalorder %s20, 1
      %p59 = por %p57, %p58
      %p60 = scmp.ne.s32.totalorder %s51, %s52
      %p61 = scmp.eq.s32.totalorder %s20, 0
      %p62 = por %p60, %p61
      %p63 = scmp.ne.s32.totalorder %s51, %s52
      %p64 = scmp.eq.s32.totalorder %s21, 1
      %p65 = por %p63, %p64
      %p67 = scmp.ne.s32.totalorder %s52, %s66
      %p68 = scmp.eq.s32.totalorder %s21, 0
      %p69 = por %p67, %p68
      %s71 = sadd.s32 %s70, 1
      %p74 = scmp.eq.s32.totalorder %s15, 1
      %p75 = scmp.ne.s32.totalorder %s70, %s72
      %p76 = scmp.eq.s32.totalorder %s15, 0
      %p77 = por %p75, %p76
      %p78 = scmp.ne.s32.totalorder %s70, %s72
      %p79 = scmp.eq.s32.totalorder %s20, 1
      %p80 = por %p78, %p79
      %p81 = scmp.ne.s32.totalorder %s72, %s73
      %p82 = scmp.eq.s32.totalorder %s20, 0
      %p83 = por %p81, %p82
      %p84 = scmp.ne.s32.totalorder %s72, %s73
      %p85 = scmp.eq.s32.totalorder %s21, 1
      %p86 = por %p84, %p85
      %p88 = scmp.ne.s32.totalorder %s73, %s87
      %p89 = scmp.eq.s32.totalorder %s21, 0
      %p90 = por %p88, %p89
      %s92 = sadd.s32 %s91, 1
      %p95 = scmp.eq.s32.totalorder %s15, 1
      %p96 = scmp.ne.s32.totalorder %s91, %s93
      %p97 = scmp.eq.s32.totalorder %s15, 0
      %p98 = por %p96, %p97
      %p99 = scmp.ne.s32.totalorder %s91, %s93
      %p100 = scmp.eq.s32.totalorder %s20, 1
      %p101 = por %p99, %p100
      %p102 = scmp.ne.s32.totalorder %s93, %s94
      %p103 = scmp.eq.s32.totalorder %s20, 0
      %p104 = por %p102, %p103
      %p105 = scmp.ne.s32.totalorder %s93, %s94
      %p106 = scmp.eq.s32.totalorder %s21, 1
      %p107 = por %p105, %p106
      %p109 = scmp.ne.s32.totalorder %s94, %s108
      %p110 = scmp.eq.s32.totalorder %s21, 0
      %p111 = por %p109, %p110
      %s113 = sadd.s32 %s112, 1
      %p116 = scmp.eq.s32.totalorder %s15, 1
      %p117 = scmp.ne.s32.totalorder %s112, %s114
      %p118 = scmp.eq.s32.totalorder %s15, 0
      %p119 = por %p117, %p118
      %p120 = scmp.ne.s32.totalorder %s112, %s114
      %p121 = scmp.eq.s32.totalorder %s20, 1
      %p122 = por %p120, %p121
      %p123 = scmp.ne.s32.totalorder %s114, %s115
      %p124 = scmp.eq.s32.totalorder %s20, 0
      %p125 = por %p123, %p124
      %p126 = scmp.ne.s32.totalorder %s114, %s115
      %p127 = scmp.eq.s32.totalorder %s21, 1
      %p128 = por %p126, %p127
      %p130 = scmp.ne.s32.totalorder %s115, %s129
      %p131 = scmp.eq.s32.totalorder %s21, 0
      %p132 = por %p130, %p131
      %s134 = sadd.s32 %s133, 1
      %p137 = scmp.eq.s32.totalorder %s15, 1
      %p138 = scmp.ne.s32.totalorder %s133, %s135
      %p139 = scmp.eq.s32.totalorder %s15, 0
      %p140 = por %p138, %p139
      %p141 = scmp.ne.s32.totalorder %s133, %s135
      %p142 = scmp.eq.s32.totalorder %s20, 1
      %p143 = por %p141, %p142
      %p144 = scmp.ne.s32.totalorder %s135, %s136
      %p145 = scmp.eq.s32.totalorder %s20, 0
      %p146 = por %p144, %p145
      %p147 = scmp.ne.s32.totalorder %s135, %s136
      %p148 = scmp.eq.s32.totalorder %s21, 1
      %p149 = por %p147, %p148
      %p151 = scmp.ne.s32.totalorder %s136, %s150
      %p152 = scmp.eq.s32.totalorder %s21, 0
      %p153 = por %p151, %p152
      %s155 = sadd.s32 %s154, 1
      %p158 = scmp.eq.s32.totalorder %s15, 1
      %p159 = scmp.ne.s32.totalorder %s154, %s156
      %p160 = scmp.eq.s32.totalorder %s15, 0
      %p161 = por %p159, %p160
      %p162 = scmp.ne.s32.totalorder %s154, %s156
      %p163 = scmp.eq.s32.totalorder %s20, 1
      %p164 = por %p162, %p163
      %p165 = scmp.ne.s32.totalorder %s156, %s157
      %p166 = scmp.eq.s32.totalorder %s20, 0
      %p167 = por %p165, %p166
      %p168 = scmp.ne.s32.totalorder %s156, %s157
      %p169 = scmp.eq.s32.totalorder %s21, 1
      %p170 = por %p168, %p169
      %p172 = scmp.ne.s32.totalorder %s157, %s171
      %p173 = scmp.eq.s32.totalorder %s21, 0
      %p174 = por %p172, %p173
      %s175 = ssub.s32 %s15, %s22
      %p176 = scmp.eq.s32.totalorder %s175, 0
      %s178 = sadd.s32 %s177, 1
      %s179 = scalar_select %p176, %s177, %s178
      %p182 = pneg %p176
      %p183 = scmp.eq.s32.totalorder %s15, 1
      %p184 = por %p182, %p183
      %p185 = scmp.ne.s32.totalorder %s177, %s180
      %p186 = scmp.eq.s32.totalorder %s15, 0
      %p187 = por %p185, %p186
      %p188 = scmp.ne.s32.totalorder %s177, %s180
      %p189 = scmp.eq.s32.totalorder %s20, 1
      %p190 = por %p188, %p189
      %p191 = scmp.ne.s32.totalorder %s180, %s181
      %p192 = scmp.eq.s32.totalorder %s20, 0
      %p193 = por %p191, %p192
      %p194 = scmp.ne.s32.totalorder %s180, %s181
      %p195 = scmp.eq.s32.totalorder %s21, 1
      %p196 = por %p194, %p195
      %p198 = scmp.ne.s32.totalorder %s181, %s197
      %p199 = scmp.eq.s32.totalorder %s21, 0
      %p200 = por %p198, %p199
      %p201 = scmp.le.s32.totalorder 1, %s15
      %p202 = scmp.lt.s32.totalorder %s15, 3
      %p203 = pnand %p201, %p202
      %p204 = pneg %p203
      // Predicated region
      $region9: #{tpu_custom_call.1} parent=5 // pred_check
        _
      $region10: #{tpu_custom_call.1} parent=5 // pred_check_branch
        %206 = sbr.rel (%p203) target = $region12
      $region11: #{tpu_custom_call.1} parent=5 // pred_region
        %s207 = ssub.s32 %s15, 1
        // Predicated region
        $region13: #{tpu_custom_call.1} parent=11 // pred_check
          %p208 = pneg %p62
        $region14: #{tpu_custom_call.1} parent=11 // pred_check_branch
          %210 = sbr.rel (%p208) target = $region16
        $region15: #{tpu_custom_call.1} parent=11 // pred_region
          %s212 = ssub.s32 18432, 18432
          %213 = vsyncadd [#allocation6], %s212
          %s214 = sshll.u32 [#allocation5], 4
          %s215 = int_to_ptr.vmem [resolvable:$true] %s214
          %220 = dma.hbm_to_vmem [thread:$0]  %s1, 18432, %s215, [#allocation6], 128, 128, 8
        $region16: #{tpu_custom_call.1} parent=11 // pred_fallthru
          _
        // Predicated region
        $region17: #{tpu_custom_call.1} parent=11 // pred_check
          %p221 = pneg %p83
        $region18: #{tpu_custom_call.1} parent=11 // pred_check_branch
          %223 = sbr.rel (%p221) target = $region20
        $region19: #{tpu_custom_call.1} parent=11 // pred_region
          _
        $region20: #{tpu_custom_call.1} parent=11 // pred_fallthru
          _
        // Predicated region
        $region21: #{tpu_custom_call.1} parent=11 // pred_check
          %p224 = pneg %p104
        $region22: #{tpu_custom_call.1} parent=11 // pred_check_branch
          %226 = sbr.rel (%p224) target = $region24
        $region23: #{tpu_custom_call.1} parent=11 // pred_region
          _
        $region24: #{tpu_custom_call.1} parent=11 // pred_fallthru
          _
        // Predicated region
        $region25: #{tpu_custom_call.1} parent=11 // pred_check
          %p227 = pneg %p125
        $region26: #{tpu_custom_call.1} parent=11 // pred_check_branch
          %229 = sbr.rel (%p227) target = $region28
        $region27: #{tpu_custom_call.1} parent=11 // pred_region
          %s231 = ssub.s32 18432, 18432
          %232 = vsyncadd [#allocation8], %s231
          %s233 = sshll.u32 [#allocation7], 4
          %s234 = int_to_ptr.vmem [resolvable:$true] %s233
          %239 = dma.hbm_to_vmem [thread:$0]  %s4, 18432, %s234, [#allocation8], 128, 128, 8
        $region28: #{tpu_custom_call.1} parent=11 // pred_fallthru
          _
        // Predicated region
        $region29: #{tpu_custom_call.1} parent=11 // pred_check
          %p240 = pneg %p146
        $region30: #{tpu_custom_call.1} parent=11 // pred_check_branch
          %242 = sbr.rel (%p240) target = $region32
        $region31: #{tpu_custom_call.1} parent=11 // pred_region
          _
        $region32: #{tpu_custom_call.1} parent=11 // pred_fallthru
          _
        // Predicated region
        $region33: #{tpu_custom_call.1} parent=11 // pred_check
          %p243 = pneg %p167
        $region34: #{tpu_custom_call.1} parent=11 // pred_check_branch
          %245 = sbr.rel (%p243) target = $region36
        $region35: #{tpu_custom_call.1} parent=11 // pred_region
          _
        $region36: #{tpu_custom_call.1} parent=11 // pred_fallthru
          _
      $region12: #{tpu_custom_call.1} parent=5 // pred_fallthru
        _
      %p246 = scmp.lt.s32.totalorder %s15, 2
      // Predicated region
      $region37: #{tpu_custom_call.1} parent=5 // pred_check
        %p247 = pneg %p246
      $region38: #{tpu_custom_call.1} parent=5 // pred_check_branch
        %249 = sbr.rel (%p247) target = $region40
      $region39: #{tpu_custom_call.1} parent=5 // pred_region
        // Predicated region
        $region41: #{tpu_custom_call.1} parent=39 // pred_check
          %p250 = pneg %p35
        $region42: #{tpu_custom_call.1} parent=39 // pred_check_branch
          %252 = sbr.rel (%p250) target = $region44
        $region43: #{tpu_custom_call.1} parent=39 // pred_region
          %p253 = scmp.lt.s32.totalorder %s15, 1
          %s254 = scalar_select %p253, %s15, 1
          %s255 = smul.addr %s254, 54
          %s256 = smul.addr %s255, 8
          %s257 = scalar_lea.vmem %s0, %s256
        $region44: #{tpu_custom_call.1} parent=39 // pred_fallthru
          _
      $region40: #{tpu_custom_call.1} parent=5 // pred_fallthru
        _
      %p258 = scmp.le.s32.totalorder 1, %s15
      %p259 = scmp.lt.s32.totalorder %s15, 3
      %p260 = pnand %p258, %p259
      %p261 = pneg %p260
      // Predicated region
      $region45: #{tpu_custom_call.1} parent=5 // pred_check
        _
      $region46: #{tpu_custom_call.1} parent=5 // pred_check_branch
        %263 = sbr.rel (%p260) target = $region48
      $region47: #{tpu_custom_call.1} parent=5 // pred_region
        %s264 = ssub.s32 %s15, 1
        // Predicated region
        $region49: #{tpu_custom_call.1} parent=47 // pred_check
          %p265 = pneg %p62
        $region50: #{tpu_custom_call.1} parent=47 // pred_check_branch
          %267 = sbr.rel (%p265) target = $region52
        $region51: #{tpu_custom_call.1} parent=47 // pred_region
          %268 = dma.done [#allocation6], 18432
        $region52: #{tpu_custom_call.1} parent=47 // pred_fallthru
          _
        // Predicated region
        $region53: #{tpu_custom_call.1} parent=47 // pred_check
          %p269 = pneg %p125
        $region54: #{tpu_custom_call.1} parent=47 // pred_check_branch
          %271 = sbr.rel (%p269) target = $region56
        $region55: #{tpu_custom_call.1} parent=47 // pred_region
          %272 = dma.done [#allocation8], 18432
        $region56: #{tpu_custom_call.1} parent=47 // pred_fallthru
          _
        %p273 = scmp.lt.s32.totalorder %s20, 1
        %s274 = scalar_select %p273, %s20, 1
        %s275 = smul.addr %s274, 54
        %s276 = smul.addr %s275, 8
        %s277 = scalar_lea.vmem %s0, %s276
        %p278 = pneg %p41
        %p279 = pneg %p38
        %p280 = pneg %p62
        %p281 = pneg %p59
        %p282 = pneg %p83
        %p283 = pneg %p80
        %p284 = pneg %p104
        %p285 = pneg %p101
        %p286 = pneg %p125
        %p287 = pneg %p122
        %p288 = pneg %p146
        %p289 = pneg %p143
        %p290 = pneg %p167
        %p291 = pneg %p164
        %p292 = pneg %p193
        %p293 = pneg %p190
        %p294 = scmp.lt.s32.totalorder %s20, 1
        %s295 = scalar_select %p294, %s20, 1
        %s296 = smul.addr %s295, 32
        %s297 = smul.addr %s296, 8
        %s298 = scalar_lea.vmem %s7, %s297
        %p299 = scmp.lt.s32.totalorder %s20, 1
        %s300 = scalar_select %p299, %s20, 1
        %s301 = smul.addr %s300, 54
        %s302 = smul.addr %s301, 8
        %s303 = scalar_lea.vmem %s0, %s302
        %p304 = scmp.lt.s32.totalorder %s20, 1
        %s305 = scalar_select %p304, %s20, 1
        %s306 = smul.addr %s305, 32
        %s307 = smul.addr %s306, 8
        %s308 = scalar_lea.vmem %s7, %s307
        %309 = vst [vmem:[#allocation2] sm:$0xff] 0.0
        %310 = vst [vmem:[#allocation2 + $0x8] sm:$0xff] 0.0
        %311 = vst [vmem:[#allocation2 + $0x10] sm:$0x3] 0.0
        %312 = vst [vmem:[#allocation2 + $0x18] sm:$0xff] 0.0
        %313 = vst [vmem:[#allocation2 + $0x20] sm:$0xff] 0.0
        %314 = vst [vmem:[#allocation2 + $0x28] sm:$0x3] 0.0
        %315 = vst [vmem:[#allocation2 + $0x30] sm:$0xff] 0.0
        %316 = vst [vmem:[#allocation2 + $0x38] sm:$0xff] 0.0
        %317 = vst [vmem:[#allocation2 + $0x40] sm:$0x3] 0.0
        %318 = vst [vmem:[#allocation2 + $0x48] sm:$0xff] 0.0
        %319 = vst [vmem:[#allocation2 + $0x50] sm:$0xff] 0.0
        %320 = vst [vmem:[#allocation2 + $0x58] sm:$0x3] 0.0
        %321 = vst [vmem:[#allocation2 + $0x60] sm:$0xff] 0.0
        %322 = vst [vmem:[#allocation2 + $0x68] sm:$0xff] 0.0
        %323 = vst [vmem:[#allocation2 + $0x70] sm:$0x3] 0.0
        %324 = vst [vmem:[#allocation2 + $0x78] sm:$0xff] 0.0
        %325 = vst [vmem:[#allocation2 + $0x80] sm:$0xff] 0.0
        %326 = vst [vmem:[#allocation2 + $0x88] sm:$0x3] 0.0
        %327 = vst [vmem:[#allocation2 + $0x90] sm:$0xff] 0.0
        %328 = vst [vmem:[#allocation2 + $0x98] sm:$0xff] 0.0
        %329 = vst [vmem:[#allocation2 + $0xa0] sm:$0x3] 0.0
        %330 = vst [vmem:[#allocation2 + $0xa8] sm:$0xff] 0.0
        %331 = vst [vmem:[#allocation2 + $0xb0] sm:$0xff] 0.0
        %332 = vst [vmem:[#allocation2 + $0xb8] sm:$0x3] 0.0
        %333 = vst [vmem:[#allocation2 + $0xc0] sm:$0xff] 0.0
        %334 = vst [vmem:[#allocation2 + $0xc8] sm:$0xff] 0.0
        %335 = vst [vmem:[#allocation2 + $0xd0] sm:$0x3] 0.0
        %336 = vst [vmem:[#allocation2 + $0xd8] sm:$0xff] 0.0
        %337 = vst [vmem:[#allocation2 + $0xe0] sm:$0xff] 0.0
        %338 = vst [vmem:[#allocation2 + $0xe8] sm:$0x3] 0.0
        %339 = vst [vmem:[#allocation2 + $0xf0] sm:$0xff] 0.0
        %340 = vst [vmem:[#allocation2 + $0xf8] sm:$0xff] 0.0
        %341 = vst [vmem:[#allocation2 + $0x100] sm:$0x3] 0.0
        %342 = vst [vmem:[#allocation2 + $0x108] sm:$0xff] 0.0
        %343 = vst [vmem:[#allocation2 + $0x110] sm:$0xff] 0.0
        %344 = vst [vmem:[#allocation2 + $0x118] sm:$0x3] 0.0
        %345 = vst [vmem:[#allocation2 + $0x120] sm:$0xff] 0.0
        %346 = vst [vmem:[#allocation2 + $0x128] sm:$0xff] 0.0
        %347 = vst [vmem:[#allocation2 + $0x130] sm:$0x3] 0.0
        %348 = vst [vmem:[#allocation2 + $0x138] sm:$0xff] 0.0
        %349 = vst [vmem:[#allocation2 + $0x140] sm:$0xff] 0.0
        %350 = vst [vmem:[#allocation2 + $0x148] sm:$0x3] 0.0
        %351 = vst [vmem:[#allocation2 + $0x150] sm:$0xff] 0.0
        %352 = vst [vmem:[#allocation2 + $0x158] sm:$0xff] 0.0
        %353 = vst [vmem:[#allocation2 + $0x160] sm:$0x3] 0.0
        %354 = vst [vmem:[#allocation2 + $0x168] sm:$0xff] 0.0
        %355 = vst [vmem:[#allocation2 + $0x170] sm:$0xff] 0.0
        %356 = vst [vmem:[#allocation2 + $0x178] sm:$0x3] 0.0
        %357 = vst [vmem:[#allocation2 + $0x180] sm:$0xff] 0.0
        %358 = vst [vmem:[#allocation2 + $0x188] sm:$0xff] 0.0
        %359 = vst [vmem:[#allocation2 + $0x190] sm:$0x3] 0.0
        %360 = vst [vmem:[#allocation2 + $0x198] sm:$0xff] 0.0
        %361 = vst [vmem:[#allocation2 + $0x1a0] sm:$0xff] 0.0
        %362 = vst [vmem:[#allocation2 + $0x1a8] sm:$0x3] 0.0
        %363 = vst [vmem:[#allocation3] sm:$0xff] 0.0
        %364 = vst [vmem:[#allocation3 + $0x8] sm:$0xff] 0.0
        %365 = vst [vmem:[#allocation3 + $0x10] sm:$0x3] 0.0
        %366 = vst [vmem:[#allocation3 + $0x18] sm:$0xff] 0.0
        %367 = vst [vmem:[#allocation3 + $0x20] sm:$0xff] 0.0
        %368 = vst [vmem:[#allocation3 + $0x28] sm:$0x3] 0.0
        %369 = vst [vmem:[#allocation3 + $0x30] sm:$0xff] 0.0
        %370 = vst [vmem:[#allocation3 + $0x38] sm:$0xff] 0.0
        %371 = vst [vmem:[#allocation3 + $0x40] sm:$0x3] 0.0
        %372 = vst [vmem:[#allocation3 + $0x48] sm:$0xff] 0.0
        %373 = vst [vmem:[#allocation3 + $0x50] sm:$0xff] 0.0
        %374 = vst [vmem:[#allocation3 + $0x58] sm:$0x3] 0.0
        %375 = vst [vmem:[#allocation3 + $0x60] sm:$0xff] 0.0
        %376 = vst [vmem:[#allocation3 + $0x68] sm:$0xff] 0.0
        %377 = vst [vmem:[#allocation3 + $0x70] sm:$0x3] 0.0
        %378 = vst [vmem:[#allocation3 + $0x78] sm:$0xff] 0.0
        %379 = vst [vmem:[#allocation3 + $0x80] sm:$0xff] 0.0
        %380 = vst [vmem:[#allocation3 + $0x88] sm:$0x3] 0.0
        %381 = vst [vmem:[#allocation3 + $0x90] sm:$0xff] 0.0
        %382 = vst [vmem:[#allocation3 + $0x98] sm:$0xff] 0.0
        %383 = vst [vmem:[#allocation3 + $0xa0] sm:$0x3] 0.0
        %384 = vst [vmem:[#allocation3 + $0xa8] sm:$0xff] 0.0
        %385 = vst [vmem:[#allocation3 + $0xb0] sm:$0xff] 0.0
        %386 = vst [vmem:[#allocation3 + $0xb8] sm:$0x3] 0.0
        %387 = vst [vmem:[#allocation3 + $0xc0] sm:$0xff] 0.0
        %388 = vst [vmem:[#allocation3 + $0xc8] sm:$0xff] 0.0
        %389 = vst [vmem:[#allocation3 + $0xd0] sm:$0x3] 0.0
        %390 = vst [vmem:[#allocation3 + $0xd8] sm:$0xff] 0.0
        %391 = vst [vmem:[#allocation3 + $0xe0] sm:$0xff] 0.0
        %392 = vst [vmem:[#allocation3 + $0xe8] sm:$0x3] 0.0
        %393 = vst [vmem:[#allocation3 + $0xf0] sm:$0xff] 0.0
        %394 = vst [vmem:[#allocation3 + $0xf8] sm:$0xff] 0.0
        %395 = vst [vmem:[#allocation3 + $0x100] sm:$0x3] 0.0
        %396 = vst [vmem:[#allocation3 + $0x108] sm:$0xff] 0.0
        %397 = vst [vmem:[#allocation3 + $0x110] sm:$0xff] 0.0
        %398 = vst [vmem:[#allocation3 + $0x118] sm:$0x3] 0.0
        %399 = vst [vmem:[#allocation3 + $0x120] sm:$0xff] 0.0
        %400 = vst [vmem:[#allocation3 + $0x128] sm:$0xff] 0.0
        %401 = vst [vmem:[#allocation3 + $0x130] sm:$0x3] 0.0
        %402 = vst [vmem:[#allocation3 + $0x138] sm:$0xff] 0.0
        %403 = vst [vmem:[#allocation3 + $0x140] sm:$0xff] 0.0
        %404 = vst [vmem:[#allocation3 + $0x148] sm:$0x3] 0.0
        %405 = vst [vmem:[#allocation3 + $0x150] sm:$0xff] 0.0
        %406 = vst [vmem:[#allocation3 + $0x158] sm:$0xff] 0.0
        %407 = vst [vmem:[#allocation3 + $0x160] sm:$0x3] 0.0
        %408 = vst [vmem:[#allocation3 + $0x168] sm:$0xff] 0.0
        %409 = vst [vmem:[#allocation3 + $0x170] sm:$0xff] 0.0
        %410 = vst [vmem:[#allocation3 + $0x178] sm:$0x3] 0.0
        %411 = vst [vmem:[#allocation3 + $0x180] sm:$0xff] 0.0
        %412 = vst [vmem:[#allocation3 + $0x188] sm:$0xff] 0.0
        %413 = vst [vmem:[#allocation3 + $0x190] sm:$0x3] 0.0
        %414 = vst [vmem:[#allocation3 + $0x198] sm:$0xff] 0.0
        %415 = vst [vmem:[#allocation3 + $0x1a0] sm:$0xff] 0.0
        %416 = vst [vmem:[#allocation3 + $0x1a8] sm:$0x3] 0.0
        %v417 = vld [vmem:[%s303] sm:$0xff]
        %v418 = vld [vmem:[%s303 + $0x8] sm:$0xff]
        %v419 = vld [vmem:[%s303 + $0x10] sm:$0x3]
        %v420 = vld [vmem:[%s303 + $0x18] sm:$0xff]
        %v421 = vld [vmem:[%s303 + $0x20] sm:$0xff]
        %v422 = vld [vmem:[%s303 + $0x28] sm:$0x3]
        %v423 = vld [vmem:[%s303 + $0x30] sm:$0xff]
        %v424 = vld [vmem:[%s303 + $0x38] sm:$0xff]
        %v425 = vld [vmem:[%s303 + $0x40] sm:$0x3]
        %v426 = vld [vmem:[%s303 + $0x48] sm:$0xff]
        %v427 = vld [vmem:[%s303 + $0x50] sm:$0xff]
        %v428 = vld [vmem:[%s303 + $0x58] sm:$0x3]
        %v429 = vld [vmem:[%s303 + $0x60] sm:$0xff]
        %v430 = vld [vmem:[%s303 + $0x68] sm:$0xff]
        %v431 = vld [vmem:[%s303 + $0x70] sm:$0x3]
        %v432 = vld [vmem:[%s303 + $0x78] sm:$0xff]
        %v433 = vld [vmem:[%s303 + $0x80] sm:$0xff]
        %v434 = vld [vmem:[%s303 + $0x88] sm:$0x3]
        %v435 = vld [vmem:[%s303 + $0x90] sm:$0xff]
        %v436 = vld [vmem:[%s303 + $0x98] sm:$0xff]
        %v437 = vld [vmem:[%s303 + $0xa0] sm:$0x3]
        %v438 = vld [vmem:[%s303 + $0xa8] sm:$0xff]
        %v439 = vld [vmem:[%s303 + $0xb0] sm:$0xff]
        %v440 = vld [vmem:[%s303 + $0xb8] sm:$0x3]
        %v441 = vld [vmem:[%s303 + $0xc0] sm:$0xff]
        %v442 = vld [vmem:[%s303 + $0xc8] sm:$0xff]
        %v443 = vld [vmem:[%s303 + $0xd0] sm:$0x3]
        %v444 = vld [vmem:[%s303 + $0xd8] sm:$0xff]
        %v445 = vld [vmem:[%s303 + $0xe0] sm:$0xff]
        %v446 = vld [vmem:[%s303 + $0xe8] sm:$0x3]
        %v447 = vld [vmem:[%s303 + $0xf0] sm:$0xff]
        %v448 = vld [vmem:[%s303 + $0xf8] sm:$0xff]
        %v449 = vld [vmem:[%s303 + $0x100] sm:$0x3]
        %v450 = vld [vmem:[%s303 + $0x108] sm:$0xff]
        %v451 = vld [vmem:[%s303 + $0x110] sm:$0xff]
        %v452 = vld [vmem:[%s303 + $0x118] sm:$0x3]
        %v453 = vld [vmem:[%s303 + $0x120] sm:$0xff]
        %v454 = vld [vmem:[%s303 + $0x128] sm:$0xff]
        %v455 = vld [vmem:[%s303 + $0x130] sm:$0x3]
        %v456 = vld [vmem:[%s303 + $0x138] sm:$0xff]
        %v457 = vld [vmem:[%s303 + $0x140] sm:$0xff]
        %v458 = vld [vmem:[%s303 + $0x148] sm:$0x3]
        %v459 = vld [vmem:[%s303 + $0x150] sm:$0xff]
        %v460 = vld [vmem:[%s303 + $0x158] sm:$0xff]
        %v461 = vld [vmem:[%s303 + $0x160] sm:$0x3]
        %v462 = vld [vmem:[%s303 + $0x168] sm:$0xff]
        %v463 = vld [vmem:[%s303 + $0x170] sm:$0xff]
        %v464 = vld [vmem:[%s303 + $0x178] sm:$0x3]
        %v465 = vld [vmem:[%s303 + $0x180] sm:$0xff]
        %v466 = vld [vmem:[%s303 + $0x188] sm:$0xff]
        %v467 = vld [vmem:[%s303 + $0x190] sm:$0x3]
        %v468 = vld [vmem:[%s303 + $0x198] sm:$0xff]
        %v469 = vld [vmem:[%s303 + $0x1a0] sm:$0xff]
        %v470 = vld [vmem:[%s303 + $0x1a8] sm:$0x3]
        %vm471 = vcmask 31744
        %472 = vst.msk [vmem:[#allocation2] sm:$0xff] %vm471, %v417
        %473 = vst.msk [vmem:[#allocation2 + $0x8] sm:$0xff] %vm471, %v418
        %vm474 = vcmask 25600
        %475 = vst.msk [vmem:[#allocation2 + $0x10] sm:$0x3] %vm474, %v419
        %476 = vst.msk [vmem:[#allocation2 + $0x18] sm:$0xff] %vm471, %v420
        %477 = vst.msk [vmem:[#allocation2 + $0x20] sm:$0xff] %vm471, %v421
        %478 = vst.msk [vmem:[#allocation2 + $0x28] sm:$0x3] %vm474, %v422
        %479 = vst.msk [vmem:[#allocation2 + $0x30] sm:$0xff] %vm471, %v423
        %480 = vst.msk [vmem:[#allocation2 + $0x38] sm:$0xff] %vm471, %v424
        %481 = vst.msk [vmem:[#allocation2 + $0x40] sm:$0x3] %vm474, %v425
        %482 = vst.msk [vmem:[#allocation2 + $0x48] sm:$0xff] %vm471, %v426
        %483 = vst.msk [vmem:[#allocation2 + $0x50] sm:$0xff] %vm471, %v427
        %484 = vst.msk [vmem:[#allocation2 + $0x58] sm:$0x3] %vm474, %v428
        %485 = vst.msk [vmem:[#allocation2 + $0x60] sm:$0xff] %vm471, %v429
        %486 = vst.msk [vmem:[#allocation2 + $0x68] sm:$0xff] %vm471, %v430
        %487 = vst.msk [vmem:[#allocation2 + $0x70] sm:$0x3] %vm474, %v431
        %488 = vst.msk [vmem:[#allocation2 + $0x78] sm:$0xff] %vm471, %v432
        %489 = vst.msk [vmem:[#allocation2 + $0x80] sm:$0xff] %vm471, %v433
        %490 = vst.msk [vmem:[#allocation2 + $0x88] sm:$0x3] %vm474, %v434
        %491 = vst.msk [vmem:[#allocation2 + $0x90] sm:$0xff] %vm471, %v435
        %492 = vst.msk [vmem:[#allocation2 + $0x98] sm:$0xff] %vm471, %v436
        %493 = vst.msk [vmem:[#allocation2 + $0xa0] sm:$0x3] %vm474, %v437
        %494 = vst.msk [vmem:[#allocation2 + $0xa8] sm:$0xff] %vm471, %v438
        %495 = vst.msk [vmem:[#allocation2 + $0xb0] sm:$0xff] %vm471, %v439
        %496 = vst.msk [vmem:[#allocation2 + $0xb8] sm:$0x3] %vm474, %v440
        %497 = vst.msk [vmem:[#allocation2 + $0xc0] sm:$0xff] %vm471, %v441
        %498 = vst.msk [vmem:[#allocation2 + $0xc8] sm:$0xff] %vm471, %v442
        %499 = vst.msk [vmem:[#allocation2 + $0xd0] sm:$0x3] %vm474, %v443
        %500 = vst.msk [vmem:[#allocation2 + $0xd8] sm:$0xff] %vm471, %v444
        %501 = vst.msk [vmem:[#allocation2 + $0xe0] sm:$0xff] %vm471, %v445
        %502 = vst.msk [vmem:[#allocation2 + $0xe8] sm:$0x3] %vm474, %v446
        %503 = vst.msk [vmem:[#allocation2 + $0xf0] sm:$0xff] %vm471, %v447
        %504 = vst.msk [vmem:[#allocation2 + $0xf8] sm:$0xff] %vm471, %v448
        %505 = vst.msk [vmem:[#allocation2 + $0x100] sm:$0x3] %vm474, %v449
        %506 = vst.msk [vmem:[#allocation2 + $0x108] sm:$0xff] %vm471, %v450
        %507 = vst.msk [vmem:[#allocation2 + $0x110] sm:$0xff] %vm471, %v451
        %508 = vst.msk [vmem:[#allocation2 + $0x118] sm:$0x3] %vm474, %v452
        %509 = vst.msk [vmem:[#allocation2 + $0x120] sm:$0xff] %vm471, %v453
        %510 = vst.msk [vmem:[#allocation2 + $0x128] sm:$0xff] %vm471, %v454
        %511 = vst.msk [vmem:[#allocation2 + $0x130] sm:$0x3] %vm474, %v455
        %512 = vst.msk [vmem:[#allocation2 + $0x138] sm:$0xff] %vm471, %v456
        %513 = vst.msk [vmem:[#allocation2 + $0x140] sm:$0xff] %vm471, %v457
        %514 = vst.msk [vmem:[#allocation2 + $0x148] sm:$0x3] %vm474, %v458
        %515 = vst.msk [vmem:[#allocation2 + $0x150] sm:$0xff] %vm471, %v459
        %516 = vst.msk [vmem:[#allocation2 + $0x158] sm:$0xff] %vm471, %v460
        %517 = vst.msk [vmem:[#allocation2 + $0x160] sm:$0x3] %vm474, %v461
        %518 = vst.msk [vmem:[#allocation2 + $0x168] sm:$0xff] %vm471, %v462
        %519 = vst.msk [vmem:[#allocation2 + $0x170] sm:$0xff] %vm471, %v463
        %520 = vst.msk [vmem:[#allocation2 + $0x178] sm:$0x3] %vm474, %v464
        %521 = vst.msk [vmem:[#allocation2 + $0x180] sm:$0xff] %vm471, %v465
        %522 = vst.msk [vmem:[#allocation2 + $0x188] sm:$0xff] %vm471, %v466
        %523 = vst.msk [vmem:[#allocation2 + $0x190] sm:$0x3] %vm474, %v467
        %524 = vst.msk [vmem:[#allocation2 + $0x198] sm:$0xff] %vm471, %v468
        %525 = vst.msk [vmem:[#allocation2 + $0x1a0] sm:$0xff] %vm471, %v469
        %526 = vst.msk [vmem:[#allocation2 + $0x1a8] sm:$0x3] %vm474, %v470
        %v527 = vld [vmem:[#allocation2] sm:$0xff]
        %v528 = vld [vmem:[#allocation2 + $0x8] sm:$0xff]
        %v529 = vld [vmem:[#allocation2 + $0x18] sm:$0xff]
        %v530 = vld [vmem:[#allocation2 + $0x20] sm:$0xff]
        %v531 = vld [vmem:[#allocation2 + $0x30] sm:$0xff]
        %v532 = vld [vmem:[#allocation2 + $0x38] sm:$0xff]
        %v533 = vld [vmem:[#allocation2 + $0x48] sm:$0xff]
        %v534 = vld [vmem:[#allocation2 + $0x50] sm:$0xff]
        %v535 = vld [vmem:[#allocation2 + $0x60] sm:$0xff]
        %v536 = vld [vmem:[#allocation2 + $0x68] sm:$0xff]
        %v537 = vld [vmem:[#allocation2 + $0x78] sm:$0xff]
        %v538 = vld [vmem:[#allocation2 + $0x80] sm:$0xff]
        %v539 = vld [vmem:[#allocation2 + $0x90] sm:$0xff]
        %v540 = vld [vmem:[#allocation2 + $0x98] sm:$0xff]
        %v541 = vld [vmem:[#allocation2 + $0xa8] sm:$0xff]
        %v542 = vld [vmem:[#allocation2 + $0xb0] sm:$0xff]
        %v543 = vld [vmem:[#allocation2 + $0xc0] sm:$0xff]
        %v544 = vld [vmem:[#allocation2 + $0xc8] sm:$0xff]
        %v545 = vld [vmem:[#allocation2 + $0xd8] sm:$0xff]
        %v546 = vld [vmem:[#allocation2 + $0xe0] sm:$0xff]
        %v547 = vld [vmem:[#allocation2 + $0xf0] sm:$0xff]
        %v548 = vld [vmem:[#allocation2 + $0xf8] sm:$0xff]
        %v549 = vld [vmem:[#allocation2 + $0x108] sm:$0xff]
        %v550 = vld [vmem:[#allocation2 + $0x110] sm:$0xff]
        %v551 = vld [vmem:[#allocation2 + $0x120] sm:$0xff]
        %v552 = vld [vmem:[#allocation2 + $0x128] sm:$0xff]
        %v553 = vld [vmem:[#allocation2 + $0x138] sm:$0xff]
        %v554 = vld [vmem:[#allocation2 + $0x140] sm:$0xff]
        %v555 = vld [vmem:[#allocation2 + $0x150] sm:$0xff]
        %v556 = vld [vmem:[#allocation2 + $0x158] sm:$0xff]
        %v557 = vld [vmem:[#allocation2 + $0x168] sm:$0xff]
        %v558 = vld [vmem:[#allocation2 + $0x170] sm:$0xff]
        %v559 = vld [vmem:[#allocation5] sm:$0xff]
        %v560 = vld [vmem:[#allocation5 + $0x8] sm:$0xff]
        %v561 = vld [vmem:[#allocation5 + $0x10] sm:$0xff]
        %v562 = vld [vmem:[#allocation5 + $0x18] sm:$0xff]
        %v563 = vld [vmem:[#allocation5 + $0x20] sm:$0xff]
        %v564 = vld [vmem:[#allocation5 + $0x28] sm:$0xff]
        %v565 = vld [vmem:[#allocation5 + $0x30] sm:$0xff]
        %v566 = vld [vmem:[#allocation5 + $0x38] sm:$0xff]
        %v567 = vld [vmem:[#allocation5 + $0x40] sm:$0xff]
        %v568 = vld [vmem:[#allocation5 + $0x48] sm:$0xff]
        %v569 = vld [vmem:[#allocation5 + $0x50] sm:$0xff]
        %v570 = vld [vmem:[#allocation5 + $0x58] sm:$0xff]
        %v571 = vld [vmem:[#allocation5 + $0x60] sm:$0xff]
        %v572 = vld [vmem:[#allocation5 + $0x68] sm:$0xff]
        %v573 = vld [vmem:[#allocation5 + $0x70] sm:$0xff]
        %v574 = vld [vmem:[#allocation5 + $0x78] sm:$0xff]
        %575 = vmatprep.subr.mxu0 0.0
        %576 = vmatpush1.msra.mxu0 %v559
        %577 = vmatprep.subr.mxu0 0.0
        %578 = vmatpush1.msra.mxu0 %v560
        %579 = vmatprep.subr.mxu0 0.0
        %580 = vmatpush1.msra.mxu0 %v561
        %581 = vmatprep.subr.mxu0 0.0
        %582 = vmatpush1.msra.mxu0 %v562
        %583 = vmatprep.subr.mxu0 0.0
        %584 = vmatpush1.msra.mxu0 %v563
        %585 = vmatprep.subr.mxu0 0.0
        %586 = vmatpush1.msra.mxu0 %v564
        %587 = vmatprep.subr.mxu0 0.0
        %588 = vmatpush1.msra.mxu0 %v565
        %589 = vmatprep.subr.mxu0 0.0
        %590 = vmatpush1.msra.mxu0 %v566
        %591 = vmatprep.subr.mxu0 0.0
        %592 = vmatpush1.msra.mxu0 %v567
        %593 = vmatprep.subr.mxu0 0.0
        %594 = vmatpush1.msra.mxu0 %v568
        %595 = vmatprep.subr.mxu0 0.0
        %596 = vmatpush1.msra.mxu0 %v569
        %597 = vmatprep.subr.mxu0 0.0
        %598 = vmatpush1.msra.mxu0 %v570
        %599 = vmatprep.subr.mxu0 0.0
        %600 = vmatpush1.msra.mxu0 %v571
        %601 = vmatprep.subr.mxu0 0.0
        %602 = vmatpush1.msra.mxu0 %v572
        %603 = vmatprep.subr.mxu0 0.0
        %604 = vmatpush1.msra.mxu0 %v573
        %605 = vmatprep.subr.mxu0 0.0
        %606 = vmatpush1.msra.mxu0 %v574
        %607 = vmatprep.subr.mxu0 0.0
        %608 = vmatpush1.msra.mxu0 0.0
        %609 = vmatprep.subr.mxu0 0.0
        %610 = vmatpush1.msra.mxu0 0.0
        %611 = vmatprep.subr.mxu0 0.0
        %612 = vmatpush1.msra.mxu0 0.0
        %613 = vmatprep.subr.mxu0 0.0
        %614 = vmatpush1.msra.mxu0 0.0
        %615 = vmatprep.subr.mxu0 0.0
        %616 = vmatpush1.msra.mxu0 0.0
        %617 = vmatprep.subr.mxu0 0.0
        %618 = vmatpush1.msra.mxu0 0.0
        %619 = vmatprep.subr.mxu0 0.0
        %620 = vmatpush1.msra.mxu0 0.0
        %621 = vmatprep.subr.mxu0 0.0
        %622 = vmatpush1.msra.mxu0 0.0
        %623 = vmatprep.subr.mxu0 0.0
        %624 = vmatpush1.msra.mxu0 0.0
        %625 = vmatprep.subr.mxu0 0.0
        %626 = vmatpush1.msra.mxu0 0.0
        %627 = vmatprep.subr.mxu0 0.0
        %628 = vmatpush1.msra.mxu0 0.0
        %629 = vmatprep.subr.mxu0 0.0
        %630 = vmatpush1.msra.mxu0 0.0
        %631 = vmatprep.subr.mxu0 0.0
        %632 = vmatpush1.msra.mxu0 0.0
        %633 = vmatprep.subr.mxu0 0.0
        %634 = vmatpush1.msra.mxu0 0.0
        %635 = vmatprep.subr.mxu0 0.0
        %636 = vmatpush1.msra.mxu0 0.0
        %637 = vmatprep.subr.mxu0 0.0
        %638 = vmatpush1.msra.mxu0 0.0
        %639 = vmatprep.mubr.f32.mxu0 0.0
        %640 = vmatmul.mubr.f32.gmra.mrb[0].mxu0 %v527
        %v641 = vpop.f32.mrb[0].mxu0
        %v642 = vadd.f32 0.0, %v641
        %v643 = vpop.f32.mrb[0].mxu0
        %644 = vmatprep.mubr.f32.mxu0 0.0
        %645 = vmatmul.mubr.f32.gmra.mrb[0].mxu0 %v528
        %v646 = vpop.f32.mrb[0].mxu0
        %v647 = vadd.f32 0.0, %v646
        %v648 = vpop.f32.mrb[0].mxu0
        %649 = vmatprep.mubr.f32.mxu0 0.0
        %650 = vmatmul.mubr.f32.gmra.mrb[0].mxu0 %v529
        %v651 = vpop.f32.mrb[0].mxu0
        %v652 = vadd.f32 0.0, %v651
        %v653 = vpop.f32.mrb[0].mxu0
        %654 = vmatprep.mubr.f32.mxu0 0.0
        %655 = vmatmul.mubr.f32.gmra.mrb[0].mxu0 %v530
        %v656 = vpop.f32.mrb[0].mxu0
        %v657 = vadd.f32 0.0, %v656
        %v658 = vpop.f32.mrb[0].mxu0
        %659 = vmatprep.mubr.f32.mxu0 0.0
        %660 = vmatmul.mubr.f32.gmra.mrb[0].mxu0 %v531
        %v661 = vpop.f32.mrb[0].mxu0
        %v662 = vadd.f32 0.0, %v661
        %v663 = vpop.f32.mrb[0].mxu0
        %664 = vmatprep.mubr.f32.mxu0 0.0
        %665 = vmatmul.mubr.f32.gmra.mrb[0].mxu0 %v532
        %v666 = vpop.f32.mrb[0].mxu0
        %v667 = vadd.f32 0.0, %v666
        %v668 = vpop.f32.mrb[0].mxu0
        %669 = vmatprep.mubr.f32.mxu0 0.0
        %670 = vmatmul.mubr.f32.gmra.mrb[0].mxu0 %v533
        %v671 = vpop.f32.mrb[0].mxu0
        %v672 = vadd.f32 0.0, %v671
        %v673 = vpop.f32.mrb[0].mxu0
        %674 = vmatprep.mubr.f32.mxu0 0.0
        %675 = vmatmul.mubr.f32.gmra.mrb[0].mxu0 %v534
        %v676 = vpop.f32.mrb[0].mxu0
        %v677 = vadd.f32 0.0, %v676
        %v678 = vpop.f32.mrb[0].mxu0
        %679 = vmatprep.mubr.f32.mxu0 0.0
        %680 = vmatmul.mubr.f32.gmra.mrb[0].mxu0 %v535
        %v681 = vpop.f32.mrb[0].mxu0
        %v682 = vadd.f32 0.0, %v681
        %v683 = vpop.f32.mrb[0].mxu0
        %684 = vmatprep.mubr.f32.mxu0 0.0
        %685 = vmatmul.mubr.f32.gmra.mrb[0].mxu0 %v536
        %v686 = vpop.f32.mrb[0].mxu0
        %v687 = vadd.f32 0.0, %v686
        %v688 = vpop.f32.mrb[0].mxu0
        %689 = vmatprep.mubr.f32.mxu0 0.0
        %690 = vmatmul.mubr.f32.gmra.mrb[0].mxu0 %v537
        %v691 = vpop.f32.mrb[0].mxu0
        %v692 = vadd.f32 0.0, %v691
        %v693 = vpop.f32.mrb[0].mxu0
        %694 = vmatprep.mubr.f32.mxu0 0.0
        %695 = vmatmul.mubr.f32.gmra.mrb[0].mxu0 %v538
        %v696 = vpop.f32.mrb[0].mxu0
        %v697 = vadd.f32 0.0, %v696
        %v698 = vpop.f32.mrb[0].mxu0
        %699 = vmatprep.mubr.f32.mxu0 0.0
        %700 = vmatmul.mubr.f32.gmra.mrb[0].mxu0 %v539
        %v701 = vpop.f32.mrb[0].mxu0
        %v702 = vadd.f32 0.0, %v701
        %v703 = vpop.f32.mrb[0].mxu0
        %704 = vmatprep.mubr.f32.mxu0 0.0
        %705 = vmatmul.mubr.f32.gmra.mrb[0].mxu0 %v540
        %v706 = vpop.f32.mrb[0].mxu0
        %v707 = vadd.f32 0.0, %v706
        %v708 = vpop.f32.mrb[0].mxu0
        %709 = vmatprep.mubr.f32.mxu0 0.0
        %710 = vmatmul.mubr.f32.gmra.mrb[0].mxu0 %v541
        %v711 = vpop.f32.mrb[0].mxu0
        %v712 = vadd.f32 0.0, %v711
        %v713 = vpop.f32.mrb[0].mxu0
        %714 = vmatprep.mubr.f32.mxu0 0.0
        %715 = vmatmul.mubr.f32.gmra.mrb[0].mxu0 %v542
        %v716 = vpop.f32.mrb[0].mxu0
        %v717 = vadd.f32 0.0, %v716
        %v718 = vpop.f32.mrb[0].mxu0
        %719 = vmatprep.mubr.f32.mxu0 0.0
        %720 = vmatmul.mubr.f32.gmra.mrb[0].mxu0 %v543
        %v721 = vpop.f32.mrb[0].mxu0
        %v722 = vadd.f32 0.0, %v721
        %v723 = vpop.f32.mrb[0].mxu0
        %724 = vmatprep.mubr.f32.mxu0 0.0
        %725 = vmatmul.mubr.f32.gmra.mrb[0].mxu0 %v544
        %v726 = vpop.f32.mrb[0].mxu0
        %v727 = vadd.f32 0.0, %v726
        %v728 = vpop.f32.mrb[0].mxu0
        %729 = vmatprep.mubr.f32.mxu0 0.0
        %730 = vmatmul.mubr.f32.gmra.mrb[0].mxu0 %v545
        %v731 = vpop.f32.mrb[0].mxu0
        %v732 = vadd.f32 0.0, %v731
        %v733 = vpop.f32.mrb[0].mxu0
        %734 = vmatprep.mubr.f32.mxu0 0.0
        %735 = vmatmul.mubr.f32.gmra.mrb[0].mxu0 %v546
        %v736 = vpop.f32.mrb[0].mxu0
        %v737 = vadd.f32 0.0, %v736
        %v738 = vpop.f32.mrb[0].mxu0
        %739 = vmatprep.mubr.f32.mxu0 0.0
        %740 = vmatmul.mubr.f32.gmra.mrb[0].mxu0 %v547
        %v741 = vpop.f32.mrb[0].mxu0
        %v742 = vadd.f32 0.0, %v741
        %v743 = vpop.f32.mrb[0].mxu0
        %744 = vmatprep.mubr.f32.mxu0 0.0
        %745 = vmatmul.mubr.f32.gmra.mrb[0].mxu0 %v548
        %v746 = vpop.f32.mrb[0].mxu0
        %v747 = vadd.f32 0.0, %v746
        %v748 = vpop.f32.mrb[0].mxu0
        %749 = vmatprep.mubr.f32.mxu0 0.0
        %750 = vmatmul.mubr.f32.gmra.mrb[0].mxu0 %v549
        %v751 = vpop.f32.mrb[0].mxu0
        %v752 = vadd.f32 0.0, %v751
        %v753 = vpop.f32.mrb[0].mxu0
        %754 = vmatprep.mubr.f32.mxu0 0.0
        %755 = vmatmul.mubr.f32.gmra.mrb[0].mxu0 %v550
        %v756 = vpop.f32.mrb[0].mxu0
        %v757 = vadd.f32 0.0, %v756
        %v758 = vpop.f32.mrb[0].mxu0
        %759 = vmatprep.mubr.f32.mxu0 0.0
        %760 = vmatmul.mubr.f32.gmra.mrb[0].mxu0 %v551
        %v761 = vpop.f32.mrb[0].mxu0
        %v762 = vadd.f32 0.0, %v761
        %v763 = vpop.f32.mrb[0].mxu0
        %764 = vmatprep.mubr.f32.mxu0 0.0
        %765 = vmatmul.mubr.f32.gmra.mrb[0].mxu0 %v552
        %v766 = vpop.f32.mrb[0].mxu0
        %v767 = vadd.f32 0.0, %v766
        %v768 = vpop.f32.mrb[0].mxu0
        %769 = vmatprep.mubr.f32.mxu0 0.0
        %770 = vmatmul.mubr.f32.gmra.mrb[0].mxu0 %v553
        %v771 = vpop.f32.mrb[0].mxu0
        %v772 = vadd.f32 0.0, %v771
        %v773 = vpop.f32.mrb[0].mxu0
        %774 = vmatprep.mubr.f32.mxu0 0.0
        %775 = vmatmul.mubr.f32.gmra.mrb[0].mxu0 %v554
        %v776 = vpop.f32.mrb[0].mxu0
        %v777 = vadd.f32 0.0, %v776
        %v778 = vpop.f32.mrb[0].mxu0
        %779 = vmatprep.mubr.f32.mxu0 0.0
        %780 = vmatmul.mubr.f32.gmra.mrb[0].mxu0 %v555
        %v781 = vpop.f32.mrb[0].mxu0
        %v782 = vadd.f32 0.0, %v781
        %v783 = vpop.f32.mrb[0].mxu0
        %784 = vmatprep.mubr.f32.mxu0 0.0
        %785 = vmatmul.mubr.f32.gmra.mrb[0].mxu0 %v556
        %v786 = vpop.f32.mrb[0].mxu0
        %v787 = vadd.f32 0.0, %v786
        %v788 = vpop.f32.mrb[0].mxu0
        %789 = vmatprep.mubr.f32.mxu0 0.0
        %790 = vmatmul.mubr.f32.gmra.mrb[0].mxu0 %v557
        %v791 = vpop.f32.mrb[0].mxu0
        %v792 = vadd.f32 0.0, %v791
        %v793 = vpop.f32.mrb[0].mxu0
        %794 = vmatprep.mubr.f32.mxu0 0.0
        %795 = vmatmul.mubr.f32.gmra.mrb[0].mxu0 %v558
        %v796 = vpop.f32.mrb[0].mxu0
        %v797 = vadd.f32 0.0, %v796
        %v798 = vpop.f32.mrb[0].mxu0
        %799 = vdwg.mxu0
        %800 = vst [vmem:[#allocation4] sm:$0xff] %v642
        %801 = vst [vmem:[#allocation4 + $0x8] sm:$0xff] %v647
        %802 = vst [vmem:[#allocation4 + $0x10] sm:$0xff] %v652
        %803 = vst [vmem:[#allocation4 + $0x18] sm:$0xff] %v657
        %804 = vst [vmem:[#allocation4 + $0x20] sm:$0xff] %v662
        %805 = vst [vmem:[#allocation4 + $0x28] sm:$0xff] %v667
        %806 = vst [vmem:[#allocation4 + $0x30] sm:$0xff] %v672
        %807 = vst [vmem:[#allocation4 + $0x38] sm:$0xff] %v677
        %808 = vst [vmem:[#allocation4 + $0x40] sm:$0xff] %v682
        %809 = vst [vmem:[#allocation4 + $0x48] sm:$0xff] %v687
        %810 = vst [vmem:[#allocation4 + $0x50] sm:$0xff] %v692
        %811 = vst [vmem:[#allocation4 + $0x58] sm:$0xff] %v697
        %812 = vst [vmem:[#allocation4 + $0x60] sm:$0xff] %v702
        %813 = vst [vmem:[#allocation4 + $0x68] sm:$0xff] %v707
        %814 = vst [vmem:[#allocation4 + $0x70] sm:$0xff] %v712
        %815 = vst [vmem:[#allocation4 + $0x78] sm:$0xff] %v717
        %816 = vst [vmem:[#allocation4 + $0x80] sm:$0xff] %v722
        %817 = vst [vmem:[#allocation4 + $0x88] sm:$0xff] %v727
        %818 = vst [vmem:[#allocation4 + $0x90] sm:$0xff] %v732
        %819 = vst [vmem:[#allocation4 + $0x98] sm:$0xff] %v737
        %820 = vst [vmem:[#allocation4 + $0xa0] sm:$0xff] %v742
        %821 = vst [vmem:[#allocation4 + $0xa8] sm:$0xff] %v747
        %822 = vst [vmem:[#allocation4 + $0xb0] sm:$0xff] %v752
        %823 = vst [vmem:[#allocation4 + $0xb8] sm:$0xff] %v757
        %824 = vst [vmem:[#allocation4 + $0xc0] sm:$0xff] %v762
        %825 = vst [vmem:[#allocation4 + $0xc8] sm:$0xff] %v767
        %826 = vst [vmem:[#allocation4 + $0xd0] sm:$0xff] %v772
        %827 = vst [vmem:[#allocation4 + $0xd8] sm:$0xff] %v777
        %828 = vst [vmem:[#allocation4 + $0xe0] sm:$0xff] %v782
        %829 = vst [vmem:[#allocation4 + $0xe8] sm:$0xff] %v787
        %830 = vst [vmem:[#allocation4 + $0xf0] sm:$0xff] %v792
        %831 = vst [vmem:[#allocation4 + $0xf8] sm:$0xff] %v797
        %v832 = vld [vmem:[#allocation2 + $0x1] sm:$0xff]
        %v833 = vld [vmem:[#allocation2 + $0x9] sm:$0xff]
        %v834 = vld [vmem:[#allocation2 + $0x19] sm:$0xff]
        %v835 = vld [vmem:[#allocation2 + $0x21] sm:$0xff]
        %v836 = vld [vmem:[#allocation2 + $0x31] sm:$0xff]
        %v837 = vld [vmem:[#allocation2 + $0x39] sm:$0xff]
        %v838 = vld [vmem:[#allocation2 + $0x49] sm:$0xff]
        %v839 = vld [vmem:[#allocation2 + $0x51] sm:$0xff]
        %v840 = vld [vmem:[#allocation2 + $0x61] sm:$0xff]
        %v841 = vld [vmem:[#allocation2 + $0x69] sm:$0xff]
        %v842 = vld [vmem:[#allocation2 + $0x79] sm:$0xff]
        %v843 = vld [vmem:[#allocation2 + $0x81] sm:$0xff]
        %v844 = vld [vmem:[#allocation2 + $0x91] sm:$0xff]
        %v845 = vld [vmem:[#allocation2 + $0x99] sm:$0xff]
        %v846 = vld [vmem:[#allocation2 + $0xa9] sm:$0xff]
        %v847 = vld [vmem:[#allocation2 + $0xb1] sm:$0xff]
        %v848 = vld [vmem:[#allocation2 + $0xc1] sm:$0xff]
        %v849 = vld [vmem:[#allocation2 + $0xc9] sm:$0xff]
        %v850 = vld [vmem:[#allocation2 + $0xd9] sm:$0xff]
        %v851 = vld [vmem:[#allocation2 + $0xe1] sm:$0xff]
        %v852 = vld [vmem:[#allocation2 + $0xf1] sm:$0xff]
        %v853 = vld [vmem:[#allocation2 + $0xf9] sm:$0xff]
        %v854 = vld [vmem:[#allocation2 + $0x109] sm:$0xff]
        %v855 = vld [vmem:[#allocation2 + $0x111] sm:$0xff]
        %v856 = vld [vmem:[#allocation2 + $0x121] sm:$0xff]
        %v857 = vld [vmem:[#allocation2 + $0x129] sm:$0xff]
        %v858 = vld [vmem:[#allocation2 + $0x139] sm:$0xff]
        %v859 = vld [vmem:[#allocation2 + $0x141] sm:$0xff]
        %v860 = vld [vmem:[#allocation2 + $0x151] sm:$0xff]
        %v861 = vld [vmem:[#allocation2 + $0x159] sm:$0xff]
        %v862 = vld [vmem:[#allocation2 + $0x169] sm:$0xff]
        %v863 = vld [vmem:[#allocation2 + $0x171] sm:$0xff]
        %s864 = scalar_lea.vmem [#allocation5], 128
        %v865 = vld [vmem:[%s864] sm:$0xff]
        %v866 = vld [vmem:[%s864 + $0x8] sm:$0xff]
        %v867 = vld [vmem:[%s864 + $0x10] sm:$0xff]
        %v868 = vld [vmem:[%s864 + $0x18] sm:$0xff]
        %v869 = vld [vmem:[%s864 + $0x20] sm:$0xff]
        %v870 = vld [vmem:[%s864 + $0x28] sm:$0xff]
        %v871 = vld [vmem:[%s864 + $0x30] sm:$0xff]
        %v872 = vld [vmem:[%s864 + $0x38] sm:$0xff]
        %v873 = vld [vmem:[%s864 + $0x40] sm:$0xff]
        %v874 = vld [vmem:[%s864 + $0x48] sm:$0xff]
        %v875 = vld [vmem:[%s864 + $0x50] sm:$0xff]
        %v876 = vld [vmem:[%s864 + $0x58] sm:$0xff]
        %v877 = vld [vmem:[%s864 + $0x60] sm:$0xff]
        %v878 = vld [vmem:[%s864 + $0x68] sm:$0xff]
        %v879 = vld [vmem:[%s864 + $0x70] sm:$0xff]
        %v880 = vld [vmem:[%s864 + $0x78] sm:$0xff]
        %881 = vmatprep.subr.mxu0 0.0
        %882 = vmatpush1.msra.mxu0 %v865
        %883 = vmatprep.subr.mxu0 0.0
        %884 = vmatpush1.msra.mxu0 %v866
        %885 = vmatprep.subr.mxu0 0.0
        %886 = vmatpush1.msra.mxu0 %v867
        %887 = vmatprep.subr.mxu0 0.0
        %888 = vmatpush1.msra.mxu0 %v868
        %889 = vmatprep.subr.mxu0 0.0
        %890 = vmatpush1.msra.mxu0 %v869
        %891 = vmatprep.subr.mxu0 0.0
        %892 = vmatpush1.msra.mxu0 %v870
        %893 = vmatprep.subr.mxu0 0.0
        %894 = vmatpush1.msra.mxu0 %v871
        %895 = vmatprep.subr.mxu0 0.0
        %896 = vmatpush1.msra.mxu0 %v872
        %897 = vmatprep.subr.mxu0 0.0
        %898 = vmatpush1.msra.mxu0 %v873
        %899 = vmatprep.subr.mxu0 0.0
        %900 = vmatpush1.msra.mxu0 %v874
        %901 = vmatprep.subr.mxu0 0.0
        %902 = vmatpush1.msra.mxu0 %v875
        %903 = vmatprep.subr.mxu0 0.0
        %904 = vmatpush1.msra.mxu0 %v876
        %905 = vmatprep.subr.mxu0 0.0
        %906 = vmatpush1.msra.mxu0 %v877
        %907 = vmatprep.subr.mxu0 0.0
        %908 = vmatpush1.msra.mxu0 %v878
        %909 = vmatprep.subr.mxu0 0.0
        %910 = vmatpush1.msra.mxu0 %v879
        %911 = vmatprep.subr.mxu0 0.0
        %912 = vmatpush1.msra.mxu0 %v880
        %913 = vmatprep.subr.mxu0 0.0
        %914 = vmatpush1.msra.mxu0 0.0
        %915 = vmatprep.subr.mxu0 0.0
        %916 = vmatpush1.msra.mxu0 0.0
        %917 = vmatprep.subr.mxu0 0.0
        %918 = vmatpush1.msra.mxu0 0.0
        %919 = vmatprep.subr.mxu0 0.0
        %920 = vmatpush1.msra.mxu0 0.0
        %921 = vmatprep.subr.mxu0 0.0
        %922 = vmatpush1.msra.mxu0 0.0
        %923 = vmatprep.subr.mxu0 0.0
        %924 = vmatpush1.msra.mxu0 0.0
        %925 = vmatprep.subr.mxu0 0.0
        %926 = vmatpush1.msra.mxu0 0.0
        %927 = vmatprep.subr.mxu0 0.0
        %928 = vmatpush1.msra.mxu0 0.0
        %929 = vmatprep.subr.mxu0 0.0
        %930 = vmatpush1.msra.mxu0 0.0
        %931 = vmatprep.subr.mxu0 0.0
        %932 = vmatpush1.msra.mxu0 0.0
        %933 = vmatprep.subr.mxu0 0.0
        %934 = vmatpush1.msra.mxu0 0.0
        %935 = vmatprep.subr.mxu0 0.0
        %936 = vmatpush1.msra.mxu0 0.0
        %937 = vmatprep.subr.mxu0 0.0
        %938 = vmatpush1.msra.mxu0 0.0
        %939 = vmatprep.subr.mxu0 0.0
        %940 = vmatpush1.msra.mxu0 0.0
        %941 = vmatprep.subr.mxu0 0.0
        %942 = vmatpush1.msra.mxu0 0.0
        %943 = vmatprep.subr.mxu0 0.0
        %944 = vmatpush1.msra.mxu0 0.0
        %945 = vmatprep.mubr.f32.mxu0 0.0
        %946 = vmatmul.mubr.f32.gmra.mrb[0].mxu0 %v832
        %v947 = vpop.f32.mrb[0].mxu0
        %v948 = vadd.f32 0.0, %v947
        %v949 = vpop.f32.mrb[0].mxu0
        %950 = vmatprep.mubr.f32.mxu0 0.0
        %951 = vmatmul.mubr.f32.gmra.mrb[0].mxu0 %v833
        %v952 = vpop.f32.mrb[0].mxu0
        %v953 = vadd.f32 0.0, %v952
        %v954 = vpop.f32.mrb[0].mxu0
        %955 = vmatprep.mubr.f32.mxu0 0.0
        %956 = vmatmul.mubr.f32.gmra.mrb[0].mxu0 %v834
        %v957 = vpop.f32.mrb[0].mxu0
        %v958 = vadd.f32 0.0, %v957
        %v959 = vpop.f32.mrb[0].mxu0
        %960 = vmatprep.mubr.f32.mxu0 0.0
        %961 = vmatmul.mubr.f32.gmra.mrb[0].mxu0 %v835
        %v962 = vpop.f32.mrb[0].mxu0
        %v963 = vadd.f32 0.0, %v962
        %v964 = vpop.f32.mrb[0].mxu0
        %965 = vmatprep.mubr.f32.mxu0 0.0
        %966 = vmatmul.mubr.f32.gmra.mrb[0].mxu0 %v836
        %v967 = vpop.f32.mrb[0].mxu0
        %v968 = vadd.f32 0.0, %v967
        %v969 = vpop.f32.mrb[0].mxu0
        %970 = vmatprep.mubr.f32.mxu0 0.0
        %971 = vmatmul.mubr.f32.gmra.mrb[0].mxu0 %v837
        %v972 = vpop.f32.mrb[0].mxu0
        %v973 = vadd.f32 0.0, %v972
        %v974 = vpop.f32.mrb[0].mxu0
        %975 = vmatprep.mubr.f32.mxu0 0.0
        %976 = vmatmul.mubr.f32.gmra.mrb[0].mxu0 %v838
        %v977 = vpop.f32.mrb[0].mxu0
        %v978 = vadd.f32 0.0, %v977
        %v979 = vpop.f32.mrb[0].mxu0
        %980 = vmatprep.mubr.f32.mxu0 0.0
        %981 = vmatmul.mubr.f32.gmra.mrb[0].mxu0 %v839
        %v982 = vpop.f32.mrb[0].mxu0
        %v983 = vadd.f32 0.0, %v982
        %v984 = vpop.f32.mrb[0].mxu0
        %985 = vmatprep.mubr.f32.mxu0 0.0
        %986 = vmatmul.mubr.f32.gmra.mrb[0].mxu0 %v840
        %v987 = vpop.f32.mrb[0].mxu0
        %v988 = vadd.f32 0.0, %v987
        %v989 = vpop.f32.mrb[0].mxu0
        %990 = vmatprep.mubr.f32.mxu0 0.0
        %991 = vmatmul.mubr.f32.gmra.mrb[0].mxu0 %v841
        %v992 = vpop.f32.mrb[0].mxu0
        %v993 = vadd.f32 0.0, %v992
        %v994 = vpop.f32.mrb[0].mxu0
        %995 = vmatprep.mubr.f32.mxu0 0.0
        %996 = vmatmul.mubr.f32.gmra.mrb[0].mxu0 %v842
        %v997 = vpop.f32.mrb[0].mxu0
        %v998 = vadd.f32 0.0, %v997
        %v999 = vpop.f32.mrb[0].mxu0
        %1000 = vmatprep.mubr.f32.mxu0 0.0
        %1001 = vmatmul.mubr.f32.gmra.mrb[0].mxu0 %v843
        %v1002 = vpop.f32.mrb[0].mxu0
        %v1003 = vadd.f32 0.0, %v1002
        %v1004 = vpop.f32.mrb[0].mxu0
        %1005 = vmatprep.mubr.f32.mxu0 0.0
        %1006 = vmatmul.mubr.f32.gmra.mrb[0].mxu0 %v844
        %v1007 = vpop.f32.mrb[0].mxu0
        %v1008 = vadd.f32 0.0, %v1007
        %v1009 = vpop.f32.mrb[0].mxu0
        %1010 = vmatprep.mubr.f32.mxu0 0.0
        %1011 = vmatmul.mubr.f32.gmra.mrb[0].mxu0 %v845
        %v1012 = vpop.f32.mrb[0].mxu0
        %v1013 = vadd.f32 0.0, %v1012
        %v1014 = vpop.f32.mrb[0].mxu0
        %1015 = vmatprep.mubr.f32.mxu0 0.0
        %1016 = vmatmul.mubr.f32.gmra.mrb[0].mxu0 %v846
        %v1017 = vpop.f32.mrb[0].mxu0
        %v1018 = vadd.f32 0.0, %v1017
        %v1019 = vpop.f32.mrb[0].mxu0
        %1020 = vmatprep.mubr.f32.mxu0 0.0
        %1021 = vmatmul.mubr.f32.gmra.mrb[0].mxu0 %v847
        %v1022 = vpop.f32.mrb[0].mxu0
        %v1023 = vadd.f32 0.0, %v1022
        %v1024 = vpop.f32.mrb[0].mxu0
        %1025 = vmatprep.mubr.f32.mxu0 0.0
        %1026 = vmatmul.mubr.f32.gmra.mrb[0].mxu0 %v848
        %v1027 = vpop.f32.mrb[0].mxu0
        %v1028 = vadd.f32 0.0, %v1027
        %v1029 = vpop.f32.mrb[0].mxu0
        %1030 = vmatprep.mubr.f32.mxu0 0.0
        %1031 = vmatmul.mubr.f32.gmra.mrb[0].mxu0 %v849
        %v1032 = vpop.f32.mrb[0].mxu0
        %v1033 = vadd.f32 0.0, %v1032
        %v1034 = vpop.f32.mrb[0].mxu0
        %1035 = vmatprep.mubr.f32.mxu0 0.0
        %1036 = vmatmul.mubr.f32.gmra.mrb[0].mxu0 %v850
        %v1037 = vpop.f32.mrb[0].mxu0
        %v1038 = vadd.f32 0.0, %v1037
        %v1039 = vpop.f32.mrb[0].mxu0
        %1040 = vmatprep.mubr.f32.mxu0 0.0
        %1041 = vmatmul.mubr.f32.gmra.mrb[0].mxu0 %v851
        %v1042 = vpop.f32.mrb[0].mxu0
        %v1043 = vadd.f32 0.0, %v1042
        %v1044 = vpop.f32.mrb[0].mxu0
        %1045 = vmatprep.mubr.f32.mxu0 0.0
        %1046 = vmatmul.mubr.f32.gmra.mrb[0].mxu0 %v852
        %v1047 = vpop.f32.mrb[0].mxu0
        %v1048 = vadd.f32 0.0, %v1047
        %v1049 = vpop.f32.mrb[0].mxu0
        %1050 = vmatprep.mubr.f32.mxu0 0.0
        %1051 = vmatmul.mubr.f32.gmra.mrb[0].mxu0 %v853
        %v1052 = vpop.f32.mrb[0].mxu0
        %v1053 = vadd.f32 0.0, %v1052
        %v1054 = vpop.f32.mrb[0].mxu0
        %1055 = vmatprep.mubr.f32.mxu0 0.0
        %1056 = vmatmul.mubr.f32.gmra.mrb[0].mxu0 %v854
        %v1057 = vpop.f32.mrb[0].mxu0
        %v1058 = vadd.f32 0.0, %v1057
        %v1059 = vpop.f32.mrb[0].mxu0
        %1060 = vmatprep.mubr.f32.mxu0 0.0
        %1061 = vmatmul.mubr.f32.gmra.mrb[0].mxu0 %v855
        %v1062 = vpop.f32.mrb[0].mxu0
        %v1063 = vadd.f32 0.0, %v1062
        %v1064 = vpop.f32.mrb[0].mxu0
        %1065 = vmatprep.mubr.f32.mxu0 0.0
        %1066 = vmatmul.mubr.f32.gmra.mrb[0].mxu0 %v856
        %v1067 = vpop.f32.mrb[0].mxu0
        %v1068 = vadd.f32 0.0, %v1067
        %v1069 = vpop.f32.mrb[0].mxu0
        %1070 = vmatprep.mubr.f32.mxu0 0.0
        %1071 = vmatmul.mubr.f32.gmra.mrb[0].mxu0 %v857
        %v1072 = vpop.f32.mrb[0].mxu0
        %v1073 = vadd.f32 0.0, %v1072
        %v1074 = vpop.f32.mrb[0].mxu0
        %1075 = vmatprep.mubr.f32.mxu0 0.0
        %1076 = vmatmul.mubr.f32.gmra.mrb[0].mxu0 %v858
        %v1077 = vpop.f32.mrb[0].mxu0
        %v1078 = vadd.f32 0.0, %v1077
        %v1079 = vpop.f32.mrb[0].mxu0
        %1080 = vmatprep.mubr.f32.mxu0 0.0
        %1081 = vmatmul.mubr.f32.gmra.mrb[0].mxu0 %v859
        %v1082 = vpop.f32.mrb[0].mxu0
        %v1083 = vadd.f32 0.0, %v1082
        %v1084 = vpop.f32.mrb[0].mxu0
        %1085 = vmatprep.mubr.f32.mxu0 0.0
        %1086 = vmatmul.mubr.f32.gmra.mrb[0].mxu0 %v860
        %v1087 = vpop.f32.mrb[0].mxu0
        %v1088 = vadd.f32 0.0, %v1087
        %v1089 = vpop.f32.mrb[0].mxu0
        %1090 = vmatprep.mubr.f32.mxu0 0.0
        %1091 = vmatmul.mubr.f32.gmra.mrb[0].mxu0 %v861
        %v1092 = vpop.f32.mrb[0].mxu0
        %v1093 = vadd.f32 0.0, %v1092
        %v1094 = vpop.f32.mrb[0].mxu0
        %1095 = vmatprep.mubr.f32.mxu0 0.0
        %1096 = vmatmul.mubr.f32.gmra.mrb[0].mxu0 %v862
        %v1097 = vpop.f32.mrb[0].mxu0
        %v1098 = vadd.f32 0.0, %v1097
        %v1099 = vpop.f32.mrb[0].mxu0
        %1100 = vmatprep.mubr.f32.mxu0 0.0
        %1101 = vmatmul.mubr.f32.gmra.mrb[0].mxu0 %v863
        %v1102 = vpop.f32.mrb[0].mxu0
        %v1103 = vadd.f32 0.0, %v1102
        %v1104 = vpop.f32.mrb[0].mxu0
        %1105 = vdwg.mxu0
        %v1106 = vld [vmem:[#allocation4] sm:$0xff]
        %v1107 = vld [vmem:[#allocation4 + $0x8] sm:$0xff]
        %v1108 = vld [vmem:[#allocation4 + $0x10] sm:$0xff]
        %v1109 = vld [vmem:[#allocation4 + $0x18] sm:$0xff]
        %v1110 = vld [vmem:[#allocation4 + $0x20] sm:$0xff]
        %v1111 = vld [vmem:[#allocation4 + $0x28] sm:$0xff]
        %v1112 = vld [vmem:[#allocation4 + $0x30] sm:$0xff]
        %v1113 = vld [vmem:[#allocation4 + $0x38] sm:$0xff]
        %v1114 = vld [vmem:[#allocation4 + $0x40] sm:$0xff]
        %v1115 = vld [vmem:[#allocation4 + $0x48] sm:$0xff]
        %v1116 = vld [vmem:[#allocation4 + $0x50] sm:$0xff]
        %v1117 = vld [vmem:[#allocation4 + $0x58] sm:$0xff]
        %v1118 = vld [vmem:[#allocation4 + $0x60] sm:$0xff]
        %v1119 = vld [vmem:[#allocation4 + $0x68] sm:$0xff]
        %v1120 = vld [vmem:[#allocation4 + $0x70] sm:$0xff]
        %v1121 = vld [vmem:[#allocation4 + $0x78] sm:$0xff]
        %v1122 = vld [vmem:[#allocation4 + $0x80] sm:$0xff]
        %v1123 = vld [vmem:[#allocation4 + $0x88] sm:$0xff]
        %v1124 = vld [vmem:[#allocation4 + $0x90] sm:$0xff]
        %v1125 = vld [vmem:[#allocation4 + $0x98] sm:$0xff]
        %v1126 = vld [vmem:[#allocation4 + $0xa0] sm:$0xff]
        %v1127 = vld [vmem:[#allocation4 + $0xa8] sm:$0xff]
        %v1128 = vld [vmem:[#allocation4 + $0xb0] sm:$0xff]
        %v1129 = vld [vmem:[#allocation4 + $0xb8] sm:$0xff]
        %v1130 = vld [vmem:[#allocation4 + $0xc0] sm:$0xff]
        %v1131 = vld [vmem:[#allocation4 + $0xc8] sm:$0xff]
        %v1132 = vld [vmem:[#allocation4 + $0xd0] sm:$0xff]
        %v1133 = vld [vmem:[#allocation4 + $0xd8] sm:$0xff]
        %v1134 = vld [vmem:[#allocation4 + $0xe0] sm:$0xff]
        %v1135 = vld [vmem:[#allocation4 + $0xe8] sm:$0xff]
        %v1136 = vld [vmem:[#allocation4 + $0xf0] sm:$0xff]
        %v1137 = vld [vmem:[#allocation4 + $0xf8] sm:$0xff]
        %v1138 = vadd.f32 %v1106, %v948
        %v1139 = vadd.f32 %v1107, %v953
        %v1140 = vadd.f32 %v1108, %v958
        %v1141 = vadd.f32 %v1109, %v963
        %v1142 = vadd.f32 %v1110, %v968
        %v1143 = vadd.f32 %v1111, %v973
        %v1144 = vadd.f32 %v1112, %v978
        %v1145 = vadd.f32 %v1113, %v983
        %v1146 = vadd.f32 %v1114, %v988
        %v1147 = vadd.f32 %v1115, %v993
        %v1148 = vadd.f32 %v1116, %v998
        %v1149 = vadd.f32 %v1117, %v1003
        %v1150 = vadd.f32 %v1118, %v1008
        %v1151 = vadd.f32 %v1119, %v1013
        %v1152 = vadd.f32 %v1120, %v1018
        %v1153 = vadd.f32 %v1121, %v1023
        %v1154 = vadd.f32 %v1122, %v1028
        %v1155 = vadd.f32 %v1123, %v1033
        %v1156 = vadd.f32 %v1124, %v1038
        %v1157 = vadd.f32 %v1125, %v1043
        %v1158 = vadd.f32 %v1126, %v1048
        %v1159 = vadd.f32 %v1127, %v1053
        %v1160 = vadd.f32 %v1128, %v1058
        %v1161 = vadd.f32 %v1129, %v1063
        %v1162 = vadd.f32 %v1130, %v1068
        %v1163 = vadd.f32 %v1131, %v1073
        %v1164 = vadd.f32 %v1132, %v1078
        %v1165 = vadd.f32 %v1133, %v1083
        %v1166 = vadd.f32 %v1134, %v1088
        %v1167 = vadd.f32 %v1135, %v1093
        %v1168 = vadd.f32 %v1136, %v1098
        %v1169 = vadd.f32 %v1137, %v1103
        %1170 = vst [vmem:[#allocation4] sm:$0xff] %v1138
        %1171 = vst [vmem:[#allocation4 + $0x8] sm:$0xff] %v1139
        %1172 = vst [vmem:[#allocation4 + $0x10] sm:$0xff] %v1140
        %1173 = vst [vmem:[#allocation4 + $0x18] sm:$0xff] %v1141
        %1174 = vst [vmem:[#allocation4 + $0x20] sm:$0xff] %v1142
        %1175 = vst [vmem:[#allocation4 + $0x28] sm:$0xff] %v1143
        %1176 = vst [vmem:[#allocation4 + $0x30] sm:$0xff] %v1144
        %1177 = vst [vmem:[#allocation4 + $0x38] sm:$0xff] %v1145
        %1178 = vst [vmem:[#allocation4 + $0x40] sm:$0xff] %v1146
        %1179 = vst [vmem:[#allocation4 + $0x48] sm:$0xff] %v1147
        %1180 = vst [vmem:[#allocation4 + $0x50] sm:$0xff] %v1148
        %1181 = vst [vmem:[#allocation4 + $0x58] sm:$0xff] %v1149
        %1182 = vst [vmem:[#allocation4 + $0x60] sm:$0xff] %v1150
        %1183 = vst [vmem:[#allocation4 + $0x68] sm:$0xff] %v1151
        %1184 = vst [vmem:[#allocation4 + $0x70] sm:$0xff] %v1152
        %1185 = vst [vmem:[#allocation4 + $0x78] sm:$0xff] %v1153
        %1186 = vst [vmem:[#allocation4 + $0x80] sm:$0xff] %v1154
        %1187 = vst [vmem:[#allocation4 + $0x88] sm:$0xff] %v1155
        %1188 = vst [vmem:[#allocation4 + $0x90] sm:$0xff] %v1156
        %1189 = vst [vmem:[#allocation4 + $0x98] sm:$0xff] %v1157
        %1190 = vst [vmem:[#allocation4 + $0xa0] sm:$0xff] %v1158
        %1191 = vst [vmem:[#allocation4 + $0xa8] sm:$0xff] %v1159
        %1192 = vst [vmem:[#allocation4 + $0xb0] sm:$0xff] %v1160
        %1193 = vst [vmem:[#allocation4 + $0xb8] sm:$0xff] %v1161
        %1194 = vst [vmem:[#allocation4 + $0xc0] sm:$0xff] %v1162
        %1195 = vst [vmem:[#allocation4 + $0xc8] sm:$0xff] %v1163
        %1196 = vst [vmem:[#allocation4 + $0xd0] sm:$0xff] %v1164
        %1197 = vst [vmem:[#allocation4 + $0xd8] sm:$0xff] %v1165
        %1198 = vst [vmem:[#allocation4 + $0xe0] sm:$0xff] %v1166
        %1199 = vst [vmem:[#allocation4 + $0xe8] sm:$0xff] %v1167
        %1200 = vst [vmem:[#allocation4 + $0xf0] sm:$0xff] %v1168
        %1201 = vst [vmem:[#allocation4 + $0xf8] sm:$0xff] %v1169
        %v1202 = vld [vmem:[#allocation2 + $0x2] sm:$0xff]
        %v1203 = vld [vmem:[#allocation2 + $0xa] sm:$0xff]
        %v1204 = vld [vmem:[#allocation2 + $0x1a] sm:$0xff]
        %v1205 = vld [vmem:[#allocation2 + $0x22] sm:$0xff]
        %v1206 = vld [vmem:[#allocation2 + $0x32] sm:$0xff]
        %v1207 = vld [vmem:[#allocation2 + $0x3a] sm:$0xff]
        %v1208 = vld [vmem:[#allocation2 + $0x4a] sm:$0xff]
        %v1209 = vld [vmem:[#allocation2 + $0x52] sm:$0xff]
        %v1210 = vld [vmem:[#allocation2 + $0x62] sm:$0xff]
        %v1211 = vld [vmem:[#allocation2 + $0x6a] sm:$0xff]
        %v1212 = vld [vmem:[#allocation2 + $0x7a] sm:$0xff]
        %v1213 = vld [vmem:[#allocation2 + $0x82] sm:$0xff]
        %v1214 = vld [vmem:[#allocation2 + $0x92] sm:$0xff]
        %v1215 = vld [vmem:[#allocation2 + $0x9a] sm:$0xff]
        %v1216 = vld [vmem:[#allocation2 + $0xaa] sm:$0xff]
        %v1217 = vld [vmem:[#allocation2 + $0xb2] sm:$0xff]
        %v1218 = vld [vmem:[#allocation2 + $0xc2] sm:$0xff]
        %v1219 = vld [vmem:[#allocation2 + $0xca] sm:$0xff]
        %v1220 = vld [vmem:[#allocation2 + $0xda] sm:$0xff]
        %v1221 = vld [vmem:[#allocation2 + $0xe2] sm:$0xff]
        %v1222 = vld [vmem:[#allocation2 + $0xf2] sm:$0xff]
        %v1223 = vld [vmem:[#allocation2 + $0xfa] sm:$0xff]
        %v1224 = vld [vmem:[#allocation2 + $0x10a] sm:$0xff]
        %v1225 = vld [vmem:[#allocation2 + $0x112] sm:$0xff]
        %v1226 = vld [vmem:[#allocation2 + $0x122] sm:$0xff]
        %v1227 = vld [vmem:[#allocation2 + $0x12a] sm:$0xff]
        %v1228 = vld [vmem:[#allocation2 + $0x13a] sm:$0xff]
        %v1229 = vld [vmem:[#allocation2 + $0x142] sm:$0xff]
        %v1230 = vld [vmem:[#allocation2 + $0x152] sm:$0xff]
        %v1231 = vld [vmem:[#allocation2 + $0x15a] sm:$0xff]
        %v1232 = vld [vmem:[#allocation2 + $0x16a] sm:$0xff]
        %v1233 = vld [vmem:[#allocation2 + $0x172] sm:$0xff]
        %s1234 = scalar_lea.vmem [#allocation5], 256
        %v1235 = vld [vmem:[%s1234] sm:$0xff]
        %v1236 = vld [vmem:[%s1234 + $0x8] sm:$0xff]
        %v1237 = vld [vmem:[%s1234 + $0x10] sm:$0xff]
        %v1238 = vld [vmem:[%s1234 + $0x18] sm:$0xff]
        %v1239 = vld [vmem:[%s1234 + $0x20] sm:$0xff]
        %v1240 = vld [vmem:[%s1234 + $0x28] sm:$0xff]
        %v1241 = vld [vmem:[%s1234 + $0x30] sm:$0xff]
        %v1242 = vld [vmem:[%s1234 + $0x38] sm:$0xff]
        %v1243 = vld [vmem:[%s1234 + $0x40] sm:$0xff]
        %v1244 = vld [vmem:[%s1234 + $0x48] sm:$0xff]
        %v1245 = vld [vmem:[%s1234 + $0x50] sm:$0xff]
        %v1246 = vld [vmem:[%s1234 + $0x58] sm:$0xff]
        %v1247 = vld [vmem:[%s1234 + $0x60] sm:$0xff]
        %v1248 = vld [vmem:[%s1234 + $0x68] sm:$0xff]
        %v1249 = vld [vmem:[%s1234 + $0x70] sm:$0xff]
        %v1250 = vld [vmem:[%s1234 + $0x78] sm:$0xff]
        %1251 = vmatprep.subr.mxu0 0.0
        %1252 = vmatpush1.msra.mxu0 %v1235
        %1253 = vmatprep.subr.mxu0 0.0
        %1254 = vmatpush1.msra.mxu0 %v1236
        %1255 = vmatprep.subr.mxu0 0.0
        %1256 = vmatpush1.msra.mxu0 %v1237
        %1257 = vmatprep.subr.mxu0 0.0
        %1258 = vmatpush1.msra.mxu0 %v1238
        %1259 = vmatprep.subr.mxu0 0.0
        %1260 = vmatpush1.msra.mxu0 %v1239
        %1261 = vmatprep.subr.mxu0 0.0
        %1262 = vmatpush1.msra.mxu0 %v1240
        %1263 = vmatprep.subr.mxu0 0.0
        %1264 = vmatpush1.msra.mxu0 %v1241
        %1265 = vmatprep.subr.mxu0 0.0
        %1266 = vmatpush1.msra.mxu0 %v1242
        %1267 = vmatprep.subr.mxu0 0.0
        %1268 = vmatpush1.msra.mxu0 %v1243
        %1269 = vmatprep.subr.mxu0 0.0
        %1270 = vmatpush1.msra.mxu0 %v1244
        %1271 = vmatprep.subr.mxu0 0.0
        %1272 = vmatpush1.msra.mxu0 %v1245
        %1273 = vmatprep.subr.mxu0 0.0
        %1274 = vmatpush1.msra.mxu0 %v1246
        %1275 = vmatprep.subr.mxu0 0.0
        %1276 = vmatpush1.msra.mxu0 %v1247
        %1277 = vmatprep.subr.mxu0 0.0
        %1278 = vmatpush1.msra.mxu0 %v1248
        %1279 = vmatprep.subr.mxu0 0.0
        %1280 = vmatpush1.msra.mxu0 %v1249
        %1281 = vmatprep.subr.mxu0 0.0
        %1282 = vmatpush1.msra.mxu0 %v1250
        %1283 = vmatprep.subr.mxu0 0.0
        %1284 = vmatpush1.msra.mxu0 0.0
        %1285 = vmatprep.subr.mxu0 0.0
        %1286 = vmatpush1.msra.mxu0 0.0
        %1287 = vmatprep.subr.mxu0 0.0
        %1288 = vmatpush1.msra.mxu0 0.0
        %1289 = vmatprep.subr.mxu0 0.0
        %1290 = vmatpush1.msra.mxu0 0.0
        %1291 = vmatprep.subr.mxu0 0.0
        %1292 = vmatpush1.msra.mxu0 0.0
        %1293 = vmatprep.subr.mxu0 0.0
        %1294 = vmatpush1.msra.mxu0 0.0
        %1295 = vmatprep.subr.mxu0 0.0
        %1296 = vmatpush1.msra.mxu0 0.0
        %1297 = vmatprep.subr.mxu0 0.0
        %1298 = vmatpush1.msra.mxu0 0.0
        %1299 = vmatprep.subr.mxu0 0.0
        %1300 = vmatpush1.msra.mxu0 0.0
        %1301 = vmatprep.subr.mxu0 0.0
        %1302 = vmatpush1.msra.mxu0 0.0
        %1303 = vmatprep.subr.mxu0 0.0
        %1304 = vmatpush1.msra.mxu0 0.0
        %1305 = vmatprep.subr.mxu0 0.0
        %1306 = vmatpush1.msra.mxu0 0.0
        %1307 = vmatprep.subr.mxu0 0.0
        %1308 = vmatpush1.msra.mxu0 0.0
        %1309 = vmatprep.subr.mxu0 0.0
        %1310 = vmatpush1.msra.mxu0 0.0
        %1311 = vmatprep.subr.mxu0 0.0
        %1312 = vmatpush1.msra.mxu0 0.0
        %1313 = vmatprep.subr.mxu0 0.0
        %1314 = vmatpush1.msra.mxu0 0.0
        %1315 = vmatprep.mubr.f32.mxu0 0.0
        %1316 = vmatmul.mubr.f32.gmra.mrb[0].mxu0 %v1202
        %v1317 = vpop.f32.mrb[0].mxu0
        %v1318 = vadd.f32 0.0, %v1317
        %v1319 = vpop.f32.mrb[0].mxu0
        %1320 = vmatprep.mubr.f32.mxu0 0.0
        %1321 = vmatmul.mubr.f32.gmra.mrb[0].mxu0 %v1203
        %v1322 = vpop.f32.mrb[0].mxu0
        %v1323 = vadd.f32 0.0, %v1322
        %v1324 = vpop.f32.mrb[0].mxu0
        %1325 = vmatprep.mubr.f32.mxu0 0.0
        %1326 = vmatmul.mubr.f32.gmra.mrb[0].mxu0 %v1204
        %v1327 = vpop.f32.mrb[0].mxu0
        %v1328 = vadd.f32 0.0, %v1327
        %v1329 = vpop.f32.mrb[0].mxu0
        %1330 = vmatprep.mubr.f32.mxu0 0.0
        %1331 = vmatmul.mubr.f32.gmra.mrb[0].mxu0 %v1205
        %v1332 = vpop.f32.mrb[0].mxu0
        %v1333 = vadd.f32 0.0, %v1332
        %v1334 = vpop.f32.mrb[0].mxu0
        %1335 = vmatprep.mubr.f32.mxu0 0.0
        %1336 = vmatmul.mubr.f32.gmra.mrb[0].mxu0 %v1206
        %v1337 = vpop.f32.mrb[0].mxu0
        %v1338 = vadd.f32 0.0, %v1337
        %v1339 = vpop.f32.mrb[0].mxu0
        %1340 = vmatprep.mubr.f32.mxu0 0.0
        %1341 = vmatmul.mubr.f32.gmra.mrb[0].mxu0 %v1207
        %v1342 = vpop.f32.mrb[0].mxu0
        %v1343 = vadd.f32 0.0, %v1342
        %v1344 = vpop.f32.mrb[0].mxu0
        %1345 = vmatprep.mubr.f32.mxu0 0.0
        %1346 = vmatmul.mubr.f32.gmra.mrb[0].mxu0 %v1208
        %v1347 = vpop.f32.mrb[0].mxu0
        %v1348 = vadd.f32 0.0, %v1347
        %v1349 = vpop.f32.mrb[0].mxu0
        %1350 = vmatprep.mubr.f32.mxu0 0.0
        %1351 = vmatmul.mubr.f32.gmra.mrb[0].mxu0 %v1209
        %v1352 = vpop.f32.mrb[0].mxu0
        %v1353 = vadd.f32 0.0, %v1352
        %v1354 = vpop.f32.mrb[0].mxu0
        %1355 = vmatprep.mubr.f32.mxu0 0.0
        %1356 = vmatmul.mubr.f32.gmra.mrb[0].mxu0 %v1210
        %v1357 = vpop.f32.mrb[0].mxu0
        %v1358 = vadd.f32 0.0, %v1357
        %v1359 = vpop.f32.mrb[0].mxu0
        %1360 = vmatprep.mubr.f32.mxu0 0.0
        %1361 = vmatmul.mubr.f32.gmra.mrb[0].mxu0 %v1211
        %v1362 = vpop.f32.mrb[0].mxu0
        %v1363 = vadd.f32 0.0, %v1362
        %v1364 = vpop.f32.mrb[0].mxu0
        %1365 = vmatprep.mubr.f32.mxu0 0.0
        %1366 = vmatmul.mubr.f32.gmra.mrb[0].mxu0 %v1212
        %v1367 = vpop.f32.mrb[0].mxu0
        %v1368 = vadd.f32 0.0, %v1367
        %v1369 = vpop.f32.mrb[0].mxu0
        %1370 = vmatprep.mubr.f32.mxu0 0.0
        %1371 = vmatmul.mubr.f32.gmra.mrb[0].mxu0 %v1213
        %v1372 = vpop.f32.mrb[0].mxu0
        %v1373 = vadd.f32 0.0, %v1372
        %v1374 = vpop.f32.mrb[0].mxu0
        %1375 = vmatprep.mubr.f32.mxu0 0.0
        %1376 = vmatmul.mubr.f32.gmra.mrb[0].mxu0 %v1214
        %v1377 = vpop.f32.mrb[0].mxu0
        %v1378 = vadd.f32 0.0, %v1377
        %v1379 = vpop.f32.mrb[0].mxu0
        %1380 = vmatprep.mubr.f32.mxu0 0.0
        %1381 = vmatmul.mubr.f32.gmra.mrb[0].mxu0 %v1215
        %v1382 = vpop.f32.mrb[0].mxu0
        %v1383 = vadd.f32 0.0, %v1382
        %v1384 = vpop.f32.mrb[0].mxu0
        %1385 = vmatprep.mubr.f32.mxu0 0.0
        %1386 = vmatmul.mubr.f32.gmra.mrb[0].mxu0 %v1216
        %v1387 = vpop.f32.mrb[0].mxu0
        %v1388 = vadd.f32 0.0, %v1387
        %v1389 = vpop.f32.mrb[0].mxu0
        %1390 = vmatprep.mubr.f32.mxu0 0.0
        %1391 = vmatmul.mubr.f32.gmra.mrb[0].mxu0 %v1217
        %v1392 = vpop.f32.mrb[0].mxu0
        %v1393 = vadd.f32 0.0, %v1392
        %v1394 = vpop.f32.mrb[0].mxu0
        %1395 = vmatprep.mubr.f32.mxu0 0.0
        %1396 = vmatmul.mubr.f32.gmra.mrb[0].mxu0 %v1218
        %v1397 = vpop.f32.mrb[0].mxu0
        %v1398 = vadd.f32 0.0, %v1397
        %v1399 = vpop.f32.mrb[0].mxu0
        %1400 = vmatprep.mubr.f32.mxu0 0.0
        %1401 = vmatmul.mubr.f32.gmra.mrb[0].mxu0 %v1219
        %v1402 = vpop.f32.mrb[0].mxu0
        %v1403 = vadd.f32 0.0, %v1402
        %v1404 = vpop.f32.mrb[0].mxu0
        %1405 = vmatprep.mubr.f32.mxu0 0.0
        %1406 = vmatmul.mubr.f32.gmra.mrb[0].mxu0 %v1220
        %v1407 = vpop.f32.mrb[0].mxu0
        %v1408 = vadd.f32 0.0, %v1407
        %v1409 = vpop.f32.mrb[0].mxu0
        %1410 = vmatprep.mubr.f32.mxu0 0.0
        %1411 = vmatmul.mubr.f32.gmra.mrb[0].mxu0 %v1221
        %v1412 = vpop.f32.mrb[0].mxu0
        %v1413 = vadd.f32 0.0, %v1412
        %v1414 = vpop.f32.mrb[0].mxu0
        %1415 = vmatprep.mubr.f32.mxu0 0.0
        %1416 = vmatmul.mubr.f32.gmra.mrb[0].mxu0 %v1222
        %v1417 = vpop.f32.mrb[0].mxu0
        %v1418 = vadd.f32 0.0, %v1417
        %v1419 = vpop.f32.mrb[0].mxu0
        %1420 = vmatprep.mubr.f32.mxu0 0.0
        %1421 = vmatmul.mubr.f32.gmra.mrb[0].mxu0 %v1223
        %v1422 = vpop.f32.mrb[0].mxu0
        %v1423 = vadd.f32 0.0, %v1422
        %v1424 = vpop.f32.mrb[0].mxu0
        %1425 = vmatprep.mubr.f32.mxu0 0.0
        %1426 = vmatmul.mubr.f32.gmra.mrb[0].mxu0 %v1224
        %v1427 = vpop.f32.mrb[0].mxu0
        %v1428 = vadd.f32 0.0, %v1427
        %v1429 = vpop.f32.mrb[0].mxu0
        %1430 = vmatprep.mubr.f32.mxu0 0.0
        %1431 = vmatmul.mubr.f32.gmra.mrb[0].mxu0 %v1225
        %v1432 = vpop.f32.mrb[0].mxu0
        %v1433 = vadd.f32 0.0, %v1432
        %v1434 = vpop.f32.mrb[0].mxu0
        %1435 = vmatprep.mubr.f32.mxu0 0.0
        %1436 = vmatmul.mubr.f32.gmra.mrb[0].mxu0 %v1226
        %v1437 = vpop.f32.mrb[0].mxu0
        %v1438 = vadd.f32 0.0, %v1437
        %v1439 = vpop.f32.mrb[0].mxu0
        %1440 = vmatprep.mubr.f32.mxu0 0.0
        %1441 = vmatmul.mubr.f32.gmra.mrb[0].mxu0 %v1227
        %v1442 = vpop.f32.mrb[0].mxu0
        %v1443 = vadd.f32 0.0, %v1442
        %v1444 = vpop.f32.mrb[0].mxu0
        %1445 = vmatprep.mubr.f32.mxu0 0.0
        %1446 = vmatmul.mubr.f32.gmra.mrb[0].mxu0 %v1228
        %v1447 = vpop.f32.mrb[0].mxu0
        %v1448 = vadd.f32 0.0, %v1447
        %v1449 = vpop.f32.mrb[0].mxu0
        %1450 = vmatprep.mubr.f32.mxu0 0.0
        %1451 = vmatmul.mubr.f32.gmra.mrb[0].mxu0 %v1229
        %v1452 = vpop.f32.mrb[0].mxu0
        %v1453 = vadd.f32 0.0, %v1452
        %v1454 = vpop.f32.mrb[0].mxu0
        %1455 = vmatprep.mubr.f32.mxu0 0.0
        %1456 = vmatmul.mubr.f32.gmra.mrb[0].mxu0 %v1230
        %v1457 = vpop.f32.mrb[0].mxu0
        %v1458 = vadd.f32 0.0, %v1457
        %v1459 = vpop.f32.mrb[0].mxu0
        %1460 = vmatprep.mubr.f32.mxu0 0.0
        %1461 = vmatmul.mubr.f32.gmra.mrb[0].mxu0 %v1231
        %v1462 = vpop.f32.mrb[0].mxu0
        %v1463 = vadd.f32 0.0, %v1462
        %v1464 = vpop.f32.mrb[0].mxu0
        %1465 = vmatprep.mubr.f32.mxu0 0.0
        %1466 = vmatmul.mubr.f32.gmra.mrb[0].mxu0 %v1232
        %v1467 = vpop.f32.mrb[0].mxu0
        %v1468 = vadd.f32 0.0, %v1467
        %v1469 = vpop.f32.mrb[0].mxu0
        %1470 = vmatprep.mubr.f32.mxu0 0.0
        %1471 = vmatmul.mubr.f32.gmra.mrb[0].mxu0 %v1233
        %v1472 = vpop.f32.mrb[0].mxu0
        %v1473 = vadd.f32 0.0, %v1472
        %v1474 = vpop.f32.mrb[0].mxu0
        %1475 = vdwg.mxu0
        %v1476 = vld [vmem:[#allocation4] sm:$0xff]
        %v1477 = vld [vmem:[#allocation4 + $0x8] sm:$0xff]
        %v1478 = vld [vmem:[#allocation4 + $0x10] sm:$0xff]
        %v1479 = vld [vmem:[#allocation4 + $0x18] sm:$0xff]
        %v1480 = vld [vmem:[#allocation4 + $0x20] sm:$0xff]
        %v1481 = vld [vmem:[#allocation4 + $0x28] sm:$0xff]
        %v1482 = vld [vmem:[#allocation4 + $0x30] sm:$0xff]
        %v1483 = vld [vmem:[#allocation4 + $0x38] sm:$0xff]
        %v1484 = vld [vmem:[#allocation4 + $0x40] sm:$0xff]
        %v1485 = vld [vmem:[#allocation4 + $0x48] sm:$0xff]
        %v1486 = vld [vmem:[#allocation4 + $0x50] sm:$0xff]
        %v1487 = vld [vmem:[#allocation4 + $0x58] sm:$0xff]
        %v1488 = vld [vmem:[#allocation4 + $0x60] sm:$0xff]
        %v1489 = vld [vmem:[#allocation4 + $0x68] sm:$0xff]
        %v1490 = vld [vmem:[#allocation4 + $0x70] sm:$0xff]
        %v1491 = vld [vmem:[#allocation4 + $0x78] sm:$0xff]
        %v1492 = vld [vmem:[#allocation4 + $0x80] sm:$0xff]
        %v1493 = vld [vmem:[#allocation4 + $0x88] sm:$0xff]
        %v1494 = vld [vmem:[#allocation4 + $0x90] sm:$0xff]
        %v1495 = vld [vmem:[#allocation4 + $0x98] sm:$0xff]
        %v1496 = vld [vmem:[#allocation4 + $0xa0] sm:$0xff]
        %v1497 = vld [vmem:[#allocation4 + $0xa8] sm:$0xff]
        %v1498 = vld [vmem:[#allocation4 + $0xb0] sm:$0xff]
        %v1499 = vld [vmem:[#allocation4 + $0xb8] sm:$0xff]
        %v1500 = vld [vmem:[#allocation4 + $0xc0] sm:$0xff]
        %v1501 = vld [vmem:[#allocation4 + $0xc8] sm:$0xff]
        %v1502 = vld [vmem:[#allocation4 + $0xd0] sm:$0xff]
        %v1503 = vld [vmem:[#allocation4 + $0xd8] sm:$0xff]
        %v1504 = vld [vmem:[#allocation4 + $0xe0] sm:$0xff]
        %v1505 = vld [vmem:[#allocation4 + $0xe8] sm:$0xff]
        %v1506 = vld [vmem:[#allocation4 + $0xf0] sm:$0xff]
        %v1507 = vld [vmem:[#allocation4 + $0xf8] sm:$0xff]
        %v1508 = vadd.f32 %v1476, %v1318
        %v1509 = vadd.f32 %v1477, %v1323
        %v1510 = vadd.f32 %v1478, %v1328
        %v1511 = vadd.f32 %v1479, %v1333
        %v1512 = vadd.f32 %v1480, %v1338
        %v1513 = vadd.f32 %v1481, %v1343
        %v1514 = vadd.f32 %v1482, %v1348
        %v1515 = vadd.f32 %v1483, %v1353
        %v1516 = vadd.f32 %v1484, %v1358
        %v1517 = vadd.f32 %v1485, %v1363
        %v1518 = vadd.f32 %v1486, %v1368
        %v1519 = vadd.f32 %v1487, %v1373
        %v1520 = vadd.f32 %v1488, %v1378
        %v1521 = vadd.f32 %v1489, %v1383
        %v1522 = vadd.f32 %v1490, %v1388
        %v1523 = vadd.f32 %v1491, %v1393
        %v1524 = vadd.f32 %v1492, %v1398
        %v1525 = vadd.f32 %v1493, %v1403
        %v1526 = vadd.f32 %v1494, %v1408
        %v1527 = vadd.f32 %v1495, %v1413
        %v1528 = vadd.f32 %v1496, %v1418
        %v1529 = vadd.f32 %v1497, %v1423
        %v1530 = vadd.f32 %v1498, %v1428
        %v1531 = vadd.f32 %v1499, %v1433
        %v1532 = vadd.f32 %v1500, %v1438
        %v1533 = vadd.f32 %v1501, %v1443
        %v1534 = vadd.f32 %v1502, %v1448
        %v1535 = vadd.f32 %v1503, %v1453
        %v1536 = vadd.f32 %v1504, %v1458
        %v1537 = vadd.f32 %v1505, %v1463
        %v1538 = vadd.f32 %v1506, %v1468
        %v1539 = vadd.f32 %v1507, %v1473
        %1540 = vst [vmem:[#allocation4] sm:$0xff] %v1508
        %1541 = vst [vmem:[#allocation4 + $0x8] sm:$0xff] %v1509
        %1542 = vst [vmem:[#allocation4 + $0x10] sm:$0xff] %v1510
        %1543 = vst [vmem:[#allocation4 + $0x18] sm:$0xff] %v1511
        %1544 = vst [vmem:[#allocation4 + $0x20] sm:$0xff] %v1512
        %1545 = vst [vmem:[#allocation4 + $0x28] sm:$0xff] %v1513
        %1546 = vst [vmem:[#allocation4 + $0x30] sm:$0xff] %v1514
        %1547 = vst [vmem:[#allocation4 + $0x38] sm:$0xff] %v1515
        %1548 = vst [vmem:[#allocation4 + $0x40] sm:$0xff] %v1516
        %1549 = vst [vmem:[#allocation4 + $0x48] sm:$0xff] %v1517
        %1550 = vst [vmem:[#allocation4 + $0x50] sm:$0xff] %v1518
        %1551 = vst [vmem:[#allocation4 + $0x58] sm:$0xff] %v1519
        %1552 = vst [vmem:[#allocation4 + $0x60] sm:$0xff] %v1520
        %1553 = vst [vmem:[#allocation4 + $0x68] sm:$0xff] %v1521
        %1554 = vst [vmem:[#allocation4 + $0x70] sm:$0xff] %v1522
        %1555 = vst [vmem:[#allocation4 + $0x78] sm:$0xff] %v1523
        %1556 = vst [vmem:[#allocation4 + $0x80] sm:$0xff] %v1524
        %1557 = vst [vmem:[#allocation4 + $0x88] sm:$0xff] %v1525
        %1558 = vst [vmem:[#allocation4 + $0x90] sm:$0xff] %v1526
        %1559 = vst [vmem:[#allocation4 + $0x98] sm:$0xff] %v1527
        %1560 = vst [vmem:[#allocation4 + $0xa0] sm:$0xff] %v1528
        %1561 = vst [vmem:[#allocation4 + $0xa8] sm:$0xff] %v1529
        %1562 = vst [vmem:[#allocation4 + $0xb0] sm:$0xff] %v1530
        %1563 = vst [vmem:[#allocation4 + $0xb8] sm:$0xff] %v1531
        %1564 = vst [vmem:[#allocation4 + $0xc0] sm:$0xff] %v1532
        %1565 = vst [vmem:[#allocation4 + $0xc8] sm:$0xff] %v1533
        %1566 = vst [vmem:[#allocation4 + $0xd0] sm:$0xff] %v1534
        %1567 = vst [vmem:[#allocation4 + $0xd8] sm:$0xff] %v1535
        %1568 = vst [vmem:[#allocation4 + $0xe0] sm:$0xff] %v1536
        %1569 = vst [vmem:[#allocation4 + $0xe8] sm:$0xff] %v1537
        %1570 = vst [vmem:[#allocation4 + $0xf0] sm:$0xff] %v1538
        %1571 = vst [vmem:[#allocation4 + $0xf8] sm:$0xff] %v1539
        %s1572 = scalar_lea.vmem [#allocation2], 24
        %v1573 = vld [vmem:[%s1572] sm:$0xff]
        %v1574 = vld [vmem:[%s1572 + $0x8] sm:$0xff]
        %v1575 = vld [vmem:[%s1572 + $0x18] sm:$0xff]
        %v1576 = vld [vmem:[%s1572 + $0x20] sm:$0xff]
        %v1577 = vld [vmem:[%s1572 + $0x30] sm:$0xff]
        %v1578 = vld [vmem:[%s1572 + $0x38] sm:$0xff]
        %v1579 = vld [vmem:[%s1572 + $0x48] sm:$0xff]
        %v1580 = vld [vmem:[%s1572 + $0x50] sm:$0xff]
        %v1581 = vld [vmem:[%s1572 + $0x60] sm:$0xff]
        %v1582 = vld [vmem:[%s1572 + $0x68] sm:$0xff]
        %v1583 = vld [vmem:[%s1572 + $0x78] sm:$0xff]
        %v1584 = vld [vmem:[%s1572 + $0x80] sm:$0xff]
        %v1585 = vld [vmem:[%s1572 + $0x90] sm:$0xff]
        %v1586 = vld [vmem:[%s1572 + $0x98] sm:$0xff]
        %v1587 = vld [vmem:[%s1572 + $0xa8] sm:$0xff]
        %v1588 = vld [vmem:[%s1572 + $0xb0] sm:$0xff]
        %v1589 = vld [vmem:[%s1572 + $0xc0] sm:$0xff]
        %v1590 = vld [vmem:[%s1572 + $0xc8] sm:$0xff]
        %v1591 = vld [vmem:[%s1572 + $0xd8] sm:$0xff]
        %v1592 = vld [vmem:[%s1572 + $0xe0] sm:$0xff]
        %v1593 = vld [vmem:[%s1572 + $0xf0] sm:$0xff]
        %v1594 = vld [vmem:[%s1572 + $0xf8] sm:$0xff]
        %v1595 = vld [vmem:[%s1572 + $0x108] sm:$0xff]
        %v1596 = vld [vmem:[%s1572 + $0x110] sm:$0xff]
        %v1597 = vld [vmem:[%s1572 + $0x120] sm:$0xff]
        %v1598 = vld [vmem:[%s1572 + $0x128] sm:$0xff]
        %v1599 = vld [vmem:[%s1572 + $0x138] sm:$0xff]
        %v1600 = vld [vmem:[%s1572 + $0x140] sm:$0xff]
        %v1601 = vld [vmem:[%s1572 + $0x150] sm:$0xff]
        %v1602 = vld [vmem:[%s1572 + $0x158] sm:$0xff]
        %v1603 = vld [vmem:[%s1572 + $0x168] sm:$0xff]
        %v1604 = vld [vmem:[%s1572 + $0x170] sm:$0xff]
        %s1605 = scalar_lea.vmem [#allocation5], 384
        %v1606 = vld [vmem:[%s1605] sm:$0xff]
        %v1607 = vld [vmem:[%s1605 + $0x8] sm:$0xff]
        %v1608 = vld [vmem:[%s1605 + $0x10] sm:$0xff]
        %v1609 = vld [vmem:[%s1605 + $0x18] sm:$0xff]
        %v1610 = vld [vmem:[%s1605 + $0x20] sm:$0xff]
        %v1611 = vld [vmem:[%s1605 + $0x28] sm:$0xff]
        %v1612 = vld [vmem:[%s1605 + $0x30] sm:$0xff]
        %v1613 = vld [vmem:[%s1605 + $0x38] sm:$0xff]
        %v1614 = vld [vmem:[%s1605 + $0x40] sm:$0xff]
        %v1615 = vld [vmem:[%s1605 + $0x48] sm:$0xff]
        %v1616 = vld [vmem:[%s1605 + $0x50] sm:$0xff]
        %v1617 = vld [vmem:[%s1605 + $0x58] sm:$0xff]
        %v1618 = vld [vmem:[%s1605 + $0x60] sm:$0xff]
        %v1619 = vld [vmem:[%s1605 + $0x68] sm:$0xff]
        %v1620 = vld [vmem:[%s1605 + $0x70] sm:$0xff]
        %v1621 = vld [vmem:[%s1605 + $0x78] sm:$0xff]
        %1622 = vmatprep.subr.mxu0 0.0
        %1623 = vmatpush1.msra.mxu0 %v1606
        %1624 = vmatprep.subr.mxu0 0.0
        %1625 = vmatpush1.msra.mxu0 %v1607
        %1626 = vmatprep.subr.mxu0 0.0
        %1627 = vmatpush1.msra.mxu0 %v1608
        %1628 = vmatprep.subr.mxu0 0.0
        %1629 = vmatpush1.msra.mxu0 %v1609
        %1630 = vmatprep.subr.mxu0 0.0
        %1631 = vmatpush1.msra.mxu0 %v1610
        %1632 = vmatprep.subr.mxu0 0.0
        %1633 = vmatpush1.msra.mxu0 %v1611
        %1634 = vmatprep.subr.mxu0 0.0
        %1635 = vmatpush1.msra.mxu0 %v1612
        %1636 = vmatprep.subr.mxu0 0.0
        %1637 = vmatpush1.msra.mxu0 %v1613
        %1638 = vmatprep.subr.mxu0 0.0
        %1639 = vmatpush1.msra.mxu0 %v1614
        %1640 = vmatprep.subr.mxu0 0.0
        %1641 = vmatpush1.msra.mxu0 %v1615
        %1642 = vmatprep.subr.mxu0 0.0
        %1643 = vmatpush1.msra.mxu0 %v1616
        %1644 = vmatprep.subr.mxu0 0.0
        %1645 = vmatpush1.msra.mxu0 %v1617
        %1646 = vmatprep.subr.mxu0 0.0
        %1647 = vmatpush1.msra.mxu0 %v1618
        %1648 = vmatprep.subr.mxu0 0.0
        %1649 = vmatpush1.msra.mxu0 %v1619
        %1650 = vmatprep.subr.mxu0 0.0
        %1651 = vmatpush1.msra.mxu0 %v1620
        %1652 = vmatprep.subr.mxu0 0.0
        %1653 = vmatpush1.msra.mxu0 %v1621
        %1654 = vmatprep.subr.mxu0 0.0
        %1655 = vmatpush1.msra.mxu0 0.0
        %1656 = vmatprep.subr.mxu0 0.0
        %1657 = vmatpush1.msra.mxu0 0.0
        %1658 = vmatprep.subr.mxu0 0.0
        %1659 = vmatpush1.msra.mxu0 0.0
        %1660 = vmatprep.subr.mxu0 0.0
        %1661 = vmatpush1.msra.mxu0 0.0
        %1662 = vmatprep.subr.mxu0 0.0
        %1663 = vmatpush1.msra.mxu0 0.0
        %1664 = vmatprep.subr.mxu0 0.0
        %1665 = vmatpush1.msra.mxu0 0.0
        %1666 = vmatprep.subr.mxu0 0.0
        %1667 = vmatpush1.msra.mxu0 0.0
        %1668 = vmatprep.subr.mxu0 0.0
        %1669 = vmatpush1.msra.mxu0 0.0
        %1670 = vmatprep.subr.mxu0 0.0
        %1671 = vmatpush1.msra.mxu0 0.0
        %1672 = vmatprep.subr.mxu0 0.0
        %1673 = vmatpush1.msra.mxu0 0.0
        %1674 = vmatprep.subr.mxu0 0.0
        %1675 = vmatpush1.msra.mxu0 0.0
        %1676 = vmatprep.subr.mxu0 0.0
        %1677 = vmatpush1.msra.mxu0 0.0
        %1678 = vmatprep.subr.mxu0 0.0
        %1679 = vmatpush1.msra.mxu0 0.0
        %1680 = vmatprep.subr.mxu0 0.0
        %1681 = vmatpush1.msra.mxu0 0.0
        %1682 = vmatprep.subr.mxu0 0.0
        %1683 = vmatpush1.msra.mxu0 0.0
        %1684 = vmatprep.subr.mxu0 0.0
        %1685 = vmatpush1.msra.mxu0 0.0
        %1686 = vmatprep.mubr.f32.mxu0 0.0
        %1687 = vmatmul.mubr.f32.gmra.mrb[0].mxu0 %v1573
        %v1688 = vpop.f32.mrb[0].mxu0
        %v1689 = vadd.f32 0.0, %v1688
        %v1690 = vpop.f32.mrb[0].mxu0
        %1691 = vmatprep.mubr.f32.mxu0 0.0
        %1692 = vmatmul.mubr.f32.gmra.mrb[0].mxu0 %v1574
        %v1693 = vpop.f32.mrb[0].mxu0
        %v1694 = vadd.f32 0.0, %v1693
        %v1695 = vpop.f32.mrb[0].mxu0
        %1696 = vmatprep.mubr.f32.mxu0 0.0
        %1697 = vmatmul.mubr.f32.gmra.mrb[0].mxu0 %v1575
        %v1698 = vpop.f32.mrb[0].mxu0
        %v1699 = vadd.f32 0.0, %v1698
        %v1700 = vpop.f32.mrb[0].mxu0
        %1701 = vmatprep.mubr.f32.mxu0 0.0
        %1702 = vmatmul.mubr.f32.gmra.mrb[0].mxu0 %v1576
        %v1703 = vpop.f32.mrb[0].mxu0
        %v1704 = vadd.f32 0.0, %v1703
        %v1705 = vpop.f32.mrb[0].mxu0
        %1706 = vmatprep.mubr.f32.mxu0 0.0
        %1707 = vmatmul.mubr.f32.gmra.mrb[0].mxu0 %v1577
        %v1708 = vpop.f32.mrb[0].mxu0
        %v1709 = vadd.f32 0.0, %v1708
        %v1710 = vpop.f32.mrb[0].mxu0
        %1711 = vmatprep.mubr.f32.mxu0 0.0
        %1712 = vmatmul.mubr.f32.gmra.mrb[0].mxu0 %v1578
        %v1713 = vpop.f32.mrb[0].mxu0
        %v1714 = vadd.f32 0.0, %v1713
        %v1715 = vpop.f32.mrb[0].mxu0
        %1716 = vmatprep.mubr.f32.mxu0 0.0
        %1717 = vmatmul.mubr.f32.gmra.mrb[0].mxu0 %v1579
        %v1718 = vpop.f32.mrb[0].mxu0
        %v1719 = vadd.f32 0.0, %v1718
        %v1720 = vpop.f32.mrb[0].mxu0
        %1721 = vmatprep.mubr.f32.mxu0 0.0
        %1722 = vmatmul.mubr.f32.gmra.mrb[0].mxu0 %v1580
        %v1723 = vpop.f32.mrb[0].mxu0
        %v1724 = vadd.f32 0.0, %v1723
        %v1725 = vpop.f32.mrb[0].mxu0
        %1726 = vmatprep.mubr.f32.mxu0 0.0
        %1727 = vmatmul.mubr.f32.gmra.mrb[0].mxu0 %v1581
        %v1728 = vpop.f32.mrb[0].mxu0
        %v1729 = vadd.f32 0.0, %v1728
        %v1730 = vpop.f32.mrb[0].mxu0
        %1731 = vmatprep.mubr.f32.mxu0 0.0
        %1732 = vmatmul.mubr.f32.gmra.mrb[0].mxu0 %v1582
        %v1733 = vpop.f32.mrb[0].mxu0
        %v1734 = vadd.f32 0.0, %v1733
        %v1735 = vpop.f32.mrb[0].mxu0
        %1736 = vmatprep.mubr.f32.mxu0 0.0
        %1737 = vmatmul.mubr.f32.gmra.mrb[0].mxu0 %v1583
        %v1738 = vpop.f32.mrb[0].mxu0
        %v1739 = vadd.f32 0.0, %v1738
        %v1740 = vpop.f32.mrb[0].mxu0
        %1741 = vmatprep.mubr.f32.mxu0 0.0
        %1742 = vmatmul.mubr.f32.gmra.mrb[0].mxu0 %v1584
        %v1743 = vpop.f32.mrb[0].mxu0
        %v1744 = vadd.f32 0.0, %v1743
        %v1745 = vpop.f32.mrb[0].mxu0
        %1746 = vmatprep.mubr.f32.mxu0 0.0
        %1747 = vmatmul.mubr.f32.gmra.mrb[0].mxu0 %v1585
        %v1748 = vpop.f32.mrb[0].mxu0
        %v1749 = vadd.f32 0.0, %v1748
        %v1750 = vpop.f32.mrb[0].mxu0
        %1751 = vmatprep.mubr.f32.mxu0 0.0
        %1752 = vmatmul.mubr.f32.gmra.mrb[0].mxu0 %v1586
        %v1753 = vpop.f32.mrb[0].mxu0
        %v1754 = vadd.f32 0.0, %v1753
        %v1755 = vpop.f32.mrb[0].mxu0
        %1756 = vmatprep.mubr.f32.mxu0 0.0
        %1757 = vmatmul.mubr.f32.gmra.mrb[0].mxu0 %v1587
        %v1758 = vpop.f32.mrb[0].mxu0
        %v1759 = vadd.f32 0.0, %v1758
        %v1760 = vpop.f32.mrb[0].mxu0
        %1761 = vmatprep.mubr.f32.mxu0 0.0
        %1762 = vmatmul.mubr.f32.gmra.mrb[0].mxu0 %v1588
        %v1763 = vpop.f32.mrb[0].mxu0
        %v1764 = vadd.f32 0.0, %v1763
        %v1765 = vpop.f32.mrb[0].mxu0
        %1766 = vmatprep.mubr.f32.mxu0 0.0
        %1767 = vmatmul.mubr.f32.gmra.mrb[0].mxu0 %v1589
        %v1768 = vpop.f32.mrb[0].mxu0
        %v1769 = vadd.f32 0.0, %v1768
        %v1770 = vpop.f32.mrb[0].mxu0
        %1771 = vmatprep.mubr.f32.mxu0 0.0
        %1772 = vmatmul.mubr.f32.gmra.mrb[0].mxu0 %v1590
        %v1773 = vpop.f32.mrb[0].mxu0
        %v1774 = vadd.f32 0.0, %v1773
        %v1775 = vpop.f32.mrb[0].mxu0
        %1776 = vmatprep.mubr.f32.mxu0 0.0
        %1777 = vmatmul.mubr.f32.gmra.mrb[0].mxu0 %v1591
        %v1778 = vpop.f32.mrb[0].mxu0
        %v1779 = vadd.f32 0.0, %v1778
        %v1780 = vpop.f32.mrb[0].mxu0
        %1781 = vmatprep.mubr.f32.mxu0 0.0
        %1782 = vmatmul.mubr.f32.gmra.mrb[0].mxu0 %v1592
        %v1783 = vpop.f32.mrb[0].mxu0
        %v1784 = vadd.f32 0.0, %v1783
        %v1785 = vpop.f32.mrb[0].mxu0
        %1786 = vmatprep.mubr.f32.mxu0 0.0
        %1787 = vmatmul.mubr.f32.gmra.mrb[0].mxu0 %v1593
        %v1788 = vpop.f32.mrb[0].mxu0
        %v1789 = vadd.f32 0.0, %v1788
        %v1790 = vpop.f32.mrb[0].mxu0
        %1791 = vmatprep.mubr.f32.mxu0 0.0
        %1792 = vmatmul.mubr.f32.gmra.mrb[0].mxu0 %v1594
        %v1793 = vpop.f32.mrb[0].mxu0
        %v1794 = vadd.f32 0.0, %v1793
        %v1795 = vpop.f32.mrb[0].mxu0
        %1796 = vmatprep.mubr.f32.mxu0 0.0
        %1797 = vmatmul.mubr.f32.gmra.mrb[0].mxu0 %v1595
        %v1798 = vpop.f32.mrb[0].mxu0
        %v1799 = vadd.f32 0.0, %v1798
        %v1800 = vpop.f32.mrb[0].mxu0
        %1801 = vmatprep.mubr.f32.mxu0 0.0
        %1802 = vmatmul.mubr.f32.gmra.mrb[0].mxu0 %v1596
        %v1803 = vpop.f32.mrb[0].mxu0
        %v1804 = vadd.f32 0.0, %v1803
        %v1805 = vpop.f32.mrb[0].mxu0
        %1806 = vmatprep.mubr.f32.mxu0 0.0
        %1807 = vmatmul.mubr.f32.gmra.mrb[0].mxu0 %v1597
        %v1808 = vpop.f32.mrb[0].mxu0
        %v1809 = vadd.f32 0.0, %v1808
        %v1810 = vpop.f32.mrb[0].mxu0
        %1811 = vmatprep.mubr.f32.mxu0 0.0
        %1812 = vmatmul.mubr.f32.gmra.mrb[0].mxu0 %v1598
        %v1813 = vpop.f32.mrb[0].mxu0
        %v1814 = vadd.f32 0.0, %v1813
        %v1815 = vpop.f32.mrb[0].mxu0
        %1816 = vmatprep.mubr.f32.mxu0 0.0
        %1817 = vmatmul.mubr.f32.gmra.mrb[0].mxu0 %v1599
        %v1818 = vpop.f32.mrb[0].mxu0
        %v1819 = vadd.f32 0.0, %v1818
        %v1820 = vpop.f32.mrb[0].mxu0
        %1821 = vmatprep.mubr.f32.mxu0 0.0
        %1822 = vmatmul.mubr.f32.gmra.mrb[0].mxu0 %v1600
        %v1823 = vpop.f32.mrb[0].mxu0
        %v1824 = vadd.f32 0.0, %v1823
        %v1825 = vpop.f32.mrb[0].mxu0
        %1826 = vmatprep.mubr.f32.mxu0 0.0
        %1827 = vmatmul.mubr.f32.gmra.mrb[0].mxu0 %v1601
        %v1828 = vpop.f32.mrb[0].mxu0
        %v1829 = vadd.f32 0.0, %v1828
        %v1830 = vpop.f32.mrb[0].mxu0
        %1831 = vmatprep.mubr.f32.mxu0 0.0
        %1832 = vmatmul.mubr.f32.gmra.mrb[0].mxu0 %v1602
        %v1833 = vpop.f32.mrb[0].mxu0
        %v1834 = vadd.f32 0.0, %v1833
        %v1835 = vpop.f32.mrb[0].mxu0
        %1836 = vmatprep.mubr.f32.mxu0 0.0
        %1837 = vmatmul.mubr.f32.gmra.mrb[0].mxu0 %v1603
        %v1838 = vpop.f32.mrb[0].mxu0
        %v1839 = vadd.f32 0.0, %v1838
        %v1840 = vpop.f32.mrb[0].mxu0
        %1841 = vmatprep.mubr.f32.mxu0 0.0
        %1842 = vmatmul.mubr.f32.gmra.mrb[0].mxu0 %v1604
        %v1843 = vpop.f32.mrb[0].mxu0
        %v1844 = vadd.f32 0.0, %v1843
        %v1845 = vpop.f32.mrb[0].mxu0
        %1846 = vdwg.mxu0
        %v1847 = vld [vmem:[#allocation4] sm:$0xff]
        %v1848 = vld [vmem:[#allocation4 + $0x8] sm:$0xff]
        %v1849 = vld [vmem:[#allocation4 + $0x10] sm:$0xff]
        %v1850 = vld [vmem:[#allocation4 + $0x18] sm:$0xff]
        %v1851 = vld [vmem:[#allocation4 + $0x20] sm:$0xff]
        %v1852 = vld [vmem:[#allocation4 + $0x28] sm:$0xff]
        %v1853 = vld [vmem:[#allocation4 + $0x30] sm:$0xff]
        %v1854 = vld [vmem:[#allocation4 + $0x38] sm:$0xff]
        %v1855 = vld [vmem:[#allocation4 + $0x40] sm:$0xff]
        %v1856 = vld [vmem:[#allocation4 + $0x48] sm:$0xff]
        %v1857 = vld [vmem:[#allocation4 + $0x50] sm:$0xff]
        %v1858 = vld [vmem:[#allocation4 + $0x58] sm:$0xff]
        %v1859 = vld [vmem:[#allocation4 + $0x60] sm:$0xff]
        %v1860 = vld [vmem:[#allocation4 + $0x68] sm:$0xff]
        %v1861 = vld [vmem:[#allocation4 + $0x70] sm:$0xff]
        %v1862 = vld [vmem:[#allocation4 + $0x78] sm:$0xff]
        %v1863 = vld [vmem:[#allocation4 + $0x80] sm:$0xff]
        %v1864 = vld [vmem:[#allocation4 + $0x88] sm:$0xff]
        %v1865 = vld [vmem:[#allocation4 + $0x90] sm:$0xff]
        %v1866 = vld [vmem:[#allocation4 + $0x98] sm:$0xff]
        %v1867 = vld [vmem:[#allocation4 + $0xa0] sm:$0xff]
        %v1868 = vld [vmem:[#allocation4 + $0xa8] sm:$0xff]
        %v1869 = vld [vmem:[#allocation4 + $0xb0] sm:$0xff]
        %v1870 = vld [vmem:[#allocation4 + $0xb8] sm:$0xff]
        %v1871 = vld [vmem:[#allocation4 + $0xc0] sm:$0xff]
        %v1872 = vld [vmem:[#allocation4 + $0xc8] sm:$0xff]
        %v1873 = vld [vmem:[#allocation4 + $0xd0] sm:$0xff]
        %v1874 = vld [vmem:[#allocation4 + $0xd8] sm:$0xff]
        %v1875 = vld [vmem:[#allocation4 + $0xe0] sm:$0xff]
        %v1876 = vld [vmem:[#allocation4 + $0xe8] sm:$0xff]
        %v1877 = vld [vmem:[#allocation4 + $0xf0] sm:$0xff]
        %v1878 = vld [vmem:[#allocation4 + $0xf8] sm:$0xff]
        %v1879 = vadd.f32 %v1847, %v1689
        %v1880 = vadd.f32 %v1848, %v1694
        %v1881 = vadd.f32 %v1849, %v1699
        %v1882 = vadd.f32 %v1850, %v1704
        %v1883 = vadd.f32 %v1851, %v1709
        %v1884 = vadd.f32 %v1852, %v1714
        %v1885 = vadd.f32 %v1853, %v1719
        %v1886 = vadd.f32 %v1854, %v1724
        %v1887 = vadd.f32 %v1855, %v1729
        %v1888 = vadd.f32 %v1856, %v1734
        %v1889 = vadd.f32 %v1857, %v1739
        %v1890 = vadd.f32 %v1858, %v1744
        %v1891 = vadd.f32 %v1859, %v1749
        %v1892 = vadd.f32 %v1860, %v1754
        %v1893 = vadd.f32 %v1861, %v1759
        %v1894 = vadd.f32 %v1862, %v1764
        %v1895 = vadd.f32 %v1863, %v1769
        %v1896 = vadd.f32 %v1864, %v1774
        %v1897 = vadd.f32 %v1865, %v1779
        %v1898 = vadd.f32 %v1866, %v1784
        %v1899 = vadd.f32 %v1867, %v1789
        %v1900 = vadd.f32 %v1868, %v1794
        %v1901 = vadd.f32 %v1869, %v1799
        %v1902 = vadd.f32 %v1870, %v1804
        %v1903 = vadd.f32 %v1871, %v1809
        %v1904 = vadd.f32 %v1872, %v1814
        %v1905 = vadd.f32 %v1873, %v1819
        %v1906 = vadd.f32 %v1874, %v1824
        %v1907 = vadd.f32 %v1875, %v1829
        %v1908 = vadd.f32 %v1876, %v1834
        %v1909 = vadd.f32 %v1877, %v1839
        %v1910 = vadd.f32 %v1878, %v1844
        %1911 = vst [vmem:[#allocation4] sm:$0xff] %v1879
        %1912 = vst [vmem:[#allocation4 + $0x8] sm:$0xff] %v1880
        %1913 = vst [vmem:[#allocation4 + $0x10] sm:$0xff] %v1881
        %1914 = vst [vmem:[#allocation4 + $0x18] sm:$0xff] %v1882
        %1915 = vst [vmem:[#allocation4 + $0x20] sm:$0xff] %v1883
        %1916 = vst [vmem:[#allocation4 + $0x28] sm:$0xff] %v1884
        %1917 = vst [vmem:[#allocation4 + $0x30] sm:$0xff] %v1885
        %1918 = vst [vmem:[#allocation4 + $0x38] sm:$0xff] %v1886
        %1919 = vst [vmem:[#allocation4 + $0x40] sm:$0xff] %v1887
        %1920 = vst [vmem:[#allocation4 + $0x48] sm:$0xff] %v1888
        %1921 = vst [vmem:[#allocation4 + $0x50] sm:$0xff] %v1889
        %1922 = vst [vmem:[#allocation4 + $0x58] sm:$0xff] %v1890
        %1923 = vst [vmem:[#allocation4 + $0x60] sm:$0xff] %v1891
        %1924 = vst [vmem:[#allocation4 + $0x68] sm:$0xff] %v1892
        %1925 = vst [vmem:[#allocation4 + $0x70] sm:$0xff] %v1893
        %1926 = vst [vmem:[#allocation4 + $0x78] sm:$0xff] %v1894
        %1927 = vst [vmem:[#allocation4 + $0x80] sm:$0xff] %v1895
        %1928 = vst [vmem:[#allocation4 + $0x88] sm:$0xff] %v1896
        %1929 = vst [vmem:[#allocation4 + $0x90] sm:$0xff] %v1897
        %1930 = vst [vmem:[#allocation4 + $0x98] sm:$0xff] %v1898
        %1931 = vst [vmem:[#allocation4 + $0xa0] sm:$0xff] %v1899
        %1932 = vst [vmem:[#allocation4 + $0xa8] sm:$0xff] %v1900
        %1933 = vst [vmem:[#allocation4 + $0xb0] sm:$0xff] %v1901
        %1934 = vst [vmem:[#allocation4 + $0xb8] sm:$0xff] %v1902
        %1935 = vst [vmem:[#allocation4 + $0xc0] sm:$0xff] %v1903
        %1936 = vst [vmem:[#allocation4 + $0xc8] sm:$0xff] %v1904
        %1937 = vst [vmem:[#allocation4 + $0xd0] sm:$0xff] %v1905
        %1938 = vst [vmem:[#allocation4 + $0xd8] sm:$0xff] %v1906
        %1939 = vst [vmem:[#allocation4 + $0xe0] sm:$0xff] %v1907
        %1940 = vst [vmem:[#allocation4 + $0xe8] sm:$0xff] %v1908
        %1941 = vst [vmem:[#allocation4 + $0xf0] sm:$0xff] %v1909
        %1942 = vst [vmem:[#allocation4 + $0xf8] sm:$0xff] %v1910
        %v1943 = vld [vmem:[%s1572 + $0x1] sm:$0xff]
        %v1944 = vld [vmem:[%s1572 + $0x9] sm:$0xff]
        %v1945 = vld [vmem:[%s1572 + $0x19] sm:$0xff]
        %v1946 = vld [vmem:[%s1572 + $0x21] sm:$0xff]
        %v1947 = vld [vmem:[%s1572 + $0x31] sm:$0xff]
        %v1948 = vld [vmem:[%s1572 + $0x39] sm:$0xff]
        %v1949 = vld [vmem:[%s1572 + $0x49] sm:$0xff]
        %v1950 = vld [vmem:[%s1572 + $0x51] sm:$0xff]
        %v1951 = vld [vmem:[%s1572 + $0x61] sm:$0xff]
        %v1952 = vld [vmem:[%s1572 + $0x69] sm:$0xff]
        %v1953 = vld [vmem:[%s1572 + $0x79] sm:$0xff]
        %v1954 = vld [vmem:[%s1572 + $0x81] sm:$0xff]
        %v1955 = vld [vmem:[%s1572 + $0x91] sm:$0xff]
        %v1956 = vld [vmem:[%s1572 + $0x99] sm:$0xff]
        %v1957 = vld [vmem:[%s1572 + $0xa9] sm:$0xff]
        %v1958 = vld [vmem:[%s1572 + $0xb1] sm:$0xff]
        %v1959 = vld [vmem:[%s1572 + $0xc1] sm:$0xff]
        %v1960 = vld [vmem:[%s1572 + $0xc9] sm:$0xff]
        %v1961 = vld [vmem:[%s1572 + $0xd9] sm:$0xff]
        %v1962 = vld [vmem:[%s1572 + $0xe1] sm:$0xff]
        %v1963 = vld [vmem:[%s1572 + $0xf1] sm:$0xff]
        %v1964 = vld [vmem:[%s1572 + $0xf9] sm:$0xff]
        %v1965 = vld [vmem:[%s1572 + $0x109] sm:$0xff]
        %v1966 = vld [vmem:[%s1572 + $0x111] sm:$0xff]
        %v1967 = vld [vmem:[%s1572 + $0x121] sm:$0xff]
        %v1968 = vld [vmem:[%s1572 + $0x129] sm:$0xff]
        %v1969 = vld [vmem:[%s1572 + $0x139] sm:$0xff]
        %v1970 = vld [vmem:[%s1572 + $0x141] sm:$0xff]
        %v1971 = vld [vmem:[%s1572 + $0x151] sm:$0xff]
        %v1972 = vld [vmem:[%s1572 + $0x159] sm:$0xff]
        %v1973 = vld [vmem:[%s1572 + $0x169] sm:$0xff]
        %v1974 = vld [vmem:[%s1572 + $0x171] sm:$0xff]
        %s1975 = scalar_lea.vmem [#allocation5], 512
        %v1976 = vld [vmem:[%s1975] sm:$0xff]
        %v1977 = vld [vmem:[%s1975 + $0x8] sm:$0xff]
        %v1978 = vld [vmem:[%s1975 + $0x10] sm:$0xff]
        %v1979 = vld [vmem:[%s1975 + $0x18] sm:$0xff]
        %v1980 = vld [vmem:[%s1975 + $0x20] sm:$0xff]
        %v1981 = vld [vmem:[%s1975 + $0x28] sm:$0xff]
        %v1982 = vld [vmem:[%s1975 + $0x30] sm:$0xff]
        %v1983 = vld [vmem:[%s1975 + $0x38] sm:$0xff]
        %v1984 = vld [vmem:[%s1975 + $0x40] sm:$0xff]
        %v1985 = vld [vmem:[%s1975 + $0x48] sm:$0xff]
        %v1986 = vld [vmem:[%s1975 + $0x50] sm:$0xff]
        %v1987 = vld [vmem:[%s1975 + $0x58] sm:$0xff]
        %v1988 = vld [vmem:[%s1975 + $0x60] sm:$0xff]
        %v1989 = vld [vmem:[%s1975 + $0x68] sm:$0xff]
        %v1990 = vld [vmem:[%s1975 + $0x70] sm:$0xff]
        %v1991 = vld [vmem:[%s1975 + $0x78] sm:$0xff]
        %1992 = vmatprep.subr.mxu0 0.0
        %1993 = vmatpush1.msra.mxu0 %v1976
        %1994 = vmatprep.subr.mxu0 0.0
        %1995 = vmatpush1.msra.mxu0 %v1977
        %1996 = vmatprep.subr.mxu0 0.0
        %1997 = vmatpush1.msra.mxu0 %v1978
        %1998 = vmatprep.subr.mxu0 0.0
        %1999 = vmatpush1.msra.mxu0 %v1979
        %2000 = vmatprep.subr.mxu0 0.0
        %2001 = vmatpush1.msra.mxu0 %v1980
        %2002 = vmatprep.subr.mxu0 0.0
        %2003 = vmatpush1.msra.mxu0 %v1981
        %2004 = vmatprep.subr.mxu0 0.0
        %2005 = vmatpush1.msra.mxu0 %v1982
        %2006 = vmatprep.subr.mxu0 0.0
        %2007 = vmatpush1.msra.mxu0 %v1983
        %2008 = vmatprep.subr.mxu0 0.0
        %2009 = vmatpush1.msra.mxu0 %v1984
        %2010 = vmatprep.subr.mxu0 0.0
        %2011 = vmatpush1.msra.mxu0 %v1985
        %2012 = vmatprep.subr.mxu0 0.0
        %2013 = vmatpush1.msra.mxu0 %v1986
        %2014 = vmatprep.subr.mxu0 0.0
        %2015 = vmatpush1.msra.mxu0 %v1987
        %2016 = vmatprep.subr.mxu0 0.0
        %2017 = vmatpush1.msra.mxu0 %v1988
        %2018 = vmatprep.subr.mxu0 0.0
        %2019 = vmatpush1.msra.mxu0 %v1989
        %2020 = vmatprep.subr.mxu0 0.0
        %2021 = vmatpush1.msra.mxu0 %v1990
        %2022 = vmatprep.subr.mxu0 0.0
        %2023 = vmatpush1.msra.mxu0 %v1991
        %2024 = vmatprep.subr.mxu0 0.0
        %2025 = vmatpush1.msra.mxu0 0.0
        %2026 = vmatprep.subr.mxu0 0.0
        %2027 = vmatpush1.msra.mxu0 0.0
        %2028 = vmatprep.subr.mxu0 0.0
        %2029 = vmatpush1.msra.mxu0 0.0
        %2030 = vmatprep.subr.mxu0 0.0
        %2031 = vmatpush1.msra.mxu0 0.0
        %2032 = vmatprep.subr.mxu0 0.0
        %2033 = vmatpush1.msra.mxu0 0.0
        %2034 = vmatprep.subr.mxu0 0.0
        %2035 = vmatpush1.msra.mxu0 0.0
        %2036 = vmatprep.subr.mxu0 0.0
        %2037 = vmatpush1.msra.mxu0 0.0
        %2038 = vmatprep.subr.mxu0 0.0
        %2039 = vmatpush1.msra.mxu0 0.0
        %2040 = vmatprep.subr.mxu0 0.0
        %2041 = vmatpush1.msra.mxu0 0.0
        %2042 = vmatprep.subr.mxu0 0.0
        %2043 = vmatpush1.msra.mxu0 0.0
        %2044 = vmatprep.subr.mxu0 0.0
        %2045 = vmatpush1.msra.mxu0 0.0
        %2046 = vmatprep.subr.mxu0 0.0
        %2047 = vmatpush1.msra.mxu0 0.0
        %2048 = vmatprep.subr.mxu0 0.0
        %2049 = vmatpush1.msra.mxu0 0.0
        %2050 = vmatprep.subr.mxu0 0.0
        %2051 = vmatpush1.msra.mxu0 0.0
        %2052 = vmatprep.subr.mxu0 0.0
        %2053 = vmatpush1.msra.mxu0 0.0
        %2054 = vmatprep.subr.mxu0 0.0
        %2055 = vmatpush1.msra.mxu0 0.0
        %2056 = vmatprep.mubr.f32.mxu0 0.0
        %2057 = vmatmul.mubr.f32.gmra.mrb[0].mxu0 %v1943
        %v2058 = vpop.f32.mrb[0].mxu0
        %v2059 = vadd.f32 0.0, %v2058
        %v2060 = vpop.f32.mrb[0].mxu0
        %2061 = vmatprep.mubr.f32.mxu0 0.0
        %2062 = vmatmul.mubr.f32.gmra.mrb[0].mxu0 %v1944
        %v2063 = vpop.f32.mrb[0].mxu0
        %v2064 = vadd.f32 0.0, %v2063
        %v2065 = vpop.f32.mrb[0].mxu0
        %2066 = vmatprep.mubr.f32.mxu0 0.0
        %2067 = vmatmul.mubr.f32.gmra.mrb[0].mxu0 %v1945
        %v2068 = vpop.f32.mrb[0].mxu0
        %v2069 = vadd.f32 0.0, %v2068
        %v2070 = vpop.f32.mrb[0].mxu0
        %2071 = vmatprep.mubr.f32.mxu0 0.0
        %2072 = vmatmul.mubr.f32.gmra.mrb[0].mxu0 %v1946
        %v2073 = vpop.f32.mrb[0].mxu0
        %v2074 = vadd.f32 0.0, %v2073
        %v2075 = vpop.f32.mrb[0].mxu0
        %2076 = vmatprep.mubr.f32.mxu0 0.0
        %2077 = vmatmul.mubr.f32.gmra.mrb[0].mxu0 %v1947
        %v2078 = vpop.f32.mrb[0].mxu0
        %v2079 = vadd.f32 0.0, %v2078
        %v2080 = vpop.f32.mrb[0].mxu0
        %2081 = vmatprep.mubr.f32.mxu0 0.0
        %2082 = vmatmul.mubr.f32.gmra.mrb[0].mxu0 %v1948
        %v2083 = vpop.f32.mrb[0].mxu0
        %v2084 = vadd.f32 0.0, %v2083
        %v2085 = vpop.f32.mrb[0].mxu0
        %2086 = vmatprep.mubr.f32.mxu0 0.0
        %2087 = vmatmul.mubr.f32.gmra.mrb[0].mxu0 %v1949
        %v2088 = vpop.f32.mrb[0].mxu0
        %v2089 = vadd.f32 0.0, %v2088
        %v2090 = vpop.f32.mrb[0].mxu0
        %2091 = vmatprep.mubr.f32.mxu0 0.0
        %2092 = vmatmul.mubr.f32.gmra.mrb[0].mxu0 %v1950
        %v2093 = vpop.f32.mrb[0].mxu0
        %v2094 = vadd.f32 0.0, %v2093
        %v2095 = vpop.f32.mrb[0].mxu0
        %2096 = vmatprep.mubr.f32.mxu0 0.0
        %2097 = vmatmul.mubr.f32.gmra.mrb[0].mxu0 %v1951
        %v2098 = vpop.f32.mrb[0].mxu0
        %v2099 = vadd.f32 0.0, %v2098
        %v2100 = vpop.f32.mrb[0].mxu0
        %2101 = vmatprep.mubr.f32.mxu0 0.0
        %2102 = vmatmul.mubr.f32.gmra.mrb[0].mxu0 %v1952
        %v2103 = vpop.f32.mrb[0].mxu0
        %v2104 = vadd.f32 0.0, %v2103
        %v2105 = vpop.f32.mrb[0].mxu0
        %2106 = vmatprep.mubr.f32.mxu0 0.0
        %2107 = vmatmul.mubr.f32.gmra.mrb[0].mxu0 %v1953
        %v2108 = vpop.f32.mrb[0].mxu0
        %v2109 = vadd.f32 0.0, %v2108
        %v2110 = vpop.f32.mrb[0].mxu0
        %2111 = vmatprep.mubr.f32.mxu0 0.0
        %2112 = vmatmul.mubr.f32.gmra.mrb[0].mxu0 %v1954
        %v2113 = vpop.f32.mrb[0].mxu0
        %v2114 = vadd.f32 0.0, %v2113
        %v2115 = vpop.f32.mrb[0].mxu0
        %2116 = vmatprep.mubr.f32.mxu0 0.0
        %2117 = vmatmul.mubr.f32.gmra.mrb[0].mxu0 %v1955
        %v2118 = vpop.f32.mrb[0].mxu0
        %v2119 = vadd.f32 0.0, %v2118
        %v2120 = vpop.f32.mrb[0].mxu0
        %2121 = vmatprep.mubr.f32.mxu0 0.0
        %2122 = vmatmul.mubr.f32.gmra.mrb[0].mxu0 %v1956
        %v2123 = vpop.f32.mrb[0].mxu0
        %v2124 = vadd.f32 0.0, %v2123
        %v2125 = vpop.f32.mrb[0].mxu0
        %2126 = vmatprep.mubr.f32.mxu0 0.0
        %2127 = vmatmul.mubr.f32.gmra.mrb[0].mxu0 %v1957
        %v2128 = vpop.f32.mrb[0].mxu0
        %v2129 = vadd.f32 0.0, %v2128
        %v2130 = vpop.f32.mrb[0].mxu0
        %2131 = vmatprep.mubr.f32.mxu0 0.0
        %2132 = vmatmul.mubr.f32.gmra.mrb[0].mxu0 %v1958
        %v2133 = vpop.f32.mrb[0].mxu0
        %v2134 = vadd.f32 0.0, %v2133
        %v2135 = vpop.f32.mrb[0].mxu0
        %2136 = vmatprep.mubr.f32.mxu0 0.0
        %2137 = vmatmul.mubr.f32.gmra.mrb[0].mxu0 %v1959
        %v2138 = vpop.f32.mrb[0].mxu0
        %v2139 = vadd.f32 0.0, %v2138
        %v2140 = vpop.f32.mrb[0].mxu0
        %2141 = vmatprep.mubr.f32.mxu0 0.0
        %2142 = vmatmul.mubr.f32.gmra.mrb[0].mxu0 %v1960
        %v2143 = vpop.f32.mrb[0].mxu0
        %v2144 = vadd.f32 0.0, %v2143
        %v2145 = vpop.f32.mrb[0].mxu0
        %2146 = vmatprep.mubr.f32.mxu0 0.0
        %2147 = vmatmul.mubr.f32.gmra.mrb[0].mxu0 %v1961
        %v2148 = vpop.f32.mrb[0].mxu0
        %v2149 = vadd.f32 0.0, %v2148
        %v2150 = vpop.f32.mrb[0].mxu0
        %2151 = vmatprep.mubr.f32.mxu0 0.0
        %2152 = vmatmul.mubr.f32.gmra.mrb[0].mxu0 %v1962
        %v2153 = vpop.f32.mrb[0].mxu0
        %v2154 = vadd.f32 0.0, %v2153
        %v2155 = vpop.f32.mrb[0].mxu0
        %2156 = vmatprep.mubr.f32.mxu0 0.0
        %2157 = vmatmul.mubr.f32.gmra.mrb[0].mxu0 %v1963
        %v2158 = vpop.f32.mrb[0].mxu0
        %v2159 = vadd.f32 0.0, %v2158
        %v2160 = vpop.f32.mrb[0].mxu0
        %2161 = vmatprep.mubr.f32.mxu0 0.0
        %2162 = vmatmul.mubr.f32.gmra.mrb[0].mxu0 %v1964
        %v2163 = vpop.f32.mrb[0].mxu0
        %v2164 = vadd.f32 0.0, %v2163
        %v2165 = vpop.f32.mrb[0].mxu0
        %2166 = vmatprep.mubr.f32.mxu0 0.0
        %2167 = vmatmul.mubr.f32.gmra.mrb[0].mxu0 %v1965
        %v2168 = vpop.f32.mrb[0].mxu0
        %v2169 = vadd.f32 0.0, %v2168
        %v2170 = vpop.f32.mrb[0].mxu0
        %2171 = vmatprep.mubr.f32.mxu0 0.0
        %2172 = vmatmul.mubr.f32.gmra.mrb[0].mxu0 %v1966
        %v2173 = vpop.f32.mrb[0].mxu0
        %v2174 = vadd.f32 0.0, %v2173
        %v2175 = vpop.f32.mrb[0].mxu0
        %2176 = vmatprep.mubr.f32.mxu0 0.0
        %2177 = vmatmul.mubr.f32.gmra.mrb[0].mxu0 %v1967
        %v2178 = vpop.f32.mrb[0].mxu0
        %v2179 = vadd.f32 0.0, %v2178
        %v2180 = vpop.f32.mrb[0].mxu0
        %2181 = vmatprep.mubr.f32.mxu0 0.0
        %2182 = vmatmul.mubr.f32.gmra.mrb[0].mxu0 %v1968
        %v2183 = vpop.f32.mrb[0].mxu0
        %v2184 = vadd.f32 0.0, %v2183
        %v2185 = vpop.f32.mrb[0].mxu0
        %2186 = vmatprep.mubr.f32.mxu0 0.0
        %2187 = vmatmul.mubr.f32.gmra.mrb[0].mxu0 %v1969
        %v2188 = vpop.f32.mrb[0].mxu0
        %v2189 = vadd.f32 0.0, %v2188
        %v2190 = vpop.f32.mrb[0].mxu0
        %2191 = vmatprep.mubr.f32.mxu0 0.0
        %2192 = vmatmul.mubr.f32.gmra.mrb[0].mxu0 %v1970
        %v2193 = vpop.f32.mrb[0].mxu0
        %v2194 = vadd.f32 0.0, %v2193
        %v2195 = vpop.f32.mrb[0].mxu0
        %2196 = vmatprep.mubr.f32.mxu0 0.0
        %2197 = vmatmul.mubr.f32.gmra.mrb[0].mxu0 %v1971
        %v2198 = vpop.f32.mrb[0].mxu0
        %v2199 = vadd.f32 0.0, %v2198
        %v2200 = vpop.f32.mrb[0].mxu0
        %2201 = vmatprep.mubr.f32.mxu0 0.0
        %2202 = vmatmul.mubr.f32.gmra.mrb[0].mxu0 %v1972
        %v2203 = vpop.f32.mrb[0].mxu0
        %v2204 = vadd.f32 0.0, %v2203
        %v2205 = vpop.f32.mrb[0].mxu0
        %2206 = vmatprep.mubr.f32.mxu0 0.0
        %2207 = vmatmul.mubr.f32.gmra.mrb[0].mxu0 %v1973
        %v2208 = vpop.f32.mrb[0].mxu0
        %v2209 = vadd.f32 0.0, %v2208
        %v2210 = vpop.f32.mrb[0].mxu0
        %2211 = vmatprep.mubr.f32.mxu0 0.0
        %2212 = vmatmul.mubr.f32.gmra.mrb[0].mxu0 %v1974
        %v2213 = vpop.f32.mrb[0].mxu0
        %v2214 = vadd.f32 0.0, %v2213
        %v2215 = vpop.f32.mrb[0].mxu0
        %2216 = vdwg.mxu0
        %v2217 = vld [vmem:[#allocation4] sm:$0xff]
        %v2218 = vld [vmem:[#allocation4 + $0x8] sm:$0xff]
        %v2219 = vld [vmem:[#allocation4 + $0x10] sm:$0xff]
        %v2220 = vld [vmem:[#allocation4 + $0x18] sm:$0xff]
        %v2221 = vld [vmem:[#allocation4 + $0x20] sm:$0xff]
        %v2222 = vld [vmem:[#allocation4 + $0x28] sm:$0xff]
        %v2223 = vld [vmem:[#allocation4 + $0x30] sm:$0xff]
        %v2224 = vld [vmem:[#allocation4 + $0x38] sm:$0xff]
        %v2225 = vld [vmem:[#allocation4 + $0x40] sm:$0xff]
        %v2226 = vld [vmem:[#allocation4 + $0x48] sm:$0xff]
        %v2227 = vld [vmem:[#allocation4 + $0x50] sm:$0xff]
        %v2228 = vld [vmem:[#allocation4 + $0x58] sm:$0xff]
        %v2229 = vld [vmem:[#allocation4 + $0x60] sm:$0xff]
        %v2230 = vld [vmem:[#allocation4 + $0x68] sm:$0xff]
        %v2231 = vld [vmem:[#allocation4 + $0x70] sm:$0xff]
        %v2232 = vld [vmem:[#allocation4 + $0x78] sm:$0xff]
        %v2233 = vld [vmem:[#allocation4 + $0x80] sm:$0xff]
        %v2234 = vld [vmem:[#allocation4 + $0x88] sm:$0xff]
        %v2235 = vld [vmem:[#allocation4 + $0x90] sm:$0xff]
        %v2236 = vld [vmem:[#allocation4 + $0x98] sm:$0xff]
        %v2237 = vld [vmem:[#allocation4 + $0xa0] sm:$0xff]
        %v2238 = vld [vmem:[#allocation4 + $0xa8] sm:$0xff]
        %v2239 = vld [vmem:[#allocation4 + $0xb0] sm:$0xff]
        %v2240 = vld [vmem:[#allocation4 + $0xb8] sm:$0xff]
        %v2241 = vld [vmem:[#allocation4 + $0xc0] sm:$0xff]
        %v2242 = vld [vmem:[#allocation4 + $0xc8] sm:$0xff]
        %v2243 = vld [vmem:[#allocation4 + $0xd0] sm:$0xff]
        %v2244 = vld [vmem:[#allocation4 + $0xd8] sm:$0xff]
        %v2245 = vld [vmem:[#allocation4 + $0xe0] sm:$0xff]
        %v2246 = vld [vmem:[#allocation4 + $0xe8] sm:$0xff]
        %v2247 = vld [vmem:[#allocation4 + $0xf0] sm:$0xff]
        %v2248 = vld [vmem:[#allocation4 + $0xf8] sm:$0xff]
        %v2249 = vadd.f32 %v2217, %v2059
        %v2250 = vadd.f32 %v2218, %v2064
        %v2251 = vadd.f32 %v2219, %v2069
        %v2252 = vadd.f32 %v2220, %v2074
        %v2253 = vadd.f32 %v2221, %v2079
        %v2254 = vadd.f32 %v2222, %v2084
        %v2255 = vadd.f32 %v2223, %v2089
        %v2256 = vadd.f32 %v2224, %v2094
        %v2257 = vadd.f32 %v2225, %v2099
        %v2258 = vadd.f32 %v2226, %v2104
        %v2259 = vadd.f32 %v2227, %v2109
        %v2260 = vadd.f32 %v2228, %v2114
        %v2261 = vadd.f32 %v2229, %v2119
        %v2262 = vadd.f32 %v2230, %v2124
        %v2263 = vadd.f32 %v2231, %v2129
        %v2264 = vadd.f32 %v2232, %v2134
        %v2265 = vadd.f32 %v2233, %v2139
        %v2266 = vadd.f32 %v2234, %v2144
        %v2267 = vadd.f32 %v2235, %v2149
        %v2268 = vadd.f32 %v2236, %v2154
        %v2269 = vadd.f32 %v2237, %v2159
        %v2270 = vadd.f32 %v2238, %v2164
        %v2271 = vadd.f32 %v2239, %v2169
        %v2272 = vadd.f32 %v2240, %v2174
        %v2273 = vadd.f32 %v2241, %v2179
        %v2274 = vadd.f32 %v2242, %v2184
        %v2275 = vadd.f32 %v2243, %v2189
        %v2276 = vadd.f32 %v2244, %v2194
        %v2277 = vadd.f32 %v2245, %v2199
        %v2278 = vadd.f32 %v2246, %v2204
        %v2279 = vadd.f32 %v2247, %v2209
        %v2280 = vadd.f32 %v2248, %v2214
        %2281 = vst [vmem:[#allocation4] sm:$0xff] %v2249
        %2282 = vst [vmem:[#allocation4 + $0x8] sm:$0xff] %v2250
        %2283 = vst [vmem:[#allocation4 + $0x10] sm:$0xff] %v2251
        %2284 = vst [vmem:[#allocation4 + $0x18] sm:$0xff] %v2252
        %2285 = vst [vmem:[#allocation4 + $0x20] sm:$0xff] %v2253
        %2286 = vst [vmem:[#allocation4 + $0x28] sm:$0xff] %v2254
        %2287 = vst [vmem:[#allocation4 + $0x30] sm:$0xff] %v2255
        %2288 = vst [vmem:[#allocation4 + $0x38] sm:$0xff] %v2256
        %2289 = vst [vmem:[#allocation4 + $0x40] sm:$0xff] %v2257
        %2290 = vst [vmem:[#allocation4 + $0x48] sm:$0xff] %v2258
        %2291 = vst [vmem:[#allocation4 + $0x50] sm:$0xff] %v2259
        %2292 = vst [vmem:[#allocation4 + $0x58] sm:$0xff] %v2260
        %2293 = vst [vmem:[#allocation4 + $0x60] sm:$0xff] %v2261
        %2294 = vst [vmem:[#allocation4 + $0x68] sm:$0xff] %v2262
        %2295 = vst [vmem:[#allocation4 + $0x70] sm:$0xff] %v2263
        %2296 = vst [vmem:[#allocation4 + $0x78] sm:$0xff] %v2264
        %2297 = vst [vmem:[#allocation4 + $0x80] sm:$0xff] %v2265
        %2298 = vst [vmem:[#allocation4 + $0x88] sm:$0xff] %v2266
        %2299 = vst [vmem:[#allocation4 + $0x90] sm:$0xff] %v2267
        %2300 = vst [vmem:[#allocation4 + $0x98] sm:$0xff] %v2268
        %2301 = vst [vmem:[#allocation4 + $0xa0] sm:$0xff] %v2269
        %2302 = vst [vmem:[#allocation4 + $0xa8] sm:$0xff] %v2270
        %2303 = vst [vmem:[#allocation4 + $0xb0] sm:$0xff] %v2271
        %2304 = vst [vmem:[#allocation4 + $0xb8] sm:$0xff] %v2272
        %2305 = vst [vmem:[#allocation4 + $0xc0] sm:$0xff] %v2273
        %2306 = vst [vmem:[#allocation4 + $0xc8] sm:$0xff] %v2274
        %2307 = vst [vmem:[#allocation4 + $0xd0] sm:$0xff] %v2275
        %2308 = vst [vmem:[#allocation4 + $0xd8] sm:$0xff] %v2276
        %2309 = vst [vmem:[#allocation4 + $0xe0] sm:$0xff] %v2277
        %2310 = vst [vmem:[#allocation4 + $0xe8] sm:$0xff] %v2278
        %2311 = vst [vmem:[#allocation4 + $0xf0] sm:$0xff] %v2279
        %2312 = vst [vmem:[#allocation4 + $0xf8] sm:$0xff] %v2280
        %v2313 = vld [vmem:[%s1572 + $0x2] sm:$0xff]
        %v2314 = vld [vmem:[%s1572 + $0xa] sm:$0xff]
        %v2315 = vld [vmem:[%s1572 + $0x1a] sm:$0xff]
        %v2316 = vld [vmem:[%s1572 + $0x22] sm:$0xff]
        %v2317 = vld [vmem:[%s1572 + $0x32] sm:$0xff]
        %v2318 = vld [vmem:[%s1572 + $0x3a] sm:$0xff]
        %v2319 = vld [vmem:[%s1572 + $0x4a] sm:$0xff]
        %v2320 = vld [vmem:[%s1572 + $0x52] sm:$0xff]
        %v2321 = vld [vmem:[%s1572 + $0x62] sm:$0xff]
        %v2322 = vld [vmem:[%s1572 + $0x6a] sm:$0xff]
        %v2323 = vld [vmem:[%s1572 + $0x7a] sm:$0xff]
        %v2324 = vld [vmem:[%s1572 + $0x82] sm:$0xff]
        %v2325 = vld [vmem:[%s1572 + $0x92] sm:$0xff]
        %v2326 = vld [vmem:[%s1572 + $0x9a] sm:$0xff]
        %v2327 = vld [vmem:[%s1572 + $0xaa] sm:$0xff]
        %v2328 = vld [vmem:[%s1572 + $0xb2] sm:$0xff]
        %v2329 = vld [vmem:[%s1572 + $0xc2] sm:$0xff]
        %v2330 = vld [vmem:[%s1572 + $0xca] sm:$0xff]
        %v2331 = vld [vmem:[%s1572 + $0xda] sm:$0xff]
        %v2332 = vld [vmem:[%s1572 + $0xe2] sm:$0xff]
        %v2333 = vld [vmem:[%s1572 + $0xf2] sm:$0xff]
        %v2334 = vld [vmem:[%s1572 + $0xfa] sm:$0xff]
        %v2335 = vld [vmem:[%s1572 + $0x10a] sm:$0xff]
        %v2336 = vld [vmem:[%s1572 + $0x112] sm:$0xff]
        %v2337 = vld [vmem:[%s1572 + $0x122] sm:$0xff]
        %v2338 = vld [vmem:[%s1572 + $0x12a] sm:$0xff]
        %v2339 = vld [vmem:[%s1572 + $0x13a] sm:$0xff]
        %v2340 = vld [vmem:[%s1572 + $0x142] sm:$0xff]
        %v2341 = vld [vmem:[%s1572 + $0x152] sm:$0xff]
        %v2342 = vld [vmem:[%s1572 + $0x15a] sm:$0xff]
        %v2343 = vld [vmem:[%s1572 + $0x16a] sm:$0xff]
        %v2344 = vld [vmem:[%s1572 + $0x172] sm:$0xff]
        %s2345 = scalar_lea.vmem [#allocation5], 640
        %v2346 = vld [vmem:[%s2345] sm:$0xff]
        %v2347 = vld [vmem:[%s2345 + $0x8] sm:$0xff]
        %v2348 = vld [vmem:[%s2345 + $0x10] sm:$0xff]
        %v2349 = vld [vmem:[%s2345 + $0x18] sm:$0xff]
        %v2350 = vld [vmem:[%s2345 + $0x20] sm:$0xff]
        %v2351 = vld [vmem:[%s2345 + $0x28] sm:$0xff]
        %v2352 = vld [vmem:[%s2345 + $0x30] sm:$0xff]
        %v2353 = vld [vmem:[%s2345 + $0x38] sm:$0xff]
        %v2354 = vld [vmem:[%s2345 + $0x40] sm:$0xff]
        %v2355 = vld [vmem:[%s2345 + $0x48] sm:$0xff]
        %v2356 = vld [vmem:[%s2345 + $0x50] sm:$0xff]
        %v2357 = vld [vmem:[%s2345 + $0x58] sm:$0xff]
        %v2358 = vld [vmem:[%s2345 + $0x60] sm:$0xff]
        %v2359 = vld [vmem:[%s2345 + $0x68] sm:$0xff]
        %v2360 = vld [vmem:[%s2345 + $0x70] sm:$0xff]
        %v2361 = vld [vmem:[%s2345 + $0x78] sm:$0xff]
        %2362 = vmatprep.subr.mxu0 0.0
        %2363 = vmatpush1.msra.mxu0 %v2346
        %2364 = vmatprep.subr.mxu0 0.0
        %2365 = vmatpush1.msra.mxu0 %v2347
        %2366 = vmatprep.subr.mxu0 0.0
        %2367 = vmatpush1.msra.mxu0 %v2348
        %2368 = vmatprep.subr.mxu0 0.0
        %2369 = vmatpush1.msra.mxu0 %v2349
        %2370 = vmatprep.subr.mxu0 0.0
        %2371 = vmatpush1.msra.mxu0 %v2350
        %2372 = vmatprep.subr.mxu0 0.0
        %2373 = vmatpush1.msra.mxu0 %v2351
        %2374 = vmatprep.subr.mxu0 0.0
        %2375 = vmatpush1.msra.mxu0 %v2352
        %2376 = vmatprep.subr.mxu0 0.0
        %2377 = vmatpush1.msra.mxu0 %v2353
        %2378 = vmatprep.subr.mxu0 0.0
        %2379 = vmatpush1.msra.mxu0 %v2354
        %2380 = vmatprep.subr.mxu0 0.0
        %2381 = vmatpush1.msra.mxu0 %v2355
        %2382 = vmatprep.subr.mxu0 0.0
        %2383 = vmatpush1.msra.mxu0 %v2356
        %2384 = vmatprep.subr.mxu0 0.0
        %2385 = vmatpush1.msra.mxu0 %v2357
        %2386 = vmatprep.subr.mxu0 0.0
        %2387 = vmatpush1.msra.mxu0 %v2358
        %2388 = vmatprep.subr.mxu0 0.0
        %2389 = vmatpush1.msra.mxu0 %v2359
        %2390 = vmatprep.subr.mxu0 0.0
        %2391 = vmatpush1.msra.mxu0 %v2360
        %2392 = vmatprep.subr.mxu0 0.0
        %2393 = vmatpush1.msra.mxu0 %v2361
        %2394 = vmatprep.subr.mxu0 0.0
        %2395 = vmatpush1.msra.mxu0 0.0
        %2396 = vmatprep.subr.mxu0 0.0
        %2397 = vmatpush1.msra.mxu0 0.0
        %2398 = vmatprep.subr.mxu0 0.0
        %2399 = vmatpush1.msra.mxu0 0.0
        %2400 = vmatprep.subr.mxu0 0.0
        %2401 = vmatpush1.msra.mxu0 0.0
        %2402 = vmatprep.subr.mxu0 0.0
        %2403 = vmatpush1.msra.mxu0 0.0
        %2404 = vmatprep.subr.mxu0 0.0
        %2405 = vmatpush1.msra.mxu0 0.0
        %2406 = vmatprep.subr.mxu0 0.0
        %2407 = vmatpush1.msra.mxu0 0.0
        %2408 = vmatprep.subr.mxu0 0.0
        %2409 = vmatpush1.msra.mxu0 0.0
        %2410 = vmatprep.subr.mxu0 0.0
        %2411 = vmatpush1.msra.mxu0 0.0
        %2412 = vmatprep.subr.mxu0 0.0
        %2413 = vmatpush1.msra.mxu0 0.0
        %2414 = vmatprep.subr.mxu0 0.0
        %2415 = vmatpush1.msra.mxu0 0.0
        %2416 = vmatprep.subr.mxu0 0.0
        %2417 = vmatpush1.msra.mxu0 0.0
        %2418 = vmatprep.subr.mxu0 0.0
        %2419 = vmatpush1.msra.mxu0 0.0
        %2420 = vmatprep.subr.mxu0 0.0
        %2421 = vmatpush1.msra.mxu0 0.0
        %2422 = vmatprep.subr.mxu0 0.0
        %2423 = vmatpush1.msra.mxu0 0.0
        %2424 = vmatprep.subr.mxu0 0.0
        %2425 = vmatpush1.msra.mxu0 0.0
        %2426 = vmatprep.mubr.f32.mxu0 0.0
        %2427 = vmatmul.mubr.f32.gmra.mrb[0].mxu0 %v2313
        %v2428 = vpop.f32.mrb[0].mxu0
        %v2429 = vadd.f32 0.0, %v2428
        %v2430 = vpop.f32.mrb[0].mxu0
        %2431 = vmatprep.mubr.f32.mxu0 0.0
        %2432 = vmatmul.mubr.f32.gmra.mrb[0].mxu0 %v2314
        %v2433 = vpop.f32.mrb[0].mxu0
        %v2434 = vadd.f32 0.0, %v2433
        %v2435 = vpop.f32.mrb[0].mxu0
        %2436 = vmatprep.mubr.f32.mxu0 0.0
        %2437 = vmatmul.mubr.f32.gmra.mrb[0].mxu0 %v2315
        %v2438 = vpop.f32.mrb[0].mxu0
        %v2439 = vadd.f32 0.0, %v2438
        %v2440 = vpop.f32.mrb[0].mxu0
        %2441 = vmatprep.mubr.f32.mxu0 0.0
        %2442 = vmatmul.mubr.f32.gmra.mrb[0].mxu0 %v2316
        %v2443 = vpop.f32.mrb[0].mxu0
        %v2444 = vadd.f32 0.0, %v2443
        %v2445 = vpop.f32.mrb[0].mxu0
        %2446 = vmatprep.mubr.f32.mxu0 0.0
        %2447 = vmatmul.mubr.f32.gmra.mrb[0].mxu0 %v2317
        %v2448 = vpop.f32.mrb[0].mxu0
        %v2449 = vadd.f32 0.0, %v2448
        %v2450 = vpop.f32.mrb[0].mxu0
        %2451 = vmatprep.mubr.f32.mxu0 0.0
        %2452 = vmatmul.mubr.f32.gmra.mrb[0].mxu0 %v2318
        %v2453 = vpop.f32.mrb[0].mxu0
        %v2454 = vadd.f32 0.0, %v2453
        %v2455 = vpop.f32.mrb[0].mxu0
        %2456 = vmatprep.mubr.f32.mxu0 0.0
        %2457 = vmatmul.mubr.f32.gmra.mrb[0].mxu0 %v2319
        %v2458 = vpop.f32.mrb[0].mxu0
        %v2459 = vadd.f32 0.0, %v2458
        %v2460 = vpop.f32.mrb[0].mxu0
        %2461 = vmatprep.mubr.f32.mxu0 0.0
        %2462 = vmatmul.mubr.f32.gmra.mrb[0].mxu0 %v2320
        %v2463 = vpop.f32.mrb[0].mxu0
        %v2464 = vadd.f32 0.0, %v2463
        %v2465 = vpop.f32.mrb[0].mxu0
        %2466 = vmatprep.mubr.f32.mxu0 0.0
        %2467 = vmatmul.mubr.f32.gmra.mrb[0].mxu0 %v2321
        %v2468 = vpop.f32.mrb[0].mxu0
        %v2469 = vadd.f32 0.0, %v2468
        %v2470 = vpop.f32.mrb[0].mxu0
        %2471 = vmatprep.mubr.f32.mxu0 0.0
        %2472 = vmatmul.mubr.f32.gmra.mrb[0].mxu0 %v2322
        %v2473 = vpop.f32.mrb[0].mxu0
        %v2474 = vadd.f32 0.0, %v2473
        %v2475 = vpop.f32.mrb[0].mxu0
        %2476 = vmatprep.mubr.f32.mxu0 0.0
        %2477 = vmatmul.mubr.f32.gmra.mrb[0].mxu0 %v2323
        %v2478 = vpop.f32.mrb[0].mxu0
        %v2479 = vadd.f32 0.0, %v2478
        %v2480 = vpop.f32.mrb[0].mxu0
        %2481 = vmatprep.mubr.f32.mxu0 0.0
        %2482 = vmatmul.mubr.f32.gmra.mrb[0].mxu0 %v2324
        %v2483 = vpop.f32.mrb[0].mxu0
        %v2484 = vadd.f32 0.0, %v2483
        %v2485 = vpop.f32.mrb[0].mxu0
        %2486 = vmatprep.mubr.f32.mxu0 0.0
        %2487 = vmatmul.mubr.f32.gmra.mrb[0].mxu0 %v2325
        %v2488 = vpop.f32.mrb[0].mxu0
        %v2489 = vadd.f32 0.0, %v2488
        %v2490 = vpop.f32.mrb[0].mxu0
        %2491 = vmatprep.mubr.f32.mxu0 0.0
        %2492 = vmatmul.mubr.f32.gmra.mrb[0].mxu0 %v2326
        %v2493 = vpop.f32.mrb[0].mxu0
        %v2494 = vadd.f32 0.0, %v2493
        %v2495 = vpop.f32.mrb[0].mxu0
        %2496 = vmatprep.mubr.f32.mxu0 0.0
        %2497 = vmatmul.mubr.f32.gmra.mrb[0].mxu0 %v2327
        %v2498 = vpop.f32.mrb[0].mxu0
        %v2499 = vadd.f32 0.0, %v2498
        %v2500 = vpop.f32.mrb[0].mxu0
        %2501 = vmatprep.mubr.f32.mxu0 0.0
        %2502 = vmatmul.mubr.f32.gmra.mrb[0].mxu0 %v2328
        %v2503 = vpop.f32.mrb[0].mxu0
        %v2504 = vadd.f32 0.0, %v2503
        %v2505 = vpop.f32.mrb[0].mxu0
        %2506 = vmatprep.mubr.f32.mxu0 0.0
        %2507 = vmatmul.mubr.f32.gmra.mrb[0].mxu0 %v2329
        %v2508 = vpop.f32.mrb[0].mxu0
        %v2509 = vadd.f32 0.0, %v2508
        %v2510 = vpop.f32.mrb[0].mxu0
        %2511 = vmatprep.mubr.f32.mxu0 0.0
        %2512 = vmatmul.mubr.f32.gmra.mrb[0].mxu0 %v2330
        %v2513 = vpop.f32.mrb[0].mxu0
        %v2514 = vadd.f32 0.0, %v2513
        %v2515 = vpop.f32.mrb[0].mxu0
        %2516 = vmatprep.mubr.f32.mxu0 0.0
        %2517 = vmatmul.mubr.f32.gmra.mrb[0].mxu0 %v2331
        %v2518 = vpop.f32.mrb[0].mxu0
        %v2519 = vadd.f32 0.0, %v2518
        %v2520 = vpop.f32.mrb[0].mxu0
        %2521 = vmatprep.mubr.f32.mxu0 0.0
        %2522 = vmatmul.mubr.f32.gmra.mrb[0].mxu0 %v2332
        %v2523 = vpop.f32.mrb[0].mxu0
        %v2524 = vadd.f32 0.0, %v2523
        %v2525 = vpop.f32.mrb[0].mxu0
        %2526 = vmatprep.mubr.f32.mxu0 0.0
        %2527 = vmatmul.mubr.f32.gmra.mrb[0].mxu0 %v2333
        %v2528 = vpop.f32.mrb[0].mxu0
        %v2529 = vadd.f32 0.0, %v2528
        %v2530 = vpop.f32.mrb[0].mxu0
        %2531 = vmatprep.mubr.f32.mxu0 0.0
        %2532 = vmatmul.mubr.f32.gmra.mrb[0].mxu0 %v2334
        %v2533 = vpop.f32.mrb[0].mxu0
        %v2534 = vadd.f32 0.0, %v2533
        %v2535 = vpop.f32.mrb[0].mxu0
        %2536 = vmatprep.mubr.f32.mxu0 0.0
        %2537 = vmatmul.mubr.f32.gmra.mrb[0].mxu0 %v2335
        %v2538 = vpop.f32.mrb[0].mxu0
        %v2539 = vadd.f32 0.0, %v2538
        %v2540 = vpop.f32.mrb[0].mxu0
        %2541 = vmatprep.mubr.f32.mxu0 0.0
        %2542 = vmatmul.mubr.f32.gmra.mrb[0].mxu0 %v2336
        %v2543 = vpop.f32.mrb[0].mxu0
        %v2544 = vadd.f32 0.0, %v2543
        %v2545 = vpop.f32.mrb[0].mxu0
        %2546 = vmatprep.mubr.f32.mxu0 0.0
        %2547 = vmatmul.mubr.f32.gmra.mrb[0].mxu0 %v2337
        %v2548 = vpop.f32.mrb[0].mxu0
        %v2549 = vadd.f32 0.0, %v2548
        %v2550 = vpop.f32.mrb[0].mxu0
        %2551 = vmatprep.mubr.f32.mxu0 0.0
        %2552 = vmatmul.mubr.f32.gmra.mrb[0].mxu0 %v2338
        %v2553 = vpop.f32.mrb[0].mxu0
        %v2554 = vadd.f32 0.0, %v2553
        %v2555 = vpop.f32.mrb[0].mxu0
        %2556 = vmatprep.mubr.f32.mxu0 0.0
        %2557 = vmatmul.mubr.f32.gmra.mrb[0].mxu0 %v2339
        %v2558 = vpop.f32.mrb[0].mxu0
        %v2559 = vadd.f32 0.0, %v2558
        %v2560 = vpop.f32.mrb[0].mxu0
        %2561 = vmatprep.mubr.f32.mxu0 0.0
        %2562 = vmatmul.mubr.f32.gmra.mrb[0].mxu0 %v2340
        %v2563 = vpop.f32.mrb[0].mxu0
        %v2564 = vadd.f32 0.0, %v2563
        %v2565 = vpop.f32.mrb[0].mxu0
        %2566 = vmatprep.mubr.f32.mxu0 0.0
        %2567 = vmatmul.mubr.f32.gmra.mrb[0].mxu0 %v2341
        %v2568 = vpop.f32.mrb[0].mxu0
        %v2569 = vadd.f32 0.0, %v2568
        %v2570 = vpop.f32.mrb[0].mxu0
        %2571 = vmatprep.mubr.f32.mxu0 0.0
        %2572 = vmatmul.mubr.f32.gmra.mrb[0].mxu0 %v2342
        %v2573 = vpop.f32.mrb[0].mxu0
        %v2574 = vadd.f32 0.0, %v2573
        %v2575 = vpop.f32.mrb[0].mxu0
        %2576 = vmatprep.mubr.f32.mxu0 0.0
        %2577 = vmatmul.mubr.f32.gmra.mrb[0].mxu0 %v2343
        %v2578 = vpop.f32.mrb[0].mxu0
        %v2579 = vadd.f32 0.0, %v2578
        %v2580 = vpop.f32.mrb[0].mxu0
        %2581 = vmatprep.mubr.f32.mxu0 0.0
        %2582 = vmatmul.mubr.f32.gmra.mrb[0].mxu0 %v2344
        %v2583 = vpop.f32.mrb[0].mxu0
        %v2584 = vadd.f32 0.0, %v2583
        %v2585 = vpop.f32.mrb[0].mxu0
        %2586 = vdwg.mxu0
        %v2587 = vld [vmem:[#allocation4] sm:$0xff]
        %v2588 = vld [vmem:[#allocation4 + $0x8] sm:$0xff]
        %v2589 = vld [vmem:[#allocation4 + $0x10] sm:$0xff]
        %v2590 = vld [vmem:[#allocation4 + $0x18] sm:$0xff]
        %v2591 = vld [vmem:[#allocation4 + $0x20] sm:$0xff]
        %v2592 = vld [vmem:[#allocation4 + $0x28] sm:$0xff]
        %v2593 = vld [vmem:[#allocation4 + $0x30] sm:$0xff]
        %v2594 = vld [vmem:[#allocation4 + $0x38] sm:$0xff]
        %v2595 = vld [vmem:[#allocation4 + $0x40] sm:$0xff]
        %v2596 = vld [vmem:[#allocation4 + $0x48] sm:$0xff]
        %v2597 = vld [vmem:[#allocation4 + $0x50] sm:$0xff]
        %v2598 = vld [vmem:[#allocation4 + $0x58] sm:$0xff]
        %v2599 = vld [vmem:[#allocation4 + $0x60] sm:$0xff]
        %v2600 = vld [vmem:[#allocation4 + $0x68] sm:$0xff]
        %v2601 = vld [vmem:[#allocation4 + $0x70] sm:$0xff]
        %v2602 = vld [vmem:[#allocation4 + $0x78] sm:$0xff]
        %v2603 = vld [vmem:[#allocation4 + $0x80] sm:$0xff]
        %v2604 = vld [vmem:[#allocation4 + $0x88] sm:$0xff]
        %v2605 = vld [vmem:[#allocation4 + $0x90] sm:$0xff]
        %v2606 = vld [vmem:[#allocation4 + $0x98] sm:$0xff]
        %v2607 = vld [vmem:[#allocation4 + $0xa0] sm:$0xff]
        %v2608 = vld [vmem:[#allocation4 + $0xa8] sm:$0xff]
        %v2609 = vld [vmem:[#allocation4 + $0xb0] sm:$0xff]
        %v2610 = vld [vmem:[#allocation4 + $0xb8] sm:$0xff]
        %v2611 = vld [vmem:[#allocation4 + $0xc0] sm:$0xff]
        %v2612 = vld [vmem:[#allocation4 + $0xc8] sm:$0xff]
        %v2613 = vld [vmem:[#allocation4 + $0xd0] sm:$0xff]
        %v2614 = vld [vmem:[#allocation4 + $0xd8] sm:$0xff]
        %v2615 = vld [vmem:[#allocation4 + $0xe0] sm:$0xff]
        %v2616 = vld [vmem:[#allocation4 + $0xe8] sm:$0xff]
        %v2617 = vld [vmem:[#allocation4 + $0xf0] sm:$0xff]
        %v2618 = vld [vmem:[#allocation4 + $0xf8] sm:$0xff]
        %v2619 = vadd.f32 %v2587, %v2429
        %v2620 = vadd.f32 %v2588, %v2434
        %v2621 = vadd.f32 %v2589, %v2439
        %v2622 = vadd.f32 %v2590, %v2444
        %v2623 = vadd.f32 %v2591, %v2449
        %v2624 = vadd.f32 %v2592, %v2454
        %v2625 = vadd.f32 %v2593, %v2459
        %v2626 = vadd.f32 %v2594, %v2464
        %v2627 = vadd.f32 %v2595, %v2469
        %v2628 = vadd.f32 %v2596, %v2474
        %v2629 = vadd.f32 %v2597, %v2479
        %v2630 = vadd.f32 %v2598, %v2484
        %v2631 = vadd.f32 %v2599, %v2489
        %v2632 = vadd.f32 %v2600, %v2494
        %v2633 = vadd.f32 %v2601, %v2499
        %v2634 = vadd.f32 %v2602, %v2504
        %v2635 = vadd.f32 %v2603, %v2509
        %v2636 = vadd.f32 %v2604, %v2514
        %v2637 = vadd.f32 %v2605, %v2519
        %v2638 = vadd.f32 %v2606, %v2524
        %v2639 = vadd.f32 %v2607, %v2529
        %v2640 = vadd.f32 %v2608, %v2534
        %v2641 = vadd.f32 %v2609, %v2539
        %v2642 = vadd.f32 %v2610, %v2544
        %v2643 = vadd.f32 %v2611, %v2549
        %v2644 = vadd.f32 %v2612, %v2554
        %v2645 = vadd.f32 %v2613, %v2559
        %v2646 = vadd.f32 %v2614, %v2564
        %v2647 = vadd.f32 %v2615, %v2569
        %v2648 = vadd.f32 %v2616, %v2574
        %v2649 = vadd.f32 %v2617, %v2579
        %v2650 = vadd.f32 %v2618, %v2584
        %2651 = vst [vmem:[#allocation4] sm:$0xff] %v2619
        %2652 = vst [vmem:[#allocation4 + $0x8] sm:$0xff] %v2620
        %2653 = vst [vmem:[#allocation4 + $0x10] sm:$0xff] %v2621
        %2654 = vst [vmem:[#allocation4 + $0x18] sm:$0xff] %v2622
        %2655 = vst [vmem:[#allocation4 + $0x20] sm:$0xff] %v2623
        %2656 = vst [vmem:[#allocation4 + $0x28] sm:$0xff] %v2624
        %2657 = vst [vmem:[#allocation4 + $0x30] sm:$0xff] %v2625
        %2658 = vst [vmem:[#allocation4 + $0x38] sm:$0xff] %v2626
        %2659 = vst [vmem:[#allocation4 + $0x40] sm:$0xff] %v2627
        %2660 = vst [vmem:[#allocation4 + $0x48] sm:$0xff] %v2628
        %2661 = vst [vmem:[#allocation4 + $0x50] sm:$0xff] %v2629
        %2662 = vst [vmem:[#allocation4 + $0x58] sm:$0xff] %v2630
        %2663 = vst [vmem:[#allocation4 + $0x60] sm:$0xff] %v2631
        %2664 = vst [vmem:[#allocation4 + $0x68] sm:$0xff] %v2632
        %2665 = vst [vmem:[#allocation4 + $0x70] sm:$0xff] %v2633
        %2666 = vst [vmem:[#allocation4 + $0x78] sm:$0xff] %v2634
        %2667 = vst [vmem:[#allocation4 + $0x80] sm:$0xff] %v2635
        %2668 = vst [vmem:[#allocation4 + $0x88] sm:$0xff] %v2636
        %2669 = vst [vmem:[#allocation4 + $0x90] sm:$0xff] %v2637
        %2670 = vst [vmem:[#allocation4 + $0x98] sm:$0xff] %v2638
        %2671 = vst [vmem:[#allocation4 + $0xa0] sm:$0xff] %v2639
        %2672 = vst [vmem:[#allocation4 + $0xa8] sm:$0xff] %v2640
        %2673 = vst [vmem:[#allocation4 + $0xb0] sm:$0xff] %v2641
        %2674 = vst [vmem:[#allocation4 + $0xb8] sm:$0xff] %v2642
        %2675 = vst [vmem:[#allocation4 + $0xc0] sm:$0xff] %v2643
        %2676 = vst [vmem:[#allocation4 + $0xc8] sm:$0xff] %v2644
        %2677 = vst [vmem:[#allocation4 + $0xd0] sm:$0xff] %v2645
        %2678 = vst [vmem:[#allocation4 + $0xd8] sm:$0xff] %v2646
        %2679 = vst [vmem:[#allocation4 + $0xe0] sm:$0xff] %v2647
        %2680 = vst [vmem:[#allocation4 + $0xe8] sm:$0xff] %v2648
        %2681 = vst [vmem:[#allocation4 + $0xf0] sm:$0xff] %v2649
        %2682 = vst [vmem:[#allocation4 + $0xf8] sm:$0xff] %v2650
        %s2683 = scalar_lea.vmem [#allocation2], 48
        %v2684 = vld [vmem:[%s2683] sm:$0xff]
        %v2685 = vld [vmem:[%s2683 + $0x8] sm:$0xff]
        %v2686 = vld [vmem:[%s2683 + $0x18] sm:$0xff]
        %v2687 = vld [vmem:[%s2683 + $0x20] sm:$0xff]
        %v2688 = vld [vmem:[%s2683 + $0x30] sm:$0xff]
        %v2689 = vld [vmem:[%s2683 + $0x38] sm:$0xff]
        %v2690 = vld [vmem:[%s2683 + $0x48] sm:$0xff]
        %v2691 = vld [vmem:[%s2683 + $0x50] sm:$0xff]
        %v2692 = vld [vmem:[%s2683 + $0x60] sm:$0xff]
        %v2693 = vld [vmem:[%s2683 + $0x68] sm:$0xff]
        %v2694 = vld [vmem:[%s2683 + $0x78] sm:$0xff]
        %v2695 = vld [vmem:[%s2683 + $0x80] sm:$0xff]
        %v2696 = vld [vmem:[%s2683 + $0x90] sm:$0xff]
        %v2697 = vld [vmem:[%s2683 + $0x98] sm:$0xff]
        %v2698 = vld [vmem:[%s2683 + $0xa8] sm:$0xff]
        %v2699 = vld [vmem:[%s2683 + $0xb0] sm:$0xff]
        %v2700 = vld [vmem:[%s2683 + $0xc0] sm:$0xff]
        %v2701 = vld [vmem:[%s2683 + $0xc8] sm:$0xff]
        %v2702 = vld [vmem:[%s2683 + $0xd8] sm:$0xff]
        %v2703 = vld [vmem:[%s2683 + $0xe0] sm:$0xff]
        %v2704 = vld [vmem:[%s2683 + $0xf0] sm:$0xff]
        %v2705 = vld [vmem:[%s2683 + $0xf8] sm:$0xff]
        %v2706 = vld [vmem:[%s2683 + $0x108] sm:$0xff]
        %v2707 = vld [vmem:[%s2683 + $0x110] sm:$0xff]
        %v2708 = vld [vmem:[%s2683 + $0x120] sm:$0xff]
        %v2709 = vld [vmem:[%s2683 + $0x128] sm:$0xff]
        %v2710 = vld [vmem:[%s2683 + $0x138] sm:$0xff]
        %v2711 = vld [vmem:[%s2683 + $0x140] sm:$0xff]
        %v2712 = vld [vmem:[%s2683 + $0x150] sm:$0xff]
        %v2713 = vld [vmem:[%s2683 + $0x158] sm:$0xff]
        %v2714 = vld [vmem:[%s2683 + $0x168] sm:$0xff]
        %v2715 = vld [vmem:[%s2683 + $0x170] sm:$0xff]
        %s2716 = scalar_lea.vmem [#allocation5], 768
        %v2717 = vld [vmem:[%s2716] sm:$0xff]
        %v2718 = vld [vmem:[%s2716 + $0x8] sm:$0xff]
        %v2719 = vld [vmem:[%s2716 + $0x10] sm:$0xff]
        %v2720 = vld [vmem:[%s2716 + $0x18] sm:$0xff]
        %v2721 = vld [vmem:[%s2716 + $0x20] sm:$0xff]
        %v2722 = vld [vmem:[%s2716 + $0x28] sm:$0xff]
        %v2723 = vld [vmem:[%s2716 + $0x30] sm:$0xff]
        %v2724 = vld [vmem:[%s2716 + $0x38] sm:$0xff]
        %v2725 = vld [vmem:[%s2716 + $0x40] sm:$0xff]
        %v2726 = vld [vmem:[%s2716 + $0x48] sm:$0xff]
        %v2727 = vld [vmem:[%s2716 + $0x50] sm:$0xff]
        %v2728 = vld [vmem:[%s2716 + $0x58] sm:$0xff]
        %v2729 = vld [vmem:[%s2716 + $0x60] sm:$0xff]
        %v2730 = vld [vmem:[%s2716 + $0x68] sm:$0xff]
        %v2731 = vld [vmem:[%s2716 + $0x70] sm:$0xff]
        %v2732 = vld [vmem:[%s2716 + $0x78] sm:$0xff]
        %2733 = vmatprep.subr.mxu0 0.0
        %2734 = vmatpush1.msra.mxu0 %v2717
        %2735 = vmatprep.subr.mxu0 0.0
        %2736 = vmatpush1.msra.mxu0 %v2718
        %2737 = vmatprep.subr.mxu0 0.0
        %2738 = vmatpush1.msra.mxu0 %v2719
        %2739 = vmatprep.subr.mxu0 0.0
        %2740 = vmatpush1.msra.mxu0 %v2720
        %2741 = vmatprep.subr.mxu0 0.0
        %2742 = vmatpush1.msra.mxu0 %v2721
        %2743 = vmatprep.subr.mxu0 0.0
        %2744 = vmatpush1.msra.mxu0 %v2722
        %2745 = vmatprep.subr.mxu0 0.0
        %2746 = vmatpush1.msra.mxu0 %v2723
        %2747 = vmatprep.subr.mxu0 0.0
        %2748 = vmatpush1.msra.mxu0 %v2724
        %2749 = vmatprep.subr.mxu0 0.0
        %2750 = vmatpush1.msra.mxu0 %v2725
        %2751 = vmatprep.subr.mxu0 0.0
        %2752 = vmatpush1.msra.mxu0 %v2726
        %2753 = vmatprep.subr.mxu0 0.0
        %2754 = vmatpush1.msra.mxu0 %v2727
        %2755 = vmatprep.subr.mxu0 0.0
        %2756 = vmatpush1.msra.mxu0 %v2728
        %2757 = vmatprep.subr.mxu0 0.0
        %2758 = vmatpush1.msra.mxu0 %v2729
        %2759 = vmatprep.subr.mxu0 0.0
        %2760 = vmatpush1.msra.mxu0 %v2730
        %2761 = vmatprep.subr.mxu0 0.0
        %2762 = vmatpush1.msra.mxu0 %v2731
        %2763 = vmatprep.subr.mxu0 0.0
        %2764 = vmatpush1.msra.mxu0 %v2732
        %2765 = vmatprep.subr.mxu0 0.0
        %2766 = vmatpush1.msra.mxu0 0.0
        %2767 = vmatprep.subr.mxu0 0.0
        %2768 = vmatpush1.msra.mxu0 0.0
        %2769 = vmatprep.subr.mxu0 0.0
        %2770 = vmatpush1.msra.mxu0 0.0
        %2771 = vmatprep.subr.mxu0 0.0
        %2772 = vmatpush1.msra.mxu0 0.0
        %2773 = vmatprep.subr.mxu0 0.0
        %2774 = vmatpush1.msra.mxu0 0.0
        %2775 = vmatprep.subr.mxu0 0.0
        %2776 = vmatpush1.msra.mxu0 0.0
        %2777 = vmatprep.subr.mxu0 0.0
        %2778 = vmatpush1.msra.mxu0 0.0
        %2779 = vmatprep.subr.mxu0 0.0
        %2780 = vmatpush1.msra.mxu0 0.0
        %2781 = vmatprep.subr.mxu0 0.0
        %2782 = vmatpush1.msra.mxu0 0.0
        %2783 = vmatprep.subr.mxu0 0.0
        %2784 = vmatpush1.msra.mxu0 0.0
        %2785 = vmatprep.subr.mxu0 0.0
        %2786 = vmatpush1.msra.mxu0 0.0
        %2787 = vmatprep.subr.mxu0 0.0
        %2788 = vmatpush1.msra.mxu0 0.0
        %2789 = vmatprep.subr.mxu0 0.0
        %2790 = vmatpush1.msra.mxu0 0.0
        %2791 = vmatprep.subr.mxu0 0.0
        %2792 = vmatpush1.msra.mxu0 0.0
        %2793 = vmatprep.subr.mxu0 0.0
        %2794 = vmatpush1.msra.mxu0 0.0
        %2795 = vmatprep.subr.mxu0 0.0
        %2796 = vmatpush1.msra.mxu0 0.0
        %2797 = vmatprep.mubr.f32.mxu0 0.0
        %2798 = vmatmul.mubr.f32.gmra.mrb[0].mxu0 %v2684
        %v2799 = vpop.f32.mrb[0].mxu0
        %v2800 = vadd.f32 0.0, %v2799
        %v2801 = vpop.f32.mrb[0].mxu0
        %2802 = vmatprep.mubr.f32.mxu0 0.0
        %2803 = vmatmul.mubr.f32.gmra.mrb[0].mxu0 %v2685
        %v2804 = vpop.f32.mrb[0].mxu0
        %v2805 = vadd.f32 0.0, %v2804
        %v2806 = vpop.f32.mrb[0].mxu0
        %2807 = vmatprep.mubr.f32.mxu0 0.0
        %2808 = vmatmul.mubr.f32.gmra.mrb[0].mxu0 %v2686
        %v2809 = vpop.f32.mrb[0].mxu0
        %v2810 = vadd.f32 0.0, %v2809
        %v2811 = vpop.f32.mrb[0].mxu0
        %2812 = vmatprep.mubr.f32.mxu0 0.0
        %2813 = vmatmul.mubr.f32.gmra.mrb[0].mxu0 %v2687
        %v2814 = vpop.f32.mrb[0].mxu0
        %v2815 = vadd.f32 0.0, %v2814
        %v2816 = vpop.f32.mrb[0].mxu0
        %2817 = vmatprep.mubr.f32.mxu0 0.0
        %2818 = vmatmul.mubr.f32.gmra.mrb[0].mxu0 %v2688
        %v2819 = vpop.f32.mrb[0].mxu0
        %v2820 = vadd.f32 0.0, %v2819
        %v2821 = vpop.f32.mrb[0].mxu0
        %2822 = vmatprep.mubr.f32.mxu0 0.0
        %2823 = vmatmul.mubr.f32.gmra.mrb[0].mxu0 %v2689
        %v2824 = vpop.f32.mrb[0].mxu0
        %v2825 = vadd.f32 0.0, %v2824
        %v2826 = vpop.f32.mrb[0].mxu0
        %2827 = vmatprep.mubr.f32.mxu0 0.0
        %2828 = vmatmul.mubr.f32.gmra.mrb[0].mxu0 %v2690
        %v2829 = vpop.f32.mrb[0].mxu0
        %v2830 = vadd.f32 0.0, %v2829
        %v2831 = vpop.f32.mrb[0].mxu0
        %2832 = vmatprep.mubr.f32.mxu0 0.0
        %2833 = vmatmul.mubr.f32.gmra.mrb[0].mxu0 %v2691
        %v2834 = vpop.f32.mrb[0].mxu0
        %v2835 = vadd.f32 0.0, %v2834
        %v2836 = vpop.f32.mrb[0].mxu0
        %2837 = vmatprep.mubr.f32.mxu0 0.0
        %2838 = vmatmul.mubr.f32.gmra.mrb[0].mxu0 %v2692
        %v2839 = vpop.f32.mrb[0].mxu0
        %v2840 = vadd.f32 0.0, %v2839
        %v2841 = vpop.f32.mrb[0].mxu0
        %2842 = vmatprep.mubr.f32.mxu0 0.0
        %2843 = vmatmul.mubr.f32.gmra.mrb[0].mxu0 %v2693
        %v2844 = vpop.f32.mrb[0].mxu0
        %v2845 = vadd.f32 0.0, %v2844
        %v2846 = vpop.f32.mrb[0].mxu0
        %2847 = vmatprep.mubr.f32.mxu0 0.0
        %2848 = vmatmul.mubr.f32.gmra.mrb[0].mxu0 %v2694
        %v2849 = vpop.f32.mrb[0].mxu0
        %v2850 = vadd.f32 0.0, %v2849
        %v2851 = vpop.f32.mrb[0].mxu0
        %2852 = vmatprep.mubr.f32.mxu0 0.0
        %2853 = vmatmul.mubr.f32.gmra.mrb[0].mxu0 %v2695
        %v2854 = vpop.f32.mrb[0].mxu0
        %v2855 = vadd.f32 0.0, %v2854
        %v2856 = vpop.f32.mrb[0].mxu0
        %2857 = vmatprep.mubr.f32.mxu0 0.0
        %2858 = vmatmul.mubr.f32.gmra.mrb[0].mxu0 %v2696
        %v2859 = vpop.f32.mrb[0].mxu0
        %v2860 = vadd.f32 0.0, %v2859
        %v2861 = vpop.f32.mrb[0].mxu0
        %2862 = vmatprep.mubr.f32.mxu0 0.0
        %2863 = vmatmul.mubr.f32.gmra.mrb[0].mxu0 %v2697
        %v2864 = vpop.f32.mrb[0].mxu0
        %v2865 = vadd.f32 0.0, %v2864
        %v2866 = vpop.f32.mrb[0].mxu0
        %2867 = vmatprep.mubr.f32.mxu0 0.0
        %2868 = vmatmul.mubr.f32.gmra.mrb[0].mxu0 %v2698
        %v2869 = vpop.f32.mrb[0].mxu0
        %v2870 = vadd.f32 0.0, %v2869
        %v2871 = vpop.f32.mrb[0].mxu0
        %2872 = vmatprep.mubr.f32.mxu0 0.0
        %2873 = vmatmul.mubr.f32.gmra.mrb[0].mxu0 %v2699
        %v2874 = vpop.f32.mrb[0].mxu0
        %v2875 = vadd.f32 0.0, %v2874
        %v2876 = vpop.f32.mrb[0].mxu0
        %2877 = vmatprep.mubr.f32.mxu0 0.0
        %2878 = vmatmul.mubr.f32.gmra.mrb[0].mxu0 %v2700
        %v2879 = vpop.f32.mrb[0].mxu0
        %v2880 = vadd.f32 0.0, %v2879
        %v2881 = vpop.f32.mrb[0].mxu0
        %2882 = vmatprep.mubr.f32.mxu0 0.0
        %2883 = vmatmul.mubr.f32.gmra.mrb[0].mxu0 %v2701
        %v2884 = vpop.f32.mrb[0].mxu0
        %v2885 = vadd.f32 0.0, %v2884
        %v2886 = vpop.f32.mrb[0].mxu0
        %2887 = vmatprep.mubr.f32.mxu0 0.0
        %2888 = vmatmul.mubr.f32.gmra.mrb[0].mxu0 %v2702
        %v2889 = vpop.f32.mrb[0].mxu0
        %v2890 = vadd.f32 0.0, %v2889
        %v2891 = vpop.f32.mrb[0].mxu0
        %2892 = vmatprep.mubr.f32.mxu0 0.0
        %2893 = vmatmul.mubr.f32.gmra.mrb[0].mxu0 %v2703
        %v2894 = vpop.f32.mrb[0].mxu0
        %v2895 = vadd.f32 0.0, %v2894
        %v2896 = vpop.f32.mrb[0].mxu0
        %2897 = vmatprep.mubr.f32.mxu0 0.0
        %2898 = vmatmul.mubr.f32.gmra.mrb[0].mxu0 %v2704
        %v2899 = vpop.f32.mrb[0].mxu0
        %v2900 = vadd.f32 0.0, %v2899
        %v2901 = vpop.f32.mrb[0].mxu0
        %2902 = vmatprep.mubr.f32.mxu0 0.0
        %2903 = vmatmul.mubr.f32.gmra.mrb[0].mxu0 %v2705
        %v2904 = vpop.f32.mrb[0].mxu0
        %v2905 = vadd.f32 0.0, %v2904
        %v2906 = vpop.f32.mrb[0].mxu0
        %2907 = vmatprep.mubr.f32.mxu0 0.0
        %2908 = vmatmul.mubr.f32.gmra.mrb[0].mxu0 %v2706
        %v2909 = vpop.f32.mrb[0].mxu0
        %v2910 = vadd.f32 0.0, %v2909
        %v2911 = vpop.f32.mrb[0].mxu0
        %2912 = vmatprep.mubr.f32.mxu0 0.0
        %2913 = vmatmul.mubr.f32.gmra.mrb[0].mxu0 %v2707
        %v2914 = vpop.f32.mrb[0].mxu0
        %v2915 = vadd.f32 0.0, %v2914
        %v2916 = vpop.f32.mrb[0].mxu0
        %2917 = vmatprep.mubr.f32.mxu0 0.0
        %2918 = vmatmul.mubr.f32.gmra.mrb[0].mxu0 %v2708
        %v2919 = vpop.f32.mrb[0].mxu0
        %v2920 = vadd.f32 0.0, %v2919
        %v2921 = vpop.f32.mrb[0].mxu0
        %2922 = vmatprep.mubr.f32.mxu0 0.0
        %2923 = vmatmul.mubr.f32.gmra.mrb[0].mxu0 %v2709
        %v2924 = vpop.f32.mrb[0].mxu0
        %v2925 = vadd.f32 0.0, %v2924
        %v2926 = vpop.f32.mrb[0].mxu0
        %2927 = vmatprep.mubr.f32.mxu0 0.0
        %2928 = vmatmul.mubr.f32.gmra.mrb[0].mxu0 %v2710
        %v2929 = vpop.f32.mrb[0].mxu0
        %v2930 = vadd.f32 0.0, %v2929
        %v2931 = vpop.f32.mrb[0].mxu0
        %2932 = vmatprep.mubr.f32.mxu0 0.0
        %2933 = vmatmul.mubr.f32.gmra.mrb[0].mxu0 %v2711
        %v2934 = vpop.f32.mrb[0].mxu0
        %v2935 = vadd.f32 0.0, %v2934
        %v2936 = vpop.f32.mrb[0].mxu0
        %2937 = vmatprep.mubr.f32.mxu0 0.0
        %2938 = vmatmul.mubr.f32.gmra.mrb[0].mxu0 %v2712
        %v2939 = vpop.f32.mrb[0].mxu0
        %v2940 = vadd.f32 0.0, %v2939
        %v2941 = vpop.f32.mrb[0].mxu0
        %2942 = vmatprep.mubr.f32.mxu0 0.0
        %2943 = vmatmul.mubr.f32.gmra.mrb[0].mxu0 %v2713
        %v2944 = vpop.f32.mrb[0].mxu0
        %v2945 = vadd.f32 0.0, %v2944
        %v2946 = vpop.f32.mrb[0].mxu0
        %2947 = vmatprep.mubr.f32.mxu0 0.0
        %2948 = vmatmul.mubr.f32.gmra.mrb[0].mxu0 %v2714
        %v2949 = vpop.f32.mrb[0].mxu0
        %v2950 = vadd.f32 0.0, %v2949
        %v2951 = vpop.f32.mrb[0].mxu0
        %2952 = vmatprep.mubr.f32.mxu0 0.0
        %2953 = vmatmul.mubr.f32.gmra.mrb[0].mxu0 %v2715
        %v2954 = vpop.f32.mrb[0].mxu0
        %v2955 = vadd.f32 0.0, %v2954
        %v2956 = vpop.f32.mrb[0].mxu0
        %2957 = vdwg.mxu0
        %v2958 = vld [vmem:[#allocation4] sm:$0xff]
        %v2959 = vld [vmem:[#allocation4 + $0x8] sm:$0xff]
        %v2960 = vld [vmem:[#allocation4 + $0x10] sm:$0xff]
        %v2961 = vld [vmem:[#allocation4 + $0x18] sm:$0xff]
        %v2962 = vld [vmem:[#allocation4 + $0x20] sm:$0xff]
        %v2963 = vld [vmem:[#allocation4 + $0x28] sm:$0xff]
        %v2964 = vld [vmem:[#allocation4 + $0x30] sm:$0xff]
        %v2965 = vld [vmem:[#allocation4 + $0x38] sm:$0xff]
        %v2966 = vld [vmem:[#allocation4 + $0x40] sm:$0xff]
        %v2967 = vld [vmem:[#allocation4 + $0x48] sm:$0xff]
        %v2968 = vld [vmem:[#allocation4 + $0x50] sm:$0xff]
        %v2969 = vld [vmem:[#allocation4 + $0x58] sm:$0xff]
        %v2970 = vld [vmem:[#allocation4 + $0x60] sm:$0xff]
        %v2971 = vld [vmem:[#allocation4 + $0x68] sm:$0xff]
        %v2972 = vld [vmem:[#allocation4 + $0x70] sm:$0xff]
        %v2973 = vld [vmem:[#allocation4 + $0x78] sm:$0xff]
        %v2974 = vld [vmem:[#allocation4 + $0x80] sm:$0xff]
        %v2975 = vld [vmem:[#allocation4 + $0x88] sm:$0xff]
        %v2976 = vld [vmem:[#allocation4 + $0x90] sm:$0xff]
        %v2977 = vld [vmem:[#allocation4 + $0x98] sm:$0xff]
        %v2978 = vld [vmem:[#allocation4 + $0xa0] sm:$0xff]
        %v2979 = vld [vmem:[#allocation4 + $0xa8] sm:$0xff]
        %v2980 = vld [vmem:[#allocation4 + $0xb0] sm:$0xff]
        %v2981 = vld [vmem:[#allocation4 + $0xb8] sm:$0xff]
        %v2982 = vld [vmem:[#allocation4 + $0xc0] sm:$0xff]
        %v2983 = vld [vmem:[#allocation4 + $0xc8] sm:$0xff]
        %v2984 = vld [vmem:[#allocation4 + $0xd0] sm:$0xff]
        %v2985 = vld [vmem:[#allocation4 + $0xd8] sm:$0xff]
        %v2986 = vld [vmem:[#allocation4 + $0xe0] sm:$0xff]
        %v2987 = vld [vmem:[#allocation4 + $0xe8] sm:$0xff]
        %v2988 = vld [vmem:[#allocation4 + $0xf0] sm:$0xff]
        %v2989 = vld [vmem:[#allocation4 + $0xf8] sm:$0xff]
        %v2990 = vadd.f32 %v2958, %v2800
        %v2991 = vadd.f32 %v2959, %v2805
        %v2992 = vadd.f32 %v2960, %v2810
        %v2993 = vadd.f32 %v2961, %v2815
        %v2994 = vadd.f32 %v2962, %v2820
        %v2995 = vadd.f32 %v2963, %v2825
        %v2996 = vadd.f32 %v2964, %v2830
        %v2997 = vadd.f32 %v2965, %v2835
        %v2998 = vadd.f32 %v2966, %v2840
        %v2999 = vadd.f32 %v2967, %v2845
        %v3000 = vadd.f32 %v2968, %v2850
        %v3001 = vadd.f32 %v2969, %v2855
        %v3002 = vadd.f32 %v2970, %v2860
        %v3003 = vadd.f32 %v2971, %v2865
        %v3004 = vadd.f32 %v2972, %v2870
        %v3005 = vadd.f32 %v2973, %v2875
        %v3006 = vadd.f32 %v2974, %v2880
        %v3007 = vadd.f32 %v2975, %v2885
        %v3008 = vadd.f32 %v2976, %v2890
        %v3009 = vadd.f32 %v2977, %v2895
        %v3010 = vadd.f32 %v2978, %v2900
        %v3011 = vadd.f32 %v2979, %v2905
        %v3012 = vadd.f32 %v2980, %v2910
        %v3013 = vadd.f32 %v2981, %v2915
        %v3014 = vadd.f32 %v2982, %v2920
        %v3015 = vadd.f32 %v2983, %v2925
        %v3016 = vadd.f32 %v2984, %v2930
        %v3017 = vadd.f32 %v2985, %v2935
        %v3018 = vadd.f32 %v2986, %v2940
        %v3019 = vadd.f32 %v2987, %v2945
        %v3020 = vadd.f32 %v2988, %v2950
        %v3021 = vadd.f32 %v2989, %v2955
        %3022 = vst [vmem:[#allocation4] sm:$0xff] %v2990
        %3023 = vst [vmem:[#allocation4 + $0x8] sm:$0xff] %v2991
        %3024 = vst [vmem:[#allocation4 + $0x10] sm:$0xff] %v2992
        %3025 = vst [vmem:[#allocation4 + $0x18] sm:$0xff] %v2993
        %3026 = vst [vmem:[#allocation4 + $0x20] sm:$0xff] %v2994
        %3027 = vst [vmem:[#allocation4 + $0x28] sm:$0xff] %v2995
        %3028 = vst [vmem:[#allocation4 + $0x30] sm:$0xff] %v2996
        %3029 = vst [vmem:[#allocation4 + $0x38] sm:$0xff] %v2997
        %3030 = vst [vmem:[#allocation4 + $0x40] sm:$0xff] %v2998
        %3031 = vst [vmem:[#allocation4 + $0x48] sm:$0xff] %v2999
        %3032 = vst [vmem:[#allocation4 + $0x50] sm:$0xff] %v3000
        %3033 = vst [vmem:[#allocation4 + $0x58] sm:$0xff] %v3001
        %3034 = vst [vmem:[#allocation4 + $0x60] sm:$0xff] %v3002
        %3035 = vst [vmem:[#allocation4 + $0x68] sm:$0xff] %v3003
        %3036 = vst [vmem:[#allocation4 + $0x70] sm:$0xff] %v3004
        %3037 = vst [vmem:[#allocation4 + $0x78] sm:$0xff] %v3005
        %3038 = vst [vmem:[#allocation4 + $0x80] sm:$0xff] %v3006
        %3039 = vst [vmem:[#allocation4 + $0x88] sm:$0xff] %v3007
        %3040 = vst [vmem:[#allocation4 + $0x90] sm:$0xff] %v3008
        %3041 = vst [vmem:[#allocation4 + $0x98] sm:$0xff] %v3009
        %3042 = vst [vmem:[#allocation4 + $0xa0] sm:$0xff] %v3010
        %3043 = vst [vmem:[#allocation4 + $0xa8] sm:$0xff] %v3011
        %3044 = vst [vmem:[#allocation4 + $0xb0] sm:$0xff] %v3012
        %3045 = vst [vmem:[#allocation4 + $0xb8] sm:$0xff] %v3013
        %3046 = vst [vmem:[#allocation4 + $0xc0] sm:$0xff] %v3014
        %3047 = vst [vmem:[#allocation4 + $0xc8] sm:$0xff] %v3015
        %3048 = vst [vmem:[#allocation4 + $0xd0] sm:$0xff] %v3016
        %3049 = vst [vmem:[#allocation4 + $0xd8] sm:$0xff] %v3017
        %3050 = vst [vmem:[#allocation4 + $0xe0] sm:$0xff] %v3018
        %3051 = vst [vmem:[#allocation4 + $0xe8] sm:$0xff] %v3019
        %3052 = vst [vmem:[#allocation4 + $0xf0] sm:$0xff] %v3020
        %3053 = vst [vmem:[#allocation4 + $0xf8] sm:$0xff] %v3021
        %v3054 = vld [vmem:[%s2683 + $0x1] sm:$0xff]
        %v3055 = vld [vmem:[%s2683 + $0x9] sm:$0xff]
        %v3056 = vld [vmem:[%s2683 + $0x19] sm:$0xff]
        %v3057 = vld [vmem:[%s2683 + $0x21] sm:$0xff]
        %v3058 = vld [vmem:[%s2683 + $0x31] sm:$0xff]
        %v3059 = vld [vmem:[%s2683 + $0x39] sm:$0xff]
        %v3060 = vld [vmem:[%s2683 + $0x49] sm:$0xff]
        %v3061 = vld [vmem:[%s2683 + $0x51] sm:$0xff]
        %v3062 = vld [vmem:[%s2683 + $0x61] sm:$0xff]
        %v3063 = vld [vmem:[%s2683 + $0x69] sm:$0xff]
        %v3064 = vld [vmem:[%s2683 + $0x79] sm:$0xff]
        %v3065 = vld [vmem:[%s2683 + $0x81] sm:$0xff]
        %v3066 = vld [vmem:[%s2683 + $0x91] sm:$0xff]
        %v3067 = vld [vmem:[%s2683 + $0x99] sm:$0xff]
        %v3068 = vld [vmem:[%s2683 + $0xa9] sm:$0xff]
        %v3069 = vld [vmem:[%s2683 + $0xb1] sm:$0xff]
        %v3070 = vld [vmem:[%s2683 + $0xc1] sm:$0xff]
        %v3071 = vld [vmem:[%s2683 + $0xc9] sm:$0xff]
        %v3072 = vld [vmem:[%s2683 + $0xd9] sm:$0xff]
        %v3073 = vld [vmem:[%s2683 + $0xe1] sm:$0xff]
        %v3074 = vld [vmem:[%s2683 + $0xf1] sm:$0xff]
        %v3075 = vld [vmem:[%s2683 + $0xf9] sm:$0xff]
        %v3076 = vld [vmem:[%s2683 + $0x109] sm:$0xff]
        %v3077 = vld [vmem:[%s2683 + $0x111] sm:$0xff]
        %v3078 = vld [vmem:[%s2683 + $0x121] sm:$0xff]
        %v3079 = vld [vmem:[%s2683 + $0x129] sm:$0xff]
        %v3080 = vld [vmem:[%s2683 + $0x139] sm:$0xff]
        %v3081 = vld [vmem:[%s2683 + $0x141] sm:$0xff]
        %v3082 = vld [vmem:[%s2683 + $0x151] sm:$0xff]
        %v3083 = vld [vmem:[%s2683 + $0x159] sm:$0xff]
        %v3084 = vld [vmem:[%s2683 + $0x169] sm:$0xff]
        %v3085 = vld [vmem:[%s2683 + $0x171] sm:$0xff]
        %s3086 = scalar_lea.vmem [#allocation5], 896
        %v3087 = vld [vmem:[%s3086] sm:$0xff]
        %v3088 = vld [vmem:[%s3086 + $0x8] sm:$0xff]
        %v3089 = vld [vmem:[%s3086 + $0x10] sm:$0xff]
        %v3090 = vld [vmem:[%s3086 + $0x18] sm:$0xff]
        %v3091 = vld [vmem:[%s3086 + $0x20] sm:$0xff]
        %v3092 = vld [vmem:[%s3086 + $0x28] sm:$0xff]
        %v3093 = vld [vmem:[%s3086 + $0x30] sm:$0xff]
        %v3094 = vld [vmem:[%s3086 + $0x38] sm:$0xff]
        %v3095 = vld [vmem:[%s3086 + $0x40] sm:$0xff]
        %v3096 = vld [vmem:[%s3086 + $0x48] sm:$0xff]
        %v3097 = vld [vmem:[%s3086 + $0x50] sm:$0xff]
        %v3098 = vld [vmem:[%s3086 + $0x58] sm:$0xff]
        %v3099 = vld [vmem:[%s3086 + $0x60] sm:$0xff]
        %v3100 = vld [vmem:[%s3086 + $0x68] sm:$0xff]
        %v3101 = vld [vmem:[%s3086 + $0x70] sm:$0xff]
        %v3102 = vld [vmem:[%s3086 + $0x78] sm:$0xff]
        %3103 = vmatprep.subr.mxu0 0.0
        %3104 = vmatpush1.msra.mxu0 %v3087
        %3105 = vmatprep.subr.mxu0 0.0
        %3106 = vmatpush1.msra.mxu0 %v3088
        %3107 = vmatprep.subr.mxu0 0.0
        %3108 = vmatpush1.msra.mxu0 %v3089
        %3109 = vmatprep.subr.mxu0 0.0
        %3110 = vmatpush1.msra.mxu0 %v3090
        %3111 = vmatprep.subr.mxu0 0.0
        %3112 = vmatpush1.msra.mxu0 %v3091
        %3113 = vmatprep.subr.mxu0 0.0
        %3114 = vmatpush1.msra.mxu0 %v3092
        %3115 = vmatprep.subr.mxu0 0.0
        %3116 = vmatpush1.msra.mxu0 %v3093
        %3117 = vmatprep.subr.mxu0 0.0
        %3118 = vmatpush1.msra.mxu0 %v3094
        %3119 = vmatprep.subr.mxu0 0.0
        %3120 = vmatpush1.msra.mxu0 %v3095
        %3121 = vmatprep.subr.mxu0 0.0
        %3122 = vmatpush1.msra.mxu0 %v3096
        %3123 = vmatprep.subr.mxu0 0.0
        %3124 = vmatpush1.msra.mxu0 %v3097
        %3125 = vmatprep.subr.mxu0 0.0
        %3126 = vmatpush1.msra.mxu0 %v3098
        %3127 = vmatprep.subr.mxu0 0.0
        %3128 = vmatpush1.msra.mxu0 %v3099
        %3129 = vmatprep.subr.mxu0 0.0
        %3130 = vmatpush1.msra.mxu0 %v3100
        %3131 = vmatprep.subr.mxu0 0.0
        %3132 = vmatpush1.msra.mxu0 %v3101
        %3133 = vmatprep.subr.mxu0 0.0
        %3134 = vmatpush1.msra.mxu0 %v3102
        %3135 = vmatprep.subr.mxu0 0.0
        %3136 = vmatpush1.msra.mxu0 0.0
        %3137 = vmatprep.subr.mxu0 0.0
        %3138 = vmatpush1.msra.mxu0 0.0
        %3139 = vmatprep.subr.mxu0 0.0
        %3140 = vmatpush1.msra.mxu0 0.0
        %3141 = vmatprep.subr.mxu0 0.0
        %3142 = vmatpush1.msra.mxu0 0.0
        %3143 = vmatprep.subr.mxu0 0.0
        %3144 = vmatpush1.msra.mxu0 0.0
        %3145 = vmatprep.subr.mxu0 0.0
        %3146 = vmatpush1.msra.mxu0 0.0
        %3147 = vmatprep.subr.mxu0 0.0
        %3148 = vmatpush1.msra.mxu0 0.0
        %3149 = vmatprep.subr.mxu0 0.0
        %3150 = vmatpush1.msra.mxu0 0.0
        %3151 = vmatprep.subr.mxu0 0.0
        %3152 = vmatpush1.msra.mxu0 0.0
        %3153 = vmatprep.subr.mxu0 0.0
        %3154 = vmatpush1.msra.mxu0 0.0
        %3155 = vmatprep.subr.mxu0 0.0
        %3156 = vmatpush1.msra.mxu0 0.0
        %3157 = vmatprep.subr.mxu0 0.0
        %3158 = vmatpush1.msra.mxu0 0.0
        %3159 = vmatprep.subr.mxu0 0.0
        %3160 = vmatpush1.msra.mxu0 0.0
        %3161 = vmatprep.subr.mxu0 0.0
        %3162 = vmatpush1.msra.mxu0 0.0
        %3163 = vmatprep.subr.mxu0 0.0
        %3164 = vmatpush1.msra.mxu0 0.0
        %3165 = vmatprep.subr.mxu0 0.0
        %3166 = vmatpush1.msra.mxu0 0.0
        %3167 = vmatprep.mubr.f32.mxu0 0.0
        %3168 = vmatmul.mubr.f32.gmra.mrb[0].mxu0 %v3054
        %v3169 = vpop.f32.mrb[0].mxu0
        %v3170 = vadd.f32 0.0, %v3169
        %v3171 = vpop.f32.mrb[0].mxu0
        %3172 = vmatprep.mubr.f32.mxu0 0.0
        %3173 = vmatmul.mubr.f32.gmra.mrb[0].mxu0 %v3055
        %v3174 = vpop.f32.mrb[0].mxu0
        %v3175 = vadd.f32 0.0, %v3174
        %v3176 = vpop.f32.mrb[0].mxu0
        %3177 = vmatprep.mubr.f32.mxu0 0.0
        %3178 = vmatmul.mubr.f32.gmra.mrb[0].mxu0 %v3056
        %v3179 = vpop.f32.mrb[0].mxu0
        %v3180 = vadd.f32 0.0, %v3179
        %v3181 = vpop.f32.mrb[0].mxu0
        %3182 = vmatprep.mubr.f32.mxu0 0.0
        %3183 = vmatmul.mubr.f32.gmra.mrb[0].mxu0 %v3057
        %v3184 = vpop.f32.mrb[0].mxu0
        %v3185 = vadd.f32 0.0, %v3184
        %v3186 = vpop.f32.mrb[0].mxu0
        %3187 = vmatprep.mubr.f32.mxu0 0.0
        %3188 = vmatmul.mubr.f32.gmra.mrb[0].mxu0 %v3058
        %v3189 = vpop.f32.mrb[0].mxu0
        %v3190 = vadd.f32 0.0, %v3189
        %v3191 = vpop.f32.mrb[0].mxu0
        %3192 = vmatprep.mubr.f32.mxu0 0.0
        %3193 = vmatmul.mubr.f32.gmra.mrb[0].mxu0 %v3059
        %v3194 = vpop.f32.mrb[0].mxu0
        %v3195 = vadd.f32 0.0, %v3194
        %v3196 = vpop.f32.mrb[0].mxu0
        %3197 = vmatprep.mubr.f32.mxu0 0.0
        %3198 = vmatmul.mubr.f32.gmra.mrb[0].mxu0 %v3060
        %v3199 = vpop.f32.mrb[0].mxu0
        %v3200 = vadd.f32 0.0, %v3199
        %v3201 = vpop.f32.mrb[0].mxu0
        %3202 = vmatprep.mubr.f32.mxu0 0.0
        %3203 = vmatmul.mubr.f32.gmra.mrb[0].mxu0 %v3061
        %v3204 = vpop.f32.mrb[0].mxu0
        %v3205 = vadd.f32 0.0, %v3204
        %v3206 = vpop.f32.mrb[0].mxu0
        %3207 = vmatprep.mubr.f32.mxu0 0.0
        %3208 = vmatmul.mubr.f32.gmra.mrb[0].mxu0 %v3062
        %v3209 = vpop.f32.mrb[0].mxu0
        %v3210 = vadd.f32 0.0, %v3209
        %v3211 = vpop.f32.mrb[0].mxu0
        %3212 = vmatprep.mubr.f32.mxu0 0.0
        %3213 = vmatmul.mubr.f32.gmra.mrb[0].mxu0 %v3063
        %v3214 = vpop.f32.mrb[0].mxu0
        %v3215 = vadd.f32 0.0, %v3214
        %v3216 = vpop.f32.mrb[0].mxu0
        %3217 = vmatprep.mubr.f32.mxu0 0.0
        %3218 = vmatmul.mubr.f32.gmra.mrb[0].mxu0 %v3064
        %v3219 = vpop.f32.mrb[0].mxu0
        %v3220 = vadd.f32 0.0, %v3219
        %v3221 = vpop.f32.mrb[0].mxu0
        %3222 = vmatprep.mubr.f32.mxu0 0.0
        %3223 = vmatmul.mubr.f32.gmra.mrb[0].mxu0 %v3065
        %v3224 = vpop.f32.mrb[0].mxu0
        %v3225 = vadd.f32 0.0, %v3224
        %v3226 = vpop.f32.mrb[0].mxu0
        %3227 = vmatprep.mubr.f32.mxu0 0.0
        %3228 = vmatmul.mubr.f32.gmra.mrb[0].mxu0 %v3066
        %v3229 = vpop.f32.mrb[0].mxu0
        %v3230 = vadd.f32 0.0, %v3229
        %v3231 = vpop.f32.mrb[0].mxu0
        %3232 = vmatprep.mubr.f32.mxu0 0.0
        %3233 = vmatmul.mubr.f32.gmra.mrb[0].mxu0 %v3067
        %v3234 = vpop.f32.mrb[0].mxu0
        %v3235 = vadd.f32 0.0, %v3234
        %v3236 = vpop.f32.mrb[0].mxu0
        %3237 = vmatprep.mubr.f32.mxu0 0.0
        %3238 = vmatmul.mubr.f32.gmra.mrb[0].mxu0 %v3068
        %v3239 = vpop.f32.mrb[0].mxu0
        %v3240 = vadd.f32 0.0, %v3239
        %v3241 = vpop.f32.mrb[0].mxu0
        %3242 = vmatprep.mubr.f32.mxu0 0.0
        %3243 = vmatmul.mubr.f32.gmra.mrb[0].mxu0 %v3069
        %v3244 = vpop.f32.mrb[0].mxu0
        %v3245 = vadd.f32 0.0, %v3244
        %v3246 = vpop.f32.mrb[0].mxu0
        %3247 = vmatprep.mubr.f32.mxu0 0.0
        %3248 = vmatmul.mubr.f32.gmra.mrb[0].mxu0 %v3070
        %v3249 = vpop.f32.mrb[0].mxu0
        %v3250 = vadd.f32 0.0, %v3249
        %v3251 = vpop.f32.mrb[0].mxu0
        %3252 = vmatprep.mubr.f32.mxu0 0.0
        %3253 = vmatmul.mubr.f32.gmra.mrb[0].mxu0 %v3071
        %v3254 = vpop.f32.mrb[0].mxu0
        %v3255 = vadd.f32 0.0, %v3254
        %v3256 = vpop.f32.mrb[0].mxu0
        %3257 = vmatprep.mubr.f32.mxu0 0.0
        %3258 = vmatmul.mubr.f32.gmra.mrb[0].mxu0 %v3072
        %v3259 = vpop.f32.mrb[0].mxu0
        %v3260 = vadd.f32 0.0, %v3259
        %v3261 = vpop.f32.mrb[0].mxu0
        %3262 = vmatprep.mubr.f32.mxu0 0.0
        %3263 = vmatmul.mubr.f32.gmra.mrb[0].mxu0 %v3073
        %v3264 = vpop.f32.mrb[0].mxu0
        %v3265 = vadd.f32 0.0, %v3264
        %v3266 = vpop.f32.mrb[0].mxu0
        %3267 = vmatprep.mubr.f32.mxu0 0.0
        %3268 = vmatmul.mubr.f32.gmra.mrb[0].mxu0 %v3074
        %v3269 = vpop.f32.mrb[0].mxu0
        %v3270 = vadd.f32 0.0, %v3269
        %v3271 = vpop.f32.mrb[0].mxu0
        %3272 = vmatprep.mubr.f32.mxu0 0.0
        %3273 = vmatmul.mubr.f32.gmra.mrb[0].mxu0 %v3075
        %v3274 = vpop.f32.mrb[0].mxu0
        %v3275 = vadd.f32 0.0, %v3274
        %v3276 = vpop.f32.mrb[0].mxu0
        %3277 = vmatprep.mubr.f32.mxu0 0.0
        %3278 = vmatmul.mubr.f32.gmra.mrb[0].mxu0 %v3076
        %v3279 = vpop.f32.mrb[0].mxu0
        %v3280 = vadd.f32 0.0, %v3279
        %v3281 = vpop.f32.mrb[0].mxu0
        %3282 = vmatprep.mubr.f32.mxu0 0.0
        %3283 = vmatmul.mubr.f32.gmra.mrb[0].mxu0 %v3077
        %v3284 = vpop.f32.mrb[0].mxu0
        %v3285 = vadd.f32 0.0, %v3284
        %v3286 = vpop.f32.mrb[0].mxu0
        %3287 = vmatprep.mubr.f32.mxu0 0.0
        %3288 = vmatmul.mubr.f32.gmra.mrb[0].mxu0 %v3078
        %v3289 = vpop.f32.mrb[0].mxu0
        %v3290 = vadd.f32 0.0, %v3289
        %v3291 = vpop.f32.mrb[0].mxu0
        %3292 = vmatprep.mubr.f32.mxu0 0.0
        %3293 = vmatmul.mubr.f32.gmra.mrb[0].mxu0 %v3079
        %v3294 = vpop.f32.mrb[0].mxu0
        %v3295 = vadd.f32 0.0, %v3294
        %v3296 = vpop.f32.mrb[0].mxu0
        %3297 = vmatprep.mubr.f32.mxu0 0.0
        %3298 = vmatmul.mubr.f32.gmra.mrb[0].mxu0 %v3080
        %v3299 = vpop.f32.mrb[0].mxu0
        %v3300 = vadd.f32 0.0, %v3299
        %v3301 = vpop.f32.mrb[0].mxu0
        %3302 = vmatprep.mubr.f32.mxu0 0.0
        %3303 = vmatmul.mubr.f32.gmra.mrb[0].mxu0 %v3081
        %v3304 = vpop.f32.mrb[0].mxu0
        %v3305 = vadd.f32 0.0, %v3304
        %v3306 = vpop.f32.mrb[0].mxu0
        %3307 = vmatprep.mubr.f32.mxu0 0.0
        %3308 = vmatmul.mubr.f32.gmra.mrb[0].mxu0 %v3082
        %v3309 = vpop.f32.mrb[0].mxu0
        %v3310 = vadd.f32 0.0, %v3309
        %v3311 = vpop.f32.mrb[0].mxu0
        %3312 = vmatprep.mubr.f32.mxu0 0.0
        %3313 = vmatmul.mubr.f32.gmra.mrb[0].mxu0 %v3083
        %v3314 = vpop.f32.mrb[0].mxu0
        %v3315 = vadd.f32 0.0, %v3314
        %v3316 = vpop.f32.mrb[0].mxu0
        %3317 = vmatprep.mubr.f32.mxu0 0.0
        %3318 = vmatmul.mubr.f32.gmra.mrb[0].mxu0 %v3084
        %v3319 = vpop.f32.mrb[0].mxu0
        %v3320 = vadd.f32 0.0, %v3319
        %v3321 = vpop.f32.mrb[0].mxu0
        %3322 = vmatprep.mubr.f32.mxu0 0.0
        %3323 = vmatmul.mubr.f32.gmra.mrb[0].mxu0 %v3085
        %v3324 = vpop.f32.mrb[0].mxu0
        %v3325 = vadd.f32 0.0, %v3324
        %v3326 = vpop.f32.mrb[0].mxu0
        %3327 = vdwg.mxu0
        %v3328 = vld [vmem:[#allocation4] sm:$0xff]
        %v3329 = vld [vmem:[#allocation4 + $0x8] sm:$0xff]
        %v3330 = vld [vmem:[#allocation4 + $0x10] sm:$0xff]
        %v3331 = vld [vmem:[#allocation4 + $0x18] sm:$0xff]
        %v3332 = vld [vmem:[#allocation4 + $0x20] sm:$0xff]
        %v3333 = vld [vmem:[#allocation4 + $0x28] sm:$0xff]
        %v3334 = vld [vmem:[#allocation4 + $0x30] sm:$0xff]
        %v3335 = vld [vmem:[#allocation4 + $0x38] sm:$0xff]
        %v3336 = vld [vmem:[#allocation4 + $0x40] sm:$0xff]
        %v3337 = vld [vmem:[#allocation4 + $0x48] sm:$0xff]
        %v3338 = vld [vmem:[#allocation4 + $0x50] sm:$0xff]
        %v3339 = vld [vmem:[#allocation4 + $0x58] sm:$0xff]
        %v3340 = vld [vmem:[#allocation4 + $0x60] sm:$0xff]
        %v3341 = vld [vmem:[#allocation4 + $0x68] sm:$0xff]
        %v3342 = vld [vmem:[#allocation4 + $0x70] sm:$0xff]
        %v3343 = vld [vmem:[#allocation4 + $0x78] sm:$0xff]
        %v3344 = vld [vmem:[#allocation4 + $0x80] sm:$0xff]
        %v3345 = vld [vmem:[#allocation4 + $0x88] sm:$0xff]
        %v3346 = vld [vmem:[#allocation4 + $0x90] sm:$0xff]
        %v3347 = vld [vmem:[#allocation4 + $0x98] sm:$0xff]
        %v3348 = vld [vmem:[#allocation4 + $0xa0] sm:$0xff]
        %v3349 = vld [vmem:[#allocation4 + $0xa8] sm:$0xff]
        %v3350 = vld [vmem:[#allocation4 + $0xb0] sm:$0xff]
        %v3351 = vld [vmem:[#allocation4 + $0xb8] sm:$0xff]
        %v3352 = vld [vmem:[#allocation4 + $0xc0] sm:$0xff]
        %v3353 = vld [vmem:[#allocation4 + $0xc8] sm:$0xff]
        %v3354 = vld [vmem:[#allocation4 + $0xd0] sm:$0xff]
        %v3355 = vld [vmem:[#allocation4 + $0xd8] sm:$0xff]
        %v3356 = vld [vmem:[#allocation4 + $0xe0] sm:$0xff]
        %v3357 = vld [vmem:[#allocation4 + $0xe8] sm:$0xff]
        %v3358 = vld [vmem:[#allocation4 + $0xf0] sm:$0xff]
        %v3359 = vld [vmem:[#allocation4 + $0xf8] sm:$0xff]
        %v3360 = vadd.f32 %v3328, %v3170
        %v3361 = vadd.f32 %v3329, %v3175
        %v3362 = vadd.f32 %v3330, %v3180
        %v3363 = vadd.f32 %v3331, %v3185
        %v3364 = vadd.f32 %v3332, %v3190
        %v3365 = vadd.f32 %v3333, %v3195
        %v3366 = vadd.f32 %v3334, %v3200
        %v3367 = vadd.f32 %v3335, %v3205
        %v3368 = vadd.f32 %v3336, %v3210
        %v3369 = vadd.f32 %v3337, %v3215
        %v3370 = vadd.f32 %v3338, %v3220
        %v3371 = vadd.f32 %v3339, %v3225
        %v3372 = vadd.f32 %v3340, %v3230
        %v3373 = vadd.f32 %v3341, %v3235
        %v3374 = vadd.f32 %v3342, %v3240
        %v3375 = vadd.f32 %v3343, %v3245
        %v3376 = vadd.f32 %v3344, %v3250
        %v3377 = vadd.f32 %v3345, %v3255
        %v3378 = vadd.f32 %v3346, %v3260
        %v3379 = vadd.f32 %v3347, %v3265
        %v3380 = vadd.f32 %v3348, %v3270
        %v3381 = vadd.f32 %v3349, %v3275
        %v3382 = vadd.f32 %v3350, %v3280
        %v3383 = vadd.f32 %v3351, %v3285
        %v3384 = vadd.f32 %v3352, %v3290
        %v3385 = vadd.f32 %v3353, %v3295
        %v3386 = vadd.f32 %v3354, %v3300
        %v3387 = vadd.f32 %v3355, %v3305
        %v3388 = vadd.f32 %v3356, %v3310
        %v3389 = vadd.f32 %v3357, %v3315
        %v3390 = vadd.f32 %v3358, %v3320
        %v3391 = vadd.f32 %v3359, %v3325
        %3392 = vst [vmem:[#allocation4] sm:$0xff] %v3360
        %3393 = vst [vmem:[#allocation4 + $0x8] sm:$0xff] %v3361
        %3394 = vst [vmem:[#allocation4 + $0x10] sm:$0xff] %v3362
        %3395 = vst [vmem:[#allocation4 + $0x18] sm:$0xff] %v3363
        %3396 = vst [vmem:[#allocation4 + $0x20] sm:$0xff] %v3364
        %3397 = vst [vmem:[#allocation4 + $0x28] sm:$0xff] %v3365
        %3398 = vst [vmem:[#allocation4 + $0x30] sm:$0xff] %v3366
        %3399 = vst [vmem:[#allocation4 + $0x38] sm:$0xff] %v3367
        %3400 = vst [vmem:[#allocation4 + $0x40] sm:$0xff] %v3368
        %3401 = vst [vmem:[#allocation4 + $0x48] sm:$0xff] %v3369
        %3402 = vst [vmem:[#allocation4 + $0x50] sm:$0xff] %v3370
        %3403 = vst [vmem:[#allocation4 + $0x58] sm:$0xff] %v3371
        %3404 = vst [vmem:[#allocation4 + $0x60] sm:$0xff] %v3372
        %3405 = vst [vmem:[#allocation4 + $0x68] sm:$0xff] %v3373
        %3406 = vst [vmem:[#allocation4 + $0x70] sm:$0xff] %v3374
        %3407 = vst [vmem:[#allocation4 + $0x78] sm:$0xff] %v3375
        %3408 = vst [vmem:[#allocation4 + $0x80] sm:$0xff] %v3376
        %3409 = vst [vmem:[#allocation4 + $0x88] sm:$0xff] %v3377
        %3410 = vst [vmem:[#allocation4 + $0x90] sm:$0xff] %v3378
        %3411 = vst [vmem:[#allocation4 + $0x98] sm:$0xff] %v3379
        %3412 = vst [vmem:[#allocation4 + $0xa0] sm:$0xff] %v3380
        %3413 = vst [vmem:[#allocation4 + $0xa8] sm:$0xff] %v3381
        %3414 = vst [vmem:[#allocation4 + $0xb0] sm:$0xff] %v3382
        %3415 = vst [vmem:[#allocation4 + $0xb8] sm:$0xff] %v3383
        %3416 = vst [vmem:[#allocation4 + $0xc0] sm:$0xff] %v3384
        %3417 = vst [vmem:[#allocation4 + $0xc8] sm:$0xff] %v3385
        %3418 = vst [vmem:[#allocation4 + $0xd0] sm:$0xff] %v3386
        %3419 = vst [vmem:[#allocation4 + $0xd8] sm:$0xff] %v3387
        %3420 = vst [vmem:[#allocation4 + $0xe0] sm:$0xff] %v3388
        %3421 = vst [vmem:[#allocation4 + $0xe8] sm:$0xff] %v3389
        %3422 = vst [vmem:[#allocation4 + $0xf0] sm:$0xff] %v3390
        %3423 = vst [vmem:[#allocation4 + $0xf8] sm:$0xff] %v3391
        %v3424 = vld [vmem:[%s2683 + $0x2] sm:$0xff]
        %v3425 = vld [vmem:[%s2683 + $0xa] sm:$0xff]
        %v3426 = vld [vmem:[%s2683 + $0x1a] sm:$0xff]
        %v3427 = vld [vmem:[%s2683 + $0x22] sm:$0xff]
        %v3428 = vld [vmem:[%s2683 + $0x32] sm:$0xff]
        %v3429 = vld [vmem:[%s2683 + $0x3a] sm:$0xff]
        %v3430 = vld [vmem:[%s2683 + $0x4a] sm:$0xff]
        %v3431 = vld [vmem:[%s2683 + $0x52] sm:$0xff]
        %v3432 = vld [vmem:[%s2683 + $0x62] sm:$0xff]
        %v3433 = vld [vmem:[%s2683 + $0x6a] sm:$0xff]
        %v3434 = vld [vmem:[%s2683 + $0x7a] sm:$0xff]
        %v3435 = vld [vmem:[%s2683 + $0x82] sm:$0xff]
        %v3436 = vld [vmem:[%s2683 + $0x92] sm:$0xff]
        %v3437 = vld [vmem:[%s2683 + $0x9a] sm:$0xff]
        %v3438 = vld [vmem:[%s2683 + $0xaa] sm:$0xff]
        %v3439 = vld [vmem:[%s2683 + $0xb2] sm:$0xff]
        %v3440 = vld [vmem:[%s2683 + $0xc2] sm:$0xff]
        %v3441 = vld [vmem:[%s2683 + $0xca] sm:$0xff]
        %v3442 = vld [vmem:[%s2683 + $0xda] sm:$0xff]
        %v3443 = vld [vmem:[%s2683 + $0xe2] sm:$0xff]
        %v3444 = vld [vmem:[%s2683 + $0xf2] sm:$0xff]
        %v3445 = vld [vmem:[%s2683 + $0xfa] sm:$0xff]
        %v3446 = vld [vmem:[%s2683 + $0x10a] sm:$0xff]
        %v3447 = vld [vmem:[%s2683 + $0x112] sm:$0xff]
        %v3448 = vld [vmem:[%s2683 + $0x122] sm:$0xff]
        %v3449 = vld [vmem:[%s2683 + $0x12a] sm:$0xff]
        %v3450 = vld [vmem:[%s2683 + $0x13a] sm:$0xff]
        %v3451 = vld [vmem:[%s2683 + $0x142] sm:$0xff]
        %v3452 = vld [vmem:[%s2683 + $0x152] sm:$0xff]
        %v3453 = vld [vmem:[%s2683 + $0x15a] sm:$0xff]
        %v3454 = vld [vmem:[%s2683 + $0x16a] sm:$0xff]
        %v3455 = vld [vmem:[%s2683 + $0x172] sm:$0xff]
        %s3456 = scalar_lea.vmem [#allocation5], 1024
        %v3457 = vld [vmem:[%s3456] sm:$0xff]
        %v3458 = vld [vmem:[%s3456 + $0x8] sm:$0xff]
        %v3459 = vld [vmem:[%s3456 + $0x10] sm:$0xff]
        %v3460 = vld [vmem:[%s3456 + $0x18] sm:$0xff]
        %v3461 = vld [vmem:[%s3456 + $0x20] sm:$0xff]
        %v3462 = vld [vmem:[%s3456 + $0x28] sm:$0xff]
        %v3463 = vld [vmem:[%s3456 + $0x30] sm:$0xff]
        %v3464 = vld [vmem:[%s3456 + $0x38] sm:$0xff]
        %v3465 = vld [vmem:[%s3456 + $0x40] sm:$0xff]
        %v3466 = vld [vmem:[%s3456 + $0x48] sm:$0xff]
        %v3467 = vld [vmem:[%s3456 + $0x50] sm:$0xff]
        %v3468 = vld [vmem:[%s3456 + $0x58] sm:$0xff]
        %v3469 = vld [vmem:[%s3456 + $0x60] sm:$0xff]
        %v3470 = vld [vmem:[%s3456 + $0x68] sm:$0xff]
        %v3471 = vld [vmem:[%s3456 + $0x70] sm:$0xff]
        %v3472 = vld [vmem:[%s3456 + $0x78] sm:$0xff]
        %3473 = vmatprep.subr.mxu0 0.0
        %3474 = vmatpush1.msra.mxu0 %v3457
        %3475 = vmatprep.subr.mxu0 0.0
        %3476 = vmatpush1.msra.mxu0 %v3458
        %3477 = vmatprep.subr.mxu0 0.0
        %3478 = vmatpush1.msra.mxu0 %v3459
        %3479 = vmatprep.subr.mxu0 0.0
        %3480 = vmatpush1.msra.mxu0 %v3460
        %3481 = vmatprep.subr.mxu0 0.0
        %3482 = vmatpush1.msra.mxu0 %v3461
        %3483 = vmatprep.subr.mxu0 0.0
        %3484 = vmatpush1.msra.mxu0 %v3462
        %3485 = vmatprep.subr.mxu0 0.0
        %3486 = vmatpush1.msra.mxu0 %v3463
        %3487 = vmatprep.subr.mxu0 0.0
        %3488 = vmatpush1.msra.mxu0 %v3464
        %3489 = vmatprep.subr.mxu0 0.0
        %3490 = vmatpush1.msra.mxu0 %v3465
        %3491 = vmatprep.subr.mxu0 0.0
        %3492 = vmatpush1.msra.mxu0 %v3466
        %3493 = vmatprep.subr.mxu0 0.0
        %3494 = vmatpush1.msra.mxu0 %v3467
        %3495 = vmatprep.subr.mxu0 0.0
        %3496 = vmatpush1.msra.mxu0 %v3468
        %3497 = vmatprep.subr.mxu0 0.0
        %3498 = vmatpush1.msra.mxu0 %v3469
        %3499 = vmatprep.subr.mxu0 0.0
        %3500 = vmatpush1.msra.mxu0 %v3470
        %3501 = vmatprep.subr.mxu0 0.0
        %3502 = vmatpush1.msra.mxu0 %v3471
        %3503 = vmatprep.subr.mxu0 0.0
        %3504 = vmatpush1.msra.mxu0 %v3472
        %3505 = vmatprep.subr.mxu0 0.0
        %3506 = vmatpush1.msra.mxu0 0.0
        %3507 = vmatprep.subr.mxu0 0.0
        %3508 = vmatpush1.msra.mxu0 0.0
        %3509 = vmatprep.subr.mxu0 0.0
        %3510 = vmatpush1.msra.mxu0 0.0
        %3511 = vmatprep.subr.mxu0 0.0
        %3512 = vmatpush1.msra.mxu0 0.0
        %3513 = vmatprep.subr.mxu0 0.0
        %3514 = vmatpush1.msra.mxu0 0.0
        %3515 = vmatprep.subr.mxu0 0.0
        %3516 = vmatpush1.msra.mxu0 0.0
        %3517 = vmatprep.subr.mxu0 0.0
        %3518 = vmatpush1.msra.mxu0 0.0
        %3519 = vmatprep.subr.mxu0 0.0
        %3520 = vmatpush1.msra.mxu0 0.0
        %3521 = vmatprep.subr.mxu0 0.0
        %3522 = vmatpush1.msra.mxu0 0.0
        %3523 = vmatprep.subr.mxu0 0.0
        %3524 = vmatpush1.msra.mxu0 0.0
        %3525 = vmatprep.subr.mxu0 0.0
        %3526 = vmatpush1.msra.mxu0 0.0
        %3527 = vmatprep.subr.mxu0 0.0
        %3528 = vmatpush1.msra.mxu0 0.0
        %3529 = vmatprep.subr.mxu0 0.0
        %3530 = vmatpush1.msra.mxu0 0.0
        %3531 = vmatprep.subr.mxu0 0.0
        %3532 = vmatpush1.msra.mxu0 0.0
        %3533 = vmatprep.subr.mxu0 0.0
        %3534 = vmatpush1.msra.mxu0 0.0
        %3535 = vmatprep.subr.mxu0 0.0
        %3536 = vmatpush1.msra.mxu0 0.0
        %3537 = vmatprep.mubr.f32.mxu0 0.0
        %3538 = vmatmul.mubr.f32.gmra.mrb[0].mxu0 %v3424
        %v3539 = vpop.f32.mrb[0].mxu0
        %v3540 = vadd.f32 0.0, %v3539
        %v3541 = vpop.f32.mrb[0].mxu0
        %3542 = vmatprep.mubr.f32.mxu0 0.0
        %3543 = vmatmul.mubr.f32.gmra.mrb[0].mxu0 %v3425
        %v3544 = vpop.f32.mrb[0].mxu0
        %v3545 = vadd.f32 0.0, %v3544
        %v3546 = vpop.f32.mrb[0].mxu0
        %3547 = vmatprep.mubr.f32.mxu0 0.0
        %3548 = vmatmul.mubr.f32.gmra.mrb[0].mxu0 %v3426
        %v3549 = vpop.f32.mrb[0].mxu0
        %v3550 = vadd.f32 0.0, %v3549
        %v3551 = vpop.f32.mrb[0].mxu0
        %3552 = vmatprep.mubr.f32.mxu0 0.0
        %3553 = vmatmul.mubr.f32.gmra.mrb[0].mxu0 %v3427
        %v3554 = vpop.f32.mrb[0].mxu0
        %v3555 = vadd.f32 0.0, %v3554
        %v3556 = vpop.f32.mrb[0].mxu0
        %3557 = vmatprep.mubr.f32.mxu0 0.0
        %3558 = vmatmul.mubr.f32.gmra.mrb[0].mxu0 %v3428
        %v3559 = vpop.f32.mrb[0].mxu0
        %v3560 = vadd.f32 0.0, %v3559
        %v3561 = vpop.f32.mrb[0].mxu0
        %3562 = vmatprep.mubr.f32.mxu0 0.0
        %3563 = vmatmul.mubr.f32.gmra.mrb[0].mxu0 %v3429
        %v3564 = vpop.f32.mrb[0].mxu0
        %v3565 = vadd.f32 0.0, %v3564
        %v3566 = vpop.f32.mrb[0].mxu0
        %3567 = vmatprep.mubr.f32.mxu0 0.0
        %3568 = vmatmul.mubr.f32.gmra.mrb[0].mxu0 %v3430
        %v3569 = vpop.f32.mrb[0].mxu0
        %v3570 = vadd.f32 0.0, %v3569
        %v3571 = vpop.f32.mrb[0].mxu0
        %3572 = vmatprep.mubr.f32.mxu0 0.0
        %3573 = vmatmul.mubr.f32.gmra.mrb[0].mxu0 %v3431
        %v3574 = vpop.f32.mrb[0].mxu0
        %v3575 = vadd.f32 0.0, %v3574
        %v3576 = vpop.f32.mrb[0].mxu0
        %3577 = vmatprep.mubr.f32.mxu0 0.0
        %3578 = vmatmul.mubr.f32.gmra.mrb[0].mxu0 %v3432
        %v3579 = vpop.f32.mrb[0].mxu0
        %v3580 = vadd.f32 0.0, %v3579
        %v3581 = vpop.f32.mrb[0].mxu0
        %3582 = vmatprep.mubr.f32.mxu0 0.0
        %3583 = vmatmul.mubr.f32.gmra.mrb[0].mxu0 %v3433
        %v3584 = vpop.f32.mrb[0].mxu0
        %v3585 = vadd.f32 0.0, %v3584
        %v3586 = vpop.f32.mrb[0].mxu0
        %3587 = vmatprep.mubr.f32.mxu0 0.0
        %3588 = vmatmul.mubr.f32.gmra.mrb[0].mxu0 %v3434
        %v3589 = vpop.f32.mrb[0].mxu0
        %v3590 = vadd.f32 0.0, %v3589
        %v3591 = vpop.f32.mrb[0].mxu0
        %3592 = vmatprep.mubr.f32.mxu0 0.0
        %3593 = vmatmul.mubr.f32.gmra.mrb[0].mxu0 %v3435
        %v3594 = vpop.f32.mrb[0].mxu0
        %v3595 = vadd.f32 0.0, %v3594
        %v3596 = vpop.f32.mrb[0].mxu0
        %3597 = vmatprep.mubr.f32.mxu0 0.0
        %3598 = vmatmul.mubr.f32.gmra.mrb[0].mxu0 %v3436
        %v3599 = vpop.f32.mrb[0].mxu0
        %v3600 = vadd.f32 0.0, %v3599
        %v3601 = vpop.f32.mrb[0].mxu0
        %3602 = vmatprep.mubr.f32.mxu0 0.0
        %3603 = vmatmul.mubr.f32.gmra.mrb[0].mxu0 %v3437
        %v3604 = vpop.f32.mrb[0].mxu0
        %v3605 = vadd.f32 0.0, %v3604
        %v3606 = vpop.f32.mrb[0].mxu0
        %3607 = vmatprep.mubr.f32.mxu0 0.0
        %3608 = vmatmul.mubr.f32.gmra.mrb[0].mxu0 %v3438
        %v3609 = vpop.f32.mrb[0].mxu0
        %v3610 = vadd.f32 0.0, %v3609
        %v3611 = vpop.f32.mrb[0].mxu0
        %3612 = vmatprep.mubr.f32.mxu0 0.0
        %3613 = vmatmul.mubr.f32.gmra.mrb[0].mxu0 %v3439
        %v3614 = vpop.f32.mrb[0].mxu0
        %v3615 = vadd.f32 0.0, %v3614
        %v3616 = vpop.f32.mrb[0].mxu0
        %3617 = vmatprep.mubr.f32.mxu0 0.0
        %3618 = vmatmul.mubr.f32.gmra.mrb[0].mxu0 %v3440
        %v3619 = vpop.f32.mrb[0].mxu0
        %v3620 = vadd.f32 0.0, %v3619
        %v3621 = vpop.f32.mrb[0].mxu0
        %3622 = vmatprep.mubr.f32.mxu0 0.0
        %3623 = vmatmul.mubr.f32.gmra.mrb[0].mxu0 %v3441
        %v3624 = vpop.f32.mrb[0].mxu0
        %v3625 = vadd.f32 0.0, %v3624
        %v3626 = vpop.f32.mrb[0].mxu0
        %3627 = vmatprep.mubr.f32.mxu0 0.0
        %3628 = vmatmul.mubr.f32.gmra.mrb[0].mxu0 %v3442
        %v3629 = vpop.f32.mrb[0].mxu0
        %v3630 = vadd.f32 0.0, %v3629
        %v3631 = vpop.f32.mrb[0].mxu0
        %3632 = vmatprep.mubr.f32.mxu0 0.0
        %3633 = vmatmul.mubr.f32.gmra.mrb[0].mxu0 %v3443
        %v3634 = vpop.f32.mrb[0].mxu0
        %v3635 = vadd.f32 0.0, %v3634
        %v3636 = vpop.f32.mrb[0].mxu0
        %3637 = vmatprep.mubr.f32.mxu0 0.0
        %3638 = vmatmul.mubr.f32.gmra.mrb[0].mxu0 %v3444
        %v3639 = vpop.f32.mrb[0].mxu0
        %v3640 = vadd.f32 0.0, %v3639
        %v3641 = vpop.f32.mrb[0].mxu0
        %3642 = vmatprep.mubr.f32.mxu0 0.0
        %3643 = vmatmul.mubr.f32.gmra.mrb[0].mxu0 %v3445
        %v3644 = vpop.f32.mrb[0].mxu0
        %v3645 = vadd.f32 0.0, %v3644
        %v3646 = vpop.f32.mrb[0].mxu0
        %3647 = vmatprep.mubr.f32.mxu0 0.0
        %3648 = vmatmul.mubr.f32.gmra.mrb[0].mxu0 %v3446
        %v3649 = vpop.f32.mrb[0].mxu0
        %v3650 = vadd.f32 0.0, %v3649
        %v3651 = vpop.f32.mrb[0].mxu0
        %3652 = vmatprep.mubr.f32.mxu0 0.0
        %3653 = vmatmul.mubr.f32.gmra.mrb[0].mxu0 %v3447
        %v3654 = vpop.f32.mrb[0].mxu0
        %v3655 = vadd.f32 0.0, %v3654
        %v3656 = vpop.f32.mrb[0].mxu0
        %3657 = vmatprep.mubr.f32.mxu0 0.0
        %3658 = vmatmul.mubr.f32.gmra.mrb[0].mxu0 %v3448
        %v3659 = vpop.f32.mrb[0].mxu0
        %v3660 = vadd.f32 0.0, %v3659
        %v3661 = vpop.f32.mrb[0].mxu0
        %3662 = vmatprep.mubr.f32.mxu0 0.0
        %3663 = vmatmul.mubr.f32.gmra.mrb[0].mxu0 %v3449
        %v3664 = vpop.f32.mrb[0].mxu0
        %v3665 = vadd.f32 0.0, %v3664
        %v3666 = vpop.f32.mrb[0].mxu0
        %3667 = vmatprep.mubr.f32.mxu0 0.0
        %3668 = vmatmul.mubr.f32.gmra.mrb[0].mxu0 %v3450
        %v3669 = vpop.f32.mrb[0].mxu0
        %v3670 = vadd.f32 0.0, %v3669
        %v3671 = vpop.f32.mrb[0].mxu0
        %3672 = vmatprep.mubr.f32.mxu0 0.0
        %3673 = vmatmul.mubr.f32.gmra.mrb[0].mxu0 %v3451
        %v3674 = vpop.f32.mrb[0].mxu0
        %v3675 = vadd.f32 0.0, %v3674
        %v3676 = vpop.f32.mrb[0].mxu0
        %3677 = vmatprep.mubr.f32.mxu0 0.0
        %3678 = vmatmul.mubr.f32.gmra.mrb[0].mxu0 %v3452
        %v3679 = vpop.f32.mrb[0].mxu0
        %v3680 = vadd.f32 0.0, %v3679
        %v3681 = vpop.f32.mrb[0].mxu0
        %3682 = vmatprep.mubr.f32.mxu0 0.0
        %3683 = vmatmul.mubr.f32.gmra.mrb[0].mxu0 %v3453
        %v3684 = vpop.f32.mrb[0].mxu0
        %v3685 = vadd.f32 0.0, %v3684
        %v3686 = vpop.f32.mrb[0].mxu0
        %3687 = vmatprep.mubr.f32.mxu0 0.0
        %3688 = vmatmul.mubr.f32.gmra.mrb[0].mxu0 %v3454
        %v3689 = vpop.f32.mrb[0].mxu0
        %v3690 = vadd.f32 0.0, %v3689
        %v3691 = vpop.f32.mrb[0].mxu0
        %3692 = vmatprep.mubr.f32.mxu0 0.0
        %3693 = vmatmul.mubr.f32.gmra.mrb[0].mxu0 %v3455
        %v3694 = vpop.f32.mrb[0].mxu0
        %v3695 = vadd.f32 0.0, %v3694
        %v3696 = vpop.f32.mrb[0].mxu0
        %3697 = vdwg.mxu0
        %v3698 = vld [vmem:[#allocation4] sm:$0xff]
        %v3699 = vld [vmem:[#allocation4 + $0x8] sm:$0xff]
        %v3700 = vld [vmem:[#allocation4 + $0x10] sm:$0xff]
        %v3701 = vld [vmem:[#allocation4 + $0x18] sm:$0xff]
        %v3702 = vld [vmem:[#allocation4 + $0x20] sm:$0xff]
        %v3703 = vld [vmem:[#allocation4 + $0x28] sm:$0xff]
        %v3704 = vld [vmem:[#allocation4 + $0x30] sm:$0xff]
        %v3705 = vld [vmem:[#allocation4 + $0x38] sm:$0xff]
        %v3706 = vld [vmem:[#allocation4 + $0x40] sm:$0xff]
        %v3707 = vld [vmem:[#allocation4 + $0x48] sm:$0xff]
        %v3708 = vld [vmem:[#allocation4 + $0x50] sm:$0xff]
        %v3709 = vld [vmem:[#allocation4 + $0x58] sm:$0xff]
        %v3710 = vld [vmem:[#allocation4 + $0x60] sm:$0xff]
        %v3711 = vld [vmem:[#allocation4 + $0x68] sm:$0xff]
        %v3712 = vld [vmem:[#allocation4 + $0x70] sm:$0xff]
        %v3713 = vld [vmem:[#allocation4 + $0x78] sm:$0xff]
        %v3714 = vld [vmem:[#allocation4 + $0x80] sm:$0xff]
        %v3715 = vld [vmem:[#allocation4 + $0x88] sm:$0xff]
        %v3716 = vld [vmem:[#allocation4 + $0x90] sm:$0xff]
        %v3717 = vld [vmem:[#allocation4 + $0x98] sm:$0xff]
        %v3718 = vld [vmem:[#allocation4 + $0xa0] sm:$0xff]
        %v3719 = vld [vmem:[#allocation4 + $0xa8] sm:$0xff]
        %v3720 = vld [vmem:[#allocation4 + $0xb0] sm:$0xff]
        %v3721 = vld [vmem:[#allocation4 + $0xb8] sm:$0xff]
        %v3722 = vld [vmem:[#allocation4 + $0xc0] sm:$0xff]
        %v3723 = vld [vmem:[#allocation4 + $0xc8] sm:$0xff]
        %v3724 = vld [vmem:[#allocation4 + $0xd0] sm:$0xff]
        %v3725 = vld [vmem:[#allocation4 + $0xd8] sm:$0xff]
        %v3726 = vld [vmem:[#allocation4 + $0xe0] sm:$0xff]
        %v3727 = vld [vmem:[#allocation4 + $0xe8] sm:$0xff]
        %v3728 = vld [vmem:[#allocation4 + $0xf0] sm:$0xff]
        %v3729 = vld [vmem:[#allocation4 + $0xf8] sm:$0xff]
        %v3730 = vadd.f32 %v3698, %v3540
        %v3731 = vadd.f32 %v3699, %v3545
        %v3732 = vadd.f32 %v3700, %v3550
        %v3733 = vadd.f32 %v3701, %v3555
        %v3734 = vadd.f32 %v3702, %v3560
        %v3735 = vadd.f32 %v3703, %v3565
        %v3736 = vadd.f32 %v3704, %v3570
        %v3737 = vadd.f32 %v3705, %v3575
        %v3738 = vadd.f32 %v3706, %v3580
        %v3739 = vadd.f32 %v3707, %v3585
        %v3740 = vadd.f32 %v3708, %v3590
        %v3741 = vadd.f32 %v3709, %v3595
        %v3742 = vadd.f32 %v3710, %v3600
        %v3743 = vadd.f32 %v3711, %v3605
        %v3744 = vadd.f32 %v3712, %v3610
        %v3745 = vadd.f32 %v3713, %v3615
        %v3746 = vadd.f32 %v3714, %v3620
        %v3747 = vadd.f32 %v3715, %v3625
        %v3748 = vadd.f32 %v3716, %v3630
        %v3749 = vadd.f32 %v3717, %v3635
        %v3750 = vadd.f32 %v3718, %v3640
        %v3751 = vadd.f32 %v3719, %v3645
        %v3752 = vadd.f32 %v3720, %v3650
        %v3753 = vadd.f32 %v3721, %v3655
        %v3754 = vadd.f32 %v3722, %v3660
        %v3755 = vadd.f32 %v3723, %v3665
        %v3756 = vadd.f32 %v3724, %v3670
        %v3757 = vadd.f32 %v3725, %v3675
        %v3758 = vadd.f32 %v3726, %v3680
        %v3759 = vadd.f32 %v3727, %v3685
        %v3760 = vadd.f32 %v3728, %v3690
        %v3761 = vadd.f32 %v3729, %v3695
        %3762 = vst [vmem:[#allocation4] sm:$0xff] %v3730
        %3763 = vst [vmem:[#allocation4 + $0x8] sm:$0xff] %v3731
        %3764 = vst [vmem:[#allocation4 + $0x10] sm:$0xff] %v3732
        %3765 = vst [vmem:[#allocation4 + $0x18] sm:$0xff] %v3733
        %3766 = vst [vmem:[#allocation4 + $0x20] sm:$0xff] %v3734
        %3767 = vst [vmem:[#allocation4 + $0x28] sm:$0xff] %v3735
        %3768 = vst [vmem:[#allocation4 + $0x30] sm:$0xff] %v3736
        %3769 = vst [vmem:[#allocation4 + $0x38] sm:$0xff] %v3737
        %3770 = vst [vmem:[#allocation4 + $0x40] sm:$0xff] %v3738
        %3771 = vst [vmem:[#allocation4 + $0x48] sm:$0xff] %v3739
        %3772 = vst [vmem:[#allocation4 + $0x50] sm:$0xff] %v3740
        %3773 = vst [vmem:[#allocation4 + $0x58] sm:$0xff] %v3741
        %3774 = vst [vmem:[#allocation4 + $0x60] sm:$0xff] %v3742
        %3775 = vst [vmem:[#allocation4 + $0x68] sm:$0xff] %v3743
        %3776 = vst [vmem:[#allocation4 + $0x70] sm:$0xff] %v3744
        %3777 = vst [vmem:[#allocation4 + $0x78] sm:$0xff] %v3745
        %3778 = vst [vmem:[#allocation4 + $0x80] sm:$0xff] %v3746
        %3779 = vst [vmem:[#allocation4 + $0x88] sm:$0xff] %v3747
        %3780 = vst [vmem:[#allocation4 + $0x90] sm:$0xff] %v3748
        %3781 = vst [vmem:[#allocation4 + $0x98] sm:$0xff] %v3749
        %3782 = vst [vmem:[#allocation4 + $0xa0] sm:$0xff] %v3750
        %3783 = vst [vmem:[#allocation4 + $0xa8] sm:$0xff] %v3751
        %3784 = vst [vmem:[#allocation4 + $0xb0] sm:$0xff] %v3752
        %3785 = vst [vmem:[#allocation4 + $0xb8] sm:$0xff] %v3753
        %3786 = vst [vmem:[#allocation4 + $0xc0] sm:$0xff] %v3754
        %3787 = vst [vmem:[#allocation4 + $0xc8] sm:$0xff] %v3755
        %3788 = vst [vmem:[#allocation4 + $0xd0] sm:$0xff] %v3756
        %3789 = vst [vmem:[#allocation4 + $0xd8] sm:$0xff] %v3757
        %3790 = vst [vmem:[#allocation4 + $0xe0] sm:$0xff] %v3758
        %3791 = vst [vmem:[#allocation4 + $0xe8] sm:$0xff] %v3759
        %3792 = vst [vmem:[#allocation4 + $0xf0] sm:$0xff] %v3760
        %3793 = vst [vmem:[#allocation4 + $0xf8] sm:$0xff] %v3761
        %v3794 = vld [vmem:[#allocation4] sm:$0xff]
        %v3795 = vld [vmem:[#allocation4 + $0x8] sm:$0xff]
        %v3796 = vld [vmem:[#allocation4 + $0x10] sm:$0xff]
        %v3797 = vld [vmem:[#allocation4 + $0x18] sm:$0xff]
        %v3798 = vld [vmem:[#allocation4 + $0x20] sm:$0xff]
        %v3799 = vld [vmem:[#allocation4 + $0x28] sm:$0xff]
        %v3800 = vld [vmem:[#allocation4 + $0x30] sm:$0xff]
        %v3801 = vld [vmem:[#allocation4 + $0x38] sm:$0xff]
        %v3802 = vld [vmem:[#allocation4 + $0x40] sm:$0xff]
        %v3803 = vld [vmem:[#allocation4 + $0x48] sm:$0xff]
        %v3804 = vld [vmem:[#allocation4 + $0x50] sm:$0xff]
        %v3805 = vld [vmem:[#allocation4 + $0x58] sm:$0xff]
        %v3806 = vld [vmem:[#allocation4 + $0x60] sm:$0xff]
        %v3807 = vld [vmem:[#allocation4 + $0x68] sm:$0xff]
        %v3808 = vld [vmem:[#allocation4 + $0x70] sm:$0xff]
        %v3809 = vld [vmem:[#allocation4 + $0x78] sm:$0xff]
        %v3810 = vld [vmem:[#allocation4 + $0x80] sm:$0xff]
        %v3811 = vld [vmem:[#allocation4 + $0x88] sm:$0xff]
        %v3812 = vld [vmem:[#allocation4 + $0x90] sm:$0xff]
        %v3813 = vld [vmem:[#allocation4 + $0x98] sm:$0xff]
        %v3814 = vld [vmem:[#allocation4 + $0xa0] sm:$0xff]
        %v3815 = vld [vmem:[#allocation4 + $0xa8] sm:$0xff]
        %v3816 = vld [vmem:[#allocation4 + $0xb0] sm:$0xff]
        %v3817 = vld [vmem:[#allocation4 + $0xb8] sm:$0xff]
        %v3818 = vld [vmem:[#allocation4 + $0xc0] sm:$0xff]
        %v3819 = vld [vmem:[#allocation4 + $0xc8] sm:$0xff]
        %v3820 = vld [vmem:[#allocation4 + $0xd0] sm:$0xff]
        %v3821 = vld [vmem:[#allocation4 + $0xd8] sm:$0xff]
        %v3822 = vld [vmem:[#allocation4 + $0xe0] sm:$0xff]
        %v3823 = vld [vmem:[#allocation4 + $0xe8] sm:$0xff]
        %v3824 = vld [vmem:[#allocation4 + $0xf0] sm:$0xff]
        %v3825 = vld [vmem:[#allocation4 + $0xf8] sm:$0xff]
        %v3826 = vld [vmem:[%s2] sm:$0x1]
        %v3828 = vlaneseq
        %v3829 = vshrl.u32 %v3828, 7
        %v3830 = vsub.s32 0, %v3829
        %v3831 = vrot.slane %v3826, %v3830
        %v3833 = vmul.f32 %v3794, %v3831
        %v3834 = vmul.f32 %v3795, %v3831
        %v3835 = vmul.f32 %v3796, %v3831
        %v3836 = vmul.f32 %v3797, %v3831
        %v3837 = vmul.f32 %v3798, %v3831
        %v3838 = vmul.f32 %v3799, %v3831
        %v3839 = vmul.f32 %v3800, %v3831
        %v3840 = vmul.f32 %v3801, %v3831
        %v3841 = vmul.f32 %v3802, %v3831
        %v3842 = vmul.f32 %v3803, %v3831
        %v3843 = vmul.f32 %v3804, %v3831
        %v3844 = vmul.f32 %v3805, %v3831
        %v3845 = vmul.f32 %v3806, %v3831
        %v3846 = vmul.f32 %v3807, %v3831
        %v3847 = vmul.f32 %v3808, %v3831
        %v3848 = vmul.f32 %v3809, %v3831
        %v3849 = vmul.f32 %v3810, %v3831
        %v3850 = vmul.f32 %v3811, %v3831
        %v3851 = vmul.f32 %v3812, %v3831
        %v3852 = vmul.f32 %v3813, %v3831
        %v3853 = vmul.f32 %v3814, %v3831
        %v3854 = vmul.f32 %v3815, %v3831
        %v3855 = vmul.f32 %v3816, %v3831
        %v3856 = vmul.f32 %v3817, %v3831
        %v3857 = vmul.f32 %v3818, %v3831
        %v3858 = vmul.f32 %v3819, %v3831
        %v3859 = vmul.f32 %v3820, %v3831
        %v3860 = vmul.f32 %v3821, %v3831
        %v3861 = vmul.f32 %v3822, %v3831
        %v3862 = vmul.f32 %v3823, %v3831
        %v3863 = vmul.f32 %v3824, %v3831
        %v3864 = vmul.f32 %v3825, %v3831
        %v3865 = vld [vmem:[%s3] sm:$0x1]
        %v3867 = vlaneseq
        %v3868 = vshrl.u32 %v3867, 7
        %v3869 = vsub.s32 0, %v3868
        %v3870 = vrot.slane %v3865, %v3869
        %v3872 = vadd.f32 %v3833, %v3870
        %v3873 = vadd.f32 %v3834, %v3870
        %v3874 = vadd.f32 %v3835, %v3870
        %v3875 = vadd.f32 %v3836, %v3870
        %v3876 = vadd.f32 %v3837, %v3870
        %v3877 = vadd.f32 %v3838, %v3870
        %v3878 = vadd.f32 %v3839, %v3870
        %v3879 = vadd.f32 %v3840, %v3870
        %v3880 = vadd.f32 %v3841, %v3870
        %v3881 = vadd.f32 %v3842, %v3870
        %v3882 = vadd.f32 %v3843, %v3870
        %v3883 = vadd.f32 %v3844, %v3870
        %v3884 = vadd.f32 %v3845, %v3870
        %v3885 = vadd.f32 %v3846, %v3870
        %v3886 = vadd.f32 %v3847, %v3870
        %v3887 = vadd.f32 %v3848, %v3870
        %v3888 = vadd.f32 %v3849, %v3870
        %v3889 = vadd.f32 %v3850, %v3870
        %v3890 = vadd.f32 %v3851, %v3870
        %v3891 = vadd.f32 %v3852, %v3870
        %v3892 = vadd.f32 %v3853, %v3870
        %v3893 = vadd.f32 %v3854, %v3870
        %v3894 = vadd.f32 %v3855, %v3870
        %v3895 = vadd.f32 %v3856, %v3870
        %v3896 = vadd.f32 %v3857, %v3870
        %v3897 = vadd.f32 %v3858, %v3870
        %v3898 = vadd.f32 %v3859, %v3870
        %v3899 = vadd.f32 %v3860, %v3870
        %v3900 = vadd.f32 %v3861, %v3870
        %v3901 = vadd.f32 %v3862, %v3870
        %v3902 = vadd.f32 %v3863, %v3870
        %v3903 = vadd.f32 %v3864, %v3870
        %v3904 = vmax.f32 %v3872, 0.0
        %v3905 = vmax.f32 %v3873, 0.0
        %v3906 = vmax.f32 %v3874, 0.0
        %v3907 = vmax.f32 %v3875, 0.0
        %v3908 = vmax.f32 %v3876, 0.0
        %v3909 = vmax.f32 %v3877, 0.0
        %v3910 = vmax.f32 %v3878, 0.0
        %v3911 = vmax.f32 %v3879, 0.0
        %v3912 = vmax.f32 %v3880, 0.0
        %v3913 = vmax.f32 %v3881, 0.0
        %v3914 = vmax.f32 %v3882, 0.0
        %v3915 = vmax.f32 %v3883, 0.0
        %v3916 = vmax.f32 %v3884, 0.0
        %v3917 = vmax.f32 %v3885, 0.0
        %v3918 = vmax.f32 %v3886, 0.0
        %v3919 = vmax.f32 %v3887, 0.0
        %v3920 = vmax.f32 %v3888, 0.0
        %v3921 = vmax.f32 %v3889, 0.0
        %v3922 = vmax.f32 %v3890, 0.0
        %v3923 = vmax.f32 %v3891, 0.0
        %v3924 = vmax.f32 %v3892, 0.0
        %v3925 = vmax.f32 %v3893, 0.0
        %v3926 = vmax.f32 %v3894, 0.0
        %v3927 = vmax.f32 %v3895, 0.0
        %v3928 = vmax.f32 %v3896, 0.0
        %v3929 = vmax.f32 %v3897, 0.0
        %v3930 = vmax.f32 %v3898, 0.0
        %v3931 = vmax.f32 %v3899, 0.0
        %v3932 = vmax.f32 %v3900, 0.0
        %v3933 = vmax.f32 %v3901, 0.0
        %v3934 = vmax.f32 %v3902, 0.0
        %v3935 = vmax.f32 %v3903, 0.0
        %s3936 = scalar_lea.vmem [#allocation3], 24
        %3937 = vst [vmem:[%s3936 + $0x1] sm:$0xff] %v3904
        %3938 = vst [vmem:[%s3936 + $0x9] sm:$0xff] %v3905
        %3939 = vst [vmem:[%s3936 + $0x19] sm:$0xff] %v3906
        %3940 = vst [vmem:[%s3936 + $0x21] sm:$0xff] %v3907
        %3941 = vst [vmem:[%s3936 + $0x31] sm:$0xff] %v3908
        %3942 = vst [vmem:[%s3936 + $0x39] sm:$0xff] %v3909
        %3943 = vst [vmem:[%s3936 + $0x49] sm:$0xff] %v3910
        %3944 = vst [vmem:[%s3936 + $0x51] sm:$0xff] %v3911
        %3945 = vst [vmem:[%s3936 + $0x61] sm:$0xff] %v3912
        %3946 = vst [vmem:[%s3936 + $0x69] sm:$0xff] %v3913
        %3947 = vst [vmem:[%s3936 + $0x79] sm:$0xff] %v3914
        %3948 = vst [vmem:[%s3936 + $0x81] sm:$0xff] %v3915
        %3949 = vst [vmem:[%s3936 + $0x91] sm:$0xff] %v3916
        %3950 = vst [vmem:[%s3936 + $0x99] sm:$0xff] %v3917
        %3951 = vst [vmem:[%s3936 + $0xa9] sm:$0xff] %v3918
        %3952 = vst [vmem:[%s3936 + $0xb1] sm:$0xff] %v3919
        %3953 = vst [vmem:[%s3936 + $0xc1] sm:$0xff] %v3920
        %3954 = vst [vmem:[%s3936 + $0xc9] sm:$0xff] %v3921
        %3955 = vst [vmem:[%s3936 + $0xd9] sm:$0xff] %v3922
        %3956 = vst [vmem:[%s3936 + $0xe1] sm:$0xff] %v3923
        %3957 = vst [vmem:[%s3936 + $0xf1] sm:$0xff] %v3924
        %3958 = vst [vmem:[%s3936 + $0xf9] sm:$0xff] %v3925
        %3959 = vst [vmem:[%s3936 + $0x109] sm:$0xff] %v3926
        %3960 = vst [vmem:[%s3936 + $0x111] sm:$0xff] %v3927
        %3961 = vst [vmem:[%s3936 + $0x121] sm:$0xff] %v3928
        %3962 = vst [vmem:[%s3936 + $0x129] sm:$0xff] %v3929
        %3963 = vst [vmem:[%s3936 + $0x139] sm:$0xff] %v3930
        %3964 = vst [vmem:[%s3936 + $0x141] sm:$0xff] %v3931
        %3965 = vst [vmem:[%s3936 + $0x151] sm:$0xff] %v3932
        %3966 = vst [vmem:[%s3936 + $0x159] sm:$0xff] %v3933
        %3967 = vst [vmem:[%s3936 + $0x169] sm:$0xff] %v3934
        %3968 = vst [vmem:[%s3936 + $0x171] sm:$0xff] %v3935
        %v3969 = vld [vmem:[#allocation3] sm:$0xff]
        %v3970 = vld [vmem:[#allocation3 + $0x8] sm:$0xff]
        %v3971 = vld [vmem:[#allocation3 + $0x18] sm:$0xff]
        %v3972 = vld [vmem:[#allocation3 + $0x20] sm:$0xff]
        %v3973 = vld [vmem:[#allocation3 + $0x30] sm:$0xff]
        %v3974 = vld [vmem:[#allocation3 + $0x38] sm:$0xff]
        %v3975 = vld [vmem:[#allocation3 + $0x48] sm:$0xff]
        %v3976 = vld [vmem:[#allocation3 + $0x50] sm:$0xff]
        %v3977 = vld [vmem:[#allocation3 + $0x60] sm:$0xff]
        %v3978 = vld [vmem:[#allocation3 + $0x68] sm:$0xff]
        %v3979 = vld [vmem:[#allocation3 + $0x78] sm:$0xff]
        %v3980 = vld [vmem:[#allocation3 + $0x80] sm:$0xff]
        %v3981 = vld [vmem:[#allocation3 + $0x90] sm:$0xff]
        %v3982 = vld [vmem:[#allocation3 + $0x98] sm:$0xff]
        %v3983 = vld [vmem:[#allocation3 + $0xa8] sm:$0xff]
        %v3984 = vld [vmem:[#allocation3 + $0xb0] sm:$0xff]
        %v3985 = vld [vmem:[#allocation3 + $0xc0] sm:$0xff]
        %v3986 = vld [vmem:[#allocation3 + $0xc8] sm:$0xff]
        %v3987 = vld [vmem:[#allocation3 + $0xd8] sm:$0xff]
        %v3988 = vld [vmem:[#allocation3 + $0xe0] sm:$0xff]
        %v3989 = vld [vmem:[#allocation3 + $0xf0] sm:$0xff]
        %v3990 = vld [vmem:[#allocation3 + $0xf8] sm:$0xff]
        %v3991 = vld [vmem:[#allocation3 + $0x108] sm:$0xff]
        %v3992 = vld [vmem:[#allocation3 + $0x110] sm:$0xff]
        %v3993 = vld [vmem:[#allocation3 + $0x120] sm:$0xff]
        %v3994 = vld [vmem:[#allocation3 + $0x128] sm:$0xff]
        %v3995 = vld [vmem:[#allocation3 + $0x138] sm:$0xff]
        %v3996 = vld [vmem:[#allocation3 + $0x140] sm:$0xff]
        %v3997 = vld [vmem:[#allocation3 + $0x150] sm:$0xff]
        %v3998 = vld [vmem:[#allocation3 + $0x158] sm:$0xff]
        %v3999 = vld [vmem:[#allocation3 + $0x168] sm:$0xff]
        %v4000 = vld [vmem:[#allocation3 + $0x170] sm:$0xff]
        %v4001 = vld [vmem:[#allocation7] sm:$0xff]
        %v4002 = vld [vmem:[#allocation7 + $0x8] sm:$0xff]
        %v4003 = vld [vmem:[#allocation7 + $0x10] sm:$0xff]
        %v4004 = vld [vmem:[#allocation7 + $0x18] sm:$0xff]
        %v4005 = vld [vmem:[#allocation7 + $0x20] sm:$0xff]
        %v4006 = vld [vmem:[#allocation7 + $0x28] sm:$0xff]
        %v4007 = vld [vmem:[#allocation7 + $0x30] sm:$0xff]
        %v4008 = vld [vmem:[#allocation7 + $0x38] sm:$0xff]
        %v4009 = vld [vmem:[#allocation7 + $0x40] sm:$0xff]
        %v4010 = vld [vmem:[#allocation7 + $0x48] sm:$0xff]
        %v4011 = vld [vmem:[#allocation7 + $0x50] sm:$0xff]
        %v4012 = vld [vmem:[#allocation7 + $0x58] sm:$0xff]
        %v4013 = vld [vmem:[#allocation7 + $0x60] sm:$0xff]
        %v4014 = vld [vmem:[#allocation7 + $0x68] sm:$0xff]
        %v4015 = vld [vmem:[#allocation7 + $0x70] sm:$0xff]
        %v4016 = vld [vmem:[#allocation7 + $0x78] sm:$0xff]
        %4017 = vmatprep.subr.mxu0 0.0
        %4018 = vmatpush1.msra.mxu0 %v4001
        %4019 = vmatprep.subr.mxu0 0.0
        %4020 = vmatpush1.msra.mxu0 %v4002
        %4021 = vmatprep.subr.mxu0 0.0
        %4022 = vmatpush1.msra.mxu0 %v4003
        %4023 = vmatprep.subr.mxu0 0.0
        %4024 = vmatpush1.msra.mxu0 %v4004
        %4025 = vmatprep.subr.mxu0 0.0
        %4026 = vmatpush1.msra.mxu0 %v4005
        %4027 = vmatprep.subr.mxu0 0.0
        %4028 = vmatpush1.msra.mxu0 %v4006
        %4029 = vmatprep.subr.mxu0 0.0
        %4030 = vmatpush1.msra.mxu0 %v4007
        %4031 = vmatprep.subr.mxu0 0.0
        %4032 = vmatpush1.msra.mxu0 %v4008
        %4033 = vmatprep.subr.mxu0 0.0
        %4034 = vmatpush1.msra.mxu0 %v4009
        %4035 = vmatprep.subr.mxu0 0.0
        %4036 = vmatpush1.msra.mxu0 %v4010
        %4037 = vmatprep.subr.mxu0 0.0
        %4038 = vmatpush1.msra.mxu0 %v4011
        %4039 = vmatprep.subr.mxu0 0.0
        %4040 = vmatpush1.msra.mxu0 %v4012
        %4041 = vmatprep.subr.mxu0 0.0
        %4042 = vmatpush1.msra.mxu0 %v4013
        %4043 = vmatprep.subr.mxu0 0.0
        %4044 = vmatpush1.msra.mxu0 %v4014
        %4045 = vmatprep.subr.mxu0 0.0
        %4046 = vmatpush1.msra.mxu0 %v4015
        %4047 = vmatprep.subr.mxu0 0.0
        %4048 = vmatpush1.msra.mxu0 %v4016
        %4049 = vmatprep.subr.mxu0 0.0
        %4050 = vmatpush1.msra.mxu0 0.0
        %4051 = vmatprep.subr.mxu0 0.0
        %4052 = vmatpush1.msra.mxu0 0.0
        %4053 = vmatprep.subr.mxu0 0.0
        %4054 = vmatpush1.msra.mxu0 0.0
        %4055 = vmatprep.subr.mxu0 0.0
        %4056 = vmatpush1.msra.mxu0 0.0
        %4057 = vmatprep.subr.mxu0 0.0
        %4058 = vmatpush1.msra.mxu0 0.0
        %4059 = vmatprep.subr.mxu0 0.0
        %4060 = vmatpush1.msra.mxu0 0.0
        %4061 = vmatprep.subr.mxu0 0.0
        %4062 = vmatpush1.msra.mxu0 0.0
        %4063 = vmatprep.subr.mxu0 0.0
        %4064 = vmatpush1.msra.mxu0 0.0
        %4065 = vmatprep.subr.mxu0 0.0
        %4066 = vmatpush1.msra.mxu0 0.0
        %4067 = vmatprep.subr.mxu0 0.0
        %4068 = vmatpush1.msra.mxu0 0.0
        %4069 = vmatprep.subr.mxu0 0.0
        %4070 = vmatpush1.msra.mxu0 0.0
        %4071 = vmatprep.subr.mxu0 0.0
        %4072 = vmatpush1.msra.mxu0 0.0
        %4073 = vmatprep.subr.mxu0 0.0
        %4074 = vmatpush1.msra.mxu0 0.0
        %4075 = vmatprep.subr.mxu0 0.0
        %4076 = vmatpush1.msra.mxu0 0.0
        %4077 = vmatprep.subr.mxu0 0.0
        %4078 = vmatpush1.msra.mxu0 0.0
        %4079 = vmatprep.subr.mxu0 0.0
        %4080 = vmatpush1.msra.mxu0 0.0
        %4081 = vmatprep.mubr.f32.mxu0 0.0
        %4082 = vmatmul.mubr.f32.gmra.mrb[0].mxu0 %v3969
        %v4083 = vpop.f32.mrb[0].mxu0
        %v4084 = vadd.f32 0.0, %v4083
        %v4085 = vpop.f32.mrb[0].mxu0
        %4086 = vmatprep.mubr.f32.mxu0 0.0
        %4087 = vmatmul.mubr.f32.gmra.mrb[0].mxu0 %v3970
        %v4088 = vpop.f32.mrb[0].mxu0
        %v4089 = vadd.f32 0.0, %v4088
        %v4090 = vpop.f32.mrb[0].mxu0
        %4091 = vmatprep.mubr.f32.mxu0 0.0
        %4092 = vmatmul.mubr.f32.gmra.mrb[0].mxu0 %v3971
        %v4093 = vpop.f32.mrb[0].mxu0
        %v4094 = vadd.f32 0.0, %v4093
        %v4095 = vpop.f32.mrb[0].mxu0
        %4096 = vmatprep.mubr.f32.mxu0 0.0
        %4097 = vmatmul.mubr.f32.gmra.mrb[0].mxu0 %v3972
        %v4098 = vpop.f32.mrb[0].mxu0
        %v4099 = vadd.f32 0.0, %v4098
        %v4100 = vpop.f32.mrb[0].mxu0
        %4101 = vmatprep.mubr.f32.mxu0 0.0
        %4102 = vmatmul.mubr.f32.gmra.mrb[0].mxu0 %v3973
        %v4103 = vpop.f32.mrb[0].mxu0
        %v4104 = vadd.f32 0.0, %v4103
        %v4105 = vpop.f32.mrb[0].mxu0
        %4106 = vmatprep.mubr.f32.mxu0 0.0
        %4107 = vmatmul.mubr.f32.gmra.mrb[0].mxu0 %v3974
        %v4108 = vpop.f32.mrb[0].mxu0
        %v4109 = vadd.f32 0.0, %v4108
        %v4110 = vpop.f32.mrb[0].mxu0
        %4111 = vmatprep.mubr.f32.mxu0 0.0
        %4112 = vmatmul.mubr.f32.gmra.mrb[0].mxu0 %v3975
        %v4113 = vpop.f32.mrb[0].mxu0
        %v4114 = vadd.f32 0.0, %v4113
        %v4115 = vpop.f32.mrb[0].mxu0
        %4116 = vmatprep.mubr.f32.mxu0 0.0
        %4117 = vmatmul.mubr.f32.gmra.mrb[0].mxu0 %v3976
        %v4118 = vpop.f32.mrb[0].mxu0
        %v4119 = vadd.f32 0.0, %v4118
        %v4120 = vpop.f32.mrb[0].mxu0
        %4121 = vmatprep.mubr.f32.mxu0 0.0
        %4122 = vmatmul.mubr.f32.gmra.mrb[0].mxu0 %v3977
        %v4123 = vpop.f32.mrb[0].mxu0
        %v4124 = vadd.f32 0.0, %v4123
        %v4125 = vpop.f32.mrb[0].mxu0
        %4126 = vmatprep.mubr.f32.mxu0 0.0
        %4127 = vmatmul.mubr.f32.gmra.mrb[0].mxu0 %v3978
        %v4128 = vpop.f32.mrb[0].mxu0
        %v4129 = vadd.f32 0.0, %v4128
        %v4130 = vpop.f32.mrb[0].mxu0
        %4131 = vmatprep.mubr.f32.mxu0 0.0
        %4132 = vmatmul.mubr.f32.gmra.mrb[0].mxu0 %v3979
        %v4133 = vpop.f32.mrb[0].mxu0
        %v4134 = vadd.f32 0.0, %v4133
        %v4135 = vpop.f32.mrb[0].mxu0
        %4136 = vmatprep.mubr.f32.mxu0 0.0
        %4137 = vmatmul.mubr.f32.gmra.mrb[0].mxu0 %v3980
        %v4138 = vpop.f32.mrb[0].mxu0
        %v4139 = vadd.f32 0.0, %v4138
        %v4140 = vpop.f32.mrb[0].mxu0
        %4141 = vmatprep.mubr.f32.mxu0 0.0
        %4142 = vmatmul.mubr.f32.gmra.mrb[0].mxu0 %v3981
        %v4143 = vpop.f32.mrb[0].mxu0
        %v4144 = vadd.f32 0.0, %v4143
        %v4145 = vpop.f32.mrb[0].mxu0
        %4146 = vmatprep.mubr.f32.mxu0 0.0
        %4147 = vmatmul.mubr.f32.gmra.mrb[0].mxu0 %v3982
        %v4148 = vpop.f32.mrb[0].mxu0
        %v4149 = vadd.f32 0.0, %v4148
        %v4150 = vpop.f32.mrb[0].mxu0
        %4151 = vmatprep.mubr.f32.mxu0 0.0
        %4152 = vmatmul.mubr.f32.gmra.mrb[0].mxu0 %v3983
        %v4153 = vpop.f32.mrb[0].mxu0
        %v4154 = vadd.f32 0.0, %v4153
        %v4155 = vpop.f32.mrb[0].mxu0
        %4156 = vmatprep.mubr.f32.mxu0 0.0
        %4157 = vmatmul.mubr.f32.gmra.mrb[0].mxu0 %v3984
        %v4158 = vpop.f32.mrb[0].mxu0
        %v4159 = vadd.f32 0.0, %v4158
        %v4160 = vpop.f32.mrb[0].mxu0
        %4161 = vmatprep.mubr.f32.mxu0 0.0
        %4162 = vmatmul.mubr.f32.gmra.mrb[0].mxu0 %v3985
        %v4163 = vpop.f32.mrb[0].mxu0
        %v4164 = vadd.f32 0.0, %v4163
        %v4165 = vpop.f32.mrb[0].mxu0
        %4166 = vmatprep.mubr.f32.mxu0 0.0
        %4167 = vmatmul.mubr.f32.gmra.mrb[0].mxu0 %v3986
        %v4168 = vpop.f32.mrb[0].mxu0
        %v4169 = vadd.f32 0.0, %v4168
        %v4170 = vpop.f32.mrb[0].mxu0
        %4171 = vmatprep.mubr.f32.mxu0 0.0
        %4172 = vmatmul.mubr.f32.gmra.mrb[0].mxu0 %v3987
        %v4173 = vpop.f32.mrb[0].mxu0
        %v4174 = vadd.f32 0.0, %v4173
        %v4175 = vpop.f32.mrb[0].mxu0
        %4176 = vmatprep.mubr.f32.mxu0 0.0
        %4177 = vmatmul.mubr.f32.gmra.mrb[0].mxu0 %v3988
        %v4178 = vpop.f32.mrb[0].mxu0
        %v4179 = vadd.f32 0.0, %v4178
        %v4180 = vpop.f32.mrb[0].mxu0
        %4181 = vmatprep.mubr.f32.mxu0 0.0
        %4182 = vmatmul.mubr.f32.gmra.mrb[0].mxu0 %v3989
        %v4183 = vpop.f32.mrb[0].mxu0
        %v4184 = vadd.f32 0.0, %v4183
        %v4185 = vpop.f32.mrb[0].mxu0
        %4186 = vmatprep.mubr.f32.mxu0 0.0
        %4187 = vmatmul.mubr.f32.gmra.mrb[0].mxu0 %v3990
        %v4188 = vpop.f32.mrb[0].mxu0
        %v4189 = vadd.f32 0.0, %v4188
        %v4190 = vpop.f32.mrb[0].mxu0
        %4191 = vmatprep.mubr.f32.mxu0 0.0
        %4192 = vmatmul.mubr.f32.gmra.mrb[0].mxu0 %v3991
        %v4193 = vpop.f32.mrb[0].mxu0
        %v4194 = vadd.f32 0.0, %v4193
        %v4195 = vpop.f32.mrb[0].mxu0
        %4196 = vmatprep.mubr.f32.mxu0 0.0
        %4197 = vmatmul.mubr.f32.gmra.mrb[0].mxu0 %v3992
        %v4198 = vpop.f32.mrb[0].mxu0
        %v4199 = vadd.f32 0.0, %v4198
        %v4200 = vpop.f32.mrb[0].mxu0
        %4201 = vmatprep.mubr.f32.mxu0 0.0
        %4202 = vmatmul.mubr.f32.gmra.mrb[0].mxu0 %v3993
        %v4203 = vpop.f32.mrb[0].mxu0
        %v4204 = vadd.f32 0.0, %v4203
        %v4205 = vpop.f32.mrb[0].mxu0
        %4206 = vmatprep.mubr.f32.mxu0 0.0
        %4207 = vmatmul.mubr.f32.gmra.mrb[0].mxu0 %v3994
        %v4208 = vpop.f32.mrb[0].mxu0
        %v4209 = vadd.f32 0.0, %v4208
        %v4210 = vpop.f32.mrb[0].mxu0
        %4211 = vmatprep.mubr.f32.mxu0 0.0
        %4212 = vmatmul.mubr.f32.gmra.mrb[0].mxu0 %v3995
        %v4213 = vpop.f32.mrb[0].mxu0
        %v4214 = vadd.f32 0.0, %v4213
        %v4215 = vpop.f32.mrb[0].mxu0
        %4216 = vmatprep.mubr.f32.mxu0 0.0
        %4217 = vmatmul.mubr.f32.gmra.mrb[0].mxu0 %v3996
        %v4218 = vpop.f32.mrb[0].mxu0
        %v4219 = vadd.f32 0.0, %v4218
        %v4220 = vpop.f32.mrb[0].mxu0
        %4221 = vmatprep.mubr.f32.mxu0 0.0
        %4222 = vmatmul.mubr.f32.gmra.mrb[0].mxu0 %v3997
        %v4223 = vpop.f32.mrb[0].mxu0
        %v4224 = vadd.f32 0.0, %v4223
        %v4225 = vpop.f32.mrb[0].mxu0
        %4226 = vmatprep.mubr.f32.mxu0 0.0
        %4227 = vmatmul.mubr.f32.gmra.mrb[0].mxu0 %v3998
        %v4228 = vpop.f32.mrb[0].mxu0
        %v4229 = vadd.f32 0.0, %v4228
        %v4230 = vpop.f32.mrb[0].mxu0
        %4231 = vmatprep.mubr.f32.mxu0 0.0
        %4232 = vmatmul.mubr.f32.gmra.mrb[0].mxu0 %v3999
        %v4233 = vpop.f32.mrb[0].mxu0
        %v4234 = vadd.f32 0.0, %v4233
        %v4235 = vpop.f32.mrb[0].mxu0
        %4236 = vmatprep.mubr.f32.mxu0 0.0
        %4237 = vmatmul.mubr.f32.gmra.mrb[0].mxu0 %v4000
        %v4238 = vpop.f32.mrb[0].mxu0
        %v4239 = vadd.f32 0.0, %v4238
        %v4240 = vpop.f32.mrb[0].mxu0
        %4241 = vdwg.mxu0
        %4242 = vst [vmem:[#allocation4] sm:$0xff] %v4084
        %4243 = vst [vmem:[#allocation4 + $0x8] sm:$0xff] %v4089
        %4244 = vst [vmem:[#allocation4 + $0x10] sm:$0xff] %v4094
        %4245 = vst [vmem:[#allocation4 + $0x18] sm:$0xff] %v4099
        %4246 = vst [vmem:[#allocation4 + $0x20] sm:$0xff] %v4104
        %4247 = vst [vmem:[#allocation4 + $0x28] sm:$0xff] %v4109
        %4248 = vst [vmem:[#allocation4 + $0x30] sm:$0xff] %v4114
        %4249 = vst [vmem:[#allocation4 + $0x38] sm:$0xff] %v4119
        %4250 = vst [vmem:[#allocation4 + $0x40] sm:$0xff] %v4124
        %4251 = vst [vmem:[#allocation4 + $0x48] sm:$0xff] %v4129
        %4252 = vst [vmem:[#allocation4 + $0x50] sm:$0xff] %v4134
        %4253 = vst [vmem:[#allocation4 + $0x58] sm:$0xff] %v4139
        %4254 = vst [vmem:[#allocation4 + $0x60] sm:$0xff] %v4144
        %4255 = vst [vmem:[#allocation4 + $0x68] sm:$0xff] %v4149
        %4256 = vst [vmem:[#allocation4 + $0x70] sm:$0xff] %v4154
        %4257 = vst [vmem:[#allocation4 + $0x78] sm:$0xff] %v4159
        %4258 = vst [vmem:[#allocation4 + $0x80] sm:$0xff] %v4164
        %4259 = vst [vmem:[#allocation4 + $0x88] sm:$0xff] %v4169
        %4260 = vst [vmem:[#allocation4 + $0x90] sm:$0xff] %v4174
        %4261 = vst [vmem:[#allocation4 + $0x98] sm:$0xff] %v4179
        %4262 = vst [vmem:[#allocation4 + $0xa0] sm:$0xff] %v4184
        %4263 = vst [vmem:[#allocation4 + $0xa8] sm:$0xff] %v4189
        %4264 = vst [vmem:[#allocation4 + $0xb0] sm:$0xff] %v4194
        %4265 = vst [vmem:[#allocation4 + $0xb8] sm:$0xff] %v4199
        %4266 = vst [vmem:[#allocation4 + $0xc0] sm:$0xff] %v4204
        %4267 = vst [vmem:[#allocation4 + $0xc8] sm:$0xff] %v4209
        %4268 = vst [vmem:[#allocation4 + $0xd0] sm:$0xff] %v4214
        %4269 = vst [vmem:[#allocation4 + $0xd8] sm:$0xff] %v4219
        %4270 = vst [vmem:[#allocation4 + $0xe0] sm:$0xff] %v4224
        %4271 = vst [vmem:[#allocation4 + $0xe8] sm:$0xff] %v4229
        %4272 = vst [vmem:[#allocation4 + $0xf0] sm:$0xff] %v4234
        %4273 = vst [vmem:[#allocation4 + $0xf8] sm:$0xff] %v4239
        %v4274 = vld [vmem:[#allocation3 + $0x1] sm:$0xff]
        %v4275 = vld [vmem:[#allocation3 + $0x9] sm:$0xff]
        %v4276 = vld [vmem:[#allocation3 + $0x19] sm:$0xff]
        %v4277 = vld [vmem:[#allocation3 + $0x21] sm:$0xff]
        %v4278 = vld [vmem:[#allocation3 + $0x31] sm:$0xff]
        %v4279 = vld [vmem:[#allocation3 + $0x39] sm:$0xff]
        %v4280 = vld [vmem:[#allocation3 + $0x49] sm:$0xff]
        %v4281 = vld [vmem:[#allocation3 + $0x51] sm:$0xff]
        %v4282 = vld [vmem:[#allocation3 + $0x61] sm:$0xff]
        %v4283 = vld [vmem:[#allocation3 + $0x69] sm:$0xff]
        %v4284 = vld [vmem:[#allocation3 + $0x79] sm:$0xff]
        %v4285 = vld [vmem:[#allocation3 + $0x81] sm:$0xff]
        %v4286 = vld [vmem:[#allocation3 + $0x91] sm:$0xff]
        %v4287 = vld [vmem:[#allocation3 + $0x99] sm:$0xff]
        %v4288 = vld [vmem:[#allocation3 + $0xa9] sm:$0xff]
        %v4289 = vld [vmem:[#allocation3 + $0xb1] sm:$0xff]
        %v4290 = vld [vmem:[#allocation3 + $0xc1] sm:$0xff]
        %v4291 = vld [vmem:[#allocation3 + $0xc9] sm:$0xff]
        %v4292 = vld [vmem:[#allocation3 + $0xd9] sm:$0xff]
        %v4293 = vld [vmem:[#allocation3 + $0xe1] sm:$0xff]
        %v4294 = vld [vmem:[#allocation3 + $0xf1] sm:$0xff]
        %v4295 = vld [vmem:[#allocation3 + $0xf9] sm:$0xff]
        %v4296 = vld [vmem:[#allocation3 + $0x109] sm:$0xff]
        %v4297 = vld [vmem:[#allocation3 + $0x111] sm:$0xff]
        %v4298 = vld [vmem:[#allocation3 + $0x121] sm:$0xff]
        %v4299 = vld [vmem:[#allocation3 + $0x129] sm:$0xff]
        %v4300 = vld [vmem:[#allocation3 + $0x139] sm:$0xff]
        %v4301 = vld [vmem:[#allocation3 + $0x141] sm:$0xff]
        %v4302 = vld [vmem:[#allocation3 + $0x151] sm:$0xff]
        %v4303 = vld [vmem:[#allocation3 + $0x159] sm:$0xff]
        %v4304 = vld [vmem:[#allocation3 + $0x169] sm:$0xff]
        %v4305 = vld [vmem:[#allocation3 + $0x171] sm:$0xff]
        %s4306 = scalar_lea.vmem [#allocation7], 128
        %v4307 = vld [vmem:[%s4306] sm:$0xff]
        %v4308 = vld [vmem:[%s4306 + $0x8] sm:$0xff]
        %v4309 = vld [vmem:[%s4306 + $0x10] sm:$0xff]
        %v4310 = vld [vmem:[%s4306 + $0x18] sm:$0xff]
        %v4311 = vld [vmem:[%s4306 + $0x20] sm:$0xff]
        %v4312 = vld [vmem:[%s4306 + $0x28] sm:$0xff]
        %v4313 = vld [vmem:[%s4306 + $0x30] sm:$0xff]
        %v4314 = vld [vmem:[%s4306 + $0x38] sm:$0xff]
        %v4315 = vld [vmem:[%s4306 + $0x40] sm:$0xff]
        %v4316 = vld [vmem:[%s4306 + $0x48] sm:$0xff]
        %v4317 = vld [vmem:[%s4306 + $0x50] sm:$0xff]
        %v4318 = vld [vmem:[%s4306 + $0x58] sm:$0xff]
        %v4319 = vld [vmem:[%s4306 + $0x60] sm:$0xff]
        %v4320 = vld [vmem:[%s4306 + $0x68] sm:$0xff]
        %v4321 = vld [vmem:[%s4306 + $0x70] sm:$0xff]
        %v4322 = vld [vmem:[%s4306 + $0x78] sm:$0xff]
        %4323 = vmatprep.subr.mxu0 0.0
        %4324 = vmatpush1.msra.mxu0 %v4307
        %4325 = vmatprep.subr.mxu0 0.0
        %4326 = vmatpush1.msra.mxu0 %v4308
        %4327 = vmatprep.subr.mxu0 0.0
        %4328 = vmatpush1.msra.mxu0 %v4309
        %4329 = vmatprep.subr.mxu0 0.0
        %4330 = vmatpush1.msra.mxu0 %v4310
        %4331 = vmatprep.subr.mxu0 0.0
        %4332 = vmatpush1.msra.mxu0 %v4311
        %4333 = vmatprep.subr.mxu0 0.0
        %4334 = vmatpush1.msra.mxu0 %v4312
        %4335 = vmatprep.subr.mxu0 0.0
        %4336 = vmatpush1.msra.mxu0 %v4313
        %4337 = vmatprep.subr.mxu0 0.0
        %4338 = vmatpush1.msra.mxu0 %v4314
        %4339 = vmatprep.subr.mxu0 0.0
        %4340 = vmatpush1.msra.mxu0 %v4315
        %4341 = vmatprep.subr.mxu0 0.0
        %4342 = vmatpush1.msra.mxu0 %v4316
        %4343 = vmatprep.subr.mxu0 0.0
        %4344 = vmatpush1.msra.mxu0 %v4317
        %4345 = vmatprep.subr.mxu0 0.0
        %4346 = vmatpush1.msra.mxu0 %v4318
        %4347 = vmatprep.subr.mxu0 0.0
        %4348 = vmatpush1.msra.mxu0 %v4319
        %4349 = vmatprep.subr.mxu0 0.0
        %4350 = vmatpush1.msra.mxu0 %v4320
        %4351 = vmatprep.subr.mxu0 0.0
        %4352 = vmatpush1.msra.mxu0 %v4321
        %4353 = vmatprep.subr.mxu0 0.0
        %4354 = vmatpush1.msra.mxu0 %v4322
        %4355 = vmatprep.subr.mxu0 0.0
        %4356 = vmatpush1.msra.mxu0 0.0
        %4357 = vmatprep.subr.mxu0 0.0
        %4358 = vmatpush1.msra.mxu0 0.0
        %4359 = vmatprep.subr.mxu0 0.0
        %4360 = vmatpush1.msra.mxu0 0.0
        %4361 = vmatprep.subr.mxu0 0.0
        %4362 = vmatpush1.msra.mxu0 0.0
        %4363 = vmatprep.subr.mxu0 0.0
        %4364 = vmatpush1.msra.mxu0 0.0
        %4365 = vmatprep.subr.mxu0 0.0
        %4366 = vmatpush1.msra.mxu0 0.0
        %4367 = vmatprep.subr.mxu0 0.0
        %4368 = vmatpush1.msra.mxu0 0.0
        %4369 = vmatprep.subr.mxu0 0.0
        %4370 = vmatpush1.msra.mxu0 0.0
        %4371 = vmatprep.subr.mxu0 0.0
        %4372 = vmatpush1.msra.mxu0 0.0
        %4373 = vmatprep.subr.mxu0 0.0
        %4374 = vmatpush1.msra.mxu0 0.0
        %4375 = vmatprep.subr.mxu0 0.0
        %4376 = vmatpush1.msra.mxu0 0.0
        %4377 = vmatprep.subr.mxu0 0.0
        %4378 = vmatpush1.msra.mxu0 0.0
        %4379 = vmatprep.subr.mxu0 0.0
        %4380 = vmatpush1.msra.mxu0 0.0
        %4381 = vmatprep.subr.mxu0 0.0
        %4382 = vmatpush1.msra.mxu0 0.0
        %4383 = vmatprep.subr.mxu0 0.0
        %4384 = vmatpush1.msra.mxu0 0.0
        %4385 = vmatprep.subr.mxu0 0.0
        %4386 = vmatpush1.msra.mxu0 0.0
        %4387 = vmatprep.mubr.f32.mxu0 0.0
        %4388 = vmatmul.mubr.f32.gmra.mrb[0].mxu0 %v4274
        %v4389 = vpop.f32.mrb[0].mxu0
        %v4390 = vadd.f32 0.0, %v4389
        %v4391 = vpop.f32.mrb[0].mxu0
        %4392 = vmatprep.mubr.f32.mxu0 0.0
        %4393 = vmatmul.mubr.f32.gmra.mrb[0].mxu0 %v4275
        %v4394 = vpop.f32.mrb[0].mxu0
        %v4395 = vadd.f32 0.0, %v4394
        %v4396 = vpop.f32.mrb[0].mxu0
        %4397 = vmatprep.mubr.f32.mxu0 0.0
        %4398 = vmatmul.mubr.f32.gmra.mrb[0].mxu0 %v4276
        %v4399 = vpop.f32.mrb[0].mxu0
        %v4400 = vadd.f32 0.0, %v4399
        %v4401 = vpop.f32.mrb[0].mxu0
        %4402 = vmatprep.mubr.f32.mxu0 0.0
        %4403 = vmatmul.mubr.f32.gmra.mrb[0].mxu0 %v4277
        %v4404 = vpop.f32.mrb[0].mxu0
        %v4405 = vadd.f32 0.0, %v4404
        %v4406 = vpop.f32.mrb[0].mxu0
        %4407 = vmatprep.mubr.f32.mxu0 0.0
        %4408 = vmatmul.mubr.f32.gmra.mrb[0].mxu0 %v4278
        %v4409 = vpop.f32.mrb[0].mxu0
        %v4410 = vadd.f32 0.0, %v4409
        %v4411 = vpop.f32.mrb[0].mxu0
        %4412 = vmatprep.mubr.f32.mxu0 0.0
        %4413 = vmatmul.mubr.f32.gmra.mrb[0].mxu0 %v4279
        %v4414 = vpop.f32.mrb[0].mxu0
        %v4415 = vadd.f32 0.0, %v4414
        %v4416 = vpop.f32.mrb[0].mxu0
        %4417 = vmatprep.mubr.f32.mxu0 0.0
        %4418 = vmatmul.mubr.f32.gmra.mrb[0].mxu0 %v4280
        %v4419 = vpop.f32.mrb[0].mxu0
        %v4420 = vadd.f32 0.0, %v4419
        %v4421 = vpop.f32.mrb[0].mxu0
        %4422 = vmatprep.mubr.f32.mxu0 0.0
        %4423 = vmatmul.mubr.f32.gmra.mrb[0].mxu0 %v4281
        %v4424 = vpop.f32.mrb[0].mxu0
        %v4425 = vadd.f32 0.0, %v4424
        %v4426 = vpop.f32.mrb[0].mxu0
        %4427 = vmatprep.mubr.f32.mxu0 0.0
        %4428 = vmatmul.mubr.f32.gmra.mrb[0].mxu0 %v4282
        %v4429 = vpop.f32.mrb[0].mxu0
        %v4430 = vadd.f32 0.0, %v4429
        %v4431 = vpop.f32.mrb[0].mxu0
        %4432 = vmatprep.mubr.f32.mxu0 0.0
        %4433 = vmatmul.mubr.f32.gmra.mrb[0].mxu0 %v4283
        %v4434 = vpop.f32.mrb[0].mxu0
        %v4435 = vadd.f32 0.0, %v4434
        %v4436 = vpop.f32.mrb[0].mxu0
        %4437 = vmatprep.mubr.f32.mxu0 0.0
        %4438 = vmatmul.mubr.f32.gmra.mrb[0].mxu0 %v4284
        %v4439 = vpop.f32.mrb[0].mxu0
        %v4440 = vadd.f32 0.0, %v4439
        %v4441 = vpop.f32.mrb[0].mxu0
        %4442 = vmatprep.mubr.f32.mxu0 0.0
        %4443 = vmatmul.mubr.f32.gmra.mrb[0].mxu0 %v4285
        %v4444 = vpop.f32.mrb[0].mxu0
        %v4445 = vadd.f32 0.0, %v4444
        %v4446 = vpop.f32.mrb[0].mxu0
        %4447 = vmatprep.mubr.f32.mxu0 0.0
        %4448 = vmatmul.mubr.f32.gmra.mrb[0].mxu0 %v4286
        %v4449 = vpop.f32.mrb[0].mxu0
        %v4450 = vadd.f32 0.0, %v4449
        %v4451 = vpop.f32.mrb[0].mxu0
        %4452 = vmatprep.mubr.f32.mxu0 0.0
        %4453 = vmatmul.mubr.f32.gmra.mrb[0].mxu0 %v4287
        %v4454 = vpop.f32.mrb[0].mxu0
        %v4455 = vadd.f32 0.0, %v4454
        %v4456 = vpop.f32.mrb[0].mxu0
        %4457 = vmatprep.mubr.f32.mxu0 0.0
        %4458 = vmatmul.mubr.f32.gmra.mrb[0].mxu0 %v4288
        %v4459 = vpop.f32.mrb[0].mxu0
        %v4460 = vadd.f32 0.0, %v4459
        %v4461 = vpop.f32.mrb[0].mxu0
        %4462 = vmatprep.mubr.f32.mxu0 0.0
        %4463 = vmatmul.mubr.f32.gmra.mrb[0].mxu0 %v4289
        %v4464 = vpop.f32.mrb[0].mxu0
        %v4465 = vadd.f32 0.0, %v4464
        %v4466 = vpop.f32.mrb[0].mxu0
        %4467 = vmatprep.mubr.f32.mxu0 0.0
        %4468 = vmatmul.mubr.f32.gmra.mrb[0].mxu0 %v4290
        %v4469 = vpop.f32.mrb[0].mxu0
        %v4470 = vadd.f32 0.0, %v4469
        %v4471 = vpop.f32.mrb[0].mxu0
        %4472 = vmatprep.mubr.f32.mxu0 0.0
        %4473 = vmatmul.mubr.f32.gmra.mrb[0].mxu0 %v4291
        %v4474 = vpop.f32.mrb[0].mxu0
        %v4475 = vadd.f32 0.0, %v4474
        %v4476 = vpop.f32.mrb[0].mxu0
        %4477 = vmatprep.mubr.f32.mxu0 0.0
        %4478 = vmatmul.mubr.f32.gmra.mrb[0].mxu0 %v4292
        %v4479 = vpop.f32.mrb[0].mxu0
        %v4480 = vadd.f32 0.0, %v4479
        %v4481 = vpop.f32.mrb[0].mxu0
        %4482 = vmatprep.mubr.f32.mxu0 0.0
        %4483 = vmatmul.mubr.f32.gmra.mrb[0].mxu0 %v4293
        %v4484 = vpop.f32.mrb[0].mxu0
        %v4485 = vadd.f32 0.0, %v4484
        %v4486 = vpop.f32.mrb[0].mxu0
        %4487 = vmatprep.mubr.f32.mxu0 0.0
        %4488 = vmatmul.mubr.f32.gmra.mrb[0].mxu0 %v4294
        %v4489 = vpop.f32.mrb[0].mxu0
        %v4490 = vadd.f32 0.0, %v4489
        %v4491 = vpop.f32.mrb[0].mxu0
        %4492 = vmatprep.mubr.f32.mxu0 0.0
        %4493 = vmatmul.mubr.f32.gmra.mrb[0].mxu0 %v4295
        %v4494 = vpop.f32.mrb[0].mxu0
        %v4495 = vadd.f32 0.0, %v4494
        %v4496 = vpop.f32.mrb[0].mxu0
        %4497 = vmatprep.mubr.f32.mxu0 0.0
        %4498 = vmatmul.mubr.f32.gmra.mrb[0].mxu0 %v4296
        %v4499 = vpop.f32.mrb[0].mxu0
        %v4500 = vadd.f32 0.0, %v4499
        %v4501 = vpop.f32.mrb[0].mxu0
        %4502 = vmatprep.mubr.f32.mxu0 0.0
        %4503 = vmatmul.mubr.f32.gmra.mrb[0].mxu0 %v4297
        %v4504 = vpop.f32.mrb[0].mxu0
        %v4505 = vadd.f32 0.0, %v4504
        %v4506 = vpop.f32.mrb[0].mxu0
        %4507 = vmatprep.mubr.f32.mxu0 0.0
        %4508 = vmatmul.mubr.f32.gmra.mrb[0].mxu0 %v4298
        %v4509 = vpop.f32.mrb[0].mxu0
        %v4510 = vadd.f32 0.0, %v4509
        %v4511 = vpop.f32.mrb[0].mxu0
        %4512 = vmatprep.mubr.f32.mxu0 0.0
        %4513 = vmatmul.mubr.f32.gmra.mrb[0].mxu0 %v4299
        %v4514 = vpop.f32.mrb[0].mxu0
        %v4515 = vadd.f32 0.0, %v4514
        %v4516 = vpop.f32.mrb[0].mxu0
        %4517 = vmatprep.mubr.f32.mxu0 0.0
        %4518 = vmatmul.mubr.f32.gmra.mrb[0].mxu0 %v4300
        %v4519 = vpop.f32.mrb[0].mxu0
        %v4520 = vadd.f32 0.0, %v4519
        %v4521 = vpop.f32.mrb[0].mxu0
        %4522 = vmatprep.mubr.f32.mxu0 0.0
        %4523 = vmatmul.mubr.f32.gmra.mrb[0].mxu0 %v4301
        %v4524 = vpop.f32.mrb[0].mxu0
        %v4525 = vadd.f32 0.0, %v4524
        %v4526 = vpop.f32.mrb[0].mxu0
        %4527 = vmatprep.mubr.f32.mxu0 0.0
        %4528 = vmatmul.mubr.f32.gmra.mrb[0].mxu0 %v4302
        %v4529 = vpop.f32.mrb[0].mxu0
        %v4530 = vadd.f32 0.0, %v4529
        %v4531 = vpop.f32.mrb[0].mxu0
        %4532 = vmatprep.mubr.f32.mxu0 0.0
        %4533 = vmatmul.mubr.f32.gmra.mrb[0].mxu0 %v4303
        %v4534 = vpop.f32.mrb[0].mxu0
        %v4535 = vadd.f32 0.0, %v4534
        %v4536 = vpop.f32.mrb[0].mxu0
        %4537 = vmatprep.mubr.f32.mxu0 0.0
        %4538 = vmatmul.mubr.f32.gmra.mrb[0].mxu0 %v4304
        %v4539 = vpop.f32.mrb[0].mxu0
        %v4540 = vadd.f32 0.0, %v4539
        %v4541 = vpop.f32.mrb[0].mxu0
        %4542 = vmatprep.mubr.f32.mxu0 0.0
        %4543 = vmatmul.mubr.f32.gmra.mrb[0].mxu0 %v4305
        %v4544 = vpop.f32.mrb[0].mxu0
        %v4545 = vadd.f32 0.0, %v4544
        %v4546 = vpop.f32.mrb[0].mxu0
        %4547 = vdwg.mxu0
        %v4548 = vld [vmem:[#allocation4] sm:$0xff]
        %v4549 = vld [vmem:[#allocation4 + $0x8] sm:$0xff]
        %v4550 = vld [vmem:[#allocation4 + $0x10] sm:$0xff]
        %v4551 = vld [vmem:[#allocation4 + $0x18] sm:$0xff]
        %v4552 = vld [vmem:[#allocation4 + $0x20] sm:$0xff]
        %v4553 = vld [vmem:[#allocation4 + $0x28] sm:$0xff]
        %v4554 = vld [vmem:[#allocation4 + $0x30] sm:$0xff]
        %v4555 = vld [vmem:[#allocation4 + $0x38] sm:$0xff]
        %v4556 = vld [vmem:[#allocation4 + $0x40] sm:$0xff]
        %v4557 = vld [vmem:[#allocation4 + $0x48] sm:$0xff]
        %v4558 = vld [vmem:[#allocation4 + $0x50] sm:$0xff]
        %v4559 = vld [vmem:[#allocation4 + $0x58] sm:$0xff]
        %v4560 = vld [vmem:[#allocation4 + $0x60] sm:$0xff]
        %v4561 = vld [vmem:[#allocation4 + $0x68] sm:$0xff]
        %v4562 = vld [vmem:[#allocation4 + $0x70] sm:$0xff]
        %v4563 = vld [vmem:[#allocation4 + $0x78] sm:$0xff]
        %v4564 = vld [vmem:[#allocation4 + $0x80] sm:$0xff]
        %v4565 = vld [vmem:[#allocation4 + $0x88] sm:$0xff]
        %v4566 = vld [vmem:[#allocation4 + $0x90] sm:$0xff]
        %v4567 = vld [vmem:[#allocation4 + $0x98] sm:$0xff]
        %v4568 = vld [vmem:[#allocation4 + $0xa0] sm:$0xff]
        %v4569 = vld [vmem:[#allocation4 + $0xa8] sm:$0xff]
        %v4570 = vld [vmem:[#allocation4 + $0xb0] sm:$0xff]
        %v4571 = vld [vmem:[#allocation4 + $0xb8] sm:$0xff]
        %v4572 = vld [vmem:[#allocation4 + $0xc0] sm:$0xff]
        %v4573 = vld [vmem:[#allocation4 + $0xc8] sm:$0xff]
        %v4574 = vld [vmem:[#allocation4 + $0xd0] sm:$0xff]
        %v4575 = vld [vmem:[#allocation4 + $0xd8] sm:$0xff]
        %v4576 = vld [vmem:[#allocation4 + $0xe0] sm:$0xff]
        %v4577 = vld [vmem:[#allocation4 + $0xe8] sm:$0xff]
        %v4578 = vld [vmem:[#allocation4 + $0xf0] sm:$0xff]
        %v4579 = vld [vmem:[#allocation4 + $0xf8] sm:$0xff]
        %v4580 = vadd.f32 %v4548, %v4390
        %v4581 = vadd.f32 %v4549, %v4395
        %v4582 = vadd.f32 %v4550, %v4400
        %v4583 = vadd.f32 %v4551, %v4405
        %v4584 = vadd.f32 %v4552, %v4410
        %v4585 = vadd.f32 %v4553, %v4415
        %v4586 = vadd.f32 %v4554, %v4420
        %v4587 = vadd.f32 %v4555, %v4425
        %v4588 = vadd.f32 %v4556, %v4430
        %v4589 = vadd.f32 %v4557, %v4435
        %v4590 = vadd.f32 %v4558, %v4440
        %v4591 = vadd.f32 %v4559, %v4445
        %v4592 = vadd.f32 %v4560, %v4450
        %v4593 = vadd.f32 %v4561, %v4455
        %v4594 = vadd.f32 %v4562, %v4460
        %v4595 = vadd.f32 %v4563, %v4465
        %v4596 = vadd.f32 %v4564, %v4470
        %v4597 = vadd.f32 %v4565, %v4475
        %v4598 = vadd.f32 %v4566, %v4480
        %v4599 = vadd.f32 %v4567, %v4485
        %v4600 = vadd.f32 %v4568, %v4490
        %v4601 = vadd.f32 %v4569, %v4495
        %v4602 = vadd.f32 %v4570, %v4500
        %v4603 = vadd.f32 %v4571, %v4505
        %v4604 = vadd.f32 %v4572, %v4510
        %v4605 = vadd.f32 %v4573, %v4515
        %v4606 = vadd.f32 %v4574, %v4520
        %v4607 = vadd.f32 %v4575, %v4525
        %v4608 = vadd.f32 %v4576, %v4530
        %v4609 = vadd.f32 %v4577, %v4535
        %v4610 = vadd.f32 %v4578, %v4540
        %v4611 = vadd.f32 %v4579, %v4545
        %4612 = vst [vmem:[#allocation4] sm:$0xff] %v4580
        %4613 = vst [vmem:[#allocation4 + $0x8] sm:$0xff] %v4581
        %4614 = vst [vmem:[#allocation4 + $0x10] sm:$0xff] %v4582
        %4615 = vst [vmem:[#allocation4 + $0x18] sm:$0xff] %v4583
        %4616 = vst [vmem:[#allocation4 + $0x20] sm:$0xff] %v4584
        %4617 = vst [vmem:[#allocation4 + $0x28] sm:$0xff] %v4585
        %4618 = vst [vmem:[#allocation4 + $0x30] sm:$0xff] %v4586
        %4619 = vst [vmem:[#allocation4 + $0x38] sm:$0xff] %v4587
        %4620 = vst [vmem:[#allocation4 + $0x40] sm:$0xff] %v4588
        %4621 = vst [vmem:[#allocation4 + $0x48] sm:$0xff] %v4589
        %4622 = vst [vmem:[#allocation4 + $0x50] sm:$0xff] %v4590
        %4623 = vst [vmem:[#allocation4 + $0x58] sm:$0xff] %v4591
        %4624 = vst [vmem:[#allocation4 + $0x60] sm:$0xff] %v4592
        %4625 = vst [vmem:[#allocation4 + $0x68] sm:$0xff] %v4593
        %4626 = vst [vmem:[#allocation4 + $0x70] sm:$0xff] %v4594
        %4627 = vst [vmem:[#allocation4 + $0x78] sm:$0xff] %v4595
        %4628 = vst [vmem:[#allocation4 + $0x80] sm:$0xff] %v4596
        %4629 = vst [vmem:[#allocation4 + $0x88] sm:$0xff] %v4597
        %4630 = vst [vmem:[#allocation4 + $0x90] sm:$0xff] %v4598
        %4631 = vst [vmem:[#allocation4 + $0x98] sm:$0xff] %v4599
        %4632 = vst [vmem:[#allocation4 + $0xa0] sm:$0xff] %v4600
        %4633 = vst [vmem:[#allocation4 + $0xa8] sm:$0xff] %v4601
        %4634 = vst [vmem:[#allocation4 + $0xb0] sm:$0xff] %v4602
        %4635 = vst [vmem:[#allocation4 + $0xb8] sm:$0xff] %v4603
        %4636 = vst [vmem:[#allocation4 + $0xc0] sm:$0xff] %v4604
        %4637 = vst [vmem:[#allocation4 + $0xc8] sm:$0xff] %v4605
        %4638 = vst [vmem:[#allocation4 + $0xd0] sm:$0xff] %v4606
        %4639 = vst [vmem:[#allocation4 + $0xd8] sm:$0xff] %v4607
        %4640 = vst [vmem:[#allocation4 + $0xe0] sm:$0xff] %v4608
        %4641 = vst [vmem:[#allocation4 + $0xe8] sm:$0xff] %v4609
        %4642 = vst [vmem:[#allocation4 + $0xf0] sm:$0xff] %v4610
        %4643 = vst [vmem:[#allocation4 + $0xf8] sm:$0xff] %v4611
        %v4644 = vld [vmem:[#allocation3 + $0x2] sm:$0xff]
        %v4645 = vld [vmem:[#allocation3 + $0xa] sm:$0xff]
        %v4646 = vld [vmem:[#allocation3 + $0x1a] sm:$0xff]
        %v4647 = vld [vmem:[#allocation3 + $0x22] sm:$0xff]
        %v4648 = vld [vmem:[#allocation3 + $0x32] sm:$0xff]
        %v4649 = vld [vmem:[#allocation3 + $0x3a] sm:$0xff]
        %v4650 = vld [vmem:[#allocation3 + $0x4a] sm:$0xff]
        %v4651 = vld [vmem:[#allocation3 + $0x52] sm:$0xff]
        %v4652 = vld [vmem:[#allocation3 + $0x62] sm:$0xff]
        %v4653 = vld [vmem:[#allocation3 + $0x6a] sm:$0xff]
        %v4654 = vld [vmem:[#allocation3 + $0x7a] sm:$0xff]
        %v4655 = vld [vmem:[#allocation3 + $0x82] sm:$0xff]
        %v4656 = vld [vmem:[#allocation3 + $0x92] sm:$0xff]
        %v4657 = vld [vmem:[#allocation3 + $0x9a] sm:$0xff]
        %v4658 = vld [vmem:[#allocation3 + $0xaa] sm:$0xff]
        %v4659 = vld [vmem:[#allocation3 + $0xb2] sm:$0xff]
        %v4660 = vld [vmem:[#allocation3 + $0xc2] sm:$0xff]
        %v4661 = vld [vmem:[#allocation3 + $0xca] sm:$0xff]
        %v4662 = vld [vmem:[#allocation3 + $0xda] sm:$0xff]
        %v4663 = vld [vmem:[#allocation3 + $0xe2] sm:$0xff]
        %v4664 = vld [vmem:[#allocation3 + $0xf2] sm:$0xff]
        %v4665 = vld [vmem:[#allocation3 + $0xfa] sm:$0xff]
        %v4666 = vld [vmem:[#allocation3 + $0x10a] sm:$0xff]
        %v4667 = vld [vmem:[#allocation3 + $0x112] sm:$0xff]
        %v4668 = vld [vmem:[#allocation3 + $0x122] sm:$0xff]
        %v4669 = vld [vmem:[#allocation3 + $0x12a] sm:$0xff]
        %v4670 = vld [vmem:[#allocation3 + $0x13a] sm:$0xff]
        %v4671 = vld [vmem:[#allocation3 + $0x142] sm:$0xff]
        %v4672 = vld [vmem:[#allocation3 + $0x152] sm:$0xff]
        %v4673 = vld [vmem:[#allocation3 + $0x15a] sm:$0xff]
        %v4674 = vld [vmem:[#allocation3 + $0x16a] sm:$0xff]
        %v4675 = vld [vmem:[#allocation3 + $0x172] sm:$0xff]
        %s4676 = scalar_lea.vmem [#allocation7], 256
        %v4677 = vld [vmem:[%s4676] sm:$0xff]
        %v4678 = vld [vmem:[%s4676 + $0x8] sm:$0xff]
        %v4679 = vld [vmem:[%s4676 + $0x10] sm:$0xff]
        %v4680 = vld [vmem:[%s4676 + $0x18] sm:$0xff]
        %v4681 = vld [vmem:[%s4676 + $0x20] sm:$0xff]
        %v4682 = vld [vmem:[%s4676 + $0x28] sm:$0xff]
        %v4683 = vld [vmem:[%s4676 + $0x30] sm:$0xff]
        %v4684 = vld [vmem:[%s4676 + $0x38] sm:$0xff]
        %v4685 = vld [vmem:[%s4676 + $0x40] sm:$0xff]
        %v4686 = vld [vmem:[%s4676 + $0x48] sm:$0xff]
        %v4687 = vld [vmem:[%s4676 + $0x50] sm:$0xff]
        %v4688 = vld [vmem:[%s4676 + $0x58] sm:$0xff]
        %v4689 = vld [vmem:[%s4676 + $0x60] sm:$0xff]
        %v4690 = vld [vmem:[%s4676 + $0x68] sm:$0xff]
        %v4691 = vld [vmem:[%s4676 + $0x70] sm:$0xff]
        %v4692 = vld [vmem:[%s4676 + $0x78] sm:$0xff]
        %4693 = vmatprep.subr.mxu0 0.0
        %4694 = vmatpush1.msra.mxu0 %v4677
        %4695 = vmatprep.subr.mxu0 0.0
        %4696 = vmatpush1.msra.mxu0 %v4678
        %4697 = vmatprep.subr.mxu0 0.0
        %4698 = vmatpush1.msra.mxu0 %v4679
        %4699 = vmatprep.subr.mxu0 0.0
        %4700 = vmatpush1.msra.mxu0 %v4680
        %4701 = vmatprep.subr.mxu0 0.0
        %4702 = vmatpush1.msra.mxu0 %v4681
        %4703 = vmatprep.subr.mxu0 0.0
        %4704 = vmatpush1.msra.mxu0 %v4682
        %4705 = vmatprep.subr.mxu0 0.0
        %4706 = vmatpush1.msra.mxu0 %v4683
        %4707 = vmatprep.subr.mxu0 0.0
        %4708 = vmatpush1.msra.mxu0 %v4684
        %4709 = vmatprep.subr.mxu0 0.0
        %4710 = vmatpush1.msra.mxu0 %v4685
        %4711 = vmatprep.subr.mxu0 0.0
        %4712 = vmatpush1.msra.mxu0 %v4686
        %4713 = vmatprep.subr.mxu0 0.0
        %4714 = vmatpush1.msra.mxu0 %v4687
        %4715 = vmatprep.subr.mxu0 0.0
        %4716 = vmatpush1.msra.mxu0 %v4688
        %4717 = vmatprep.subr.mxu0 0.0
        %4718 = vmatpush1.msra.mxu0 %v4689
        %4719 = vmatprep.subr.mxu0 0.0
        %4720 = vmatpush1.msra.mxu0 %v4690
        %4721 = vmatprep.subr.mxu0 0.0
        %4722 = vmatpush1.msra.mxu0 %v4691
        %4723 = vmatprep.subr.mxu0 0.0
        %4724 = vmatpush1.msra.mxu0 %v4692
        %4725 = vmatprep.subr.mxu0 0.0
        %4726 = vmatpush1.msra.mxu0 0.0
        %4727 = vmatprep.subr.mxu0 0.0
        %4728 = vmatpush1.msra.mxu0 0.0
        %4729 = vmatprep.subr.mxu0 0.0
        %4730 = vmatpush1.msra.mxu0 0.0
        %4731 = vmatprep.subr.mxu0 0.0
        %4732 = vmatpush1.msra.mxu0 0.0
        %4733 = vmatprep.subr.mxu0 0.0
        %4734 = vmatpush1.msra.mxu0 0.0
        %4735 = vmatprep.subr.mxu0 0.0
        %4736 = vmatpush1.msra.mxu0 0.0
        %4737 = vmatprep.subr.mxu0 0.0
        %4738 = vmatpush1.msra.mxu0 0.0
        %4739 = vmatprep.subr.mxu0 0.0
        %4740 = vmatpush1.msra.mxu0 0.0
        %4741 = vmatprep.subr.mxu0 0.0
        %4742 = vmatpush1.msra.mxu0 0.0
        %4743 = vmatprep.subr.mxu0 0.0
        %4744 = vmatpush1.msra.mxu0 0.0
        %4745 = vmatprep.subr.mxu0 0.0
        %4746 = vmatpush1.msra.mxu0 0.0
        %4747 = vmatprep.subr.mxu0 0.0
        %4748 = vmatpush1.msra.mxu0 0.0
        %4749 = vmatprep.subr.mxu0 0.0
        %4750 = vmatpush1.msra.mxu0 0.0
        %4751 = vmatprep.subr.mxu0 0.0
        %4752 = vmatpush1.msra.mxu0 0.0
        %4753 = vmatprep.subr.mxu0 0.0
        %4754 = vmatpush1.msra.mxu0 0.0
        %4755 = vmatprep.subr.mxu0 0.0
        %4756 = vmatpush1.msra.mxu0 0.0
        %4757 = vmatprep.mubr.f32.mxu0 0.0
        %4758 = vmatmul.mubr.f32.gmra.mrb[0].mxu0 %v4644
        %v4759 = vpop.f32.mrb[0].mxu0
        %v4760 = vadd.f32 0.0, %v4759
        %v4761 = vpop.f32.mrb[0].mxu0
        %4762 = vmatprep.mubr.f32.mxu0 0.0
        %4763 = vmatmul.mubr.f32.gmra.mrb[0].mxu0 %v4645
        %v4764 = vpop.f32.mrb[0].mxu0
        %v4765 = vadd.f32 0.0, %v4764
        %v4766 = vpop.f32.mrb[0].mxu0
        %4767 = vmatprep.mubr.f32.mxu0 0.0
        %4768 = vmatmul.mubr.f32.gmra.mrb[0].mxu0 %v4646
        %v4769 = vpop.f32.mrb[0].mxu0
        %v4770 = vadd.f32 0.0, %v4769
        %v4771 = vpop.f32.mrb[0].mxu0
        %4772 = vmatprep.mubr.f32.mxu0 0.0
        %4773 = vmatmul.mubr.f32.gmra.mrb[0].mxu0 %v4647
        %v4774 = vpop.f32.mrb[0].mxu0
        %v4775 = vadd.f32 0.0, %v4774
        %v4776 = vpop.f32.mrb[0].mxu0
        %4777 = vmatprep.mubr.f32.mxu0 0.0
        %4778 = vmatmul.mubr.f32.gmra.mrb[0].mxu0 %v4648
        %v4779 = vpop.f32.mrb[0].mxu0
        %v4780 = vadd.f32 0.0, %v4779
        %v4781 = vpop.f32.mrb[0].mxu0
        %4782 = vmatprep.mubr.f32.mxu0 0.0
        %4783 = vmatmul.mubr.f32.gmra.mrb[0].mxu0 %v4649
        %v4784 = vpop.f32.mrb[0].mxu0
        %v4785 = vadd.f32 0.0, %v4784
        %v4786 = vpop.f32.mrb[0].mxu0
        %4787 = vmatprep.mubr.f32.mxu0 0.0
        %4788 = vmatmul.mubr.f32.gmra.mrb[0].mxu0 %v4650
        %v4789 = vpop.f32.mrb[0].mxu0
        %v4790 = vadd.f32 0.0, %v4789
        %v4791 = vpop.f32.mrb[0].mxu0
        %4792 = vmatprep.mubr.f32.mxu0 0.0
        %4793 = vmatmul.mubr.f32.gmra.mrb[0].mxu0 %v4651
        %v4794 = vpop.f32.mrb[0].mxu0
        %v4795 = vadd.f32 0.0, %v4794
        %v4796 = vpop.f32.mrb[0].mxu0
        %4797 = vmatprep.mubr.f32.mxu0 0.0
        %4798 = vmatmul.mubr.f32.gmra.mrb[0].mxu0 %v4652
        %v4799 = vpop.f32.mrb[0].mxu0
        %v4800 = vadd.f32 0.0, %v4799
        %v4801 = vpop.f32.mrb[0].mxu0
        %4802 = vmatprep.mubr.f32.mxu0 0.0
        %4803 = vmatmul.mubr.f32.gmra.mrb[0].mxu0 %v4653
        %v4804 = vpop.f32.mrb[0].mxu0
        %v4805 = vadd.f32 0.0, %v4804
        %v4806 = vpop.f32.mrb[0].mxu0
        %4807 = vmatprep.mubr.f32.mxu0 0.0
        %4808 = vmatmul.mubr.f32.gmra.mrb[0].mxu0 %v4654
        %v4809 = vpop.f32.mrb[0].mxu0
        %v4810 = vadd.f32 0.0, %v4809
        %v4811 = vpop.f32.mrb[0].mxu0
        %4812 = vmatprep.mubr.f32.mxu0 0.0
        %4813 = vmatmul.mubr.f32.gmra.mrb[0].mxu0 %v4655
        %v4814 = vpop.f32.mrb[0].mxu0
        %v4815 = vadd.f32 0.0, %v4814
        %v4816 = vpop.f32.mrb[0].mxu0
        %4817 = vmatprep.mubr.f32.mxu0 0.0
        %4818 = vmatmul.mubr.f32.gmra.mrb[0].mxu0 %v4656
        %v4819 = vpop.f32.mrb[0].mxu0
        %v4820 = vadd.f32 0.0, %v4819
        %v4821 = vpop.f32.mrb[0].mxu0
        %4822 = vmatprep.mubr.f32.mxu0 0.0
        %4823 = vmatmul.mubr.f32.gmra.mrb[0].mxu0 %v4657
        %v4824 = vpop.f32.mrb[0].mxu0
        %v4825 = vadd.f32 0.0, %v4824
        %v4826 = vpop.f32.mrb[0].mxu0
        %4827 = vmatprep.mubr.f32.mxu0 0.0
        %4828 = vmatmul.mubr.f32.gmra.mrb[0].mxu0 %v4658
        %v4829 = vpop.f32.mrb[0].mxu0
        %v4830 = vadd.f32 0.0, %v4829
        %v4831 = vpop.f32.mrb[0].mxu0
        %4832 = vmatprep.mubr.f32.mxu0 0.0
        %4833 = vmatmul.mubr.f32.gmra.mrb[0].mxu0 %v4659
        %v4834 = vpop.f32.mrb[0].mxu0
        %v4835 = vadd.f32 0.0, %v4834
        %v4836 = vpop.f32.mrb[0].mxu0
        %4837 = vmatprep.mubr.f32.mxu0 0.0
        %4838 = vmatmul.mubr.f32.gmra.mrb[0].mxu0 %v4660
        %v4839 = vpop.f32.mrb[0].mxu0
        %v4840 = vadd.f32 0.0, %v4839
        %v4841 = vpop.f32.mrb[0].mxu0
        %4842 = vmatprep.mubr.f32.mxu0 0.0
        %4843 = vmatmul.mubr.f32.gmra.mrb[0].mxu0 %v4661
        %v4844 = vpop.f32.mrb[0].mxu0
        %v4845 = vadd.f32 0.0, %v4844
        %v4846 = vpop.f32.mrb[0].mxu0
        %4847 = vmatprep.mubr.f32.mxu0 0.0
        %4848 = vmatmul.mubr.f32.gmra.mrb[0].mxu0 %v4662
        %v4849 = vpop.f32.mrb[0].mxu0
        %v4850 = vadd.f32 0.0, %v4849
        %v4851 = vpop.f32.mrb[0].mxu0
        %4852 = vmatprep.mubr.f32.mxu0 0.0
        %4853 = vmatmul.mubr.f32.gmra.mrb[0].mxu0 %v4663
        %v4854 = vpop.f32.mrb[0].mxu0
        %v4855 = vadd.f32 0.0, %v4854
        %v4856 = vpop.f32.mrb[0].mxu0
        %4857 = vmatprep.mubr.f32.mxu0 0.0
        %4858 = vmatmul.mubr.f32.gmra.mrb[0].mxu0 %v4664
        %v4859 = vpop.f32.mrb[0].mxu0
        %v4860 = vadd.f32 0.0, %v4859
        %v4861 = vpop.f32.mrb[0].mxu0
        %4862 = vmatprep.mubr.f32.mxu0 0.0
        %4863 = vmatmul.mubr.f32.gmra.mrb[0].mxu0 %v4665
        %v4864 = vpop.f32.mrb[0].mxu0
        %v4865 = vadd.f32 0.0, %v4864
        %v4866 = vpop.f32.mrb[0].mxu0
        %4867 = vmatprep.mubr.f32.mxu0 0.0
        %4868 = vmatmul.mubr.f32.gmra.mrb[0].mxu0 %v4666
        %v4869 = vpop.f32.mrb[0].mxu0
        %v4870 = vadd.f32 0.0, %v4869
        %v4871 = vpop.f32.mrb[0].mxu0
        %4872 = vmatprep.mubr.f32.mxu0 0.0
        %4873 = vmatmul.mubr.f32.gmra.mrb[0].mxu0 %v4667
        %v4874 = vpop.f32.mrb[0].mxu0
        %v4875 = vadd.f32 0.0, %v4874
        %v4876 = vpop.f32.mrb[0].mxu0
        %4877 = vmatprep.mubr.f32.mxu0 0.0
        %4878 = vmatmul.mubr.f32.gmra.mrb[0].mxu0 %v4668
        %v4879 = vpop.f32.mrb[0].mxu0
        %v4880 = vadd.f32 0.0, %v4879
        %v4881 = vpop.f32.mrb[0].mxu0
        %4882 = vmatprep.mubr.f32.mxu0 0.0
        %4883 = vmatmul.mubr.f32.gmra.mrb[0].mxu0 %v4669
        %v4884 = vpop.f32.mrb[0].mxu0
        %v4885 = vadd.f32 0.0, %v4884
        %v4886 = vpop.f32.mrb[0].mxu0
        %4887 = vmatprep.mubr.f32.mxu0 0.0
        %4888 = vmatmul.mubr.f32.gmra.mrb[0].mxu0 %v4670
        %v4889 = vpop.f32.mrb[0].mxu0
        %v4890 = vadd.f32 0.0, %v4889
        %v4891 = vpop.f32.mrb[0].mxu0
        %4892 = vmatprep.mubr.f32.mxu0 0.0
        %4893 = vmatmul.mubr.f32.gmra.mrb[0].mxu0 %v4671
        %v4894 = vpop.f32.mrb[0].mxu0
        %v4895 = vadd.f32 0.0, %v4894
        %v4896 = vpop.f32.mrb[0].mxu0
        %4897 = vmatprep.mubr.f32.mxu0 0.0
        %4898 = vmatmul.mubr.f32.gmra.mrb[0].mxu0 %v4672
        %v4899 = vpop.f32.mrb[0].mxu0
        %v4900 = vadd.f32 0.0, %v4899
        %v4901 = vpop.f32.mrb[0].mxu0
        %4902 = vmatprep.mubr.f32.mxu0 0.0
        %4903 = vmatmul.mubr.f32.gmra.mrb[0].mxu0 %v4673
        %v4904 = vpop.f32.mrb[0].mxu0
        %v4905 = vadd.f32 0.0, %v4904
        %v4906 = vpop.f32.mrb[0].mxu0
        %4907 = vmatprep.mubr.f32.mxu0 0.0
        %4908 = vmatmul.mubr.f32.gmra.mrb[0].mxu0 %v4674
        %v4909 = vpop.f32.mrb[0].mxu0
        %v4910 = vadd.f32 0.0, %v4909
        %v4911 = vpop.f32.mrb[0].mxu0
        %4912 = vmatprep.mubr.f32.mxu0 0.0
        %4913 = vmatmul.mubr.f32.gmra.mrb[0].mxu0 %v4675
        %v4914 = vpop.f32.mrb[0].mxu0
        %v4915 = vadd.f32 0.0, %v4914
        %v4916 = vpop.f32.mrb[0].mxu0
        %4917 = vdwg.mxu0
        %v4918 = vld [vmem:[#allocation4] sm:$0xff]
        %v4919 = vld [vmem:[#allocation4 + $0x8] sm:$0xff]
        %v4920 = vld [vmem:[#allocation4 + $0x10] sm:$0xff]
        %v4921 = vld [vmem:[#allocation4 + $0x18] sm:$0xff]
        %v4922 = vld [vmem:[#allocation4 + $0x20] sm:$0xff]
        %v4923 = vld [vmem:[#allocation4 + $0x28] sm:$0xff]
        %v4924 = vld [vmem:[#allocation4 + $0x30] sm:$0xff]
        %v4925 = vld [vmem:[#allocation4 + $0x38] sm:$0xff]
        %v4926 = vld [vmem:[#allocation4 + $0x40] sm:$0xff]
        %v4927 = vld [vmem:[#allocation4 + $0x48] sm:$0xff]
        %v4928 = vld [vmem:[#allocation4 + $0x50] sm:$0xff]
        %v4929 = vld [vmem:[#allocation4 + $0x58] sm:$0xff]
        %v4930 = vld [vmem:[#allocation4 + $0x60] sm:$0xff]
        %v4931 = vld [vmem:[#allocation4 + $0x68] sm:$0xff]
        %v4932 = vld [vmem:[#allocation4 + $0x70] sm:$0xff]
        %v4933 = vld [vmem:[#allocation4 + $0x78] sm:$0xff]
        %v4934 = vld [vmem:[#allocation4 + $0x80] sm:$0xff]
        %v4935 = vld [vmem:[#allocation4 + $0x88] sm:$0xff]
        %v4936 = vld [vmem:[#allocation4 + $0x90] sm:$0xff]
        %v4937 = vld [vmem:[#allocation4 + $0x98] sm:$0xff]
        %v4938 = vld [vmem:[#allocation4 + $0xa0] sm:$0xff]
        %v4939 = vld [vmem:[#allocation4 + $0xa8] sm:$0xff]
        %v4940 = vld [vmem:[#allocation4 + $0xb0] sm:$0xff]
        %v4941 = vld [vmem:[#allocation4 + $0xb8] sm:$0xff]
        %v4942 = vld [vmem:[#allocation4 + $0xc0] sm:$0xff]
        %v4943 = vld [vmem:[#allocation4 + $0xc8] sm:$0xff]
        %v4944 = vld [vmem:[#allocation4 + $0xd0] sm:$0xff]
        %v4945 = vld [vmem:[#allocation4 + $0xd8] sm:$0xff]
        %v4946 = vld [vmem:[#allocation4 + $0xe0] sm:$0xff]
        %v4947 = vld [vmem:[#allocation4 + $0xe8] sm:$0xff]
        %v4948 = vld [vmem:[#allocation4 + $0xf0] sm:$0xff]
        %v4949 = vld [vmem:[#allocation4 + $0xf8] sm:$0xff]
        %v4950 = vadd.f32 %v4918, %v4760
        %v4951 = vadd.f32 %v4919, %v4765
        %v4952 = vadd.f32 %v4920, %v4770
        %v4953 = vadd.f32 %v4921, %v4775
        %v4954 = vadd.f32 %v4922, %v4780
        %v4955 = vadd.f32 %v4923, %v4785
        %v4956 = vadd.f32 %v4924, %v4790
        %v4957 = vadd.f32 %v4925, %v4795
        %v4958 = vadd.f32 %v4926, %v4800
        %v4959 = vadd.f32 %v4927, %v4805
        %v4960 = vadd.f32 %v4928, %v4810
        %v4961 = vadd.f32 %v4929, %v4815
        %v4962 = vadd.f32 %v4930, %v4820
        %v4963 = vadd.f32 %v4931, %v4825
        %v4964 = vadd.f32 %v4932, %v4830
        %v4965 = vadd.f32 %v4933, %v4835
        %v4966 = vadd.f32 %v4934, %v4840
        %v4967 = vadd.f32 %v4935, %v4845
        %v4968 = vadd.f32 %v4936, %v4850
        %v4969 = vadd.f32 %v4937, %v4855
        %v4970 = vadd.f32 %v4938, %v4860
        %v4971 = vadd.f32 %v4939, %v4865
        %v4972 = vadd.f32 %v4940, %v4870
        %v4973 = vadd.f32 %v4941, %v4875
        %v4974 = vadd.f32 %v4942, %v4880
        %v4975 = vadd.f32 %v4943, %v4885
        %v4976 = vadd.f32 %v4944, %v4890
        %v4977 = vadd.f32 %v4945, %v4895
        %v4978 = vadd.f32 %v4946, %v4900
        %v4979 = vadd.f32 %v4947, %v4905
        %v4980 = vadd.f32 %v4948, %v4910
        %v4981 = vadd.f32 %v4949, %v4915
        %4982 = vst [vmem:[#allocation4] sm:$0xff] %v4950
        %4983 = vst [vmem:[#allocation4 + $0x8] sm:$0xff] %v4951
        %4984 = vst [vmem:[#allocation4 + $0x10] sm:$0xff] %v4952
        %4985 = vst [vmem:[#allocation4 + $0x18] sm:$0xff] %v4953
        %4986 = vst [vmem:[#allocation4 + $0x20] sm:$0xff] %v4954
        %4987 = vst [vmem:[#allocation4 + $0x28] sm:$0xff] %v4955
        %4988 = vst [vmem:[#allocation4 + $0x30] sm:$0xff] %v4956
        %4989 = vst [vmem:[#allocation4 + $0x38] sm:$0xff] %v4957
        %4990 = vst [vmem:[#allocation4 + $0x40] sm:$0xff] %v4958
        %4991 = vst [vmem:[#allocation4 + $0x48] sm:$0xff] %v4959
        %4992 = vst [vmem:[#allocation4 + $0x50] sm:$0xff] %v4960
        %4993 = vst [vmem:[#allocation4 + $0x58] sm:$0xff] %v4961
        %4994 = vst [vmem:[#allocation4 + $0x60] sm:$0xff] %v4962
        %4995 = vst [vmem:[#allocation4 + $0x68] sm:$0xff] %v4963
        %4996 = vst [vmem:[#allocation4 + $0x70] sm:$0xff] %v4964
        %4997 = vst [vmem:[#allocation4 + $0x78] sm:$0xff] %v4965
        %4998 = vst [vmem:[#allocation4 + $0x80] sm:$0xff] %v4966
        %4999 = vst [vmem:[#allocation4 + $0x88] sm:$0xff] %v4967
        %5000 = vst [vmem:[#allocation4 + $0x90] sm:$0xff] %v4968
        %5001 = vst [vmem:[#allocation4 + $0x98] sm:$0xff] %v4969
        %5002 = vst [vmem:[#allocation4 + $0xa0] sm:$0xff] %v4970
        %5003 = vst [vmem:[#allocation4 + $0xa8] sm:$0xff] %v4971
        %5004 = vst [vmem:[#allocation4 + $0xb0] sm:$0xff] %v4972
        %5005 = vst [vmem:[#allocation4 + $0xb8] sm:$0xff] %v4973
        %5006 = vst [vmem:[#allocation4 + $0xc0] sm:$0xff] %v4974
        %5007 = vst [vmem:[#allocation4 + $0xc8] sm:$0xff] %v4975
        %5008 = vst [vmem:[#allocation4 + $0xd0] sm:$0xff] %v4976
        %5009 = vst [vmem:[#allocation4 + $0xd8] sm:$0xff] %v4977
        %5010 = vst [vmem:[#allocation4 + $0xe0] sm:$0xff] %v4978
        %5011 = vst [vmem:[#allocation4 + $0xe8] sm:$0xff] %v4979
        %5012 = vst [vmem:[#allocation4 + $0xf0] sm:$0xff] %v4980
        %5013 = vst [vmem:[#allocation4 + $0xf8] sm:$0xff] %v4981
        %v5014 = vld [vmem:[%s3936] sm:$0xff]
        %v5015 = vld [vmem:[%s3936 + $0x8] sm:$0xff]
        %v5016 = vld [vmem:[%s3936 + $0x18] sm:$0xff]
        %v5017 = vld [vmem:[%s3936 + $0x20] sm:$0xff]
        %v5018 = vld [vmem:[%s3936 + $0x30] sm:$0xff]
        %v5019 = vld [vmem:[%s3936 + $0x38] sm:$0xff]
        %v5020 = vld [vmem:[%s3936 + $0x48] sm:$0xff]
        %v5021 = vld [vmem:[%s3936 + $0x50] sm:$0xff]
        %v5022 = vld [vmem:[%s3936 + $0x60] sm:$0xff]
        %v5023 = vld [vmem:[%s3936 + $0x68] sm:$0xff]
        %v5024 = vld [vmem:[%s3936 + $0x78] sm:$0xff]
        %v5025 = vld [vmem:[%s3936 + $0x80] sm:$0xff]
        %v5026 = vld [vmem:[%s3936 + $0x90] sm:$0xff]
        %v5027 = vld [vmem:[%s3936 + $0x98] sm:$0xff]
        %v5028 = vld [vmem:[%s3936 + $0xa8] sm:$0xff]
        %v5029 = vld [vmem:[%s3936 + $0xb0] sm:$0xff]
        %v5030 = vld [vmem:[%s3936 + $0xc0] sm:$0xff]
        %v5031 = vld [vmem:[%s3936 + $0xc8] sm:$0xff]
        %v5032 = vld [vmem:[%s3936 + $0xd8] sm:$0xff]
        %v5033 = vld [vmem:[%s3936 + $0xe0] sm:$0xff]
        %v5034 = vld [vmem:[%s3936 + $0xf0] sm:$0xff]
        %v5035 = vld [vmem:[%s3936 + $0xf8] sm:$0xff]
        %v5036 = vld [vmem:[%s3936 + $0x108] sm:$0xff]
        %v5037 = vld [vmem:[%s3936 + $0x110] sm:$0xff]
        %v5038 = vld [vmem:[%s3936 + $0x120] sm:$0xff]
        %v5039 = vld [vmem:[%s3936 + $0x128] sm:$0xff]
        %v5040 = vld [vmem:[%s3936 + $0x138] sm:$0xff]
        %v5041 = vld [vmem:[%s3936 + $0x140] sm:$0xff]
        %v5042 = vld [vmem:[%s3936 + $0x150] sm:$0xff]
        %v5043 = vld [vmem:[%s3936 + $0x158] sm:$0xff]
        %v5044 = vld [vmem:[%s3936 + $0x168] sm:$0xff]
        %v5045 = vld [vmem:[%s3936 + $0x170] sm:$0xff]
        %s5046 = scalar_lea.vmem [#allocation7], 384
        %v5047 = vld [vmem:[%s5046] sm:$0xff]
        %v5048 = vld [vmem:[%s5046 + $0x8] sm:$0xff]
        %v5049 = vld [vmem:[%s5046 + $0x10] sm:$0xff]
        %v5050 = vld [vmem:[%s5046 + $0x18] sm:$0xff]
        %v5051 = vld [vmem:[%s5046 + $0x20] sm:$0xff]
        %v5052 = vld [vmem:[%s5046 + $0x28] sm:$0xff]
        %v5053 = vld [vmem:[%s5046 + $0x30] sm:$0xff]
        %v5054 = vld [vmem:[%s5046 + $0x38] sm:$0xff]
        %v5055 = vld [vmem:[%s5046 + $0x40] sm:$0xff]
        %v5056 = vld [vmem:[%s5046 + $0x48] sm:$0xff]
        %v5057 = vld [vmem:[%s5046 + $0x50] sm:$0xff]
        %v5058 = vld [vmem:[%s5046 + $0x58] sm:$0xff]
        %v5059 = vld [vmem:[%s5046 + $0x60] sm:$0xff]
        %v5060 = vld [vmem:[%s5046 + $0x68] sm:$0xff]
        %v5061 = vld [vmem:[%s5046 + $0x70] sm:$0xff]
        %v5062 = vld [vmem:[%s5046 + $0x78] sm:$0xff]
        %5063 = vmatprep.subr.mxu0 0.0
        %5064 = vmatpush1.msra.mxu0 %v5047
        %5065 = vmatprep.subr.mxu0 0.0
        %5066 = vmatpush1.msra.mxu0 %v5048
        %5067 = vmatprep.subr.mxu0 0.0
        %5068 = vmatpush1.msra.mxu0 %v5049
        %5069 = vmatprep.subr.mxu0 0.0
        %5070 = vmatpush1.msra.mxu0 %v5050
        %5071 = vmatprep.subr.mxu0 0.0
        %5072 = vmatpush1.msra.mxu0 %v5051
        %5073 = vmatprep.subr.mxu0 0.0
        %5074 = vmatpush1.msra.mxu0 %v5052
        %5075 = vmatprep.subr.mxu0 0.0
        %5076 = vmatpush1.msra.mxu0 %v5053
        %5077 = vmatprep.subr.mxu0 0.0
        %5078 = vmatpush1.msra.mxu0 %v5054
        %5079 = vmatprep.subr.mxu0 0.0
        %5080 = vmatpush1.msra.mxu0 %v5055
        %5081 = vmatprep.subr.mxu0 0.0
        %5082 = vmatpush1.msra.mxu0 %v5056
        %5083 = vmatprep.subr.mxu0 0.0
        %5084 = vmatpush1.msra.mxu0 %v5057
        %5085 = vmatprep.subr.mxu0 0.0
        %5086 = vmatpush1.msra.mxu0 %v5058
        %5087 = vmatprep.subr.mxu0 0.0
        %5088 = vmatpush1.msra.mxu0 %v5059
        %5089 = vmatprep.subr.mxu0 0.0
        %5090 = vmatpush1.msra.mxu0 %v5060
        %5091 = vmatprep.subr.mxu0 0.0
        %5092 = vmatpush1.msra.mxu0 %v5061
        %5093 = vmatprep.subr.mxu0 0.0
        %5094 = vmatpush1.msra.mxu0 %v5062
        %5095 = vmatprep.subr.mxu0 0.0
        %5096 = vmatpush1.msra.mxu0 0.0
        %5097 = vmatprep.subr.mxu0 0.0
        %5098 = vmatpush1.msra.mxu0 0.0
        %5099 = vmatprep.subr.mxu0 0.0
        %5100 = vmatpush1.msra.mxu0 0.0
        %5101 = vmatprep.subr.mxu0 0.0
        %5102 = vmatpush1.msra.mxu0 0.0
        %5103 = vmatprep.subr.mxu0 0.0
        %5104 = vmatpush1.msra.mxu0 0.0
        %5105 = vmatprep.subr.mxu0 0.0
        %5106 = vmatpush1.msra.mxu0 0.0
        %5107 = vmatprep.subr.mxu0 0.0
        %5108 = vmatpush1.msra.mxu0 0.0
        %5109 = vmatprep.subr.mxu0 0.0
        %5110 = vmatpush1.msra.mxu0 0.0
        %5111 = vmatprep.subr.mxu0 0.0
        %5112 = vmatpush1.msra.mxu0 0.0
        %5113 = vmatprep.subr.mxu0 0.0
        %5114 = vmatpush1.msra.mxu0 0.0
        %5115 = vmatprep.subr.mxu0 0.0
        %5116 = vmatpush1.msra.mxu0 0.0
        %5117 = vmatprep.subr.mxu0 0.0
        %5118 = vmatpush1.msra.mxu0 0.0
        %5119 = vmatprep.subr.mxu0 0.0
        %5120 = vmatpush1.msra.mxu0 0.0
        %5121 = vmatprep.subr.mxu0 0.0
        %5122 = vmatpush1.msra.mxu0 0.0
        %5123 = vmatprep.subr.mxu0 0.0
        %5124 = vmatpush1.msra.mxu0 0.0
        %5125 = vmatprep.subr.mxu0 0.0
        %5126 = vmatpush1.msra.mxu0 0.0
        %5127 = vmatprep.mubr.f32.mxu0 0.0
        %5128 = vmatmul.mubr.f32.gmra.mrb[0].mxu0 %v5014
        %v5129 = vpop.f32.mrb[0].mxu0
        %v5130 = vadd.f32 0.0, %v5129
        %v5131 = vpop.f32.mrb[0].mxu0
        %5132 = vmatprep.mubr.f32.mxu0 0.0
        %5133 = vmatmul.mubr.f32.gmra.mrb[0].mxu0 %v5015
        %v5134 = vpop.f32.mrb[0].mxu0
        %v5135 = vadd.f32 0.0, %v5134
        %v5136 = vpop.f32.mrb[0].mxu0
        %5137 = vmatprep.mubr.f32.mxu0 0.0
        %5138 = vmatmul.mubr.f32.gmra.mrb[0].mxu0 %v5016
        %v5139 = vpop.f32.mrb[0].mxu0
        %v5140 = vadd.f32 0.0, %v5139
        %v5141 = vpop.f32.mrb[0].mxu0
        %5142 = vmatprep.mubr.f32.mxu0 0.0
        %5143 = vmatmul.mubr.f32.gmra.mrb[0].mxu0 %v5017
        %v5144 = vpop.f32.mrb[0].mxu0
        %v5145 = vadd.f32 0.0, %v5144
        %v5146 = vpop.f32.mrb[0].mxu0
        %5147 = vmatprep.mubr.f32.mxu0 0.0
        %5148 = vmatmul.mubr.f32.gmra.mrb[0].mxu0 %v5018
        %v5149 = vpop.f32.mrb[0].mxu0
        %v5150 = vadd.f32 0.0, %v5149
        %v5151 = vpop.f32.mrb[0].mxu0
        %5152 = vmatprep.mubr.f32.mxu0 0.0
        %5153 = vmatmul.mubr.f32.gmra.mrb[0].mxu0 %v5019
        %v5154 = vpop.f32.mrb[0].mxu0
        %v5155 = vadd.f32 0.0, %v5154
        %v5156 = vpop.f32.mrb[0].mxu0
        %5157 = vmatprep.mubr.f32.mxu0 0.0
        %5158 = vmatmul.mubr.f32.gmra.mrb[0].mxu0 %v5020
        %v5159 = vpop.f32.mrb[0].mxu0
        %v5160 = vadd.f32 0.0, %v5159
        %v5161 = vpop.f32.mrb[0].mxu0
        %5162 = vmatprep.mubr.f32.mxu0 0.0
        %5163 = vmatmul.mubr.f32.gmra.mrb[0].mxu0 %v5021
        %v5164 = vpop.f32.mrb[0].mxu0
        %v5165 = vadd.f32 0.0, %v5164
        %v5166 = vpop.f32.mrb[0].mxu0
        %5167 = vmatprep.mubr.f32.mxu0 0.0
        %5168 = vmatmul.mubr.f32.gmra.mrb[0].mxu0 %v5022
        %v5169 = vpop.f32.mrb[0].mxu0
        %v5170 = vadd.f32 0.0, %v5169
        %v5171 = vpop.f32.mrb[0].mxu0
        %5172 = vmatprep.mubr.f32.mxu0 0.0
        %5173 = vmatmul.mubr.f32.gmra.mrb[0].mxu0 %v5023
        %v5174 = vpop.f32.mrb[0].mxu0
        %v5175 = vadd.f32 0.0, %v5174
        %v5176 = vpop.f32.mrb[0].mxu0
        %5177 = vmatprep.mubr.f32.mxu0 0.0
        %5178 = vmatmul.mubr.f32.gmra.mrb[0].mxu0 %v5024
        %v5179 = vpop.f32.mrb[0].mxu0
        %v5180 = vadd.f32 0.0, %v5179
        %v5181 = vpop.f32.mrb[0].mxu0
        %5182 = vmatprep.mubr.f32.mxu0 0.0
        %5183 = vmatmul.mubr.f32.gmra.mrb[0].mxu0 %v5025
        %v5184 = vpop.f32.mrb[0].mxu0
        %v5185 = vadd.f32 0.0, %v5184
        %v5186 = vpop.f32.mrb[0].mxu0
        %5187 = vmatprep.mubr.f32.mxu0 0.0
        %5188 = vmatmul.mubr.f32.gmra.mrb[0].mxu0 %v5026
        %v5189 = vpop.f32.mrb[0].mxu0
        %v5190 = vadd.f32 0.0, %v5189
        %v5191 = vpop.f32.mrb[0].mxu0
        %5192 = vmatprep.mubr.f32.mxu0 0.0
        %5193 = vmatmul.mubr.f32.gmra.mrb[0].mxu0 %v5027
        %v5194 = vpop.f32.mrb[0].mxu0
        %v5195 = vadd.f32 0.0, %v5194
        %v5196 = vpop.f32.mrb[0].mxu0
        %5197 = vmatprep.mubr.f32.mxu0 0.0
        %5198 = vmatmul.mubr.f32.gmra.mrb[0].mxu0 %v5028
        %v5199 = vpop.f32.mrb[0].mxu0
        %v5200 = vadd.f32 0.0, %v5199
        %v5201 = vpop.f32.mrb[0].mxu0
        %5202 = vmatprep.mubr.f32.mxu0 0.0
        %5203 = vmatmul.mubr.f32.gmra.mrb[0].mxu0 %v5029
        %v5204 = vpop.f32.mrb[0].mxu0
        %v5205 = vadd.f32 0.0, %v5204
        %v5206 = vpop.f32.mrb[0].mxu0
        %5207 = vmatprep.mubr.f32.mxu0 0.0
        %5208 = vmatmul.mubr.f32.gmra.mrb[0].mxu0 %v5030
        %v5209 = vpop.f32.mrb[0].mxu0
        %v5210 = vadd.f32 0.0, %v5209
        %v5211 = vpop.f32.mrb[0].mxu0
        %5212 = vmatprep.mubr.f32.mxu0 0.0
        %5213 = vmatmul.mubr.f32.gmra.mrb[0].mxu0 %v5031
        %v5214 = vpop.f32.mrb[0].mxu0
        %v5215 = vadd.f32 0.0, %v5214
        %v5216 = vpop.f32.mrb[0].mxu0
        %5217 = vmatprep.mubr.f32.mxu0 0.0
        %5218 = vmatmul.mubr.f32.gmra.mrb[0].mxu0 %v5032
        %v5219 = vpop.f32.mrb[0].mxu0
        %v5220 = vadd.f32 0.0, %v5219
        %v5221 = vpop.f32.mrb[0].mxu0
        %5222 = vmatprep.mubr.f32.mxu0 0.0
        %5223 = vmatmul.mubr.f32.gmra.mrb[0].mxu0 %v5033
        %v5224 = vpop.f32.mrb[0].mxu0
        %v5225 = vadd.f32 0.0, %v5224
        %v5226 = vpop.f32.mrb[0].mxu0
        %5227 = vmatprep.mubr.f32.mxu0 0.0
        %5228 = vmatmul.mubr.f32.gmra.mrb[0].mxu0 %v5034
        %v5229 = vpop.f32.mrb[0].mxu0
        %v5230 = vadd.f32 0.0, %v5229
        %v5231 = vpop.f32.mrb[0].mxu0
        %5232 = vmatprep.mubr.f32.mxu0 0.0
        %5233 = vmatmul.mubr.f32.gmra.mrb[0].mxu0 %v5035
        %v5234 = vpop.f32.mrb[0].mxu0
        %v5235 = vadd.f32 0.0, %v5234
        %v5236 = vpop.f32.mrb[0].mxu0
        %5237 = vmatprep.mubr.f32.mxu0 0.0
        %5238 = vmatmul.mubr.f32.gmra.mrb[0].mxu0 %v5036
        %v5239 = vpop.f32.mrb[0].mxu0
        %v5240 = vadd.f32 0.0, %v5239
        %v5241 = vpop.f32.mrb[0].mxu0
        %5242 = vmatprep.mubr.f32.mxu0 0.0
        %5243 = vmatmul.mubr.f32.gmra.mrb[0].mxu0 %v5037
        %v5244 = vpop.f32.mrb[0].mxu0
        %v5245 = vadd.f32 0.0, %v5244
        %v5246 = vpop.f32.mrb[0].mxu0
        %5247 = vmatprep.mubr.f32.mxu0 0.0
        %5248 = vmatmul.mubr.f32.gmra.mrb[0].mxu0 %v5038
        %v5249 = vpop.f32.mrb[0].mxu0
        %v5250 = vadd.f32 0.0, %v5249
        %v5251 = vpop.f32.mrb[0].mxu0
        %5252 = vmatprep.mubr.f32.mxu0 0.0
        %5253 = vmatmul.mubr.f32.gmra.mrb[0].mxu0 %v5039
        %v5254 = vpop.f32.mrb[0].mxu0
        %v5255 = vadd.f32 0.0, %v5254
        %v5256 = vpop.f32.mrb[0].mxu0
        %5257 = vmatprep.mubr.f32.mxu0 0.0
        %5258 = vmatmul.mubr.f32.gmra.mrb[0].mxu0 %v5040
        %v5259 = vpop.f32.mrb[0].mxu0
        %v5260 = vadd.f32 0.0, %v5259
        %v5261 = vpop.f32.mrb[0].mxu0
        %5262 = vmatprep.mubr.f32.mxu0 0.0
        %5263 = vmatmul.mubr.f32.gmra.mrb[0].mxu0 %v5041
        %v5264 = vpop.f32.mrb[0].mxu0
        %v5265 = vadd.f32 0.0, %v5264
        %v5266 = vpop.f32.mrb[0].mxu0
        %5267 = vmatprep.mubr.f32.mxu0 0.0
        %5268 = vmatmul.mubr.f32.gmra.mrb[0].mxu0 %v5042
        %v5269 = vpop.f32.mrb[0].mxu0
        %v5270 = vadd.f32 0.0, %v5269
        %v5271 = vpop.f32.mrb[0].mxu0
        %5272 = vmatprep.mubr.f32.mxu0 0.0
        %5273 = vmatmul.mubr.f32.gmra.mrb[0].mxu0 %v5043
        %v5274 = vpop.f32.mrb[0].mxu0
        %v5275 = vadd.f32 0.0, %v5274
        %v5276 = vpop.f32.mrb[0].mxu0
        %5277 = vmatprep.mubr.f32.mxu0 0.0
        %5278 = vmatmul.mubr.f32.gmra.mrb[0].mxu0 %v5044
        %v5279 = vpop.f32.mrb[0].mxu0
        %v5280 = vadd.f32 0.0, %v5279
        %v5281 = vpop.f32.mrb[0].mxu0
        %5282 = vmatprep.mubr.f32.mxu0 0.0
        %5283 = vmatmul.mubr.f32.gmra.mrb[0].mxu0 %v5045
        %v5284 = vpop.f32.mrb[0].mxu0
        %v5285 = vadd.f32 0.0, %v5284
        %v5286 = vpop.f32.mrb[0].mxu0
        %5287 = vdwg.mxu0
        %v5288 = vld [vmem:[#allocation4] sm:$0xff]
        %v5289 = vld [vmem:[#allocation4 + $0x8] sm:$0xff]
        %v5290 = vld [vmem:[#allocation4 + $0x10] sm:$0xff]
        %v5291 = vld [vmem:[#allocation4 + $0x18] sm:$0xff]
        %v5292 = vld [vmem:[#allocation4 + $0x20] sm:$0xff]
        %v5293 = vld [vmem:[#allocation4 + $0x28] sm:$0xff]
        %v5294 = vld [vmem:[#allocation4 + $0x30] sm:$0xff]
        %v5295 = vld [vmem:[#allocation4 + $0x38] sm:$0xff]
        %v5296 = vld [vmem:[#allocation4 + $0x40] sm:$0xff]
        %v5297 = vld [vmem:[#allocation4 + $0x48] sm:$0xff]
        %v5298 = vld [vmem:[#allocation4 + $0x50] sm:$0xff]
        %v5299 = vld [vmem:[#allocation4 + $0x58] sm:$0xff]
        %v5300 = vld [vmem:[#allocation4 + $0x60] sm:$0xff]
        %v5301 = vld [vmem:[#allocation4 + $0x68] sm:$0xff]
        %v5302 = vld [vmem:[#allocation4 + $0x70] sm:$0xff]
        %v5303 = vld [vmem:[#allocation4 + $0x78] sm:$0xff]
        %v5304 = vld [vmem:[#allocation4 + $0x80] sm:$0xff]
        %v5305 = vld [vmem:[#allocation4 + $0x88] sm:$0xff]
        %v5306 = vld [vmem:[#allocation4 + $0x90] sm:$0xff]
        %v5307 = vld [vmem:[#allocation4 + $0x98] sm:$0xff]
        %v5308 = vld [vmem:[#allocation4 + $0xa0] sm:$0xff]
        %v5309 = vld [vmem:[#allocation4 + $0xa8] sm:$0xff]
        %v5310 = vld [vmem:[#allocation4 + $0xb0] sm:$0xff]
        %v5311 = vld [vmem:[#allocation4 + $0xb8] sm:$0xff]
        %v5312 = vld [vmem:[#allocation4 + $0xc0] sm:$0xff]
        %v5313 = vld [vmem:[#allocation4 + $0xc8] sm:$0xff]
        %v5314 = vld [vmem:[#allocation4 + $0xd0] sm:$0xff]
        %v5315 = vld [vmem:[#allocation4 + $0xd8] sm:$0xff]
        %v5316 = vld [vmem:[#allocation4 + $0xe0] sm:$0xff]
        %v5317 = vld [vmem:[#allocation4 + $0xe8] sm:$0xff]
        %v5318 = vld [vmem:[#allocation4 + $0xf0] sm:$0xff]
        %v5319 = vld [vmem:[#allocation4 + $0xf8] sm:$0xff]
        %v5320 = vadd.f32 %v5288, %v5130
        %v5321 = vadd.f32 %v5289, %v5135
        %v5322 = vadd.f32 %v5290, %v5140
        %v5323 = vadd.f32 %v5291, %v5145
        %v5324 = vadd.f32 %v5292, %v5150
        %v5325 = vadd.f32 %v5293, %v5155
        %v5326 = vadd.f32 %v5294, %v5160
        %v5327 = vadd.f32 %v5295, %v5165
        %v5328 = vadd.f32 %v5296, %v5170
        %v5329 = vadd.f32 %v5297, %v5175
        %v5330 = vadd.f32 %v5298, %v5180
        %v5331 = vadd.f32 %v5299, %v5185
        %v5332 = vadd.f32 %v5300, %v5190
        %v5333 = vadd.f32 %v5301, %v5195
        %v5334 = vadd.f32 %v5302, %v5200
        %v5335 = vadd.f32 %v5303, %v5205
        %v5336 = vadd.f32 %v5304, %v5210
        %v5337 = vadd.f32 %v5305, %v5215
        %v5338 = vadd.f32 %v5306, %v5220
        %v5339 = vadd.f32 %v5307, %v5225
        %v5340 = vadd.f32 %v5308, %v5230
        %v5341 = vadd.f32 %v5309, %v5235
        %v5342 = vadd.f32 %v5310, %v5240
        %v5343 = vadd.f32 %v5311, %v5245
        %v5344 = vadd.f32 %v5312, %v5250
        %v5345 = vadd.f32 %v5313, %v5255
        %v5346 = vadd.f32 %v5314, %v5260
        %v5347 = vadd.f32 %v5315, %v5265
        %v5348 = vadd.f32 %v5316, %v5270
        %v5349 = vadd.f32 %v5317, %v5275
        %v5350 = vadd.f32 %v5318, %v5280
        %v5351 = vadd.f32 %v5319, %v5285
        %5352 = vst [vmem:[#allocation4] sm:$0xff] %v5320
        %5353 = vst [vmem:[#allocation4 + $0x8] sm:$0xff] %v5321
        %5354 = vst [vmem:[#allocation4 + $0x10] sm:$0xff] %v5322
        %5355 = vst [vmem:[#allocation4 + $0x18] sm:$0xff] %v5323
        %5356 = vst [vmem:[#allocation4 + $0x20] sm:$0xff] %v5324
        %5357 = vst [vmem:[#allocation4 + $0x28] sm:$0xff] %v5325
        %5358 = vst [vmem:[#allocation4 + $0x30] sm:$0xff] %v5326
        %5359 = vst [vmem:[#allocation4 + $0x38] sm:$0xff] %v5327
        %5360 = vst [vmem:[#allocation4 + $0x40] sm:$0xff] %v5328
        %5361 = vst [vmem:[#allocation4 + $0x48] sm:$0xff] %v5329
        %5362 = vst [vmem:[#allocation4 + $0x50] sm:$0xff] %v5330
        %5363 = vst [vmem:[#allocation4 + $0x58] sm:$0xff] %v5331
        %5364 = vst [vmem:[#allocation4 + $0x60] sm:$0xff] %v5332
        %5365 = vst [vmem:[#allocation4 + $0x68] sm:$0xff] %v5333
        %5366 = vst [vmem:[#allocation4 + $0x70] sm:$0xff] %v5334
        %5367 = vst [vmem:[#allocation4 + $0x78] sm:$0xff] %v5335
        %5368 = vst [vmem:[#allocation4 + $0x80] sm:$0xff] %v5336
        %5369 = vst [vmem:[#allocation4 + $0x88] sm:$0xff] %v5337
        %5370 = vst [vmem:[#allocation4 + $0x90] sm:$0xff] %v5338
        %5371 = vst [vmem:[#allocation4 + $0x98] sm:$0xff] %v5339
        %5372 = vst [vmem:[#allocation4 + $0xa0] sm:$0xff] %v5340
        %5373 = vst [vmem:[#allocation4 + $0xa8] sm:$0xff] %v5341
        %5374 = vst [vmem:[#allocation4 + $0xb0] sm:$0xff] %v5342
        %5375 = vst [vmem:[#allocation4 + $0xb8] sm:$0xff] %v5343
        %5376 = vst [vmem:[#allocation4 + $0xc0] sm:$0xff] %v5344
        %5377 = vst [vmem:[#allocation4 + $0xc8] sm:$0xff] %v5345
        %5378 = vst [vmem:[#allocation4 + $0xd0] sm:$0xff] %v5346
        %5379 = vst [vmem:[#allocation4 + $0xd8] sm:$0xff] %v5347
        %5380 = vst [vmem:[#allocation4 + $0xe0] sm:$0xff] %v5348
        %5381 = vst [vmem:[#allocation4 + $0xe8] sm:$0xff] %v5349
        %5382 = vst [vmem:[#allocation4 + $0xf0] sm:$0xff] %v5350
        %5383 = vst [vmem:[#allocation4 + $0xf8] sm:$0xff] %v5351
        %v5384 = vld [vmem:[%s3936 + $0x1] sm:$0xff]
        %v5385 = vld [vmem:[%s3936 + $0x9] sm:$0xff]
        %v5386 = vld [vmem:[%s3936 + $0x19] sm:$0xff]
        %v5387 = vld [vmem:[%s3936 + $0x21] sm:$0xff]
        %v5388 = vld [vmem:[%s3936 + $0x31] sm:$0xff]
        %v5389 = vld [vmem:[%s3936 + $0x39] sm:$0xff]
        %v5390 = vld [vmem:[%s3936 + $0x49] sm:$0xff]
        %v5391 = vld [vmem:[%s3936 + $0x51] sm:$0xff]
        %v5392 = vld [vmem:[%s3936 + $0x61] sm:$0xff]
        %v5393 = vld [vmem:[%s3936 + $0x69] sm:$0xff]
        %v5394 = vld [vmem:[%s3936 + $0x79] sm:$0xff]
        %v5395 = vld [vmem:[%s3936 + $0x81] sm:$0xff]
        %v5396 = vld [vmem:[%s3936 + $0x91] sm:$0xff]
        %v5397 = vld [vmem:[%s3936 + $0x99] sm:$0xff]
        %v5398 = vld [vmem:[%s3936 + $0xa9] sm:$0xff]
        %v5399 = vld [vmem:[%s3936 + $0xb1] sm:$0xff]
        %v5400 = vld [vmem:[%s3936 + $0xc1] sm:$0xff]
        %v5401 = vld [vmem:[%s3936 + $0xc9] sm:$0xff]
        %v5402 = vld [vmem:[%s3936 + $0xd9] sm:$0xff]
        %v5403 = vld [vmem:[%s3936 + $0xe1] sm:$0xff]
        %v5404 = vld [vmem:[%s3936 + $0xf1] sm:$0xff]
        %v5405 = vld [vmem:[%s3936 + $0xf9] sm:$0xff]
        %v5406 = vld [vmem:[%s3936 + $0x109] sm:$0xff]
        %v5407 = vld [vmem:[%s3936 + $0x111] sm:$0xff]
        %v5408 = vld [vmem:[%s3936 + $0x121] sm:$0xff]
        %v5409 = vld [vmem:[%s3936 + $0x129] sm:$0xff]
        %v5410 = vld [vmem:[%s3936 + $0x139] sm:$0xff]
        %v5411 = vld [vmem:[%s3936 + $0x141] sm:$0xff]
        %v5412 = vld [vmem:[%s3936 + $0x151] sm:$0xff]
        %v5413 = vld [vmem:[%s3936 + $0x159] sm:$0xff]
        %v5414 = vld [vmem:[%s3936 + $0x169] sm:$0xff]
        %v5415 = vld [vmem:[%s3936 + $0x171] sm:$0xff]
        %s5416 = scalar_lea.vmem [#allocation7], 512
        %v5417 = vld [vmem:[%s5416] sm:$0xff]
        %v5418 = vld [vmem:[%s5416 + $0x8] sm:$0xff]
        %v5419 = vld [vmem:[%s5416 + $0x10] sm:$0xff]
        %v5420 = vld [vmem:[%s5416 + $0x18] sm:$0xff]
        %v5421 = vld [vmem:[%s5416 + $0x20] sm:$0xff]
        %v5422 = vld [vmem:[%s5416 + $0x28] sm:$0xff]
        %v5423 = vld [vmem:[%s5416 + $0x30] sm:$0xff]
        %v5424 = vld [vmem:[%s5416 + $0x38] sm:$0xff]
        %v5425 = vld [vmem:[%s5416 + $0x40] sm:$0xff]
        %v5426 = vld [vmem:[%s5416 + $0x48] sm:$0xff]
        %v5427 = vld [vmem:[%s5416 + $0x50] sm:$0xff]
        %v5428 = vld [vmem:[%s5416 + $0x58] sm:$0xff]
        %v5429 = vld [vmem:[%s5416 + $0x60] sm:$0xff]
        %v5430 = vld [vmem:[%s5416 + $0x68] sm:$0xff]
        %v5431 = vld [vmem:[%s5416 + $0x70] sm:$0xff]
        %v5432 = vld [vmem:[%s5416 + $0x78] sm:$0xff]
        %5433 = vmatprep.subr.mxu0 0.0
        %5434 = vmatpush1.msra.mxu0 %v5417
        %5435 = vmatprep.subr.mxu0 0.0
        %5436 = vmatpush1.msra.mxu0 %v5418
        %5437 = vmatprep.subr.mxu0 0.0
        %5438 = vmatpush1.msra.mxu0 %v5419
        %5439 = vmatprep.subr.mxu0 0.0
        %5440 = vmatpush1.msra.mxu0 %v5420
        %5441 = vmatprep.subr.mxu0 0.0
        %5442 = vmatpush1.msra.mxu0 %v5421
        %5443 = vmatprep.subr.mxu0 0.0
        %5444 = vmatpush1.msra.mxu0 %v5422
        %5445 = vmatprep.subr.mxu0 0.0
        %5446 = vmatpush1.msra.mxu0 %v5423
        %5447 = vmatprep.subr.mxu0 0.0
        %5448 = vmatpush1.msra.mxu0 %v5424
        %5449 = vmatprep.subr.mxu0 0.0
        %5450 = vmatpush1.msra.mxu0 %v5425
        %5451 = vmatprep.subr.mxu0 0.0
        %5452 = vmatpush1.msra.mxu0 %v5426
        %5453 = vmatprep.subr.mxu0 0.0
        %5454 = vmatpush1.msra.mxu0 %v5427
        %5455 = vmatprep.subr.mxu0 0.0
        %5456 = vmatpush1.msra.mxu0 %v5428
        %5457 = vmatprep.subr.mxu0 0.0
        %5458 = vmatpush1.msra.mxu0 %v5429
        %5459 = vmatprep.subr.mxu0 0.0
        %5460 = vmatpush1.msra.mxu0 %v5430
        %5461 = vmatprep.subr.mxu0 0.0
        %5462 = vmatpush1.msra.mxu0 %v5431
        %5463 = vmatprep.subr.mxu0 0.0
        %5464 = vmatpush1.msra.mxu0 %v5432
        %5465 = vmatprep.subr.mxu0 0.0
        %5466 = vmatpush1.msra.mxu0 0.0
        %5467 = vmatprep.subr.mxu0 0.0
        %5468 = vmatpush1.msra.mxu0 0.0
        %5469 = vmatprep.subr.mxu0 0.0
        %5470 = vmatpush1.msra.mxu0 0.0
        %5471 = vmatprep.subr.mxu0 0.0
        %5472 = vmatpush1.msra.mxu0 0.0
        %5473 = vmatprep.subr.mxu0 0.0
        %5474 = vmatpush1.msra.mxu0 0.0
        %5475 = vmatprep.subr.mxu0 0.0
        %5476 = vmatpush1.msra.mxu0 0.0
        %5477 = vmatprep.subr.mxu0 0.0
        %5478 = vmatpush1.msra.mxu0 0.0
        %5479 = vmatprep.subr.mxu0 0.0
        %5480 = vmatpush1.msra.mxu0 0.0
        %5481 = vmatprep.subr.mxu0 0.0
        %5482 = vmatpush1.msra.mxu0 0.0
        %5483 = vmatprep.subr.mxu0 0.0
        %5484 = vmatpush1.msra.mxu0 0.0
        %5485 = vmatprep.subr.mxu0 0.0
        %5486 = vmatpush1.msra.mxu0 0.0
        %5487 = vmatprep.subr.mxu0 0.0
        %5488 = vmatpush1.msra.mxu0 0.0
        %5489 = vmatprep.subr.mxu0 0.0
        %5490 = vmatpush1.msra.mxu0 0.0
        %5491 = vmatprep.subr.mxu0 0.0
        %5492 = vmatpush1.msra.mxu0 0.0
        %5493 = vmatprep.subr.mxu0 0.0
        %5494 = vmatpush1.msra.mxu0 0.0
        %5495 = vmatprep.subr.mxu0 0.0
        %5496 = vmatpush1.msra.mxu0 0.0
        %5497 = vmatprep.mubr.f32.mxu0 0.0
        %5498 = vmatmul.mubr.f32.gmra.mrb[0].mxu0 %v5384
        %v5499 = vpop.f32.mrb[0].mxu0
        %v5500 = vadd.f32 0.0, %v5499
        %v5501 = vpop.f32.mrb[0].mxu0
        %5502 = vmatprep.mubr.f32.mxu0 0.0
        %5503 = vmatmul.mubr.f32.gmra.mrb[0].mxu0 %v5385
        %v5504 = vpop.f32.mrb[0].mxu0
        %v5505 = vadd.f32 0.0, %v5504
        %v5506 = vpop.f32.mrb[0].mxu0
        %5507 = vmatprep.mubr.f32.mxu0 0.0
        %5508 = vmatmul.mubr.f32.gmra.mrb[0].mxu0 %v5386
        %v5509 = vpop.f32.mrb[0].mxu0
        %v5510 = vadd.f32 0.0, %v5509
        %v5511 = vpop.f32.mrb[0].mxu0
        %5512 = vmatprep.mubr.f32.mxu0 0.0
        %5513 = vmatmul.mubr.f32.gmra.mrb[0].mxu0 %v5387
        %v5514 = vpop.f32.mrb[0].mxu0
        %v5515 = vadd.f32 0.0, %v5514
        %v5516 = vpop.f32.mrb[0].mxu0
        %5517 = vmatprep.mubr.f32.mxu0 0.0
        %5518 = vmatmul.mubr.f32.gmra.mrb[0].mxu0 %v5388
        %v5519 = vpop.f32.mrb[0].mxu0
        %v5520 = vadd.f32 0.0, %v5519
        %v5521 = vpop.f32.mrb[0].mxu0
        %5522 = vmatprep.mubr.f32.mxu0 0.0
        %5523 = vmatmul.mubr.f32.gmra.mrb[0].mxu0 %v5389
        %v5524 = vpop.f32.mrb[0].mxu0
        %v5525 = vadd.f32 0.0, %v5524
        %v5526 = vpop.f32.mrb[0].mxu0
        %5527 = vmatprep.mubr.f32.mxu0 0.0
        %5528 = vmatmul.mubr.f32.gmra.mrb[0].mxu0 %v5390
        %v5529 = vpop.f32.mrb[0].mxu0
        %v5530 = vadd.f32 0.0, %v5529
        %v5531 = vpop.f32.mrb[0].mxu0
        %5532 = vmatprep.mubr.f32.mxu0 0.0
        %5533 = vmatmul.mubr.f32.gmra.mrb[0].mxu0 %v5391
        %v5534 = vpop.f32.mrb[0].mxu0
        %v5535 = vadd.f32 0.0, %v5534
        %v5536 = vpop.f32.mrb[0].mxu0
        %5537 = vmatprep.mubr.f32.mxu0 0.0
        %5538 = vmatmul.mubr.f32.gmra.mrb[0].mxu0 %v5392
        %v5539 = vpop.f32.mrb[0].mxu0
        %v5540 = vadd.f32 0.0, %v5539
        %v5541 = vpop.f32.mrb[0].mxu0
        %5542 = vmatprep.mubr.f32.mxu0 0.0
        %5543 = vmatmul.mubr.f32.gmra.mrb[0].mxu0 %v5393
        %v5544 = vpop.f32.mrb[0].mxu0
        %v5545 = vadd.f32 0.0, %v5544
        %v5546 = vpop.f32.mrb[0].mxu0
        %5547 = vmatprep.mubr.f32.mxu0 0.0
        %5548 = vmatmul.mubr.f32.gmra.mrb[0].mxu0 %v5394
        %v5549 = vpop.f32.mrb[0].mxu0
        %v5550 = vadd.f32 0.0, %v5549
        %v5551 = vpop.f32.mrb[0].mxu0
        %5552 = vmatprep.mubr.f32.mxu0 0.0
        %5553 = vmatmul.mubr.f32.gmra.mrb[0].mxu0 %v5395
        %v5554 = vpop.f32.mrb[0].mxu0
        %v5555 = vadd.f32 0.0, %v5554
        %v5556 = vpop.f32.mrb[0].mxu0
        %5557 = vmatprep.mubr.f32.mxu0 0.0
        %5558 = vmatmul.mubr.f32.gmra.mrb[0].mxu0 %v5396
        %v5559 = vpop.f32.mrb[0].mxu0
        %v5560 = vadd.f32 0.0, %v5559
        %v5561 = vpop.f32.mrb[0].mxu0
        %5562 = vmatprep.mubr.f32.mxu0 0.0
        %5563 = vmatmul.mubr.f32.gmra.mrb[0].mxu0 %v5397
        %v5564 = vpop.f32.mrb[0].mxu0
        %v5565 = vadd.f32 0.0, %v5564
        %v5566 = vpop.f32.mrb[0].mxu0
        %5567 = vmatprep.mubr.f32.mxu0 0.0
        %5568 = vmatmul.mubr.f32.gmra.mrb[0].mxu0 %v5398
        %v5569 = vpop.f32.mrb[0].mxu0
        %v5570 = vadd.f32 0.0, %v5569
        %v5571 = vpop.f32.mrb[0].mxu0
        %5572 = vmatprep.mubr.f32.mxu0 0.0
        %5573 = vmatmul.mubr.f32.gmra.mrb[0].mxu0 %v5399
        %v5574 = vpop.f32.mrb[0].mxu0
        %v5575 = vadd.f32 0.0, %v5574
        %v5576 = vpop.f32.mrb[0].mxu0
        %5577 = vmatprep.mubr.f32.mxu0 0.0
        %5578 = vmatmul.mubr.f32.gmra.mrb[0].mxu0 %v5400
        %v5579 = vpop.f32.mrb[0].mxu0
        %v5580 = vadd.f32 0.0, %v5579
        %v5581 = vpop.f32.mrb[0].mxu0
        %5582 = vmatprep.mubr.f32.mxu0 0.0
        %5583 = vmatmul.mubr.f32.gmra.mrb[0].mxu0 %v5401
        %v5584 = vpop.f32.mrb[0].mxu0
        %v5585 = vadd.f32 0.0, %v5584
        %v5586 = vpop.f32.mrb[0].mxu0
        %5587 = vmatprep.mubr.f32.mxu0 0.0
        %5588 = vmatmul.mubr.f32.gmra.mrb[0].mxu0 %v5402
        %v5589 = vpop.f32.mrb[0].mxu0
        %v5590 = vadd.f32 0.0, %v5589
        %v5591 = vpop.f32.mrb[0].mxu0
        %5592 = vmatprep.mubr.f32.mxu0 0.0
        %5593 = vmatmul.mubr.f32.gmra.mrb[0].mxu0 %v5403
        %v5594 = vpop.f32.mrb[0].mxu0
        %v5595 = vadd.f32 0.0, %v5594
        %v5596 = vpop.f32.mrb[0].mxu0
        %5597 = vmatprep.mubr.f32.mxu0 0.0
        %5598 = vmatmul.mubr.f32.gmra.mrb[0].mxu0 %v5404
        %v5599 = vpop.f32.mrb[0].mxu0
        %v5600 = vadd.f32 0.0, %v5599
        %v5601 = vpop.f32.mrb[0].mxu0
        %5602 = vmatprep.mubr.f32.mxu0 0.0
        %5603 = vmatmul.mubr.f32.gmra.mrb[0].mxu0 %v5405
        %v5604 = vpop.f32.mrb[0].mxu0
        %v5605 = vadd.f32 0.0, %v5604
        %v5606 = vpop.f32.mrb[0].mxu0
        %5607 = vmatprep.mubr.f32.mxu0 0.0
        %5608 = vmatmul.mubr.f32.gmra.mrb[0].mxu0 %v5406
        %v5609 = vpop.f32.mrb[0].mxu0
        %v5610 = vadd.f32 0.0, %v5609
        %v5611 = vpop.f32.mrb[0].mxu0
        %5612 = vmatprep.mubr.f32.mxu0 0.0
        %5613 = vmatmul.mubr.f32.gmra.mrb[0].mxu0 %v5407
        %v5614 = vpop.f32.mrb[0].mxu0
        %v5615 = vadd.f32 0.0, %v5614
        %v5616 = vpop.f32.mrb[0].mxu0
        %5617 = vmatprep.mubr.f32.mxu0 0.0
        %5618 = vmatmul.mubr.f32.gmra.mrb[0].mxu0 %v5408
        %v5619 = vpop.f32.mrb[0].mxu0
        %v5620 = vadd.f32 0.0, %v5619
        %v5621 = vpop.f32.mrb[0].mxu0
        %5622 = vmatprep.mubr.f32.mxu0 0.0
        %5623 = vmatmul.mubr.f32.gmra.mrb[0].mxu0 %v5409
        %v5624 = vpop.f32.mrb[0].mxu0
        %v5625 = vadd.f32 0.0, %v5624
        %v5626 = vpop.f32.mrb[0].mxu0
        %5627 = vmatprep.mubr.f32.mxu0 0.0
        %5628 = vmatmul.mubr.f32.gmra.mrb[0].mxu0 %v5410
        %v5629 = vpop.f32.mrb[0].mxu0
        %v5630 = vadd.f32 0.0, %v5629
        %v5631 = vpop.f32.mrb[0].mxu0
        %5632 = vmatprep.mubr.f32.mxu0 0.0
        %5633 = vmatmul.mubr.f32.gmra.mrb[0].mxu0 %v5411
        %v5634 = vpop.f32.mrb[0].mxu0
        %v5635 = vadd.f32 0.0, %v5634
        %v5636 = vpop.f32.mrb[0].mxu0
        %5637 = vmatprep.mubr.f32.mxu0 0.0
        %5638 = vmatmul.mubr.f32.gmra.mrb[0].mxu0 %v5412
        %v5639 = vpop.f32.mrb[0].mxu0
        %v5640 = vadd.f32 0.0, %v5639
        %v5641 = vpop.f32.mrb[0].mxu0
        %5642 = vmatprep.mubr.f32.mxu0 0.0
        %5643 = vmatmul.mubr.f32.gmra.mrb[0].mxu0 %v5413
        %v5644 = vpop.f32.mrb[0].mxu0
        %v5645 = vadd.f32 0.0, %v5644
        %v5646 = vpop.f32.mrb[0].mxu0
        %5647 = vmatprep.mubr.f32.mxu0 0.0
        %5648 = vmatmul.mubr.f32.gmra.mrb[0].mxu0 %v5414
        %v5649 = vpop.f32.mrb[0].mxu0
        %v5650 = vadd.f32 0.0, %v5649
        %v5651 = vpop.f32.mrb[0].mxu0
        %5652 = vmatprep.mubr.f32.mxu0 0.0
        %5653 = vmatmul.mubr.f32.gmra.mrb[0].mxu0 %v5415
        %v5654 = vpop.f32.mrb[0].mxu0
        %v5655 = vadd.f32 0.0, %v5654
        %v5656 = vpop.f32.mrb[0].mxu0
        %5657 = vdwg.mxu0
        %v5658 = vld [vmem:[#allocation4] sm:$0xff]
        %v5659 = vld [vmem:[#allocation4 + $0x8] sm:$0xff]
        %v5660 = vld [vmem:[#allocation4 + $0x10] sm:$0xff]
        %v5661 = vld [vmem:[#allocation4 + $0x18] sm:$0xff]
        %v5662 = vld [vmem:[#allocation4 + $0x20] sm:$0xff]
        %v5663 = vld [vmem:[#allocation4 + $0x28] sm:$0xff]
        %v5664 = vld [vmem:[#allocation4 + $0x30] sm:$0xff]
        %v5665 = vld [vmem:[#allocation4 + $0x38] sm:$0xff]
        %v5666 = vld [vmem:[#allocation4 + $0x40] sm:$0xff]
        %v5667 = vld [vmem:[#allocation4 + $0x48] sm:$0xff]
        %v5668 = vld [vmem:[#allocation4 + $0x50] sm:$0xff]
        %v5669 = vld [vmem:[#allocation4 + $0x58] sm:$0xff]
        %v5670 = vld [vmem:[#allocation4 + $0x60] sm:$0xff]
        %v5671 = vld [vmem:[#allocation4 + $0x68] sm:$0xff]
        %v5672 = vld [vmem:[#allocation4 + $0x70] sm:$0xff]
        %v5673 = vld [vmem:[#allocation4 + $0x78] sm:$0xff]
        %v5674 = vld [vmem:[#allocation4 + $0x80] sm:$0xff]
        %v5675 = vld [vmem:[#allocation4 + $0x88] sm:$0xff]
        %v5676 = vld [vmem:[#allocation4 + $0x90] sm:$0xff]
        %v5677 = vld [vmem:[#allocation4 + $0x98] sm:$0xff]
        %v5678 = vld [vmem:[#allocation4 + $0xa0] sm:$0xff]
        %v5679 = vld [vmem:[#allocation4 + $0xa8] sm:$0xff]
        %v5680 = vld [vmem:[#allocation4 + $0xb0] sm:$0xff]
        %v5681 = vld [vmem:[#allocation4 + $0xb8] sm:$0xff]
        %v5682 = vld [vmem:[#allocation4 + $0xc0] sm:$0xff]
        %v5683 = vld [vmem:[#allocation4 + $0xc8] sm:$0xff]
        %v5684 = vld [vmem:[#allocation4 + $0xd0] sm:$0xff]
        %v5685 = vld [vmem:[#allocation4 + $0xd8] sm:$0xff]
        %v5686 = vld [vmem:[#allocation4 + $0xe0] sm:$0xff]
        %v5687 = vld [vmem:[#allocation4 + $0xe8] sm:$0xff]
        %v5688 = vld [vmem:[#allocation4 + $0xf0] sm:$0xff]
        %v5689 = vld [vmem:[#allocation4 + $0xf8] sm:$0xff]
        %v5690 = vadd.f32 %v5658, %v5500
        %v5691 = vadd.f32 %v5659, %v5505
        %v5692 = vadd.f32 %v5660, %v5510
        %v5693 = vadd.f32 %v5661, %v5515
        %v5694 = vadd.f32 %v5662, %v5520
        %v5695 = vadd.f32 %v5663, %v5525
        %v5696 = vadd.f32 %v5664, %v5530
        %v5697 = vadd.f32 %v5665, %v5535
        %v5698 = vadd.f32 %v5666, %v5540
        %v5699 = vadd.f32 %v5667, %v5545
        %v5700 = vadd.f32 %v5668, %v5550
        %v5701 = vadd.f32 %v5669, %v5555
        %v5702 = vadd.f32 %v5670, %v5560
        %v5703 = vadd.f32 %v5671, %v5565
        %v5704 = vadd.f32 %v5672, %v5570
        %v5705 = vadd.f32 %v5673, %v5575
        %v5706 = vadd.f32 %v5674, %v5580
        %v5707 = vadd.f32 %v5675, %v5585
        %v5708 = vadd.f32 %v5676, %v5590
        %v5709 = vadd.f32 %v5677, %v5595
        %v5710 = vadd.f32 %v5678, %v5600
        %v5711 = vadd.f32 %v5679, %v5605
        %v5712 = vadd.f32 %v5680, %v5610
        %v5713 = vadd.f32 %v5681, %v5615
        %v5714 = vadd.f32 %v5682, %v5620
        %v5715 = vadd.f32 %v5683, %v5625
        %v5716 = vadd.f32 %v5684, %v5630
        %v5717 = vadd.f32 %v5685, %v5635
        %v5718 = vadd.f32 %v5686, %v5640
        %v5719 = vadd.f32 %v5687, %v5645
        %v5720 = vadd.f32 %v5688, %v5650
        %v5721 = vadd.f32 %v5689, %v5655
        %5722 = vst [vmem:[#allocation4] sm:$0xff] %v5690
        %5723 = vst [vmem:[#allocation4 + $0x8] sm:$0xff] %v5691
        %5724 = vst [vmem:[#allocation4 + $0x10] sm:$0xff] %v5692
        %5725 = vst [vmem:[#allocation4 + $0x18] sm:$0xff] %v5693
        %5726 = vst [vmem:[#allocation4 + $0x20] sm:$0xff] %v5694
        %5727 = vst [vmem:[#allocation4 + $0x28] sm:$0xff] %v5695
        %5728 = vst [vmem:[#allocation4 + $0x30] sm:$0xff] %v5696
        %5729 = vst [vmem:[#allocation4 + $0x38] sm:$0xff] %v5697
        %5730 = vst [vmem:[#allocation4 + $0x40] sm:$0xff] %v5698
        %5731 = vst [vmem:[#allocation4 + $0x48] sm:$0xff] %v5699
        %5732 = vst [vmem:[#allocation4 + $0x50] sm:$0xff] %v5700
        %5733 = vst [vmem:[#allocation4 + $0x58] sm:$0xff] %v5701
        %5734 = vst [vmem:[#allocation4 + $0x60] sm:$0xff] %v5702
        %5735 = vst [vmem:[#allocation4 + $0x68] sm:$0xff] %v5703
        %5736 = vst [vmem:[#allocation4 + $0x70] sm:$0xff] %v5704
        %5737 = vst [vmem:[#allocation4 + $0x78] sm:$0xff] %v5705
        %5738 = vst [vmem:[#allocation4 + $0x80] sm:$0xff] %v5706
        %5739 = vst [vmem:[#allocation4 + $0x88] sm:$0xff] %v5707
        %5740 = vst [vmem:[#allocation4 + $0x90] sm:$0xff] %v5708
        %5741 = vst [vmem:[#allocation4 + $0x98] sm:$0xff] %v5709
        %5742 = vst [vmem:[#allocation4 + $0xa0] sm:$0xff] %v5710
        %5743 = vst [vmem:[#allocation4 + $0xa8] sm:$0xff] %v5711
        %5744 = vst [vmem:[#allocation4 + $0xb0] sm:$0xff] %v5712
        %5745 = vst [vmem:[#allocation4 + $0xb8] sm:$0xff] %v5713
        %5746 = vst [vmem:[#allocation4 + $0xc0] sm:$0xff] %v5714
        %5747 = vst [vmem:[#allocation4 + $0xc8] sm:$0xff] %v5715
        %5748 = vst [vmem:[#allocation4 + $0xd0] sm:$0xff] %v5716
        %5749 = vst [vmem:[#allocation4 + $0xd8] sm:$0xff] %v5717
        %5750 = vst [vmem:[#allocation4 + $0xe0] sm:$0xff] %v5718
        %5751 = vst [vmem:[#allocation4 + $0xe8] sm:$0xff] %v5719
        %5752 = vst [vmem:[#allocation4 + $0xf0] sm:$0xff] %v5720
        %5753 = vst [vmem:[#allocation4 + $0xf8] sm:$0xff] %v5721
        %v5754 = vld [vmem:[%s3936 + $0x2] sm:$0xff]
        %v5755 = vld [vmem:[%s3936 + $0xa] sm:$0xff]
        %v5756 = vld [vmem:[%s3936 + $0x1a] sm:$0xff]
        %v5757 = vld [vmem:[%s3936 + $0x22] sm:$0xff]
        %v5758 = vld [vmem:[%s3936 + $0x32] sm:$0xff]
        %v5759 = vld [vmem:[%s3936 + $0x3a] sm:$0xff]
        %v5760 = vld [vmem:[%s3936 + $0x4a] sm:$0xff]
        %v5761 = vld [vmem:[%s3936 + $0x52] sm:$0xff]
        %v5762 = vld [vmem:[%s3936 + $0x62] sm:$0xff]
        %v5763 = vld [vmem:[%s3936 + $0x6a] sm:$0xff]
        %v5764 = vld [vmem:[%s3936 + $0x7a] sm:$0xff]
        %v5765 = vld [vmem:[%s3936 + $0x82] sm:$0xff]
        %v5766 = vld [vmem:[%s3936 + $0x92] sm:$0xff]
        %v5767 = vld [vmem:[%s3936 + $0x9a] sm:$0xff]
        %v5768 = vld [vmem:[%s3936 + $0xaa] sm:$0xff]
        %v5769 = vld [vmem:[%s3936 + $0xb2] sm:$0xff]
        %v5770 = vld [vmem:[%s3936 + $0xc2] sm:$0xff]
        %v5771 = vld [vmem:[%s3936 + $0xca] sm:$0xff]
        %v5772 = vld [vmem:[%s3936 + $0xda] sm:$0xff]
        %v5773 = vld [vmem:[%s3936 + $0xe2] sm:$0xff]
        %v5774 = vld [vmem:[%s3936 + $0xf2] sm:$0xff]
        %v5775 = vld [vmem:[%s3936 + $0xfa] sm:$0xff]
        %v5776 = vld [vmem:[%s3936 + $0x10a] sm:$0xff]
        %v5777 = vld [vmem:[%s3936 + $0x112] sm:$0xff]
        %v5778 = vld [vmem:[%s3936 + $0x122] sm:$0xff]
        %v5779 = vld [vmem:[%s3936 + $0x12a] sm:$0xff]
        %v5780 = vld [vmem:[%s3936 + $0x13a] sm:$0xff]
        %v5781 = vld [vmem:[%s3936 + $0x142] sm:$0xff]
        %v5782 = vld [vmem:[%s3936 + $0x152] sm:$0xff]
        %v5783 = vld [vmem:[%s3936 + $0x15a] sm:$0xff]
        %v5784 = vld [vmem:[%s3936 + $0x16a] sm:$0xff]
        %v5785 = vld [vmem:[%s3936 + $0x172] sm:$0xff]
        %s5786 = scalar_lea.vmem [#allocation7], 640
        %v5787 = vld [vmem:[%s5786] sm:$0xff]
        %v5788 = vld [vmem:[%s5786 + $0x8] sm:$0xff]
        %v5789 = vld [vmem:[%s5786 + $0x10] sm:$0xff]
        %v5790 = vld [vmem:[%s5786 + $0x18] sm:$0xff]
        %v5791 = vld [vmem:[%s5786 + $0x20] sm:$0xff]
        %v5792 = vld [vmem:[%s5786 + $0x28] sm:$0xff]
        %v5793 = vld [vmem:[%s5786 + $0x30] sm:$0xff]
        %v5794 = vld [vmem:[%s5786 + $0x38] sm:$0xff]
        %v5795 = vld [vmem:[%s5786 + $0x40] sm:$0xff]
        %v5796 = vld [vmem:[%s5786 + $0x48] sm:$0xff]
        %v5797 = vld [vmem:[%s5786 + $0x50] sm:$0xff]
        %v5798 = vld [vmem:[%s5786 + $0x58] sm:$0xff]
        %v5799 = vld [vmem:[%s5786 + $0x60] sm:$0xff]
        %v5800 = vld [vmem:[%s5786 + $0x68] sm:$0xff]
        %v5801 = vld [vmem:[%s5786 + $0x70] sm:$0xff]
        %v5802 = vld [vmem:[%s5786 + $0x78] sm:$0xff]
        %5803 = vmatprep.subr.mxu0 0.0
        %5804 = vmatpush1.msra.mxu0 %v5787
        %5805 = vmatprep.subr.mxu0 0.0
        %5806 = vmatpush1.msra.mxu0 %v5788
        %5807 = vmatprep.subr.mxu0 0.0
        %5808 = vmatpush1.msra.mxu0 %v5789
        %5809 = vmatprep.subr.mxu0 0.0
        %5810 = vmatpush1.msra.mxu0 %v5790
        %5811 = vmatprep.subr.mxu0 0.0
        %5812 = vmatpush1.msra.mxu0 %v5791
        %5813 = vmatprep.subr.mxu0 0.0
        %5814 = vmatpush1.msra.mxu0 %v5792
        %5815 = vmatprep.subr.mxu0 0.0
        %5816 = vmatpush1.msra.mxu0 %v5793
        %5817 = vmatprep.subr.mxu0 0.0
        %5818 = vmatpush1.msra.mxu0 %v5794
        %5819 = vmatprep.subr.mxu0 0.0
        %5820 = vmatpush1.msra.mxu0 %v5795
        %5821 = vmatprep.subr.mxu0 0.0
        %5822 = vmatpush1.msra.mxu0 %v5796
        %5823 = vmatprep.subr.mxu0 0.0
        %5824 = vmatpush1.msra.mxu0 %v5797
        %5825 = vmatprep.subr.mxu0 0.0
        %5826 = vmatpush1.msra.mxu0 %v5798
        %5827 = vmatprep.subr.mxu0 0.0
        %5828 = vmatpush1.msra.mxu0 %v5799
        %5829 = vmatprep.subr.mxu0 0.0
        %5830 = vmatpush1.msra.mxu0 %v5800
        %5831 = vmatprep.subr.mxu0 0.0
        %5832 = vmatpush1.msra.mxu0 %v5801
        %5833 = vmatprep.subr.mxu0 0.0
        %5834 = vmatpush1.msra.mxu0 %v5802
        %5835 = vmatprep.subr.mxu0 0.0
        %5836 = vmatpush1.msra.mxu0 0.0
        %5837 = vmatprep.subr.mxu0 0.0
        %5838 = vmatpush1.msra.mxu0 0.0
        %5839 = vmatprep.subr.mxu0 0.0
        %5840 = vmatpush1.msra.mxu0 0.0
        %5841 = vmatprep.subr.mxu0 0.0
        %5842 = vmatpush1.msra.mxu0 0.0
        %5843 = vmatprep.subr.mxu0 0.0
        %5844 = vmatpush1.msra.mxu0 0.0
        %5845 = vmatprep.subr.mxu0 0.0
        %5846 = vmatpush1.msra.mxu0 0.0
        %5847 = vmatprep.subr.mxu0 0.0
        %5848 = vmatpush1.msra.mxu0 0.0
        %5849 = vmatprep.subr.mxu0 0.0
        %5850 = vmatpush1.msra.mxu0 0.0
        %5851 = vmatprep.subr.mxu0 0.0
        %5852 = vmatpush1.msra.mxu0 0.0
        %5853 = vmatprep.subr.mxu0 0.0
        %5854 = vmatpush1.msra.mxu0 0.0
        %5855 = vmatprep.subr.mxu0 0.0
        %5856 = vmatpush1.msra.mxu0 0.0
        %5857 = vmatprep.subr.mxu0 0.0
        %5858 = vmatpush1.msra.mxu0 0.0
        %5859 = vmatprep.subr.mxu0 0.0
        %5860 = vmatpush1.msra.mxu0 0.0
        %5861 = vmatprep.subr.mxu0 0.0
        %5862 = vmatpush1.msra.mxu0 0.0
        %5863 = vmatprep.subr.mxu0 0.0
        %5864 = vmatpush1.msra.mxu0 0.0
        %5865 = vmatprep.subr.mxu0 0.0
        %5866 = vmatpush1.msra.mxu0 0.0
        %5867 = vmatprep.mubr.f32.mxu0 0.0
        %5868 = vmatmul.mubr.f32.gmra.mrb[0].mxu0 %v5754
        %v5869 = vpop.f32.mrb[0].mxu0
        %v5870 = vadd.f32 0.0, %v5869
        %v5871 = vpop.f32.mrb[0].mxu0
        %5872 = vmatprep.mubr.f32.mxu0 0.0
        %5873 = vmatmul.mubr.f32.gmra.mrb[0].mxu0 %v5755
        %v5874 = vpop.f32.mrb[0].mxu0
        %v5875 = vadd.f32 0.0, %v5874
        %v5876 = vpop.f32.mrb[0].mxu0
        %5877 = vmatprep.mubr.f32.mxu0 0.0
        %5878 = vmatmul.mubr.f32.gmra.mrb[0].mxu0 %v5756
        %v5879 = vpop.f32.mrb[0].mxu0
        %v5880 = vadd.f32 0.0, %v5879
        %v5881 = vpop.f32.mrb[0].mxu0
        %5882 = vmatprep.mubr.f32.mxu0 0.0
        %5883 = vmatmul.mubr.f32.gmra.mrb[0].mxu0 %v5757
        %v5884 = vpop.f32.mrb[0].mxu0
        %v5885 = vadd.f32 0.0, %v5884
        %v5886 = vpop.f32.mrb[0].mxu0
        %5887 = vmatprep.mubr.f32.mxu0 0.0
        %5888 = vmatmul.mubr.f32.gmra.mrb[0].mxu0 %v5758
        %v5889 = vpop.f32.mrb[0].mxu0
        %v5890 = vadd.f32 0.0, %v5889
        %v5891 = vpop.f32.mrb[0].mxu0
        %5892 = vmatprep.mubr.f32.mxu0 0.0
        %5893 = vmatmul.mubr.f32.gmra.mrb[0].mxu0 %v5759
        %v5894 = vpop.f32.mrb[0].mxu0
        %v5895 = vadd.f32 0.0, %v5894
        %v5896 = vpop.f32.mrb[0].mxu0
        %5897 = vmatprep.mubr.f32.mxu0 0.0
        %5898 = vmatmul.mubr.f32.gmra.mrb[0].mxu0 %v5760
        %v5899 = vpop.f32.mrb[0].mxu0
        %v5900 = vadd.f32 0.0, %v5899
        %v5901 = vpop.f32.mrb[0].mxu0
        %5902 = vmatprep.mubr.f32.mxu0 0.0
        %5903 = vmatmul.mubr.f32.gmra.mrb[0].mxu0 %v5761
        %v5904 = vpop.f32.mrb[0].mxu0
        %v5905 = vadd.f32 0.0, %v5904
        %v5906 = vpop.f32.mrb[0].mxu0
        %5907 = vmatprep.mubr.f32.mxu0 0.0
        %5908 = vmatmul.mubr.f32.gmra.mrb[0].mxu0 %v5762
        %v5909 = vpop.f32.mrb[0].mxu0
        %v5910 = vadd.f32 0.0, %v5909
        %v5911 = vpop.f32.mrb[0].mxu0
        %5912 = vmatprep.mubr.f32.mxu0 0.0
        %5913 = vmatmul.mubr.f32.gmra.mrb[0].mxu0 %v5763
        %v5914 = vpop.f32.mrb[0].mxu0
        %v5915 = vadd.f32 0.0, %v5914
        %v5916 = vpop.f32.mrb[0].mxu0
        %5917 = vmatprep.mubr.f32.mxu0 0.0
        %5918 = vmatmul.mubr.f32.gmra.mrb[0].mxu0 %v5764
        %v5919 = vpop.f32.mrb[0].mxu0
        %v5920 = vadd.f32 0.0, %v5919
        %v5921 = vpop.f32.mrb[0].mxu0
        %5922 = vmatprep.mubr.f32.mxu0 0.0
        %5923 = vmatmul.mubr.f32.gmra.mrb[0].mxu0 %v5765
        %v5924 = vpop.f32.mrb[0].mxu0
        %v5925 = vadd.f32 0.0, %v5924
        %v5926 = vpop.f32.mrb[0].mxu0
        %5927 = vmatprep.mubr.f32.mxu0 0.0
        %5928 = vmatmul.mubr.f32.gmra.mrb[0].mxu0 %v5766
        %v5929 = vpop.f32.mrb[0].mxu0
        %v5930 = vadd.f32 0.0, %v5929
        %v5931 = vpop.f32.mrb[0].mxu0
        %5932 = vmatprep.mubr.f32.mxu0 0.0
        %5933 = vmatmul.mubr.f32.gmra.mrb[0].mxu0 %v5767
        %v5934 = vpop.f32.mrb[0].mxu0
        %v5935 = vadd.f32 0.0, %v5934
        %v5936 = vpop.f32.mrb[0].mxu0
        %5937 = vmatprep.mubr.f32.mxu0 0.0
        %5938 = vmatmul.mubr.f32.gmra.mrb[0].mxu0 %v5768
        %v5939 = vpop.f32.mrb[0].mxu0
        %v5940 = vadd.f32 0.0, %v5939
        %v5941 = vpop.f32.mrb[0].mxu0
        %5942 = vmatprep.mubr.f32.mxu0 0.0
        %5943 = vmatmul.mubr.f32.gmra.mrb[0].mxu0 %v5769
        %v5944 = vpop.f32.mrb[0].mxu0
        %v5945 = vadd.f32 0.0, %v5944
        %v5946 = vpop.f32.mrb[0].mxu0
        %5947 = vmatprep.mubr.f32.mxu0 0.0
        %5948 = vmatmul.mubr.f32.gmra.mrb[0].mxu0 %v5770
        %v5949 = vpop.f32.mrb[0].mxu0
        %v5950 = vadd.f32 0.0, %v5949
        %v5951 = vpop.f32.mrb[0].mxu0
        %5952 = vmatprep.mubr.f32.mxu0 0.0
        %5953 = vmatmul.mubr.f32.gmra.mrb[0].mxu0 %v5771
        %v5954 = vpop.f32.mrb[0].mxu0
        %v5955 = vadd.f32 0.0, %v5954
        %v5956 = vpop.f32.mrb[0].mxu0
        %5957 = vmatprep.mubr.f32.mxu0 0.0
        %5958 = vmatmul.mubr.f32.gmra.mrb[0].mxu0 %v5772
        %v5959 = vpop.f32.mrb[0].mxu0
        %v5960 = vadd.f32 0.0, %v5959
        %v5961 = vpop.f32.mrb[0].mxu0
        %5962 = vmatprep.mubr.f32.mxu0 0.0
        %5963 = vmatmul.mubr.f32.gmra.mrb[0].mxu0 %v5773
        %v5964 = vpop.f32.mrb[0].mxu0
        %v5965 = vadd.f32 0.0, %v5964
        %v5966 = vpop.f32.mrb[0].mxu0
        %5967 = vmatprep.mubr.f32.mxu0 0.0
        %5968 = vmatmul.mubr.f32.gmra.mrb[0].mxu0 %v5774
        %v5969 = vpop.f32.mrb[0].mxu0
        %v5970 = vadd.f32 0.0, %v5969
        %v5971 = vpop.f32.mrb[0].mxu0
        %5972 = vmatprep.mubr.f32.mxu0 0.0
        %5973 = vmatmul.mubr.f32.gmra.mrb[0].mxu0 %v5775
        %v5974 = vpop.f32.mrb[0].mxu0
        %v5975 = vadd.f32 0.0, %v5974
        %v5976 = vpop.f32.mrb[0].mxu0
        %5977 = vmatprep.mubr.f32.mxu0 0.0
        %5978 = vmatmul.mubr.f32.gmra.mrb[0].mxu0 %v5776
        %v5979 = vpop.f32.mrb[0].mxu0
        %v5980 = vadd.f32 0.0, %v5979
        %v5981 = vpop.f32.mrb[0].mxu0
        %5982 = vmatprep.mubr.f32.mxu0 0.0
        %5983 = vmatmul.mubr.f32.gmra.mrb[0].mxu0 %v5777
        %v5984 = vpop.f32.mrb[0].mxu0
        %v5985 = vadd.f32 0.0, %v5984
        %v5986 = vpop.f32.mrb[0].mxu0
        %5987 = vmatprep.mubr.f32.mxu0 0.0
        %5988 = vmatmul.mubr.f32.gmra.mrb[0].mxu0 %v5778
        %v5989 = vpop.f32.mrb[0].mxu0
        %v5990 = vadd.f32 0.0, %v5989
        %v5991 = vpop.f32.mrb[0].mxu0
        %5992 = vmatprep.mubr.f32.mxu0 0.0
        %5993 = vmatmul.mubr.f32.gmra.mrb[0].mxu0 %v5779
        %v5994 = vpop.f32.mrb[0].mxu0
        %v5995 = vadd.f32 0.0, %v5994
        %v5996 = vpop.f32.mrb[0].mxu0
        %5997 = vmatprep.mubr.f32.mxu0 0.0
        %5998 = vmatmul.mubr.f32.gmra.mrb[0].mxu0 %v5780
        %v5999 = vpop.f32.mrb[0].mxu0
        %v6000 = vadd.f32 0.0, %v5999
        %v6001 = vpop.f32.mrb[0].mxu0
        %6002 = vmatprep.mubr.f32.mxu0 0.0
        %6003 = vmatmul.mubr.f32.gmra.mrb[0].mxu0 %v5781
        %v6004 = vpop.f32.mrb[0].mxu0
        %v6005 = vadd.f32 0.0, %v6004
        %v6006 = vpop.f32.mrb[0].mxu0
        %6007 = vmatprep.mubr.f32.mxu0 0.0
        %6008 = vmatmul.mubr.f32.gmra.mrb[0].mxu0 %v5782
        %v6009 = vpop.f32.mrb[0].mxu0
        %v6010 = vadd.f32 0.0, %v6009
        %v6011 = vpop.f32.mrb[0].mxu0
        %6012 = vmatprep.mubr.f32.mxu0 0.0
        %6013 = vmatmul.mubr.f32.gmra.mrb[0].mxu0 %v5783
        %v6014 = vpop.f32.mrb[0].mxu0
        %v6015 = vadd.f32 0.0, %v6014
        %v6016 = vpop.f32.mrb[0].mxu0
        %6017 = vmatprep.mubr.f32.mxu0 0.0
        %6018 = vmatmul.mubr.f32.gmra.mrb[0].mxu0 %v5784
        %v6019 = vpop.f32.mrb[0].mxu0
        %v6020 = vadd.f32 0.0, %v6019
        %v6021 = vpop.f32.mrb[0].mxu0
        %6022 = vmatprep.mubr.f32.mxu0 0.0
        %6023 = vmatmul.mubr.f32.gmra.mrb[0].mxu0 %v5785
        %v6024 = vpop.f32.mrb[0].mxu0
        %v6025 = vadd.f32 0.0, %v6024
        %v6026 = vpop.f32.mrb[0].mxu0
        %6027 = vdwg.mxu0
        %v6028 = vld [vmem:[#allocation4] sm:$0xff]
        %v6029 = vld [vmem:[#allocation4 + $0x8] sm:$0xff]
        %v6030 = vld [vmem:[#allocation4 + $0x10] sm:$0xff]
        %v6031 = vld [vmem:[#allocation4 + $0x18] sm:$0xff]
        %v6032 = vld [vmem:[#allocation4 + $0x20] sm:$0xff]
        %v6033 = vld [vmem:[#allocation4 + $0x28] sm:$0xff]
        %v6034 = vld [vmem:[#allocation4 + $0x30] sm:$0xff]
        %v6035 = vld [vmem:[#allocation4 + $0x38] sm:$0xff]
        %v6036 = vld [vmem:[#allocation4 + $0x40] sm:$0xff]
        %v6037 = vld [vmem:[#allocation4 + $0x48] sm:$0xff]
        %v6038 = vld [vmem:[#allocation4 + $0x50] sm:$0xff]
        %v6039 = vld [vmem:[#allocation4 + $0x58] sm:$0xff]
        %v6040 = vld [vmem:[#allocation4 + $0x60] sm:$0xff]
        %v6041 = vld [vmem:[#allocation4 + $0x68] sm:$0xff]
        %v6042 = vld [vmem:[#allocation4 + $0x70] sm:$0xff]
        %v6043 = vld [vmem:[#allocation4 + $0x78] sm:$0xff]
        %v6044 = vld [vmem:[#allocation4 + $0x80] sm:$0xff]
        %v6045 = vld [vmem:[#allocation4 + $0x88] sm:$0xff]
        %v6046 = vld [vmem:[#allocation4 + $0x90] sm:$0xff]
        %v6047 = vld [vmem:[#allocation4 + $0x98] sm:$0xff]
        %v6048 = vld [vmem:[#allocation4 + $0xa0] sm:$0xff]
        %v6049 = vld [vmem:[#allocation4 + $0xa8] sm:$0xff]
        %v6050 = vld [vmem:[#allocation4 + $0xb0] sm:$0xff]
        %v6051 = vld [vmem:[#allocation4 + $0xb8] sm:$0xff]
        %v6052 = vld [vmem:[#allocation4 + $0xc0] sm:$0xff]
        %v6053 = vld [vmem:[#allocation4 + $0xc8] sm:$0xff]
        %v6054 = vld [vmem:[#allocation4 + $0xd0] sm:$0xff]
        %v6055 = vld [vmem:[#allocation4 + $0xd8] sm:$0xff]
        %v6056 = vld [vmem:[#allocation4 + $0xe0] sm:$0xff]
        %v6057 = vld [vmem:[#allocation4 + $0xe8] sm:$0xff]
        %v6058 = vld [vmem:[#allocation4 + $0xf0] sm:$0xff]
        %v6059 = vld [vmem:[#allocation4 + $0xf8] sm:$0xff]
        %v6060 = vadd.f32 %v6028, %v5870
        %v6061 = vadd.f32 %v6029, %v5875
        %v6062 = vadd.f32 %v6030, %v5880
        %v6063 = vadd.f32 %v6031, %v5885
        %v6064 = vadd.f32 %v6032, %v5890
        %v6065 = vadd.f32 %v6033, %v5895
        %v6066 = vadd.f32 %v6034, %v5900
        %v6067 = vadd.f32 %v6035, %v5905
        %v6068 = vadd.f32 %v6036, %v5910
        %v6069 = vadd.f32 %v6037, %v5915
        %v6070 = vadd.f32 %v6038, %v5920
        %v6071 = vadd.f32 %v6039, %v5925
        %v6072 = vadd.f32 %v6040, %v5930
        %v6073 = vadd.f32 %v6041, %v5935
        %v6074 = vadd.f32 %v6042, %v5940
        %v6075 = vadd.f32 %v6043, %v5945
        %v6076 = vadd.f32 %v6044, %v5950
        %v6077 = vadd.f32 %v6045, %v5955
        %v6078 = vadd.f32 %v6046, %v5960
        %v6079 = vadd.f32 %v6047, %v5965
        %v6080 = vadd.f32 %v6048, %v5970
        %v6081 = vadd.f32 %v6049, %v5975
        %v6082 = vadd.f32 %v6050, %v5980
        %v6083 = vadd.f32 %v6051, %v5985
        %v6084 = vadd.f32 %v6052, %v5990
        %v6085 = vadd.f32 %v6053, %v5995
        %v6086 = vadd.f32 %v6054, %v6000
        %v6087 = vadd.f32 %v6055, %v6005
        %v6088 = vadd.f32 %v6056, %v6010
        %v6089 = vadd.f32 %v6057, %v6015
        %v6090 = vadd.f32 %v6058, %v6020
        %v6091 = vadd.f32 %v6059, %v6025
        %6092 = vst [vmem:[#allocation4] sm:$0xff] %v6060
        %6093 = vst [vmem:[#allocation4 + $0x8] sm:$0xff] %v6061
        %6094 = vst [vmem:[#allocation4 + $0x10] sm:$0xff] %v6062
        %6095 = vst [vmem:[#allocation4 + $0x18] sm:$0xff] %v6063
        %6096 = vst [vmem:[#allocation4 + $0x20] sm:$0xff] %v6064
        %6097 = vst [vmem:[#allocation4 + $0x28] sm:$0xff] %v6065
        %6098 = vst [vmem:[#allocation4 + $0x30] sm:$0xff] %v6066
        %6099 = vst [vmem:[#allocation4 + $0x38] sm:$0xff] %v6067
        %6100 = vst [vmem:[#allocation4 + $0x40] sm:$0xff] %v6068
        %6101 = vst [vmem:[#allocation4 + $0x48] sm:$0xff] %v6069
        %6102 = vst [vmem:[#allocation4 + $0x50] sm:$0xff] %v6070
        %6103 = vst [vmem:[#allocation4 + $0x58] sm:$0xff] %v6071
        %6104 = vst [vmem:[#allocation4 + $0x60] sm:$0xff] %v6072
        %6105 = vst [vmem:[#allocation4 + $0x68] sm:$0xff] %v6073
        %6106 = vst [vmem:[#allocation4 + $0x70] sm:$0xff] %v6074
        %6107 = vst [vmem:[#allocation4 + $0x78] sm:$0xff] %v6075
        %6108 = vst [vmem:[#allocation4 + $0x80] sm:$0xff] %v6076
        %6109 = vst [vmem:[#allocation4 + $0x88] sm:$0xff] %v6077
        %6110 = vst [vmem:[#allocation4 + $0x90] sm:$0xff] %v6078
        %6111 = vst [vmem:[#allocation4 + $0x98] sm:$0xff] %v6079
        %6112 = vst [vmem:[#allocation4 + $0xa0] sm:$0xff] %v6080
        %6113 = vst [vmem:[#allocation4 + $0xa8] sm:$0xff] %v6081
        %6114 = vst [vmem:[#allocation4 + $0xb0] sm:$0xff] %v6082
        %6115 = vst [vmem:[#allocation4 + $0xb8] sm:$0xff] %v6083
        %6116 = vst [vmem:[#allocation4 + $0xc0] sm:$0xff] %v6084
        %6117 = vst [vmem:[#allocation4 + $0xc8] sm:$0xff] %v6085
        %6118 = vst [vmem:[#allocation4 + $0xd0] sm:$0xff] %v6086
        %6119 = vst [vmem:[#allocation4 + $0xd8] sm:$0xff] %v6087
        %6120 = vst [vmem:[#allocation4 + $0xe0] sm:$0xff] %v6088
        %6121 = vst [vmem:[#allocation4 + $0xe8] sm:$0xff] %v6089
        %6122 = vst [vmem:[#allocation4 + $0xf0] sm:$0xff] %v6090
        %6123 = vst [vmem:[#allocation4 + $0xf8] sm:$0xff] %v6091
        %s6124 = scalar_lea.vmem [#allocation3], 48
        %v6125 = vld [vmem:[%s6124] sm:$0xff]
        %v6126 = vld [vmem:[%s6124 + $0x8] sm:$0xff]
        %v6127 = vld [vmem:[%s6124 + $0x18] sm:$0xff]
        %v6128 = vld [vmem:[%s6124 + $0x20] sm:$0xff]
        %v6129 = vld [vmem:[%s6124 + $0x30] sm:$0xff]
        %v6130 = vld [vmem:[%s6124 + $0x38] sm:$0xff]
        %v6131 = vld [vmem:[%s6124 + $0x48] sm:$0xff]
        %v6132 = vld [vmem:[%s6124 + $0x50] sm:$0xff]
        %v6133 = vld [vmem:[%s6124 + $0x60] sm:$0xff]
        %v6134 = vld [vmem:[%s6124 + $0x68] sm:$0xff]
        %v6135 = vld [vmem:[%s6124 + $0x78] sm:$0xff]
        %v6136 = vld [vmem:[%s6124 + $0x80] sm:$0xff]
        %v6137 = vld [vmem:[%s6124 + $0x90] sm:$0xff]
        %v6138 = vld [vmem:[%s6124 + $0x98] sm:$0xff]
        %v6139 = vld [vmem:[%s6124 + $0xa8] sm:$0xff]
        %v6140 = vld [vmem:[%s6124 + $0xb0] sm:$0xff]
        %v6141 = vld [vmem:[%s6124 + $0xc0] sm:$0xff]
        %v6142 = vld [vmem:[%s6124 + $0xc8] sm:$0xff]
        %v6143 = vld [vmem:[%s6124 + $0xd8] sm:$0xff]
        %v6144 = vld [vmem:[%s6124 + $0xe0] sm:$0xff]
        %v6145 = vld [vmem:[%s6124 + $0xf0] sm:$0xff]
        %v6146 = vld [vmem:[%s6124 + $0xf8] sm:$0xff]
        %v6147 = vld [vmem:[%s6124 + $0x108] sm:$0xff]
        %v6148 = vld [vmem:[%s6124 + $0x110] sm:$0xff]
        %v6149 = vld [vmem:[%s6124 + $0x120] sm:$0xff]
        %v6150 = vld [vmem:[%s6124 + $0x128] sm:$0xff]
        %v6151 = vld [vmem:[%s6124 + $0x138] sm:$0xff]
        %v6152 = vld [vmem:[%s6124 + $0x140] sm:$0xff]
        %v6153 = vld [vmem:[%s6124 + $0x150] sm:$0xff]
        %v6154 = vld [vmem:[%s6124 + $0x158] sm:$0xff]
        %v6155 = vld [vmem:[%s6124 + $0x168] sm:$0xff]
        %v6156 = vld [vmem:[%s6124 + $0x170] sm:$0xff]
        %s6157 = scalar_lea.vmem [#allocation7], 768
        %v6158 = vld [vmem:[%s6157] sm:$0xff]
        %v6159 = vld [vmem:[%s6157 + $0x8] sm:$0xff]
        %v6160 = vld [vmem:[%s6157 + $0x10] sm:$0xff]
        %v6161 = vld [vmem:[%s6157 + $0x18] sm:$0xff]
        %v6162 = vld [vmem:[%s6157 + $0x20] sm:$0xff]
        %v6163 = vld [vmem:[%s6157 + $0x28] sm:$0xff]
        %v6164 = vld [vmem:[%s6157 + $0x30] sm:$0xff]
        %v6165 = vld [vmem:[%s6157 + $0x38] sm:$0xff]
        %v6166 = vld [vmem:[%s6157 + $0x40] sm:$0xff]
        %v6167 = vld [vmem:[%s6157 + $0x48] sm:$0xff]
        %v6168 = vld [vmem:[%s6157 + $0x50] sm:$0xff]
        %v6169 = vld [vmem:[%s6157 + $0x58] sm:$0xff]
        %v6170 = vld [vmem:[%s6157 + $0x60] sm:$0xff]
        %v6171 = vld [vmem:[%s6157 + $0x68] sm:$0xff]
        %v6172 = vld [vmem:[%s6157 + $0x70] sm:$0xff]
        %v6173 = vld [vmem:[%s6157 + $0x78] sm:$0xff]
        %6174 = vmatprep.subr.mxu0 0.0
        %6175 = vmatpush1.msra.mxu0 %v6158
        %6176 = vmatprep.subr.mxu0 0.0
        %6177 = vmatpush1.msra.mxu0 %v6159
        %6178 = vmatprep.subr.mxu0 0.0
        %6179 = vmatpush1.msra.mxu0 %v6160
        %6180 = vmatprep.subr.mxu0 0.0
        %6181 = vmatpush1.msra.mxu0 %v6161
        %6182 = vmatprep.subr.mxu0 0.0
        %6183 = vmatpush1.msra.mxu0 %v6162
        %6184 = vmatprep.subr.mxu0 0.0
        %6185 = vmatpush1.msra.mxu0 %v6163
        %6186 = vmatprep.subr.mxu0 0.0
        %6187 = vmatpush1.msra.mxu0 %v6164
        %6188 = vmatprep.subr.mxu0 0.0
        %6189 = vmatpush1.msra.mxu0 %v6165
        %6190 = vmatprep.subr.mxu0 0.0
        %6191 = vmatpush1.msra.mxu0 %v6166
        %6192 = vmatprep.subr.mxu0 0.0
        %6193 = vmatpush1.msra.mxu0 %v6167
        %6194 = vmatprep.subr.mxu0 0.0
        %6195 = vmatpush1.msra.mxu0 %v6168
        %6196 = vmatprep.subr.mxu0 0.0
        %6197 = vmatpush1.msra.mxu0 %v6169
        %6198 = vmatprep.subr.mxu0 0.0
        %6199 = vmatpush1.msra.mxu0 %v6170
        %6200 = vmatprep.subr.mxu0 0.0
        %6201 = vmatpush1.msra.mxu0 %v6171
        %6202 = vmatprep.subr.mxu0 0.0
        %6203 = vmatpush1.msra.mxu0 %v6172
        %6204 = vmatprep.subr.mxu0 0.0
        %6205 = vmatpush1.msra.mxu0 %v6173
        %6206 = vmatprep.subr.mxu0 0.0
        %6207 = vmatpush1.msra.mxu0 0.0
        %6208 = vmatprep.subr.mxu0 0.0
        %6209 = vmatpush1.msra.mxu0 0.0
        %6210 = vmatprep.subr.mxu0 0.0
        %6211 = vmatpush1.msra.mxu0 0.0
        %6212 = vmatprep.subr.mxu0 0.0
        %6213 = vmatpush1.msra.mxu0 0.0
        %6214 = vmatprep.subr.mxu0 0.0
        %6215 = vmatpush1.msra.mxu0 0.0
        %6216 = vmatprep.subr.mxu0 0.0
        %6217 = vmatpush1.msra.mxu0 0.0
        %6218 = vmatprep.subr.mxu0 0.0
        %6219 = vmatpush1.msra.mxu0 0.0
        %6220 = vmatprep.subr.mxu0 0.0
        %6221 = vmatpush1.msra.mxu0 0.0
        %6222 = vmatprep.subr.mxu0 0.0
        %6223 = vmatpush1.msra.mxu0 0.0
        %6224 = vmatprep.subr.mxu0 0.0
        %6225 = vmatpush1.msra.mxu0 0.0
        %6226 = vmatprep.subr.mxu0 0.0
        %6227 = vmatpush1.msra.mxu0 0.0
        %6228 = vmatprep.subr.mxu0 0.0
        %6229 = vmatpush1.msra.mxu0 0.0
        %6230 = vmatprep.subr.mxu0 0.0
        %6231 = vmatpush1.msra.mxu0 0.0
        %6232 = vmatprep.subr.mxu0 0.0
        %6233 = vmatpush1.msra.mxu0 0.0
        %6234 = vmatprep.subr.mxu0 0.0
        %6235 = vmatpush1.msra.mxu0 0.0
        %6236 = vmatprep.subr.mxu0 0.0
        %6237 = vmatpush1.msra.mxu0 0.0
        %6238 = vmatprep.mubr.f32.mxu0 0.0
        %6239 = vmatmul.mubr.f32.gmra.mrb[0].mxu0 %v6125
        %v6240 = vpop.f32.mrb[0].mxu0
        %v6241 = vadd.f32 0.0, %v6240
        %v6242 = vpop.f32.mrb[0].mxu0
        %6243 = vmatprep.mubr.f32.mxu0 0.0
        %6244 = vmatmul.mubr.f32.gmra.mrb[0].mxu0 %v6126
        %v6245 = vpop.f32.mrb[0].mxu0
        %v6246 = vadd.f32 0.0, %v6245
        %v6247 = vpop.f32.mrb[0].mxu0
        %6248 = vmatprep.mubr.f32.mxu0 0.0
        %6249 = vmatmul.mubr.f32.gmra.mrb[0].mxu0 %v6127
        %v6250 = vpop.f32.mrb[0].mxu0
        %v6251 = vadd.f32 0.0, %v6250
        %v6252 = vpop.f32.mrb[0].mxu0
        %6253 = vmatprep.mubr.f32.mxu0 0.0
        %6254 = vmatmul.mubr.f32.gmra.mrb[0].mxu0 %v6128
        %v6255 = vpop.f32.mrb[0].mxu0
        %v6256 = vadd.f32 0.0, %v6255
        %v6257 = vpop.f32.mrb[0].mxu0
        %6258 = vmatprep.mubr.f32.mxu0 0.0
        %6259 = vmatmul.mubr.f32.gmra.mrb[0].mxu0 %v6129
        %v6260 = vpop.f32.mrb[0].mxu0
        %v6261 = vadd.f32 0.0, %v6260
        %v6262 = vpop.f32.mrb[0].mxu0
        %6263 = vmatprep.mubr.f32.mxu0 0.0
        %6264 = vmatmul.mubr.f32.gmra.mrb[0].mxu0 %v6130
        %v6265 = vpop.f32.mrb[0].mxu0
        %v6266 = vadd.f32 0.0, %v6265
        %v6267 = vpop.f32.mrb[0].mxu0
        %6268 = vmatprep.mubr.f32.mxu0 0.0
        %6269 = vmatmul.mubr.f32.gmra.mrb[0].mxu0 %v6131
        %v6270 = vpop.f32.mrb[0].mxu0
        %v6271 = vadd.f32 0.0, %v6270
        %v6272 = vpop.f32.mrb[0].mxu0
        %6273 = vmatprep.mubr.f32.mxu0 0.0
        %6274 = vmatmul.mubr.f32.gmra.mrb[0].mxu0 %v6132
        %v6275 = vpop.f32.mrb[0].mxu0
        %v6276 = vadd.f32 0.0, %v6275
        %v6277 = vpop.f32.mrb[0].mxu0
        %6278 = vmatprep.mubr.f32.mxu0 0.0
        %6279 = vmatmul.mubr.f32.gmra.mrb[0].mxu0 %v6133
        %v6280 = vpop.f32.mrb[0].mxu0
        %v6281 = vadd.f32 0.0, %v6280
        %v6282 = vpop.f32.mrb[0].mxu0
        %6283 = vmatprep.mubr.f32.mxu0 0.0
        %6284 = vmatmul.mubr.f32.gmra.mrb[0].mxu0 %v6134
        %v6285 = vpop.f32.mrb[0].mxu0
        %v6286 = vadd.f32 0.0, %v6285
        %v6287 = vpop.f32.mrb[0].mxu0
        %6288 = vmatprep.mubr.f32.mxu0 0.0
        %6289 = vmatmul.mubr.f32.gmra.mrb[0].mxu0 %v6135
        %v6290 = vpop.f32.mrb[0].mxu0
        %v6291 = vadd.f32 0.0, %v6290
        %v6292 = vpop.f32.mrb[0].mxu0
        %6293 = vmatprep.mubr.f32.mxu0 0.0
        %6294 = vmatmul.mubr.f32.gmra.mrb[0].mxu0 %v6136
        %v6295 = vpop.f32.mrb[0].mxu0
        %v6296 = vadd.f32 0.0, %v6295
        %v6297 = vpop.f32.mrb[0].mxu0
        %6298 = vmatprep.mubr.f32.mxu0 0.0
        %6299 = vmatmul.mubr.f32.gmra.mrb[0].mxu0 %v6137
        %v6300 = vpop.f32.mrb[0].mxu0
        %v6301 = vadd.f32 0.0, %v6300
        %v6302 = vpop.f32.mrb[0].mxu0
        %6303 = vmatprep.mubr.f32.mxu0 0.0
        %6304 = vmatmul.mubr.f32.gmra.mrb[0].mxu0 %v6138
        %v6305 = vpop.f32.mrb[0].mxu0
        %v6306 = vadd.f32 0.0, %v6305
        %v6307 = vpop.f32.mrb[0].mxu0
        %6308 = vmatprep.mubr.f32.mxu0 0.0
        %6309 = vmatmul.mubr.f32.gmra.mrb[0].mxu0 %v6139
        %v6310 = vpop.f32.mrb[0].mxu0
        %v6311 = vadd.f32 0.0, %v6310
        %v6312 = vpop.f32.mrb[0].mxu0
        %6313 = vmatprep.mubr.f32.mxu0 0.0
        %6314 = vmatmul.mubr.f32.gmra.mrb[0].mxu0 %v6140
        %v6315 = vpop.f32.mrb[0].mxu0
        %v6316 = vadd.f32 0.0, %v6315
        %v6317 = vpop.f32.mrb[0].mxu0
        %6318 = vmatprep.mubr.f32.mxu0 0.0
        %6319 = vmatmul.mubr.f32.gmra.mrb[0].mxu0 %v6141
        %v6320 = vpop.f32.mrb[0].mxu0
        %v6321 = vadd.f32 0.0, %v6320
        %v6322 = vpop.f32.mrb[0].mxu0
        %6323 = vmatprep.mubr.f32.mxu0 0.0
        %6324 = vmatmul.mubr.f32.gmra.mrb[0].mxu0 %v6142
        %v6325 = vpop.f32.mrb[0].mxu0
        %v6326 = vadd.f32 0.0, %v6325
        %v6327 = vpop.f32.mrb[0].mxu0
        %6328 = vmatprep.mubr.f32.mxu0 0.0
        %6329 = vmatmul.mubr.f32.gmra.mrb[0].mxu0 %v6143
        %v6330 = vpop.f32.mrb[0].mxu0
        %v6331 = vadd.f32 0.0, %v6330
        %v6332 = vpop.f32.mrb[0].mxu0
        %6333 = vmatprep.mubr.f32.mxu0 0.0
        %6334 = vmatmul.mubr.f32.gmra.mrb[0].mxu0 %v6144
        %v6335 = vpop.f32.mrb[0].mxu0
        %v6336 = vadd.f32 0.0, %v6335
        %v6337 = vpop.f32.mrb[0].mxu0
        %6338 = vmatprep.mubr.f32.mxu0 0.0
        %6339 = vmatmul.mubr.f32.gmra.mrb[0].mxu0 %v6145
        %v6340 = vpop.f32.mrb[0].mxu0
        %v6341 = vadd.f32 0.0, %v6340
        %v6342 = vpop.f32.mrb[0].mxu0
        %6343 = vmatprep.mubr.f32.mxu0 0.0
        %6344 = vmatmul.mubr.f32.gmra.mrb[0].mxu0 %v6146
        %v6345 = vpop.f32.mrb[0].mxu0
        %v6346 = vadd.f32 0.0, %v6345
        %v6347 = vpop.f32.mrb[0].mxu0
        %6348 = vmatprep.mubr.f32.mxu0 0.0
        %6349 = vmatmul.mubr.f32.gmra.mrb[0].mxu0 %v6147
        %v6350 = vpop.f32.mrb[0].mxu0
        %v6351 = vadd.f32 0.0, %v6350
        %v6352 = vpop.f32.mrb[0].mxu0
        %6353 = vmatprep.mubr.f32.mxu0 0.0
        %6354 = vmatmul.mubr.f32.gmra.mrb[0].mxu0 %v6148
        %v6355 = vpop.f32.mrb[0].mxu0
        %v6356 = vadd.f32 0.0, %v6355
        %v6357 = vpop.f32.mrb[0].mxu0
        %6358 = vmatprep.mubr.f32.mxu0 0.0
        %6359 = vmatmul.mubr.f32.gmra.mrb[0].mxu0 %v6149
        %v6360 = vpop.f32.mrb[0].mxu0
        %v6361 = vadd.f32 0.0, %v6360
        %v6362 = vpop.f32.mrb[0].mxu0
        %6363 = vmatprep.mubr.f32.mxu0 0.0
        %6364 = vmatmul.mubr.f32.gmra.mrb[0].mxu0 %v6150
        %v6365 = vpop.f32.mrb[0].mxu0
        %v6366 = vadd.f32 0.0, %v6365
        %v6367 = vpop.f32.mrb[0].mxu0
        %6368 = vmatprep.mubr.f32.mxu0 0.0
        %6369 = vmatmul.mubr.f32.gmra.mrb[0].mxu0 %v6151
        %v6370 = vpop.f32.mrb[0].mxu0
        %v6371 = vadd.f32 0.0, %v6370
        %v6372 = vpop.f32.mrb[0].mxu0
        %6373 = vmatprep.mubr.f32.mxu0 0.0
        %6374 = vmatmul.mubr.f32.gmra.mrb[0].mxu0 %v6152
        %v6375 = vpop.f32.mrb[0].mxu0
        %v6376 = vadd.f32 0.0, %v6375
        %v6377 = vpop.f32.mrb[0].mxu0
        %6378 = vmatprep.mubr.f32.mxu0 0.0
        %6379 = vmatmul.mubr.f32.gmra.mrb[0].mxu0 %v6153
        %v6380 = vpop.f32.mrb[0].mxu0
        %v6381 = vadd.f32 0.0, %v6380
        %v6382 = vpop.f32.mrb[0].mxu0
        %6383 = vmatprep.mubr.f32.mxu0 0.0
        %6384 = vmatmul.mubr.f32.gmra.mrb[0].mxu0 %v6154
        %v6385 = vpop.f32.mrb[0].mxu0
        %v6386 = vadd.f32 0.0, %v6385
        %v6387 = vpop.f32.mrb[0].mxu0
        %6388 = vmatprep.mubr.f32.mxu0 0.0
        %6389 = vmatmul.mubr.f32.gmra.mrb[0].mxu0 %v6155
        %v6390 = vpop.f32.mrb[0].mxu0
        %v6391 = vadd.f32 0.0, %v6390
        %v6392 = vpop.f32.mrb[0].mxu0
        %6393 = vmatprep.mubr.f32.mxu0 0.0
        %6394 = vmatmul.mubr.f32.gmra.mrb[0].mxu0 %v6156
        %v6395 = vpop.f32.mrb[0].mxu0
        %v6396 = vadd.f32 0.0, %v6395
        %v6397 = vpop.f32.mrb[0].mxu0
        %6398 = vdwg.mxu0
        %v6399 = vld [vmem:[#allocation4] sm:$0xff]
        %v6400 = vld [vmem:[#allocation4 + $0x8] sm:$0xff]
        %v6401 = vld [vmem:[#allocation4 + $0x10] sm:$0xff]
        %v6402 = vld [vmem:[#allocation4 + $0x18] sm:$0xff]
        %v6403 = vld [vmem:[#allocation4 + $0x20] sm:$0xff]
        %v6404 = vld [vmem:[#allocation4 + $0x28] sm:$0xff]
        %v6405 = vld [vmem:[#allocation4 + $0x30] sm:$0xff]
        %v6406 = vld [vmem:[#allocation4 + $0x38] sm:$0xff]
        %v6407 = vld [vmem:[#allocation4 + $0x40] sm:$0xff]
        %v6408 = vld [vmem:[#allocation4 + $0x48] sm:$0xff]
        %v6409 = vld [vmem:[#allocation4 + $0x50] sm:$0xff]
        %v6410 = vld [vmem:[#allocation4 + $0x58] sm:$0xff]
        %v6411 = vld [vmem:[#allocation4 + $0x60] sm:$0xff]
        %v6412 = vld [vmem:[#allocation4 + $0x68] sm:$0xff]
        %v6413 = vld [vmem:[#allocation4 + $0x70] sm:$0xff]
        %v6414 = vld [vmem:[#allocation4 + $0x78] sm:$0xff]
        %v6415 = vld [vmem:[#allocation4 + $0x80] sm:$0xff]
        %v6416 = vld [vmem:[#allocation4 + $0x88] sm:$0xff]
        %v6417 = vld [vmem:[#allocation4 + $0x90] sm:$0xff]
        %v6418 = vld [vmem:[#allocation4 + $0x98] sm:$0xff]
        %v6419 = vld [vmem:[#allocation4 + $0xa0] sm:$0xff]
        %v6420 = vld [vmem:[#allocation4 + $0xa8] sm:$0xff]
        %v6421 = vld [vmem:[#allocation4 + $0xb0] sm:$0xff]
        %v6422 = vld [vmem:[#allocation4 + $0xb8] sm:$0xff]
        %v6423 = vld [vmem:[#allocation4 + $0xc0] sm:$0xff]
        %v6424 = vld [vmem:[#allocation4 + $0xc8] sm:$0xff]
        %v6425 = vld [vmem:[#allocation4 + $0xd0] sm:$0xff]
        %v6426 = vld [vmem:[#allocation4 + $0xd8] sm:$0xff]
        %v6427 = vld [vmem:[#allocation4 + $0xe0] sm:$0xff]
        %v6428 = vld [vmem:[#allocation4 + $0xe8] sm:$0xff]
        %v6429 = vld [vmem:[#allocation4 + $0xf0] sm:$0xff]
        %v6430 = vld [vmem:[#allocation4 + $0xf8] sm:$0xff]
        %v6431 = vadd.f32 %v6399, %v6241
        %v6432 = vadd.f32 %v6400, %v6246
        %v6433 = vadd.f32 %v6401, %v6251
        %v6434 = vadd.f32 %v6402, %v6256
        %v6435 = vadd.f32 %v6403, %v6261
        %v6436 = vadd.f32 %v6404, %v6266
        %v6437 = vadd.f32 %v6405, %v6271
        %v6438 = vadd.f32 %v6406, %v6276
        %v6439 = vadd.f32 %v6407, %v6281
        %v6440 = vadd.f32 %v6408, %v6286
        %v6441 = vadd.f32 %v6409, %v6291
        %v6442 = vadd.f32 %v6410, %v6296
        %v6443 = vadd.f32 %v6411, %v6301
        %v6444 = vadd.f32 %v6412, %v6306
        %v6445 = vadd.f32 %v6413, %v6311
        %v6446 = vadd.f32 %v6414, %v6316
        %v6447 = vadd.f32 %v6415, %v6321
        %v6448 = vadd.f32 %v6416, %v6326
        %v6449 = vadd.f32 %v6417, %v6331
        %v6450 = vadd.f32 %v6418, %v6336
        %v6451 = vadd.f32 %v6419, %v6341
        %v6452 = vadd.f32 %v6420, %v6346
        %v6453 = vadd.f32 %v6421, %v6351
        %v6454 = vadd.f32 %v6422, %v6356
        %v6455 = vadd.f32 %v6423, %v6361
        %v6456 = vadd.f32 %v6424, %v6366
        %v6457 = vadd.f32 %v6425, %v6371
        %v6458 = vadd.f32 %v6426, %v6376
        %v6459 = vadd.f32 %v6427, %v6381
        %v6460 = vadd.f32 %v6428, %v6386
        %v6461 = vadd.f32 %v6429, %v6391
        %v6462 = vadd.f32 %v6430, %v6396
        %6463 = vst [vmem:[#allocation4] sm:$0xff] %v6431
        %6464 = vst [vmem:[#allocation4 + $0x8] sm:$0xff] %v6432
        %6465 = vst [vmem:[#allocation4 + $0x10] sm:$0xff] %v6433
        %6466 = vst [vmem:[#allocation4 + $0x18] sm:$0xff] %v6434
        %6467 = vst [vmem:[#allocation4 + $0x20] sm:$0xff] %v6435
        %6468 = vst [vmem:[#allocation4 + $0x28] sm:$0xff] %v6436
        %6469 = vst [vmem:[#allocation4 + $0x30] sm:$0xff] %v6437
        %6470 = vst [vmem:[#allocation4 + $0x38] sm:$0xff] %v6438
        %6471 = vst [vmem:[#allocation4 + $0x40] sm:$0xff] %v6439
        %6472 = vst [vmem:[#allocation4 + $0x48] sm:$0xff] %v6440
        %6473 = vst [vmem:[#allocation4 + $0x50] sm:$0xff] %v6441
        %6474 = vst [vmem:[#allocation4 + $0x58] sm:$0xff] %v6442
        %6475 = vst [vmem:[#allocation4 + $0x60] sm:$0xff] %v6443
        %6476 = vst [vmem:[#allocation4 + $0x68] sm:$0xff] %v6444
        %6477 = vst [vmem:[#allocation4 + $0x70] sm:$0xff] %v6445
        %6478 = vst [vmem:[#allocation4 + $0x78] sm:$0xff] %v6446
        %6479 = vst [vmem:[#allocation4 + $0x80] sm:$0xff] %v6447
        %6480 = vst [vmem:[#allocation4 + $0x88] sm:$0xff] %v6448
        %6481 = vst [vmem:[#allocation4 + $0x90] sm:$0xff] %v6449
        %6482 = vst [vmem:[#allocation4 + $0x98] sm:$0xff] %v6450
        %6483 = vst [vmem:[#allocation4 + $0xa0] sm:$0xff] %v6451
        %6484 = vst [vmem:[#allocation4 + $0xa8] sm:$0xff] %v6452
        %6485 = vst [vmem:[#allocation4 + $0xb0] sm:$0xff] %v6453
        %6486 = vst [vmem:[#allocation4 + $0xb8] sm:$0xff] %v6454
        %6487 = vst [vmem:[#allocation4 + $0xc0] sm:$0xff] %v6455
        %6488 = vst [vmem:[#allocation4 + $0xc8] sm:$0xff] %v6456
        %6489 = vst [vmem:[#allocation4 + $0xd0] sm:$0xff] %v6457
        %6490 = vst [vmem:[#allocation4 + $0xd8] sm:$0xff] %v6458
        %6491 = vst [vmem:[#allocation4 + $0xe0] sm:$0xff] %v6459
        %6492 = vst [vmem:[#allocation4 + $0xe8] sm:$0xff] %v6460
        %6493 = vst [vmem:[#allocation4 + $0xf0] sm:$0xff] %v6461
        %6494 = vst [vmem:[#allocation4 + $0xf8] sm:$0xff] %v6462
        %v6495 = vld [vmem:[%s6124 + $0x1] sm:$0xff]
        %v6496 = vld [vmem:[%s6124 + $0x9] sm:$0xff]
        %v6497 = vld [vmem:[%s6124 + $0x19] sm:$0xff]
        %v6498 = vld [vmem:[%s6124 + $0x21] sm:$0xff]
        %v6499 = vld [vmem:[%s6124 + $0x31] sm:$0xff]
        %v6500 = vld [vmem:[%s6124 + $0x39] sm:$0xff]
        %v6501 = vld [vmem:[%s6124 + $0x49] sm:$0xff]
        %v6502 = vld [vmem:[%s6124 + $0x51] sm:$0xff]
        %v6503 = vld [vmem:[%s6124 + $0x61] sm:$0xff]
        %v6504 = vld [vmem:[%s6124 + $0x69] sm:$0xff]
        %v6505 = vld [vmem:[%s6124 + $0x79] sm:$0xff]
        %v6506 = vld [vmem:[%s6124 + $0x81] sm:$0xff]
        %v6507 = vld [vmem:[%s6124 + $0x91] sm:$0xff]
        %v6508 = vld [vmem:[%s6124 + $0x99] sm:$0xff]
        %v6509 = vld [vmem:[%s6124 + $0xa9] sm:$0xff]
        %v6510 = vld [vmem:[%s6124 + $0xb1] sm:$0xff]
        %v6511 = vld [vmem:[%s6124 + $0xc1] sm:$0xff]
        %v6512 = vld [vmem:[%s6124 + $0xc9] sm:$0xff]
        %v6513 = vld [vmem:[%s6124 + $0xd9] sm:$0xff]
        %v6514 = vld [vmem:[%s6124 + $0xe1] sm:$0xff]
        %v6515 = vld [vmem:[%s6124 + $0xf1] sm:$0xff]
        %v6516 = vld [vmem:[%s6124 + $0xf9] sm:$0xff]
        %v6517 = vld [vmem:[%s6124 + $0x109] sm:$0xff]
        %v6518 = vld [vmem:[%s6124 + $0x111] sm:$0xff]
        %v6519 = vld [vmem:[%s6124 + $0x121] sm:$0xff]
        %v6520 = vld [vmem:[%s6124 + $0x129] sm:$0xff]
        %v6521 = vld [vmem:[%s6124 + $0x139] sm:$0xff]
        %v6522 = vld [vmem:[%s6124 + $0x141] sm:$0xff]
        %v6523 = vld [vmem:[%s6124 + $0x151] sm:$0xff]
        %v6524 = vld [vmem:[%s6124 + $0x159] sm:$0xff]
        %v6525 = vld [vmem:[%s6124 + $0x169] sm:$0xff]
        %v6526 = vld [vmem:[%s6124 + $0x171] sm:$0xff]
        %s6527 = scalar_lea.vmem [#allocation7], 896
        %v6528 = vld [vmem:[%s6527] sm:$0xff]
        %v6529 = vld [vmem:[%s6527 + $0x8] sm:$0xff]
        %v6530 = vld [vmem:[%s6527 + $0x10] sm:$0xff]
        %v6531 = vld [vmem:[%s6527 + $0x18] sm:$0xff]
        %v6532 = vld [vmem:[%s6527 + $0x20] sm:$0xff]
        %v6533 = vld [vmem:[%s6527 + $0x28] sm:$0xff]
        %v6534 = vld [vmem:[%s6527 + $0x30] sm:$0xff]
        %v6535 = vld [vmem:[%s6527 + $0x38] sm:$0xff]
        %v6536 = vld [vmem:[%s6527 + $0x40] sm:$0xff]
        %v6537 = vld [vmem:[%s6527 + $0x48] sm:$0xff]
        %v6538 = vld [vmem:[%s6527 + $0x50] sm:$0xff]
        %v6539 = vld [vmem:[%s6527 + $0x58] sm:$0xff]
        %v6540 = vld [vmem:[%s6527 + $0x60] sm:$0xff]
        %v6541 = vld [vmem:[%s6527 + $0x68] sm:$0xff]
        %v6542 = vld [vmem:[%s6527 + $0x70] sm:$0xff]
        %v6543 = vld [vmem:[%s6527 + $0x78] sm:$0xff]
        %6544 = vmatprep.subr.mxu0 0.0
        %6545 = vmatpush1.msra.mxu0 %v6528
        %6546 = vmatprep.subr.mxu0 0.0
        %6547 = vmatpush1.msra.mxu0 %v6529
        %6548 = vmatprep.subr.mxu0 0.0
        %6549 = vmatpush1.msra.mxu0 %v6530
        %6550 = vmatprep.subr.mxu0 0.0
        %6551 = vmatpush1.msra.mxu0 %v6531
        %6552 = vmatprep.subr.mxu0 0.0
        %6553 = vmatpush1.msra.mxu0 %v6532
        %6554 = vmatprep.subr.mxu0 0.0
        %6555 = vmatpush1.msra.mxu0 %v6533
        %6556 = vmatprep.subr.mxu0 0.0
        %6557 = vmatpush1.msra.mxu0 %v6534
        %6558 = vmatprep.subr.mxu0 0.0
        %6559 = vmatpush1.msra.mxu0 %v6535
        %6560 = vmatprep.subr.mxu0 0.0
        %6561 = vmatpush1.msra.mxu0 %v6536
        %6562 = vmatprep.subr.mxu0 0.0
        %6563 = vmatpush1.msra.mxu0 %v6537
        %6564 = vmatprep.subr.mxu0 0.0
        %6565 = vmatpush1.msra.mxu0 %v6538
        %6566 = vmatprep.subr.mxu0 0.0
        %6567 = vmatpush1.msra.mxu0 %v6539
        %6568 = vmatprep.subr.mxu0 0.0
        %6569 = vmatpush1.msra.mxu0 %v6540
        %6570 = vmatprep.subr.mxu0 0.0
        %6571 = vmatpush1.msra.mxu0 %v6541
        %6572 = vmatprep.subr.mxu0 0.0
        %6573 = vmatpush1.msra.mxu0 %v6542
        %6574 = vmatprep.subr.mxu0 0.0
        %6575 = vmatpush1.msra.mxu0 %v6543
        %6576 = vmatprep.subr.mxu0 0.0
        %6577 = vmatpush1.msra.mxu0 0.0
        %6578 = vmatprep.subr.mxu0 0.0
        %6579 = vmatpush1.msra.mxu0 0.0
        %6580 = vmatprep.subr.mxu0 0.0
        %6581 = vmatpush1.msra.mxu0 0.0
        %6582 = vmatprep.subr.mxu0 0.0
        %6583 = vmatpush1.msra.mxu0 0.0
        %6584 = vmatprep.subr.mxu0 0.0
        %6585 = vmatpush1.msra.mxu0 0.0
        %6586 = vmatprep.subr.mxu0 0.0
        %6587 = vmatpush1.msra.mxu0 0.0
        %6588 = vmatprep.subr.mxu0 0.0
        %6589 = vmatpush1.msra.mxu0 0.0
        %6590 = vmatprep.subr.mxu0 0.0
        %6591 = vmatpush1.msra.mxu0 0.0
        %6592 = vmatprep.subr.mxu0 0.0
        %6593 = vmatpush1.msra.mxu0 0.0
        %6594 = vmatprep.subr.mxu0 0.0
        %6595 = vmatpush1.msra.mxu0 0.0
        %6596 = vmatprep.subr.mxu0 0.0
        %6597 = vmatpush1.msra.mxu0 0.0
        %6598 = vmatprep.subr.mxu0 0.0
        %6599 = vmatpush1.msra.mxu0 0.0
        %6600 = vmatprep.subr.mxu0 0.0
        %6601 = vmatpush1.msra.mxu0 0.0
        %6602 = vmatprep.subr.mxu0 0.0
        %6603 = vmatpush1.msra.mxu0 0.0
        %6604 = vmatprep.subr.mxu0 0.0
        %6605 = vmatpush1.msra.mxu0 0.0
        %6606 = vmatprep.subr.mxu0 0.0
        %6607 = vmatpush1.msra.mxu0 0.0
        %6608 = vmatprep.mubr.f32.mxu0 0.0
        %6609 = vmatmul.mubr.f32.gmra.mrb[0].mxu0 %v6495
        %v6610 = vpop.f32.mrb[0].mxu0
        %v6611 = vadd.f32 0.0, %v6610
        %v6612 = vpop.f32.mrb[0].mxu0
        %6613 = vmatprep.mubr.f32.mxu0 0.0
        %6614 = vmatmul.mubr.f32.gmra.mrb[0].mxu0 %v6496
        %v6615 = vpop.f32.mrb[0].mxu0
        %v6616 = vadd.f32 0.0, %v6615
        %v6617 = vpop.f32.mrb[0].mxu0
        %6618 = vmatprep.mubr.f32.mxu0 0.0
        %6619 = vmatmul.mubr.f32.gmra.mrb[0].mxu0 %v6497
        %v6620 = vpop.f32.mrb[0].mxu0
        %v6621 = vadd.f32 0.0, %v6620
        %v6622 = vpop.f32.mrb[0].mxu0
        %6623 = vmatprep.mubr.f32.mxu0 0.0
        %6624 = vmatmul.mubr.f32.gmra.mrb[0].mxu0 %v6498
        %v6625 = vpop.f32.mrb[0].mxu0
        %v6626 = vadd.f32 0.0, %v6625
        %v6627 = vpop.f32.mrb[0].mxu0
        %6628 = vmatprep.mubr.f32.mxu0 0.0
        %6629 = vmatmul.mubr.f32.gmra.mrb[0].mxu0 %v6499
        %v6630 = vpop.f32.mrb[0].mxu0
        %v6631 = vadd.f32 0.0, %v6630
        %v6632 = vpop.f32.mrb[0].mxu0
        %6633 = vmatprep.mubr.f32.mxu0 0.0
        %6634 = vmatmul.mubr.f32.gmra.mrb[0].mxu0 %v6500
        %v6635 = vpop.f32.mrb[0].mxu0
        %v6636 = vadd.f32 0.0, %v6635
        %v6637 = vpop.f32.mrb[0].mxu0
        %6638 = vmatprep.mubr.f32.mxu0 0.0
        %6639 = vmatmul.mubr.f32.gmra.mrb[0].mxu0 %v6501
        %v6640 = vpop.f32.mrb[0].mxu0
        %v6641 = vadd.f32 0.0, %v6640
        %v6642 = vpop.f32.mrb[0].mxu0
        %6643 = vmatprep.mubr.f32.mxu0 0.0
        %6644 = vmatmul.mubr.f32.gmra.mrb[0].mxu0 %v6502
        %v6645 = vpop.f32.mrb[0].mxu0
        %v6646 = vadd.f32 0.0, %v6645
        %v6647 = vpop.f32.mrb[0].mxu0
        %6648 = vmatprep.mubr.f32.mxu0 0.0
        %6649 = vmatmul.mubr.f32.gmra.mrb[0].mxu0 %v6503
        %v6650 = vpop.f32.mrb[0].mxu0
        %v6651 = vadd.f32 0.0, %v6650
        %v6652 = vpop.f32.mrb[0].mxu0
        %6653 = vmatprep.mubr.f32.mxu0 0.0
        %6654 = vmatmul.mubr.f32.gmra.mrb[0].mxu0 %v6504
        %v6655 = vpop.f32.mrb[0].mxu0
        %v6656 = vadd.f32 0.0, %v6655
        %v6657 = vpop.f32.mrb[0].mxu0
        %6658 = vmatprep.mubr.f32.mxu0 0.0
        %6659 = vmatmul.mubr.f32.gmra.mrb[0].mxu0 %v6505
        %v6660 = vpop.f32.mrb[0].mxu0
        %v6661 = vadd.f32 0.0, %v6660
        %v6662 = vpop.f32.mrb[0].mxu0
        %6663 = vmatprep.mubr.f32.mxu0 0.0
        %6664 = vmatmul.mubr.f32.gmra.mrb[0].mxu0 %v6506
        %v6665 = vpop.f32.mrb[0].mxu0
        %v6666 = vadd.f32 0.0, %v6665
        %v6667 = vpop.f32.mrb[0].mxu0
        %6668 = vmatprep.mubr.f32.mxu0 0.0
        %6669 = vmatmul.mubr.f32.gmra.mrb[0].mxu0 %v6507
        %v6670 = vpop.f32.mrb[0].mxu0
        %v6671 = vadd.f32 0.0, %v6670
        %v6672 = vpop.f32.mrb[0].mxu0
        %6673 = vmatprep.mubr.f32.mxu0 0.0
        %6674 = vmatmul.mubr.f32.gmra.mrb[0].mxu0 %v6508
        %v6675 = vpop.f32.mrb[0].mxu0
        %v6676 = vadd.f32 0.0, %v6675
        %v6677 = vpop.f32.mrb[0].mxu0
        %6678 = vmatprep.mubr.f32.mxu0 0.0
        %6679 = vmatmul.mubr.f32.gmra.mrb[0].mxu0 %v6509
        %v6680 = vpop.f32.mrb[0].mxu0
        %v6681 = vadd.f32 0.0, %v6680
        %v6682 = vpop.f32.mrb[0].mxu0
        %6683 = vmatprep.mubr.f32.mxu0 0.0
        %6684 = vmatmul.mubr.f32.gmra.mrb[0].mxu0 %v6510
        %v6685 = vpop.f32.mrb[0].mxu0
        %v6686 = vadd.f32 0.0, %v6685
        %v6687 = vpop.f32.mrb[0].mxu0
        %6688 = vmatprep.mubr.f32.mxu0 0.0
        %6689 = vmatmul.mubr.f32.gmra.mrb[0].mxu0 %v6511
        %v6690 = vpop.f32.mrb[0].mxu0
        %v6691 = vadd.f32 0.0, %v6690
        %v6692 = vpop.f32.mrb[0].mxu0
        %6693 = vmatprep.mubr.f32.mxu0 0.0
        %6694 = vmatmul.mubr.f32.gmra.mrb[0].mxu0 %v6512
        %v6695 = vpop.f32.mrb[0].mxu0
        %v6696 = vadd.f32 0.0, %v6695
        %v6697 = vpop.f32.mrb[0].mxu0
        %6698 = vmatprep.mubr.f32.mxu0 0.0
        %6699 = vmatmul.mubr.f32.gmra.mrb[0].mxu0 %v6513
        %v6700 = vpop.f32.mrb[0].mxu0
        %v6701 = vadd.f32 0.0, %v6700
        %v6702 = vpop.f32.mrb[0].mxu0
        %6703 = vmatprep.mubr.f32.mxu0 0.0
        %6704 = vmatmul.mubr.f32.gmra.mrb[0].mxu0 %v6514
        %v6705 = vpop.f32.mrb[0].mxu0
        %v6706 = vadd.f32 0.0, %v6705
        %v6707 = vpop.f32.mrb[0].mxu0
        %6708 = vmatprep.mubr.f32.mxu0 0.0
        %6709 = vmatmul.mubr.f32.gmra.mrb[0].mxu0 %v6515
        %v6710 = vpop.f32.mrb[0].mxu0
        %v6711 = vadd.f32 0.0, %v6710
        %v6712 = vpop.f32.mrb[0].mxu0
        %6713 = vmatprep.mubr.f32.mxu0 0.0
        %6714 = vmatmul.mubr.f32.gmra.mrb[0].mxu0 %v6516
        %v6715 = vpop.f32.mrb[0].mxu0
        %v6716 = vadd.f32 0.0, %v6715
        %v6717 = vpop.f32.mrb[0].mxu0
        %6718 = vmatprep.mubr.f32.mxu0 0.0
        %6719 = vmatmul.mubr.f32.gmra.mrb[0].mxu0 %v6517
        %v6720 = vpop.f32.mrb[0].mxu0
        %v6721 = vadd.f32 0.0, %v6720
        %v6722 = vpop.f32.mrb[0].mxu0
        %6723 = vmatprep.mubr.f32.mxu0 0.0
        %6724 = vmatmul.mubr.f32.gmra.mrb[0].mxu0 %v6518
        %v6725 = vpop.f32.mrb[0].mxu0
        %v6726 = vadd.f32 0.0, %v6725
        %v6727 = vpop.f32.mrb[0].mxu0
        %6728 = vmatprep.mubr.f32.mxu0 0.0
        %6729 = vmatmul.mubr.f32.gmra.mrb[0].mxu0 %v6519
        %v6730 = vpop.f32.mrb[0].mxu0
        %v6731 = vadd.f32 0.0, %v6730
        %v6732 = vpop.f32.mrb[0].mxu0
        %6733 = vmatprep.mubr.f32.mxu0 0.0
        %6734 = vmatmul.mubr.f32.gmra.mrb[0].mxu0 %v6520
        %v6735 = vpop.f32.mrb[0].mxu0
        %v6736 = vadd.f32 0.0, %v6735
        %v6737 = vpop.f32.mrb[0].mxu0
        %6738 = vmatprep.mubr.f32.mxu0 0.0
        %6739 = vmatmul.mubr.f32.gmra.mrb[0].mxu0 %v6521
        %v6740 = vpop.f32.mrb[0].mxu0
        %v6741 = vadd.f32 0.0, %v6740
        %v6742 = vpop.f32.mrb[0].mxu0
        %6743 = vmatprep.mubr.f32.mxu0 0.0
        %6744 = vmatmul.mubr.f32.gmra.mrb[0].mxu0 %v6522
        %v6745 = vpop.f32.mrb[0].mxu0
        %v6746 = vadd.f32 0.0, %v6745
        %v6747 = vpop.f32.mrb[0].mxu0
        %6748 = vmatprep.mubr.f32.mxu0 0.0
        %6749 = vmatmul.mubr.f32.gmra.mrb[0].mxu0 %v6523
        %v6750 = vpop.f32.mrb[0].mxu0
        %v6751 = vadd.f32 0.0, %v6750
        %v6752 = vpop.f32.mrb[0].mxu0
        %6753 = vmatprep.mubr.f32.mxu0 0.0
        %6754 = vmatmul.mubr.f32.gmra.mrb[0].mxu0 %v6524
        %v6755 = vpop.f32.mrb[0].mxu0
        %v6756 = vadd.f32 0.0, %v6755
        %v6757 = vpop.f32.mrb[0].mxu0
        %6758 = vmatprep.mubr.f32.mxu0 0.0
        %6759 = vmatmul.mubr.f32.gmra.mrb[0].mxu0 %v6525
        %v6760 = vpop.f32.mrb[0].mxu0
        %v6761 = vadd.f32 0.0, %v6760
        %v6762 = vpop.f32.mrb[0].mxu0
        %6763 = vmatprep.mubr.f32.mxu0 0.0
        %6764 = vmatmul.mubr.f32.gmra.mrb[0].mxu0 %v6526
        %v6765 = vpop.f32.mrb[0].mxu0
        %v6766 = vadd.f32 0.0, %v6765
        %v6767 = vpop.f32.mrb[0].mxu0
        %6768 = vdwg.mxu0
        %v6769 = vld [vmem:[#allocation4] sm:$0xff]
        %v6770 = vld [vmem:[#allocation4 + $0x8] sm:$0xff]
        %v6771 = vld [vmem:[#allocation4 + $0x10] sm:$0xff]
        %v6772 = vld [vmem:[#allocation4 + $0x18] sm:$0xff]
        %v6773 = vld [vmem:[#allocation4 + $0x20] sm:$0xff]
        %v6774 = vld [vmem:[#allocation4 + $0x28] sm:$0xff]
        %v6775 = vld [vmem:[#allocation4 + $0x30] sm:$0xff]
        %v6776 = vld [vmem:[#allocation4 + $0x38] sm:$0xff]
        %v6777 = vld [vmem:[#allocation4 + $0x40] sm:$0xff]
        %v6778 = vld [vmem:[#allocation4 + $0x48] sm:$0xff]
        %v6779 = vld [vmem:[#allocation4 + $0x50] sm:$0xff]
        %v6780 = vld [vmem:[#allocation4 + $0x58] sm:$0xff]
        %v6781 = vld [vmem:[#allocation4 + $0x60] sm:$0xff]
        %v6782 = vld [vmem:[#allocation4 + $0x68] sm:$0xff]
        %v6783 = vld [vmem:[#allocation4 + $0x70] sm:$0xff]
        %v6784 = vld [vmem:[#allocation4 + $0x78] sm:$0xff]
        %v6785 = vld [vmem:[#allocation4 + $0x80] sm:$0xff]
        %v6786 = vld [vmem:[#allocation4 + $0x88] sm:$0xff]
        %v6787 = vld [vmem:[#allocation4 + $0x90] sm:$0xff]
        %v6788 = vld [vmem:[#allocation4 + $0x98] sm:$0xff]
        %v6789 = vld [vmem:[#allocation4 + $0xa0] sm:$0xff]
        %v6790 = vld [vmem:[#allocation4 + $0xa8] sm:$0xff]
        %v6791 = vld [vmem:[#allocation4 + $0xb0] sm:$0xff]
        %v6792 = vld [vmem:[#allocation4 + $0xb8] sm:$0xff]
        %v6793 = vld [vmem:[#allocation4 + $0xc0] sm:$0xff]
        %v6794 = vld [vmem:[#allocation4 + $0xc8] sm:$0xff]
        %v6795 = vld [vmem:[#allocation4 + $0xd0] sm:$0xff]
        %v6796 = vld [vmem:[#allocation4 + $0xd8] sm:$0xff]
        %v6797 = vld [vmem:[#allocation4 + $0xe0] sm:$0xff]
        %v6798 = vld [vmem:[#allocation4 + $0xe8] sm:$0xff]
        %v6799 = vld [vmem:[#allocation4 + $0xf0] sm:$0xff]
        %v6800 = vld [vmem:[#allocation4 + $0xf8] sm:$0xff]
        %v6801 = vadd.f32 %v6769, %v6611
        %v6802 = vadd.f32 %v6770, %v6616
        %v6803 = vadd.f32 %v6771, %v6621
        %v6804 = vadd.f32 %v6772, %v6626
        %v6805 = vadd.f32 %v6773, %v6631
        %v6806 = vadd.f32 %v6774, %v6636
        %v6807 = vadd.f32 %v6775, %v6641
        %v6808 = vadd.f32 %v6776, %v6646
        %v6809 = vadd.f32 %v6777, %v6651
        %v6810 = vadd.f32 %v6778, %v6656
        %v6811 = vadd.f32 %v6779, %v6661
        %v6812 = vadd.f32 %v6780, %v6666
        %v6813 = vadd.f32 %v6781, %v6671
        %v6814 = vadd.f32 %v6782, %v6676
        %v6815 = vadd.f32 %v6783, %v6681
        %v6816 = vadd.f32 %v6784, %v6686
        %v6817 = vadd.f32 %v6785, %v6691
        %v6818 = vadd.f32 %v6786, %v6696
        %v6819 = vadd.f32 %v6787, %v6701
        %v6820 = vadd.f32 %v6788, %v6706
        %v6821 = vadd.f32 %v6789, %v6711
        %v6822 = vadd.f32 %v6790, %v6716
        %v6823 = vadd.f32 %v6791, %v6721
        %v6824 = vadd.f32 %v6792, %v6726
        %v6825 = vadd.f32 %v6793, %v6731
        %v6826 = vadd.f32 %v6794, %v6736
        %v6827 = vadd.f32 %v6795, %v6741
        %v6828 = vadd.f32 %v6796, %v6746
        %v6829 = vadd.f32 %v6797, %v6751
        %v6830 = vadd.f32 %v6798, %v6756
        %v6831 = vadd.f32 %v6799, %v6761
        %v6832 = vadd.f32 %v6800, %v6766
        %6833 = vst [vmem:[#allocation4] sm:$0xff] %v6801
        %6834 = vst [vmem:[#allocation4 + $0x8] sm:$0xff] %v6802
        %6835 = vst [vmem:[#allocation4 + $0x10] sm:$0xff] %v6803
        %6836 = vst [vmem:[#allocation4 + $0x18] sm:$0xff] %v6804
        %6837 = vst [vmem:[#allocation4 + $0x20] sm:$0xff] %v6805
        %6838 = vst [vmem:[#allocation4 + $0x28] sm:$0xff] %v6806
        %6839 = vst [vmem:[#allocation4 + $0x30] sm:$0xff] %v6807
        %6840 = vst [vmem:[#allocation4 + $0x38] sm:$0xff] %v6808
        %6841 = vst [vmem:[#allocation4 + $0x40] sm:$0xff] %v6809
        %6842 = vst [vmem:[#allocation4 + $0x48] sm:$0xff] %v6810
        %6843 = vst [vmem:[#allocation4 + $0x50] sm:$0xff] %v6811
        %6844 = vst [vmem:[#allocation4 + $0x58] sm:$0xff] %v6812
        %6845 = vst [vmem:[#allocation4 + $0x60] sm:$0xff] %v6813
        %6846 = vst [vmem:[#allocation4 + $0x68] sm:$0xff] %v6814
        %6847 = vst [vmem:[#allocation4 + $0x70] sm:$0xff] %v6815
        %6848 = vst [vmem:[#allocation4 + $0x78] sm:$0xff] %v6816
        %6849 = vst [vmem:[#allocation4 + $0x80] sm:$0xff] %v6817
        %6850 = vst [vmem:[#allocation4 + $0x88] sm:$0xff] %v6818
        %6851 = vst [vmem:[#allocation4 + $0x90] sm:$0xff] %v6819
        %6852 = vst [vmem:[#allocation4 + $0x98] sm:$0xff] %v6820
        %6853 = vst [vmem:[#allocation4 + $0xa0] sm:$0xff] %v6821
        %6854 = vst [vmem:[#allocation4 + $0xa8] sm:$0xff] %v6822
        %6855 = vst [vmem:[#allocation4 + $0xb0] sm:$0xff] %v6823
        %6856 = vst [vmem:[#allocation4 + $0xb8] sm:$0xff] %v6824
        %6857 = vst [vmem:[#allocation4 + $0xc0] sm:$0xff] %v6825
        %6858 = vst [vmem:[#allocation4 + $0xc8] sm:$0xff] %v6826
        %6859 = vst [vmem:[#allocation4 + $0xd0] sm:$0xff] %v6827
        %6860 = vst [vmem:[#allocation4 + $0xd8] sm:$0xff] %v6828
        %6861 = vst [vmem:[#allocation4 + $0xe0] sm:$0xff] %v6829
        %6862 = vst [vmem:[#allocation4 + $0xe8] sm:$0xff] %v6830
        %6863 = vst [vmem:[#allocation4 + $0xf0] sm:$0xff] %v6831
        %6864 = vst [vmem:[#allocation4 + $0xf8] sm:$0xff] %v6832
        %v6865 = vld [vmem:[%s6124 + $0x2] sm:$0xff]
        %v6866 = vld [vmem:[%s6124 + $0xa] sm:$0xff]
        %v6867 = vld [vmem:[%s6124 + $0x1a] sm:$0xff]
        %v6868 = vld [vmem:[%s6124 + $0x22] sm:$0xff]
        %v6869 = vld [vmem:[%s6124 + $0x32] sm:$0xff]
        %v6870 = vld [vmem:[%s6124 + $0x3a] sm:$0xff]
        %v6871 = vld [vmem:[%s6124 + $0x4a] sm:$0xff]
        %v6872 = vld [vmem:[%s6124 + $0x52] sm:$0xff]
        %v6873 = vld [vmem:[%s6124 + $0x62] sm:$0xff]
        %v6874 = vld [vmem:[%s6124 + $0x6a] sm:$0xff]
        %v6875 = vld [vmem:[%s6124 + $0x7a] sm:$0xff]
        %v6876 = vld [vmem:[%s6124 + $0x82] sm:$0xff]
        %v6877 = vld [vmem:[%s6124 + $0x92] sm:$0xff]
        %v6878 = vld [vmem:[%s6124 + $0x9a] sm:$0xff]
        %v6879 = vld [vmem:[%s6124 + $0xaa] sm:$0xff]
        %v6880 = vld [vmem:[%s6124 + $0xb2] sm:$0xff]
        %v6881 = vld [vmem:[%s6124 + $0xc2] sm:$0xff]
        %v6882 = vld [vmem:[%s6124 + $0xca] sm:$0xff]
        %v6883 = vld [vmem:[%s6124 + $0xda] sm:$0xff]
        %v6884 = vld [vmem:[%s6124 + $0xe2] sm:$0xff]
        %v6885 = vld [vmem:[%s6124 + $0xf2] sm:$0xff]
        %v6886 = vld [vmem:[%s6124 + $0xfa] sm:$0xff]
        %v6887 = vld [vmem:[%s6124 + $0x10a] sm:$0xff]
        %v6888 = vld [vmem:[%s6124 + $0x112] sm:$0xff]
        %v6889 = vld [vmem:[%s6124 + $0x122] sm:$0xff]
        %v6890 = vld [vmem:[%s6124 + $0x12a] sm:$0xff]
        %v6891 = vld [vmem:[%s6124 + $0x13a] sm:$0xff]
        %v6892 = vld [vmem:[%s6124 + $0x142] sm:$0xff]
        %v6893 = vld [vmem:[%s6124 + $0x152] sm:$0xff]
        %v6894 = vld [vmem:[%s6124 + $0x15a] sm:$0xff]
        %v6895 = vld [vmem:[%s6124 + $0x16a] sm:$0xff]
        %v6896 = vld [vmem:[%s6124 + $0x172] sm:$0xff]
        %s6897 = scalar_lea.vmem [#allocation7], 1024
        %v6898 = vld [vmem:[%s6897] sm:$0xff]
        %v6899 = vld [vmem:[%s6897 + $0x8] sm:$0xff]
        %v6900 = vld [vmem:[%s6897 + $0x10] sm:$0xff]
        %v6901 = vld [vmem:[%s6897 + $0x18] sm:$0xff]
        %v6902 = vld [vmem:[%s6897 + $0x20] sm:$0xff]
        %v6903 = vld [vmem:[%s6897 + $0x28] sm:$0xff]
        %v6904 = vld [vmem:[%s6897 + $0x30] sm:$0xff]
        %v6905 = vld [vmem:[%s6897 + $0x38] sm:$0xff]
        %v6906 = vld [vmem:[%s6897 + $0x40] sm:$0xff]
        %v6907 = vld [vmem:[%s6897 + $0x48] sm:$0xff]
        %v6908 = vld [vmem:[%s6897 + $0x50] sm:$0xff]
        %v6909 = vld [vmem:[%s6897 + $0x58] sm:$0xff]
        %v6910 = vld [vmem:[%s6897 + $0x60] sm:$0xff]
        %v6911 = vld [vmem:[%s6897 + $0x68] sm:$0xff]
        %v6912 = vld [vmem:[%s6897 + $0x70] sm:$0xff]
        %v6913 = vld [vmem:[%s6897 + $0x78] sm:$0xff]
        %6914 = vmatprep.subr.mxu0 0.0
        %6915 = vmatpush1.msra.mxu0 %v6898
        %6916 = vmatprep.subr.mxu0 0.0
        %6917 = vmatpush1.msra.mxu0 %v6899
        %6918 = vmatprep.subr.mxu0 0.0
        %6919 = vmatpush1.msra.mxu0 %v6900
        %6920 = vmatprep.subr.mxu0 0.0
        %6921 = vmatpush1.msra.mxu0 %v6901
        %6922 = vmatprep.subr.mxu0 0.0
        %6923 = vmatpush1.msra.mxu0 %v6902
        %6924 = vmatprep.subr.mxu0 0.0
        %6925 = vmatpush1.msra.mxu0 %v6903
        %6926 = vmatprep.subr.mxu0 0.0
        %6927 = vmatpush1.msra.mxu0 %v6904
        %6928 = vmatprep.subr.mxu0 0.0
        %6929 = vmatpush1.msra.mxu0 %v6905
        %6930 = vmatprep.subr.mxu0 0.0
        %6931 = vmatpush1.msra.mxu0 %v6906
        %6932 = vmatprep.subr.mxu0 0.0
        %6933 = vmatpush1.msra.mxu0 %v6907
        %6934 = vmatprep.subr.mxu0 0.0
        %6935 = vmatpush1.msra.mxu0 %v6908
        %6936 = vmatprep.subr.mxu0 0.0
        %6937 = vmatpush1.msra.mxu0 %v6909
        %6938 = vmatprep.subr.mxu0 0.0
        %6939 = vmatpush1.msra.mxu0 %v6910
        %6940 = vmatprep.subr.mxu0 0.0
        %6941 = vmatpush1.msra.mxu0 %v6911
        %6942 = vmatprep.subr.mxu0 0.0
        %6943 = vmatpush1.msra.mxu0 %v6912
        %6944 = vmatprep.subr.mxu0 0.0
        %6945 = vmatpush1.msra.mxu0 %v6913
        %6946 = vmatprep.subr.mxu0 0.0
        %6947 = vmatpush1.msra.mxu0 0.0
        %6948 = vmatprep.subr.mxu0 0.0
        %6949 = vmatpush1.msra.mxu0 0.0
        %6950 = vmatprep.subr.mxu0 0.0
        %6951 = vmatpush1.msra.mxu0 0.0
        %6952 = vmatprep.subr.mxu0 0.0
        %6953 = vmatpush1.msra.mxu0 0.0
        %6954 = vmatprep.subr.mxu0 0.0
        %6955 = vmatpush1.msra.mxu0 0.0
        %6956 = vmatprep.subr.mxu0 0.0
        %6957 = vmatpush1.msra.mxu0 0.0
        %6958 = vmatprep.subr.mxu0 0.0
        %6959 = vmatpush1.msra.mxu0 0.0
        %6960 = vmatprep.subr.mxu0 0.0
        %6961 = vmatpush1.msra.mxu0 0.0
        %6962 = vmatprep.subr.mxu0 0.0
        %6963 = vmatpush1.msra.mxu0 0.0
        %6964 = vmatprep.subr.mxu0 0.0
        %6965 = vmatpush1.msra.mxu0 0.0
        %6966 = vmatprep.subr.mxu0 0.0
        %6967 = vmatpush1.msra.mxu0 0.0
        %6968 = vmatprep.subr.mxu0 0.0
        %6969 = vmatpush1.msra.mxu0 0.0
        %6970 = vmatprep.subr.mxu0 0.0
        %6971 = vmatpush1.msra.mxu0 0.0
        %6972 = vmatprep.subr.mxu0 0.0
        %6973 = vmatpush1.msra.mxu0 0.0
        %6974 = vmatprep.subr.mxu0 0.0
        %6975 = vmatpush1.msra.mxu0 0.0
        %6976 = vmatprep.subr.mxu0 0.0
        %6977 = vmatpush1.msra.mxu0 0.0
        %6978 = vmatprep.mubr.f32.mxu0 0.0
        %6979 = vmatmul.mubr.f32.gmra.mrb[0].mxu0 %v6865
        %v6980 = vpop.f32.mrb[0].mxu0
        %v6981 = vadd.f32 0.0, %v6980
        %v6982 = vpop.f32.mrb[0].mxu0
        %6983 = vmatprep.mubr.f32.mxu0 0.0
        %6984 = vmatmul.mubr.f32.gmra.mrb[0].mxu0 %v6866
        %v6985 = vpop.f32.mrb[0].mxu0
        %v6986 = vadd.f32 0.0, %v6985
        %v6987 = vpop.f32.mrb[0].mxu0
        %6988 = vmatprep.mubr.f32.mxu0 0.0
        %6989 = vmatmul.mubr.f32.gmra.mrb[0].mxu0 %v6867
        %v6990 = vpop.f32.mrb[0].mxu0
        %v6991 = vadd.f32 0.0, %v6990
        %v6992 = vpop.f32.mrb[0].mxu0
        %6993 = vmatprep.mubr.f32.mxu0 0.0
        %6994 = vmatmul.mubr.f32.gmra.mrb[0].mxu0 %v6868
        %v6995 = vpop.f32.mrb[0].mxu0
        %v6996 = vadd.f32 0.0, %v6995
        %v6997 = vpop.f32.mrb[0].mxu0
        %6998 = vmatprep.mubr.f32.mxu0 0.0
        %6999 = vmatmul.mubr.f32.gmra.mrb[0].mxu0 %v6869
        %v7000 = vpop.f32.mrb[0].mxu0
        %v7001 = vadd.f32 0.0, %v7000
        %v7002 = vpop.f32.mrb[0].mxu0
        %7003 = vmatprep.mubr.f32.mxu0 0.0
        %7004 = vmatmul.mubr.f32.gmra.mrb[0].mxu0 %v6870
        %v7005 = vpop.f32.mrb[0].mxu0
        %v7006 = vadd.f32 0.0, %v7005
        %v7007 = vpop.f32.mrb[0].mxu0
        %7008 = vmatprep.mubr.f32.mxu0 0.0
        %7009 = vmatmul.mubr.f32.gmra.mrb[0].mxu0 %v6871
        %v7010 = vpop.f32.mrb[0].mxu0
        %v7011 = vadd.f32 0.0, %v7010
        %v7012 = vpop.f32.mrb[0].mxu0
        %7013 = vmatprep.mubr.f32.mxu0 0.0
        %7014 = vmatmul.mubr.f32.gmra.mrb[0].mxu0 %v6872
        %v7015 = vpop.f32.mrb[0].mxu0
        %v7016 = vadd.f32 0.0, %v7015
        %v7017 = vpop.f32.mrb[0].mxu0
        %7018 = vmatprep.mubr.f32.mxu0 0.0
        %7019 = vmatmul.mubr.f32.gmra.mrb[0].mxu0 %v6873
        %v7020 = vpop.f32.mrb[0].mxu0
        %v7021 = vadd.f32 0.0, %v7020
        %v7022 = vpop.f32.mrb[0].mxu0
        %7023 = vmatprep.mubr.f32.mxu0 0.0
        %7024 = vmatmul.mubr.f32.gmra.mrb[0].mxu0 %v6874
        %v7025 = vpop.f32.mrb[0].mxu0
        %v7026 = vadd.f32 0.0, %v7025
        %v7027 = vpop.f32.mrb[0].mxu0
        %7028 = vmatprep.mubr.f32.mxu0 0.0
        %7029 = vmatmul.mubr.f32.gmra.mrb[0].mxu0 %v6875
        %v7030 = vpop.f32.mrb[0].mxu0
        %v7031 = vadd.f32 0.0, %v7030
        %v7032 = vpop.f32.mrb[0].mxu0
        %7033 = vmatprep.mubr.f32.mxu0 0.0
        %7034 = vmatmul.mubr.f32.gmra.mrb[0].mxu0 %v6876
        %v7035 = vpop.f32.mrb[0].mxu0
        %v7036 = vadd.f32 0.0, %v7035
        %v7037 = vpop.f32.mrb[0].mxu0
        %7038 = vmatprep.mubr.f32.mxu0 0.0
        %7039 = vmatmul.mubr.f32.gmra.mrb[0].mxu0 %v6877
        %v7040 = vpop.f32.mrb[0].mxu0
        %v7041 = vadd.f32 0.0, %v7040
        %v7042 = vpop.f32.mrb[0].mxu0
        %7043 = vmatprep.mubr.f32.mxu0 0.0
        %7044 = vmatmul.mubr.f32.gmra.mrb[0].mxu0 %v6878
        %v7045 = vpop.f32.mrb[0].mxu0
        %v7046 = vadd.f32 0.0, %v7045
        %v7047 = vpop.f32.mrb[0].mxu0
        %7048 = vmatprep.mubr.f32.mxu0 0.0
        %7049 = vmatmul.mubr.f32.gmra.mrb[0].mxu0 %v6879
        %v7050 = vpop.f32.mrb[0].mxu0
        %v7051 = vadd.f32 0.0, %v7050
        %v7052 = vpop.f32.mrb[0].mxu0
        %7053 = vmatprep.mubr.f32.mxu0 0.0
        %7054 = vmatmul.mubr.f32.gmra.mrb[0].mxu0 %v6880
        %v7055 = vpop.f32.mrb[0].mxu0
        %v7056 = vadd.f32 0.0, %v7055
        %v7057 = vpop.f32.mrb[0].mxu0
        %7058 = vmatprep.mubr.f32.mxu0 0.0
        %7059 = vmatmul.mubr.f32.gmra.mrb[0].mxu0 %v6881
        %v7060 = vpop.f32.mrb[0].mxu0
        %v7061 = vadd.f32 0.0, %v7060
        %v7062 = vpop.f32.mrb[0].mxu0
        %7063 = vmatprep.mubr.f32.mxu0 0.0
        %7064 = vmatmul.mubr.f32.gmra.mrb[0].mxu0 %v6882
        %v7065 = vpop.f32.mrb[0].mxu0
        %v7066 = vadd.f32 0.0, %v7065
        %v7067 = vpop.f32.mrb[0].mxu0
        %7068 = vmatprep.mubr.f32.mxu0 0.0
        %7069 = vmatmul.mubr.f32.gmra.mrb[0].mxu0 %v6883
        %v7070 = vpop.f32.mrb[0].mxu0
        %v7071 = vadd.f32 0.0, %v7070
        %v7072 = vpop.f32.mrb[0].mxu0
        %7073 = vmatprep.mubr.f32.mxu0 0.0
        %7074 = vmatmul.mubr.f32.gmra.mrb[0].mxu0 %v6884
        %v7075 = vpop.f32.mrb[0].mxu0
        %v7076 = vadd.f32 0.0, %v7075
        %v7077 = vpop.f32.mrb[0].mxu0
        %7078 = vmatprep.mubr.f32.mxu0 0.0
        %7079 = vmatmul.mubr.f32.gmra.mrb[0].mxu0 %v6885
        %v7080 = vpop.f32.mrb[0].mxu0
        %v7081 = vadd.f32 0.0, %v7080
        %v7082 = vpop.f32.mrb[0].mxu0
        %7083 = vmatprep.mubr.f32.mxu0 0.0
        %7084 = vmatmul.mubr.f32.gmra.mrb[0].mxu0 %v6886
        %v7085 = vpop.f32.mrb[0].mxu0
        %v7086 = vadd.f32 0.0, %v7085
        %v7087 = vpop.f32.mrb[0].mxu0
        %7088 = vmatprep.mubr.f32.mxu0 0.0
        %7089 = vmatmul.mubr.f32.gmra.mrb[0].mxu0 %v6887
        %v7090 = vpop.f32.mrb[0].mxu0
        %v7091 = vadd.f32 0.0, %v7090
        %v7092 = vpop.f32.mrb[0].mxu0
        %7093 = vmatprep.mubr.f32.mxu0 0.0
        %7094 = vmatmul.mubr.f32.gmra.mrb[0].mxu0 %v6888
        %v7095 = vpop.f32.mrb[0].mxu0
        %v7096 = vadd.f32 0.0, %v7095
        %v7097 = vpop.f32.mrb[0].mxu0
        %7098 = vmatprep.mubr.f32.mxu0 0.0
        %7099 = vmatmul.mubr.f32.gmra.mrb[0].mxu0 %v6889
        %v7100 = vpop.f32.mrb[0].mxu0
        %v7101 = vadd.f32 0.0, %v7100
        %v7102 = vpop.f32.mrb[0].mxu0
        %7103 = vmatprep.mubr.f32.mxu0 0.0
        %7104 = vmatmul.mubr.f32.gmra.mrb[0].mxu0 %v6890
        %v7105 = vpop.f32.mrb[0].mxu0
        %v7106 = vadd.f32 0.0, %v7105
        %v7107 = vpop.f32.mrb[0].mxu0
        %7108 = vmatprep.mubr.f32.mxu0 0.0
        %7109 = vmatmul.mubr.f32.gmra.mrb[0].mxu0 %v6891
        %v7110 = vpop.f32.mrb[0].mxu0
        %v7111 = vadd.f32 0.0, %v7110
        %v7112 = vpop.f32.mrb[0].mxu0
        %7113 = vmatprep.mubr.f32.mxu0 0.0
        %7114 = vmatmul.mubr.f32.gmra.mrb[0].mxu0 %v6892
        %v7115 = vpop.f32.mrb[0].mxu0
        %v7116 = vadd.f32 0.0, %v7115
        %v7117 = vpop.f32.mrb[0].mxu0
        %7118 = vmatprep.mubr.f32.mxu0 0.0
        %7119 = vmatmul.mubr.f32.gmra.mrb[0].mxu0 %v6893
        %v7120 = vpop.f32.mrb[0].mxu0
        %v7121 = vadd.f32 0.0, %v7120
        %v7122 = vpop.f32.mrb[0].mxu0
        %7123 = vmatprep.mubr.f32.mxu0 0.0
        %7124 = vmatmul.mubr.f32.gmra.mrb[0].mxu0 %v6894
        %v7125 = vpop.f32.mrb[0].mxu0
        %v7126 = vadd.f32 0.0, %v7125
        %v7127 = vpop.f32.mrb[0].mxu0
        %7128 = vmatprep.mubr.f32.mxu0 0.0
        %7129 = vmatmul.mubr.f32.gmra.mrb[0].mxu0 %v6895
        %v7130 = vpop.f32.mrb[0].mxu0
        %v7131 = vadd.f32 0.0, %v7130
        %v7132 = vpop.f32.mrb[0].mxu0
        %7133 = vmatprep.mubr.f32.mxu0 0.0
        %7134 = vmatmul.mubr.f32.gmra.mrb[0].mxu0 %v6896
        %v7135 = vpop.f32.mrb[0].mxu0
        %v7136 = vadd.f32 0.0, %v7135
        %v7137 = vpop.f32.mrb[0].mxu0
        %7138 = vdwg.mxu0
        %v7139 = vld [vmem:[#allocation4] sm:$0xff]
        %v7140 = vld [vmem:[#allocation4 + $0x8] sm:$0xff]
        %v7141 = vld [vmem:[#allocation4 + $0x10] sm:$0xff]
        %v7142 = vld [vmem:[#allocation4 + $0x18] sm:$0xff]
        %v7143 = vld [vmem:[#allocation4 + $0x20] sm:$0xff]
        %v7144 = vld [vmem:[#allocation4 + $0x28] sm:$0xff]
        %v7145 = vld [vmem:[#allocation4 + $0x30] sm:$0xff]
        %v7146 = vld [vmem:[#allocation4 + $0x38] sm:$0xff]
        %v7147 = vld [vmem:[#allocation4 + $0x40] sm:$0xff]
        %v7148 = vld [vmem:[#allocation4 + $0x48] sm:$0xff]
        %v7149 = vld [vmem:[#allocation4 + $0x50] sm:$0xff]
        %v7150 = vld [vmem:[#allocation4 + $0x58] sm:$0xff]
        %v7151 = vld [vmem:[#allocation4 + $0x60] sm:$0xff]
        %v7152 = vld [vmem:[#allocation4 + $0x68] sm:$0xff]
        %v7153 = vld [vmem:[#allocation4 + $0x70] sm:$0xff]
        %v7154 = vld [vmem:[#allocation4 + $0x78] sm:$0xff]
        %v7155 = vld [vmem:[#allocation4 + $0x80] sm:$0xff]
        %v7156 = vld [vmem:[#allocation4 + $0x88] sm:$0xff]
        %v7157 = vld [vmem:[#allocation4 + $0x90] sm:$0xff]
        %v7158 = vld [vmem:[#allocation4 + $0x98] sm:$0xff]
        %v7159 = vld [vmem:[#allocation4 + $0xa0] sm:$0xff]
        %v7160 = vld [vmem:[#allocation4 + $0xa8] sm:$0xff]
        %v7161 = vld [vmem:[#allocation4 + $0xb0] sm:$0xff]
        %v7162 = vld [vmem:[#allocation4 + $0xb8] sm:$0xff]
        %v7163 = vld [vmem:[#allocation4 + $0xc0] sm:$0xff]
        %v7164 = vld [vmem:[#allocation4 + $0xc8] sm:$0xff]
        %v7165 = vld [vmem:[#allocation4 + $0xd0] sm:$0xff]
        %v7166 = vld [vmem:[#allocation4 + $0xd8] sm:$0xff]
        %v7167 = vld [vmem:[#allocation4 + $0xe0] sm:$0xff]
        %v7168 = vld [vmem:[#allocation4 + $0xe8] sm:$0xff]
        %v7169 = vld [vmem:[#allocation4 + $0xf0] sm:$0xff]
        %v7170 = vld [vmem:[#allocation4 + $0xf8] sm:$0xff]
        %v7171 = vadd.f32 %v7139, %v6981
        %v7172 = vadd.f32 %v7140, %v6986
        %v7173 = vadd.f32 %v7141, %v6991
        %v7174 = vadd.f32 %v7142, %v6996
        %v7175 = vadd.f32 %v7143, %v7001
        %v7176 = vadd.f32 %v7144, %v7006
        %v7177 = vadd.f32 %v7145, %v7011
        %v7178 = vadd.f32 %v7146, %v7016
        %v7179 = vadd.f32 %v7147, %v7021
        %v7180 = vadd.f32 %v7148, %v7026
        %v7181 = vadd.f32 %v7149, %v7031
        %v7182 = vadd.f32 %v7150, %v7036
        %v7183 = vadd.f32 %v7151, %v7041
        %v7184 = vadd.f32 %v7152, %v7046
        %v7185 = vadd.f32 %v7153, %v7051
        %v7186 = vadd.f32 %v7154, %v7056
        %v7187 = vadd.f32 %v7155, %v7061
        %v7188 = vadd.f32 %v7156, %v7066
        %v7189 = vadd.f32 %v7157, %v7071
        %v7190 = vadd.f32 %v7158, %v7076
        %v7191 = vadd.f32 %v7159, %v7081
        %v7192 = vadd.f32 %v7160, %v7086
        %v7193 = vadd.f32 %v7161, %v7091
        %v7194 = vadd.f32 %v7162, %v7096
        %v7195 = vadd.f32 %v7163, %v7101
        %v7196 = vadd.f32 %v7164, %v7106
        %v7197 = vadd.f32 %v7165, %v7111
        %v7198 = vadd.f32 %v7166, %v7116
        %v7199 = vadd.f32 %v7167, %v7121
        %v7200 = vadd.f32 %v7168, %v7126
        %v7201 = vadd.f32 %v7169, %v7131
        %v7202 = vadd.f32 %v7170, %v7136
        %7203 = vst [vmem:[#allocation4] sm:$0xff] %v7171
        %7204 = vst [vmem:[#allocation4 + $0x8] sm:$0xff] %v7172
        %7205 = vst [vmem:[#allocation4 + $0x10] sm:$0xff] %v7173
        %7206 = vst [vmem:[#allocation4 + $0x18] sm:$0xff] %v7174
        %7207 = vst [vmem:[#allocation4 + $0x20] sm:$0xff] %v7175
        %7208 = vst [vmem:[#allocation4 + $0x28] sm:$0xff] %v7176
        %7209 = vst [vmem:[#allocation4 + $0x30] sm:$0xff] %v7177
        %7210 = vst [vmem:[#allocation4 + $0x38] sm:$0xff] %v7178
        %7211 = vst [vmem:[#allocation4 + $0x40] sm:$0xff] %v7179
        %7212 = vst [vmem:[#allocation4 + $0x48] sm:$0xff] %v7180
        %7213 = vst [vmem:[#allocation4 + $0x50] sm:$0xff] %v7181
        %7214 = vst [vmem:[#allocation4 + $0x58] sm:$0xff] %v7182
        %7215 = vst [vmem:[#allocation4 + $0x60] sm:$0xff] %v7183
        %7216 = vst [vmem:[#allocation4 + $0x68] sm:$0xff] %v7184
        %7217 = vst [vmem:[#allocation4 + $0x70] sm:$0xff] %v7185
        %7218 = vst [vmem:[#allocation4 + $0x78] sm:$0xff] %v7186
        %7219 = vst [vmem:[#allocation4 + $0x80] sm:$0xff] %v7187
        %7220 = vst [vmem:[#allocation4 + $0x88] sm:$0xff] %v7188
        %7221 = vst [vmem:[#allocation4 + $0x90] sm:$0xff] %v7189
        %7222 = vst [vmem:[#allocation4 + $0x98] sm:$0xff] %v7190
        %7223 = vst [vmem:[#allocation4 + $0xa0] sm:$0xff] %v7191
        %7224 = vst [vmem:[#allocation4 + $0xa8] sm:$0xff] %v7192
        %7225 = vst [vmem:[#allocation4 + $0xb0] sm:$0xff] %v7193
        %7226 = vst [vmem:[#allocation4 + $0xb8] sm:$0xff] %v7194
        %7227 = vst [vmem:[#allocation4 + $0xc0] sm:$0xff] %v7195
        %7228 = vst [vmem:[#allocation4 + $0xc8] sm:$0xff] %v7196
        %7229 = vst [vmem:[#allocation4 + $0xd0] sm:$0xff] %v7197
        %7230 = vst [vmem:[#allocation4 + $0xd8] sm:$0xff] %v7198
        %7231 = vst [vmem:[#allocation4 + $0xe0] sm:$0xff] %v7199
        %7232 = vst [vmem:[#allocation4 + $0xe8] sm:$0xff] %v7200
        %7233 = vst [vmem:[#allocation4 + $0xf0] sm:$0xff] %v7201
        %7234 = vst [vmem:[#allocation4 + $0xf8] sm:$0xff] %v7202
        %v7235 = vld [vmem:[#allocation4] sm:$0xff]
        %v7236 = vld [vmem:[#allocation4 + $0x8] sm:$0xff]
        %v7237 = vld [vmem:[#allocation4 + $0x10] sm:$0xff]
        %v7238 = vld [vmem:[#allocation4 + $0x18] sm:$0xff]
        %v7239 = vld [vmem:[#allocation4 + $0x20] sm:$0xff]
        %v7240 = vld [vmem:[#allocation4 + $0x28] sm:$0xff]
        %v7241 = vld [vmem:[#allocation4 + $0x30] sm:$0xff]
        %v7242 = vld [vmem:[#allocation4 + $0x38] sm:$0xff]
        %v7243 = vld [vmem:[#allocation4 + $0x40] sm:$0xff]
        %v7244 = vld [vmem:[#allocation4 + $0x48] sm:$0xff]
        %v7245 = vld [vmem:[#allocation4 + $0x50] sm:$0xff]
        %v7246 = vld [vmem:[#allocation4 + $0x58] sm:$0xff]
        %v7247 = vld [vmem:[#allocation4 + $0x60] sm:$0xff]
        %v7248 = vld [vmem:[#allocation4 + $0x68] sm:$0xff]
        %v7249 = vld [vmem:[#allocation4 + $0x70] sm:$0xff]
        %v7250 = vld [vmem:[#allocation4 + $0x78] sm:$0xff]
        %v7251 = vld [vmem:[#allocation4 + $0x80] sm:$0xff]
        %v7252 = vld [vmem:[#allocation4 + $0x88] sm:$0xff]
        %v7253 = vld [vmem:[#allocation4 + $0x90] sm:$0xff]
        %v7254 = vld [vmem:[#allocation4 + $0x98] sm:$0xff]
        %v7255 = vld [vmem:[#allocation4 + $0xa0] sm:$0xff]
        %v7256 = vld [vmem:[#allocation4 + $0xa8] sm:$0xff]
        %v7257 = vld [vmem:[#allocation4 + $0xb0] sm:$0xff]
        %v7258 = vld [vmem:[#allocation4 + $0xb8] sm:$0xff]
        %v7259 = vld [vmem:[#allocation4 + $0xc0] sm:$0xff]
        %v7260 = vld [vmem:[#allocation4 + $0xc8] sm:$0xff]
        %v7261 = vld [vmem:[#allocation4 + $0xd0] sm:$0xff]
        %v7262 = vld [vmem:[#allocation4 + $0xd8] sm:$0xff]
        %v7263 = vld [vmem:[#allocation4 + $0xe0] sm:$0xff]
        %v7264 = vld [vmem:[#allocation4 + $0xe8] sm:$0xff]
        %v7265 = vld [vmem:[#allocation4 + $0xf0] sm:$0xff]
        %v7266 = vld [vmem:[#allocation4 + $0xf8] sm:$0xff]
        %v7267 = vld [vmem:[%s5] sm:$0x1]
        %v7269 = vlaneseq
        %v7270 = vshrl.u32 %v7269, 7
        %v7271 = vsub.s32 0, %v7270
        %v7272 = vrot.slane %v7267, %v7271
        %v7274 = vmul.f32 %v7235, %v7272
        %v7275 = vmul.f32 %v7236, %v7272
        %v7276 = vmul.f32 %v7237, %v7272
        %v7277 = vmul.f32 %v7238, %v7272
        %v7278 = vmul.f32 %v7239, %v7272
        %v7279 = vmul.f32 %v7240, %v7272
        %v7280 = vmul.f32 %v7241, %v7272
        %v7281 = vmul.f32 %v7242, %v7272
        %v7282 = vmul.f32 %v7243, %v7272
        %v7283 = vmul.f32 %v7244, %v7272
        %v7284 = vmul.f32 %v7245, %v7272
        %v7285 = vmul.f32 %v7246, %v7272
        %v7286 = vmul.f32 %v7247, %v7272
        %v7287 = vmul.f32 %v7248, %v7272
        %v7288 = vmul.f32 %v7249, %v7272
        %v7289 = vmul.f32 %v7250, %v7272
        %v7290 = vmul.f32 %v7251, %v7272
        %v7291 = vmul.f32 %v7252, %v7272
        %v7292 = vmul.f32 %v7253, %v7272
        %v7293 = vmul.f32 %v7254, %v7272
        %v7294 = vmul.f32 %v7255, %v7272
        %v7295 = vmul.f32 %v7256, %v7272
        %v7296 = vmul.f32 %v7257, %v7272
        %v7297 = vmul.f32 %v7258, %v7272
        %v7298 = vmul.f32 %v7259, %v7272
        %v7299 = vmul.f32 %v7260, %v7272
        %v7300 = vmul.f32 %v7261, %v7272
        %v7301 = vmul.f32 %v7262, %v7272
        %v7302 = vmul.f32 %v7263, %v7272
        %v7303 = vmul.f32 %v7264, %v7272
        %v7304 = vmul.f32 %v7265, %v7272
        %v7305 = vmul.f32 %v7266, %v7272
        %v7306 = vld [vmem:[%s6] sm:$0x1]
        %v7308 = vlaneseq
        %v7309 = vshrl.u32 %v7308, 7
        %v7310 = vsub.s32 0, %v7309
        %v7311 = vrot.slane %v7306, %v7310
        %v7313 = vadd.f32 %v7274, %v7311
        %v7314 = vadd.f32 %v7275, %v7311
        %v7315 = vadd.f32 %v7276, %v7311
        %v7316 = vadd.f32 %v7277, %v7311
        %v7317 = vadd.f32 %v7278, %v7311
        %v7318 = vadd.f32 %v7279, %v7311
        %v7319 = vadd.f32 %v7280, %v7311
        %v7320 = vadd.f32 %v7281, %v7311
        %v7321 = vadd.f32 %v7282, %v7311
        %v7322 = vadd.f32 %v7283, %v7311
        %v7323 = vadd.f32 %v7284, %v7311
        %v7324 = vadd.f32 %v7285, %v7311
        %v7325 = vadd.f32 %v7286, %v7311
        %v7326 = vadd.f32 %v7287, %v7311
        %v7327 = vadd.f32 %v7288, %v7311
        %v7328 = vadd.f32 %v7289, %v7311
        %v7329 = vadd.f32 %v7290, %v7311
        %v7330 = vadd.f32 %v7291, %v7311
        %v7331 = vadd.f32 %v7292, %v7311
        %v7332 = vadd.f32 %v7293, %v7311
        %v7333 = vadd.f32 %v7294, %v7311
        %v7334 = vadd.f32 %v7295, %v7311
        %v7335 = vadd.f32 %v7296, %v7311
        %v7336 = vadd.f32 %v7297, %v7311
        %v7337 = vadd.f32 %v7298, %v7311
        %v7338 = vadd.f32 %v7299, %v7311
        %v7339 = vadd.f32 %v7300, %v7311
        %v7340 = vadd.f32 %v7301, %v7311
        %v7341 = vadd.f32 %v7302, %v7311
        %v7342 = vadd.f32 %v7303, %v7311
        %v7343 = vadd.f32 %v7304, %v7311
        %v7344 = vadd.f32 %v7305, %v7311
        %v7345 = vmax.f32 %v7313, 0.0
        %v7346 = vmax.f32 %v7314, 0.0
        %v7347 = vmax.f32 %v7315, 0.0
        %v7348 = vmax.f32 %v7316, 0.0
        %v7349 = vmax.f32 %v7317, 0.0
        %v7350 = vmax.f32 %v7318, 0.0
        %v7351 = vmax.f32 %v7319, 0.0
        %v7352 = vmax.f32 %v7320, 0.0
        %v7353 = vmax.f32 %v7321, 0.0
        %v7354 = vmax.f32 %v7322, 0.0
        %v7355 = vmax.f32 %v7323, 0.0
        %v7356 = vmax.f32 %v7324, 0.0
        %v7357 = vmax.f32 %v7325, 0.0
        %v7358 = vmax.f32 %v7326, 0.0
        %v7359 = vmax.f32 %v7327, 0.0
        %v7360 = vmax.f32 %v7328, 0.0
        %v7361 = vmax.f32 %v7329, 0.0
        %v7362 = vmax.f32 %v7330, 0.0
        %v7363 = vmax.f32 %v7331, 0.0
        %v7364 = vmax.f32 %v7332, 0.0
        %v7365 = vmax.f32 %v7333, 0.0
        %v7366 = vmax.f32 %v7334, 0.0
        %v7367 = vmax.f32 %v7335, 0.0
        %v7368 = vmax.f32 %v7336, 0.0
        %v7369 = vmax.f32 %v7337, 0.0
        %v7370 = vmax.f32 %v7338, 0.0
        %v7371 = vmax.f32 %v7339, 0.0
        %v7372 = vmax.f32 %v7340, 0.0
        %v7373 = vmax.f32 %v7341, 0.0
        %v7374 = vmax.f32 %v7342, 0.0
        %v7375 = vmax.f32 %v7343, 0.0
        %v7376 = vmax.f32 %v7344, 0.0
        %vm7377 = vcmask 64512
        %7378 = vst.msk [vmem:[%s308] sm:$0xff] %vm7377, %v7345
        %7379 = vst.msk [vmem:[%s308 + $0x8] sm:$0xff] %vm7377, %v7346
        %7380 = vst.msk [vmem:[%s308 + $0x10] sm:$0xff] %vm7377, %v7347
        %7381 = vst.msk [vmem:[%s308 + $0x18] sm:$0xff] %vm7377, %v7348
        %7382 = vst.msk [vmem:[%s308 + $0x20] sm:$0xff] %vm7377, %v7349
        %7383 = vst.msk [vmem:[%s308 + $0x28] sm:$0xff] %vm7377, %v7350
        %7384 = vst.msk [vmem:[%s308 + $0x30] sm:$0xff] %vm7377, %v7351
        %7385 = vst.msk [vmem:[%s308 + $0x38] sm:$0xff] %vm7377, %v7352
        %7386 = vst.msk [vmem:[%s308 + $0x40] sm:$0xff] %vm7377, %v7353
        %7387 = vst.msk [vmem:[%s308 + $0x48] sm:$0xff] %vm7377, %v7354
        %7388 = vst.msk [vmem:[%s308 + $0x50] sm:$0xff] %vm7377, %v7355
        %7389 = vst.msk [vmem:[%s308 + $0x58] sm:$0xff] %vm7377, %v7356
        %7390 = vst.msk [vmem:[%s308 + $0x60] sm:$0xff] %vm7377, %v7357
        %7391 = vst.msk [vmem:[%s308 + $0x68] sm:$0xff] %vm7377, %v7358
        %7392 = vst.msk [vmem:[%s308 + $0x70] sm:$0xff] %vm7377, %v7359
        %7393 = vst.msk [vmem:[%s308 + $0x78] sm:$0xff] %vm7377, %v7360
        %7394 = vst.msk [vmem:[%s308 + $0x80] sm:$0xff] %vm7377, %v7361
        %7395 = vst.msk [vmem:[%s308 + $0x88] sm:$0xff] %vm7377, %v7362
        %7396 = vst.msk [vmem:[%s308 + $0x90] sm:$0xff] %vm7377, %v7363
        %7397 = vst.msk [vmem:[%s308 + $0x98] sm:$0xff] %vm7377, %v7364
        %7398 = vst.msk [vmem:[%s308 + $0xa0] sm:$0xff] %vm7377, %v7365
        %7399 = vst.msk [vmem:[%s308 + $0xa8] sm:$0xff] %vm7377, %v7366
        %7400 = vst.msk [vmem:[%s308 + $0xb0] sm:$0xff] %vm7377, %v7367
        %7401 = vst.msk [vmem:[%s308 + $0xb8] sm:$0xff] %vm7377, %v7368
        %7402 = vst.msk [vmem:[%s308 + $0xc0] sm:$0xff] %vm7377, %v7369
        %7403 = vst.msk [vmem:[%s308 + $0xc8] sm:$0xff] %vm7377, %v7370
        %7404 = vst.msk [vmem:[%s308 + $0xd0] sm:$0xff] %vm7377, %v7371
        %7405 = vst.msk [vmem:[%s308 + $0xd8] sm:$0xff] %vm7377, %v7372
        %7406 = vst.msk [vmem:[%s308 + $0xe0] sm:$0xff] %vm7377, %v7373
        %7407 = vst.msk [vmem:[%s308 + $0xe8] sm:$0xff] %vm7377, %v7374
        %7408 = vst.msk [vmem:[%s308 + $0xf0] sm:$0xff] %vm7377, %v7375
        %7409 = vst.msk [vmem:[%s308 + $0xf8] sm:$0xff] %vm7377, %v7376
        %p7410 = scmp.lt.s32.totalorder %s20, 1
        %s7411 = scalar_select %p7410, %s20, 1
        %s7412 = smul.addr %s7411, 32
        %s7413 = smul.addr %s7412, 8
        %s7414 = scalar_lea.vmem %s7, %s7413
        // Predicated region
        $region57: #{tpu_custom_call.1} parent=47 // pred_check
          %p7415 = pneg %p190
        $region58: #{tpu_custom_call.1} parent=47 // pred_check_branch
          %7417 = sbr.rel (%p7415) target = $region60
        $region59: #{tpu_custom_call.1} parent=47 // pred_region
          _
        $region60: #{tpu_custom_call.1} parent=47 // pred_fallthru
          _
      $region48: #{tpu_custom_call.1} parent=5 // pred_fallthru
        _
      %p7418 = scmp.le.s32.totalorder 2, %s15
      // Predicated region
      $region61: #{tpu_custom_call.1} parent=5 // pred_check
        %p7419 = pneg %p7418
      $region62: #{tpu_custom_call.1} parent=5 // pred_check_branch
        %7421 = sbr.rel (%p7419) target = $region64
      $region63: #{tpu_custom_call.1} parent=5 // pred_region
        %s7422 = ssub.s32 %s15, 2
        // Predicated region
        $region65: #{tpu_custom_call.1} parent=63 // pred_check
          %p7423 = pneg %p196
        $region66: #{tpu_custom_call.1} parent=63 // pred_check_branch
          %7425 = sbr.rel (%p7423) target = $region68
        $region67: #{tpu_custom_call.1} parent=63 // pred_region
          %p7426 = scmp.lt.s32.totalorder %s21, 1
          %s7427 = scalar_select %p7426, %s21, 1
          %s7428 = smul.addr %s7427, 32
          %s7429 = smul.addr %s7428, 8
          %s7430 = scalar_lea.vmem %s7, %s7429
        $region68: #{tpu_custom_call.1} parent=63 // pred_fallthru
          _
      $region64: #{tpu_custom_call.1} parent=5 // pred_fallthru
        _
    $region6: #{tpu_custom_call.1} parent=1 // loop_footer
      %s19 = sadd.s32 1, %s15
    $region7: #{tpu_custom_call.1} parent=1 // loop_footer_branch
      %14 = sbr.rel target = $region3
    $region8: #{tpu_custom_call.1} parent=1 // loop_exit
      _
    %7431 = vsyncpa [#allocation6], 1
    %s7432 = scalar_lea.sflag [#allocation6], 1
    %7433 = vsyncpa %s7432, 1
    %7434 = vsyncpa [#allocation8], 1

</llo_original>
